<compile_context>
chip_gen: v5e
topology: v5e:2x2
jax: 0.10.0
libtpu: 0.0.40
codegen_flags: <defaults>
</compile_context>

<pallas_src>
import jax
import jax.numpy as jnp
from jax import lax
from jax.experimental import pallas as pl
from jax.experimental.pallas import tpu as pltpu


# ----------------------------------------------------------------------------
# Fused kernel: conv1 + ReLU + pool + conv2 + ReLU + fc1 + ReLU + fc2 + log_softmax
# ----------------------------------------------------------------------------
def digit_fused_kernel(xs_ref, w1_ref, b1_ref, w2_ref, b2_ref,
                       wf1_ref, bf1_ref, wf2_ref, bf2_ref,
                       o_ref, s1_ref, pool_ref, s2_ref):
    # xs_ref  : (2, 12, Bt, 140) bf16  xs[p, yp, b, ky*28+j] = x[b, 2*yp+p+ky, j]
    # w1_ref  : (140, 256)      bf16  banded conv1 (cols: [even-x|pad|odd-x|pad])
    # b1_ref  : (1, 256)        f32
    # w2_ref  : (384, 256)      bf16  banded conv2 (rows: ky*128 + x2*10+ci, cols: xo*20+co | pad)
    # b2_ref  : (1, 256)        f32
    # wf1_ref : (2560, 512)     bf16  fc1 permuted to rows yo*256 + (xo*20+co)
    # bf1_ref : (1, 512)        f32
    # wf2_ref : (512, 128)      bf16
    # bf2_ref : (1, 128)        f32
    # o_ref   : (Bt, 128)       f32   log-probs in lanes [0, 10)
    # s1_ref  : (2, 12, Bt, 256) bf16 conv1 activations (even/odd y halves)
    # pool_ref: (12, Bt, 128)   bf16  pooled activations, y-major
    # s2_ref  : (Bt, 2560)      bf16  conv2 activations laid out for fc1
    Bt = o_ref.shape[0]

    # ---- conv1: one banded MXU matmul per even/odd output-row half ---------
    for p in range(2):                                    # p = output-row parity
        lhs = xs_ref[p].reshape(12 * Bt, 140)             # bf16, free (Bt % 8 == 0)
        h = jnp.dot(lhs, w1_ref[...], preferred_element_type=jnp.float32)
        h = jnp.maximum(h + b1_ref[...], 0.0)             # bias + ReLU (f32)
        s1_ref[p] = h.astype(jnp.bfloat16).reshape(12, Bt, 256)

    # ---- 2x2/2 max-pool: H = even/odd halves, W = 128-lane halves ----------
    for yp in range(12):
        hm = jnp.maximum(s1_ref[0, yp], s1_ref[1, yp])    # (Bt, 256)
        pool_ref[yp] = jnp.maximum(hm[:, 0:128], hm[:, 128:256])

    # ---- conv2 (banded, K = 3*128) fused with fc1 input staging ------------
    for yo in range(10):
        lhs2 = jnp.concatenate([pool_ref[yo], pool_ref[yo + 1], pool_ref[yo + 2]],
                               axis=-1)                   # (Bt, 384) bf16, lane-aligned
        h2 = jnp.dot(lhs2, w2_ref[...], preferred_element_type=jnp.float32)
        h2 = jnp.maximum(h2 + b2_ref[...], 0.0)           # (Bt, 256) f32
        s2_ref[:, yo * 256:(yo + 1) * 256] = h2.astype(jnp.bfloat16)

    # ---- fc1: single K = 2560 MXU matmul ------------------------------------
    hf = jnp.dot(s2_ref[...], wf1_ref[...], preferred_element_type=jnp.float32)
    hf = jnp.maximum(hf + bf1_ref[...], 0.0)              # (Bt, 512) f32

    # ---- fc2 + log_softmax over the 10 real lanes ---------------------------
    logits = jnp.dot(hf.astype(jnp.bfloat16), wf2_ref[...],
                     preferred_element_type=jnp.float32) + bf2_ref[...]   # (Bt, 128)
    mask = lax.broadcasted_iota(jnp.int32, (1, 128), 1) < 10
    lm = jnp.where(mask, logits, -1e30)
    m = jnp.max(lm, axis=-1, keepdims=True)
    s = lm - m
    ex = jnp.where(mask, jnp.exp(s), 0.0)
    lse = jnp.log(jnp.sum(ex, axis=-1, keepdims=True))
    o_ref[...] = s - lse


# ----------------------------------------------------------------------------
# Wrapper-side data / weight re-layouts (pure XLA glue, tiny tensors)
# ----------------------------------------------------------------------------
def _stack_conv1_input(x):
    # x: (B, 28, 28) -> (2, 12, B, 140) with xs[p, yp, b, ky*28+j] = x[b, 2*yp+p+ky, j]
    slabs = []
    for ky in range(5):
        s = x[:, ky:ky + 24, :]                            # (B, 24, 28)
        slabs.append(s.reshape(-1, 12, 2, 28))             # (B, yp, p, 28)
    s = jnp.stack(slabs, axis=3)                           # (B, yp, p, ky, 28)
    s = jnp.transpose(s, (2, 1, 0, 3, 4))                  # (p, yp, B, ky, 28)
    return s.reshape(2, 12, -1, 140)


def _conv1_weight(conv1_w):
    # (10,1,5,5) -> (140, 256): row = ky*28+j, cols = [even-x (120) | pad 8 | odd-x (120) | pad 8]
    w = jnp.transpose(conv1_w[:, 0, :, :], (1, 2, 0))      # (ky, kx, co)
    j = jnp.arange(28)[:, None]
    xo = jnp.arange(24)[None, :]
    kx = j - xo
    valid = (kx >= 0) & (kx < 5)
    g = w[:, jnp.clip(kx, 0, 4), :]                        # (5, 28, 24, 10)
    g = jnp.where(valid[None, :, :, None], g, 0.0)
    even = g[:, :, 0::2, :].reshape(5, 28, 120)            # col = xp*10 + co  (x = 2*xp)
    odd = g[:, :, 1::2, :].reshape(5, 28, 120)             # col = xp*10 + co  (x = 2*xp+1)
    z = jnp.zeros((5, 28, 8), jnp.float32)
    return jnp.concatenate([even, z, odd, z], axis=-1).reshape(140, 256)


def _conv2_weight(conv2_w):
    # (20,10,3,3) -> (384, 256): row = ky*128 + x2*10+ci, col = xo*20+co (cols 200..255 / rows *+120..127 zero)
    w = jnp.transpose(conv2_w, (2, 3, 1, 0))               # (ky, kx, ci, co)
    x2 = jnp.arange(12)[:, None]
    xo = jnp.arange(10)[None, :]
    kx = x2 - xo
    valid = (kx >= 0) & (kx < 3)
    g = w[:, jnp.clip(kx, 0, 2), :, :]                     # (ky, x2, xo, ci, co)
    g = jnp.where(valid[None, :, :, None, None], g, 0.0)
    g = jnp.transpose(g, (0, 1, 3, 2, 4)).reshape(3, 120, 200)   # (ky, x2*10+ci, xo*20+co)
    g = jnp.pad(g, ((0, 0), (0, 8), (0, 56)))              # (3, 128, 256)
    return g.reshape(384, 256)


def _fc1_weight(fc1_w):
    # PyTorch flatten index = co*100 + yo*10 + xo; our s2 lane index = yo*256 + (xo*20+co).
    w = fc1_w.reshape(500, 20, 10, 10)                     # (out, co, yo, xo)
    w = jnp.transpose(w, (2, 3, 1, 0)).reshape(10, 200, 500)   # (yo, xo*20+co, out)
    w = jnp.pad(w, ((0, 0), (0, 56), (0, 12)))             # (10, 256, 512)
    return w.reshape(2560, 512)


# ----------------------------------------------------------------------------
# Forward wrapper
# ----------------------------------------------------------------------------
def digit_forward(x_nchw, params, block_b=32):
    B = x_nchw.shape[0]
    x = x_nchw[:, 0, :, :].astype(jnp.float32)             # (B, 28, 28)

    # Batch tile: multiple of 8 (sublane alignment), capped at block_b, and the
    # grid always has >= 2 steps so v7x can shard across both TensorCores.
    block_b = max(8, (block_b // 8) * 8)
    half = (B + 1) // 2
    bt = min(block_b, max(8, ((half + 7) // 8) * 8))
    nsteps = max(2, (B + bt - 1) // bt)
    bpad = nsteps * bt
    assert bt % 8 == 0
    if bpad != B:
        x = jnp.pad(x, ((0, bpad - B), (0, 0), (0, 0)))

    # Pre-stacked, ky-concatenated, y-major conv1 input (bf16 halves the DMA).
    xs = _stack_conv1_input(x).astype(jnp.bfloat16)        # (2, 12, bpad, 140)

    # Padded / banded bf16 weights, f32 biases.
    w1 = _conv1_weight(params["conv1_w"]).astype(jnp.bfloat16)
    b1 = jnp.concatenate([jnp.tile(params["conv1_b"], 12), jnp.zeros(8, jnp.float32),
                          jnp.tile(params["conv1_b"], 12), jnp.zeros(8, jnp.float32)]
                         ).reshape(1, 256)
    w2 = _conv2_weight(params["conv2_w"]).astype(jnp.bfloat16)
    b2 = jnp.concatenate([jnp.tile(params["conv2_b"], 10),
                          jnp.zeros(56, jnp.float32)]).reshape(1, 256)
    wf1 = _fc1_weight(params["fc1_w"]).astype(jnp.bfloat16)
    bf1 = jnp.pad(params["fc1_b"], (0, 12)).reshape(1, 512)
    wf2 = jnp.pad(params["fc2_w"].T, ((0, 12), (0, 118))).astype(jnp.bfloat16)
    bf2 = jnp.pad(params["fc2_b"], (0, 118)).reshape(1, 128)

    out = pl.pallas_call(
        digit_fused_kernel,
        out_shape=jax.ShapeDtypeStruct((bpad, 128), jnp.float32),
        grid=(nsteps,),
        in_specs=[
            pl.BlockSpec((2, 12, bt, 140), lambda g: (0, 0, g, 0)),
            pl.BlockSpec((140, 256), lambda g: (0, 0)),
            pl.BlockSpec((1, 256), lambda g: (0, 0)),
            pl.BlockSpec((384, 256), lambda g: (0, 0)),
            pl.BlockSpec((1, 256), lambda g: (0, 0)),
            pl.BlockSpec((2560, 512), lambda g: (0, 0)),
            pl.BlockSpec((1, 512), lambda g: (0, 0)),
            pl.BlockSpec((512, 128), lambda g: (0, 0)),
            pl.BlockSpec((1, 128), lambda g: (0, 0)),
        ],
        out_specs=pl.BlockSpec((bt, 128), lambda g: (g, 0)),
        scratch_shapes=[
            pltpu.VMEM((2, 12, bt, 256), jnp.bfloat16),    # conv1 activations (even/odd y)
            pltpu.VMEM((12, bt, 128), jnp.bfloat16),       # pooled activations, y-major
            pltpu.VMEM((bt, 2560), jnp.bfloat16),          # conv2 activations / fc1 input
        ],
        compiler_params=pltpu.CompilerParams(
            dimension_semantics=("parallel",),
            vmem_limit_bytes=32 * 1024 * 1024),
    )(xs, w1, b1, w2, b2, wf1, bf1, wf2, bf2)
    return out[:B, :10]


# ----------------------------------------------------------------------------
# Pure-JAX/XLA reference of the PyTorch forward (for validation)
# ----------------------------------------------------------------------------
def digit_reference(x_nchw, p):
    dn = ("NCHW", "OIHW", "NCHW")
    h = lax.conv_general_dilated(x_nchw.astype(jnp.float32), p["conv1_w"],
                                 (1, 1), "VALID", dimension_numbers=dn)
    h = jnp.maximum(h + p["conv1_b"][None, :, None, None], 0.0)
    h = lax.reduce_window(h, -jnp.inf, lax.max,
                          (1, 1, 2, 2), (1, 1, 2, 2), "VALID")
    h = lax.conv_general_dilated(h, p["conv2_w"], (1, 1), "VALID",
                                 dimension_numbers=dn)
    h = jnp.maximum(h + p["conv2_b"][None, :, None, None], 0.0)
    h = h.reshape(x_nchw.shape[0], -1)
    h = jnp.maximum(h @ p["fc1_w"].T + p["fc1_b"], 0.0)
    logits = h @ p["fc2_w"].T + p["fc2_b"]
    return jax.nn.log_softmax(logits, axis=-1)


def init_params(key):
    ks = jax.random.split(key, 8)

    def u(k, shape, fan_in):
        bound = 1.0 / jnp.sqrt(jnp.float32(fan_in))
        return jax.random.uniform(k, shape, jnp.float32, -bound, bound)

    return dict(
        conv1_w=u(ks[0], (10, 1, 5, 5), 1 * 5 * 5),     # PyTorch (Cout, Cin, kh, kw)
        conv1_b=u(ks[1], (10,), 1 * 5 * 5),
        conv2_w=u(ks[2], (20, 10, 3, 3), 10 * 3 * 3),
        conv2_b=u(ks[3], (20,), 10 * 3 * 3),
        fc1_w=u(ks[4], (500, 2000), 2000),              # PyTorch (out, in), in = (C,H,W) flat
        fc1_b=u(ks[5], (500,), 2000),
        fc2_w=u(ks[6], (10, 500), 500),
        fc2_b=u(ks[7], (10,), 500),
    )


if __name__ == "__main__":
    key = jax.random.PRNGKey(0)
    pkey, xkey = jax.random.split(key)
    params = init_params(pkey)

    # fc1 = Linear(20*10*10, 500) pins the input to 1x28x28; keep batch small.
    x = jax.random.normal(xkey, (2, 1, 28, 28), jnp.float32)          # NCHW like PyTorch

    out = jax.jit(digit_forward)(x, params)
    out = jax.block_until_ready(out)

    assert out.shape == (2, 10)
    assert bool(jnp.all(jnp.isfinite(out)))
    # log_softmax rows must exponentiate-sum to 1.
    assert jnp.allclose(jnp.exp(out).sum(axis=1), 1.0, atol=1e-3)

    # Validate against a pure-JAX f32 reference of the PyTorch forward pass
    # (bf16 MXU operands -> loose-ish tolerance).
    ref = jax.jit(digit_reference)(x, params)
    max_err = float(jnp.max(jnp.abs(out - ref)))
    assert max_err < 2e-2, f"mismatch vs reference, max |err| = {max_err}"

    print("KERNEL_OK")
</pallas_src>

<mosaic_0001>
module attributes {stable_mosaic.version = 11 : i64} {
  func.func @digit_fused_kernel(%arg0: i32, %arg1: memref<2x12x8x140xbf16, #tpu.memory_space<vmem>>, %arg2: memref<140x256xbf16, #tpu.memory_space<vmem>>, %arg3: memref<1x256xf32, #tpu.memory_space<vmem>>, %arg4: memref<384x256xbf16, #tpu.memory_space<vmem>>, %arg5: memref<1x256xf32, #tpu.memory_space<vmem>>, %arg6: memref<2560x512xbf16, #tpu.memory_space<vmem>>, %arg7: memref<1x512xf32, #tpu.memory_space<vmem>>, %arg8: memref<512x128xbf16, #tpu.memory_space<vmem>>, %arg9: memref<1x128xf32, #tpu.memory_space<vmem>>, %arg10: memref<8x128xf32, #tpu.memory_space<vmem>>, %arg11: memref<2x12x8x256xbf16, #tpu.memory_space<vmem>>, %arg12: memref<12x8x128xbf16, #tpu.memory_space<vmem>>, %arg13: memref<8x2560xbf16, #tpu.memory_space<vmem>>) attributes {dimension_semantics = [#tpu.dimension_semantics<parallel>], iteration_bounds = array<i64: 2>, scalar_prefetch = 0 : i64, scratch_operands = 3 : i64, tpu.core_type = #tpu.core_type<tc>, window_params = [{transform_indices = @transform_0, window_bounds = array<i64: 2, 12, 8, 140>}, {pipeline_mode = #tpu.pipeline_mode<synchronous>, transform_indices = @transform_1, window_bounds = array<i64: 140, 256>}, {pipeline_mode = #tpu.pipeline_mode<synchronous>, transform_indices = @transform_2, window_bounds = array<i64: 1, 256>}, {pipeline_mode = #tpu.pipeline_mode<synchronous>, transform_indices = @transform_3, window_bounds = array<i64: 384, 256>}, {pipeline_mode = #tpu.pipeline_mode<synchronous>, transform_indices = @transform_4, window_bounds = array<i64: 1, 256>}, {pipeline_mode = #tpu.pipeline_mode<synchronous>, transform_indices = @transform_5, window_bounds = array<i64: 2560, 512>}, {pipeline_mode = #tpu.pipeline_mode<synchronous>, transform_indices = @transform_6, window_bounds = array<i64: 1, 512>}, {pipeline_mode = #tpu.pipeline_mode<synchronous>, transform_indices = @transform_7, window_bounds = array<i64: 512, 128>}, {pipeline_mode = #tpu.pipeline_mode<synchronous>, transform_indices = @transform_8, window_bounds = array<i64: 1, 128>}, {transform_indices = @transform_9, window_bounds = array<i64: 8, 128>}]} {
    %c0 = arith.constant 0 : index
    %c0_0 = arith.constant 0 : index
    %c0_1 = arith.constant 0 : index
    %c0_2 = arith.constant 0 : index
    %0 = vector.load %arg1[%c0, %c0_0, %c0_1, %c0_2] : memref<2x12x8x140xbf16, #tpu.memory_space<vmem>>, vector<1x12x8x140xbf16>
    %1 = vector.shape_cast %0 : vector<1x12x8x140xbf16> to vector<12x8x140xbf16>
    %2 = vector.shape_cast %1 : vector<12x8x140xbf16> to vector<96x140xbf16>
    %c0_3 = arith.constant 0 : index
    %c0_4 = arith.constant 0 : index
    %3 = vector.load %arg2[%c0_3, %c0_4] : memref<140x256xbf16, #tpu.memory_space<vmem>>, vector<140x256xbf16>
    %cst = arith.constant dense<0.000000e+00> : vector<96x256xf32>
    %4 = tpu.matmul %2, %3, %cst {dimension_numbers = #tpu.dot_dimension_numbers<[1], [0], [0], [1], [0, 0, 1, 1], [], []>} : vector<96x140xbf16>, vector<140x256xbf16>, vector<96x256xf32> -> vector<96x256xf32>
    %c0_5 = arith.constant 0 : index
    %c0_6 = arith.constant 0 : index
    %5 = vector.load %arg3[%c0_5, %c0_6] : memref<1x256xf32, #tpu.memory_space<vmem>>, vector<1x256xf32>
    %6 = vector.broadcast %5 : vector<1x256xf32> to vector<96x256xf32>
    %7 = arith.addf %4, %6 : vector<96x256xf32>
    %cst_7 = arith.constant 0.000000e+00 : f32
    %8 = vector.broadcast %cst_7 : f32 to vector<96x256xf32>
    %9 = arith.maximumf %7, %8 : vector<96x256xf32>
    %10 = arith.truncf %9 : vector<96x256xf32> to vector<96x256xbf16>
    %11 = vector.shape_cast %10 : vector<96x256xbf16> to vector<12x8x256xbf16>
    %c0_8 = arith.constant 0 : index
    %c0_9 = arith.constant 0 : index
    %c0_10 = arith.constant 0 : index
    %c0_11 = arith.constant 0 : index
    %12 = vector.load %arg11[%c0_8, %c0_9, %c0_10, %c0_11] : memref<2x12x8x256xbf16, #tpu.memory_space<vmem>>, vector<1x12x8x256xbf16>
    %13 = vector.shape_cast %12 : vector<1x12x8x256xbf16> to vector<12x8x256xbf16>
    %14 = vector.shape_cast %11 : vector<12x8x256xbf16> to vector<1x12x8x256xbf16>
    tpu.vector_store %arg11[%c0_8, %c0_9, %c0_10, %c0_11], %14 {strides = array<i32>} : memref<2x12x8x256xbf16, #tpu.memory_space<vmem>>, vector<1x12x8x256xbf16>,
    %c1 = arith.constant 1 : index
    %c0_12 = arith.constant 0 : index
    %c0_13 = arith.constant 0 : index
    %c0_14 = arith.constant 0 : index
    %15 = vector.load %arg1[%c1, %c0_12, %c0_13, %c0_14] : memref<2x12x8x140xbf16, #tpu.memory_space<vmem>>, vector<1x12x8x140xbf16>
    %16 = vector.shape_cast %15 : vector<1x12x8x140xbf16> to vector<12x8x140xbf16>
    %17 = vector.shape_cast %16 : vector<12x8x140xbf16> to vector<96x140xbf16>
    %c0_15 = arith.constant 0 : index
    %c0_16 = arith.constant 0 : index
    %18 = vector.load %arg2[%c0_15, %c0_16] : memref<140x256xbf16, #tpu.memory_space<vmem>>, vector<140x256xbf16>
    %cst_17 = arith.constant dense<0.000000e+00> : vector<96x256xf32>
    %19 = tpu.matmul %17, %18, %cst_17 {dimension_numbers = #tpu.dot_dimension_numbers<[1], [0], [0], [1], [0, 0, 1, 1], [], []>} : vector<96x140xbf16>, vector<140x256xbf16>, vector<96x256xf32> -> vector<96x256xf32>
    %c0_18 = arith.constant 0 : index
    %c0_19 = arith.constant 0 : index
    %20 = vector.load %arg3[%c0_18, %c0_19] : memref<1x256xf32, #tpu.memory_space<vmem>>, vector<1x256xf32>
    %21 = vector.broadcast %20 : vector<1x256xf32> to vector<96x256xf32>
    %22 = arith.addf %19, %21 : vector<96x256xf32>
    %cst_20 = arith.constant 0.000000e+00 : f32
    %23 = vector.broadcast %cst_20 : f32 to vector<96x256xf32>
    %24 = arith.maximumf %22, %23 : vector<96x256xf32>
    %25 = arith.truncf %24 : vector<96x256xf32> to vector<96x256xbf16>
    %26 = vector.shape_cast %25 : vector<96x256xbf16> to vector<12x8x256xbf16>
    %c1_21 = arith.constant 1 : index
    %c0_22 = arith.constant 0 : index
    %c0_23 = arith.constant 0 : index
    %c0_24 = arith.constant 0 : index
    %27 = vector.load %arg11[%c1_21, %c0_22, %c0_23, %c0_24] : memref<2x12x8x256xbf16, #tpu.memory_space<vmem>>, vector<1x12x8x256xbf16>
    %28 = vector.shape_cast %27 : vector<1x12x8x256xbf16> to vector<12x8x256xbf16>
    %29 = vector.shape_cast %26 : vector<12x8x256xbf16> to vector<1x12x8x256xbf16>
    tpu.vector_store %arg11[%c1_21, %c0_22, %c0_23, %c0_24], %29 {strides = array<i32>} : memref<2x12x8x256xbf16, #tpu.memory_space<vmem>>, vector<1x12x8x256xbf16>,
    %c0_25 = arith.constant 0 : index
    %c0_26 = arith.constant 0 : index
    %c0_27 = arith.constant 0 : index
    %c0_28 = arith.constant 0 : index
    %30 = vector.load %arg11[%c0_25, %c0_26, %c0_27, %c0_28] : memref<2x12x8x256xbf16, #tpu.memory_space<vmem>>, vector<1x1x8x256xbf16>
    %31 = vector.shape_cast %30 : vector<1x1x8x256xbf16> to vector<8x256xbf16>
    %c1_29 = arith.constant 1 : index
    %c0_30 = arith.constant 0 : index
    %c0_31 = arith.constant 0 : index
    %c0_32 = arith.constant 0 : index
    %32 = vector.load %arg11[%c1_29, %c0_30, %c0_31, %c0_32] : memref<2x12x8x256xbf16, #tpu.memory_space<vmem>>, vector<1x1x8x256xbf16>
    %33 = vector.shape_cast %32 : vector<1x1x8x256xbf16> to vector<8x256xbf16>
    %34 = arith.maximumf %31, %33 : vector<8x256xbf16>
    %35 = vector.extract_strided_slice %34 {offsets = [0, 0], sizes = [8, 128], strides = [1, 1]} : vector<8x256xbf16> to vector<8x128xbf16>
    %36 = vector.extract_strided_slice %34 {offsets = [0, 128], sizes = [8, 128], strides = [1, 1]} : vector<8x256xbf16> to vector<8x128xbf16>
    %37 = arith.maximumf %35, %36 : vector<8x128xbf16>
    %c0_33 = arith.constant 0 : index
    %c0_34 = arith.constant 0 : index
    %c0_35 = arith.constant 0 : index
    %38 = vector.load %arg12[%c0_33, %c0_34, %c0_35] : memref<12x8x128xbf16, #tpu.memory_space<vmem>>, vector<1x8x128xbf16>
    %39 = vector.shape_cast %38 : vector<1x8x128xbf16> to vector<8x128xbf16>
    %40 = vector.shape_cast %37 : vector<8x128xbf16> to vector<1x8x128xbf16>
    tpu.vector_store %arg12[%c0_33, %c0_34, %c0_35], %40 {strides = array<i32>} : memref<12x8x128xbf16, #tpu.memory_space<vmem>>, vector<1x8x128xbf16>,
    %c0_36 = arith.constant 0 : index
    %c1_37 = arith.constant 1 : index
    %c0_38 = arith.constant 0 : index
    %c0_39 = arith.constant 0 : index
    %41 = vector.load %arg11[%c0_36, %c1_37, %c0_38, %c0_39] : memref<2x12x8x256xbf16, #tpu.memory_space<vmem>>, vector<1x1x8x256xbf16>
    %42 = vector.shape_cast %41 : vector<1x1x8x256xbf16> to vector<8x256xbf16>
    %c1_40 = arith.constant 1 : index
    %c1_41 = arith.constant 1 : index
    %c0_42 = arith.constant 0 : index
    %c0_43 = arith.constant 0 : index
    %43 = vector.load %arg11[%c1_40, %c1_41, %c0_42, %c0_43] : memref<2x12x8x256xbf16, #tpu.memory_space<vmem>>, vector<1x1x8x256xbf16>
    %44 = vector.shape_cast %43 : vector<1x1x8x256xbf16> to vector<8x256xbf16>
    %45 = arith.maximumf %42, %44 : vector<8x256xbf16>
    %46 = vector.extract_strided_slice %45 {offsets = [0, 0], sizes = [8, 128], strides = [1, 1]} : vector<8x256xbf16> to vector<8x128xbf16>
    %47 = vector.extract_strided_slice %45 {offsets = [0, 128], sizes = [8, 128], strides = [1, 1]} : vector<8x256xbf16> to vector<8x128xbf16>
    %48 = arith.maximumf %46, %47 : vector<8x128xbf16>
    %c1_44 = arith.constant 1 : index
    %c0_45 = arith.constant 0 : index
    %c0_46 = arith.constant 0 : index
    %49 = vector.load %arg12[%c1_44, %c0_45, %c0_46] : memref<12x8x128xbf16, #tpu.memory_space<vmem>>, vector<1x8x128xbf16>
    %50 = vector.shape_cast %49 : vector<1x8x128xbf16> to vector<8x128xbf16>
    %51 = vector.shape_cast %48 : vector<8x128xbf16> to vector<1x8x128xbf16>
    tpu.vector_store %arg12[%c1_44, %c0_45, %c0_46], %51 {strides = array<i32>} : memref<12x8x128xbf16, #tpu.memory_space<vmem>>, vector<1x8x128xbf16>,
    %c0_47 = arith.constant 0 : index
    %c2 = arith.constant 2 : index
    %c0_48 = arith.constant 0 : index
    %c0_49 = arith.constant 0 : index
    %52 = vector.load %arg11[%c0_47, %c2, %c0_48, %c0_49] : memref<2x12x8x256xbf16, #tpu.memory_space<vmem>>, vector<1x1x8x256xbf16>
    %53 = vector.shape_cast %52 : vector<1x1x8x256xbf16> to vector<8x256xbf16>
    %c1_50 = arith.constant 1 : index
    %c2_51 = arith.constant 2 : index
    %c0_52 = arith.constant 0 : index
    %c0_53 = arith.constant 0 : index
    %54 = vector.load %arg11[%c1_50, %c2_51, %c0_52, %c0_53] : memref<2x12x8x256xbf16, #tpu.memory_space<vmem>>, vector<1x1x8x256xbf16>
    %55 = vector.shape_cast %54 : vector<1x1x8x256xbf16> to vector<8x256xbf16>
    %56 = arith.maximumf %53, %55 : vector<8x256xbf16>
    %57 = vector.extract_strided_slice %56 {offsets = [0, 0], sizes = [8, 128], strides = [1, 1]} : vector<8x256xbf16> to vector<8x128xbf16>
    %58 = vector.extract_strided_slice %56 {offsets = [0, 128], sizes = [8, 128], strides = [1, 1]} : vector<8x256xbf16> to vector<8x128xbf16>
    %59 = arith.maximumf %57, %58 : vector<8x128xbf16>
    %c2_54 = arith.constant 2 : index
    %c0_55 = arith.constant 0 : index
    %c0_56 = arith.constant 0 : index
    %60 = vector.load %arg12[%c2_54, %c0_55, %c0_56] : memref<12x8x128xbf16, #tpu.memory_space<vmem>>, vector<1x8x128xbf16>
    %61 = vector.shape_cast %60 : vector<1x8x128xbf16> to vector<8x128xbf16>
    %62 = vector.shape_cast %59 : vector<8x128xbf16> to vector<1x8x128xbf16>
    tpu.vector_store %arg12[%c2_54, %c0_55, %c0_56], %62 {strides = array<i32>} : memref<12x8x128xbf16, #tpu.memory_space<vmem>>, vector<1x8x128xbf16>,
    %c0_57 = arith.constant 0 : index
    %c3 = arith.constant 3 : index
    %c0_58 = arith.constant 0 : index
    %c0_59 = arith.constant 0 : index
    %63 = vector.load %arg11[%c0_57, %c3, %c0_58, %c0_59] : memref<2x12x8x256xbf16, #tpu.memory_space<vmem>>, vector<1x1x8x256xbf16>
    %64 = vector.shape_cast %63 : vector<1x1x8x256xbf16> to vector<8x256xbf16>
    %c1_60 = arith.constant 1 : index
    %c3_61 = arith.constant 3 : index
    %c0_62 = arith.constant 0 : index
    %c0_63 = arith.constant 0 : index
    %65 = vector.load %arg11[%c1_60, %c3_61, %c0_62, %c0_63] : memref<2x12x8x256xbf16, #tpu.memory_space<vmem>>, vector<1x1x8x256xbf16>
    %66 = vector.shape_cast %65 : vector<1x1x8x256xbf16> to vector<8x256xbf16>
    %67 = arith.maximumf %64, %66 : vector<8x256xbf16>
    %68 = vector.extract_strided_slice %67 {offsets = [0, 0], sizes = [8, 128], strides = [1, 1]} : vector<8x256xbf16> to vector<8x128xbf16>
    %69 = vector.extract_strided_slice %67 {offsets = [0, 128], sizes = [8, 128], strides = [1, 1]} : vector<8x256xbf16> to vector<8x128xbf16>
    %70 = arith.maximumf %68, %69 : vector<8x128xbf16>
    %c3_64 = arith.constant 3 : index
    %c0_65 = arith.constant 0 : index
    %c0_66 = arith.constant 0 : index
    %71 = vector.load %arg12[%c3_64, %c0_65, %c0_66] : memref<12x8x128xbf16, #tpu.memory_space<vmem>>, vector<1x8x128xbf16>
    %72 = vector.shape_cast %71 : vector<1x8x128xbf16> to vector<8x128xbf16>
    %73 = vector.shape_cast %70 : vector<8x128xbf16> to vector<1x8x128xbf16>
    tpu.vector_store %arg12[%c3_64, %c0_65, %c0_66], %73 {strides = array<i32>} : memref<12x8x128xbf16, #tpu.memory_space<vmem>>, vector<1x8x128xbf16>,
    %c0_67 = arith.constant 0 : index
    %c4 = arith.constant 4 : index
    %c0_68 = arith.constant 0 : index
    %c0_69 = arith.constant 0 : index
    %74 = vector.load %arg11[%c0_67, %c4, %c0_68, %c0_69] : memref<2x12x8x256xbf16, #tpu.memory_space<vmem>>, vector<1x1x8x256xbf16>
    %75 = vector.shape_cast %74 : vector<1x1x8x256xbf16> to vector<8x256xbf16>
    %c1_70 = arith.constant 1 : index
    %c4_71 = arith.constant 4 : index
    %c0_72 = arith.constant 0 : index
    %c0_73 = arith.constant 0 : index
    %76 = vector.load %arg11[%c1_70, %c4_71, %c0_72, %c0_73] : memref<2x12x8x256xbf16, #tpu.memory_space<vmem>>, vector<1x1x8x256xbf16>
    %77 = vector.shape_cast %76 : vector<1x1x8x256xbf16> to vector<8x256xbf16>
    %78 = arith.maximumf %75, %77 : vector<8x256xbf16>
    %79 = vector.extract_strided_slice %78 {offsets = [0, 0], sizes = [8, 128], strides = [1, 1]} : vector<8x256xbf16> to vector<8x128xbf16>
    %80 = vector.extract_strided_slice %78 {offsets = [0, 128], sizes = [8, 128], strides = [1, 1]} : vector<8x256xbf16> to vector<8x128xbf16>
    %81 = arith.maximumf %79, %80 : vector<8x128xbf16>
    %c4_74 = arith.constant 4 : index
    %c0_75 = arith.constant 0 : index
    %c0_76 = arith.constant 0 : index
    %82 = vector.load %arg12[%c4_74, %c0_75, %c0_76] : memref<12x8x128xbf16, #tpu.memory_space<vmem>>, vector<1x8x128xbf16>
    %83 = vector.shape_cast %82 : vector<1x8x128xbf16> to vector<8x128xbf16>
    %84 = vector.shape_cast %81 : vector<8x128xbf16> to vector<1x8x128xbf16>
    tpu.vector_store %arg12[%c4_74, %c0_75, %c0_76], %84 {strides = array<i32>} : memref<12x8x128xbf16, #tpu.memory_space<vmem>>, vector<1x8x128xbf16>,
    %c0_77 = arith.constant 0 : index
    %c5 = arith.constant 5 : index
    %c0_78 = arith.constant 0 : index
    %c0_79 = arith.constant 0 : index
    %85 = vector.load %arg11[%c0_77, %c5, %c0_78, %c0_79] : memref<2x12x8x256xbf16, #tpu.memory_space<vmem>>, vector<1x1x8x256xbf16>
    %86 = vector.shape_cast %85 : vector<1x1x8x256xbf16> to vector<8x256xbf16>
    %c1_80 = arith.constant 1 : index
    %c5_81 = arith.constant 5 : index
    %c0_82 = arith.constant 0 : index
    %c0_83 = arith.constant 0 : index
    %87 = vector.load %arg11[%c1_80, %c5_81, %c0_82, %c0_83] : memref<2x12x8x256xbf16, #tpu.memory_space<vmem>>, vector<1x1x8x256xbf16>
    %88 = vector.shape_cast %87 : vector<1x1x8x256xbf16> to vector<8x256xbf16>
    %89 = arith.maximumf %86, %88 : vector<8x256xbf16>
    %90 = vector.extract_strided_slice %89 {offsets = [0, 0], sizes = [8, 128], strides = [1, 1]} : vector<8x256xbf16> to vector<8x128xbf16>
    %91 = vector.extract_strided_slice %89 {offsets = [0, 128], sizes = [8, 128], strides = [1, 1]} : vector<8x256xbf16> to vector<8x128xbf16>
    %92 = arith.maximumf %90, %91 : vector<8x128xbf16>
    %c5_84 = arith.constant 5 : index
    %c0_85 = arith.constant 0 : index
    %c0_86 = arith.constant 0 : index
    %93 = vector.load %arg12[%c5_84, %c0_85, %c0_86] : memref<12x8x128xbf16, #tpu.memory_space<vmem>>, vector<1x8x128xbf16>
    %94 = vector.shape_cast %93 : vector<1x8x128xbf16> to vector<8x128xbf16>
    %95 = vector.shape_cast %92 : vector<8x128xbf16> to vector<1x8x128xbf16>
    tpu.vector_store %arg12[%c5_84, %c0_85, %c0_86], %95 {strides = array<i32>} : memref<12x8x128xbf16, #tpu.memory_space<vmem>>, vector<1x8x128xbf16>,
    %c0_87 = arith.constant 0 : index
    %c6 = arith.constant 6 : index
    %c0_88 = arith.constant 0 : index
    %c0_89 = arith.constant 0 : index
    %96 = vector.load %arg11[%c0_87, %c6, %c0_88, %c0_89] : memref<2x12x8x256xbf16, #tpu.memory_space<vmem>>, vector<1x1x8x256xbf16>
    %97 = vector.shape_cast %96 : vector<1x1x8x256xbf16> to vector<8x256xbf16>
    %c1_90 = arith.constant 1 : index
    %c6_91 = arith.constant 6 : index
    %c0_92 = arith.constant 0 : index
    %c0_93 = arith.constant 0 : index
    %98 = vector.load %arg11[%c1_90, %c6_91, %c0_92, %c0_93] : memref<2x12x8x256xbf16, #tpu.memory_space<vmem>>, vector<1x1x8x256xbf16>
    %99 = vector.shape_cast %98 : vector<1x1x8x256xbf16> to vector<8x256xbf16>
    %100 = arith.maximumf %97, %99 : vector<8x256xbf16>
    %101 = vector.extract_strided_slice %100 {offsets = [0, 0], sizes = [8, 128], strides = [1, 1]} : vector<8x256xbf16> to vector<8x128xbf16>
    %102 = vector.extract_strided_slice %100 {offsets = [0, 128], sizes = [8, 128], strides = [1, 1]} : vector<8x256xbf16> to vector<8x128xbf16>
    %103 = arith.maximumf %101, %102 : vector<8x128xbf16>
    %c6_94 = arith.constant 6 : index
    %c0_95 = arith.constant 0 : index
    %c0_96 = arith.constant 0 : index
    %104 = vector.load %arg12[%c6_94, %c0_95, %c0_96] : memref<12x8x128xbf16, #tpu.memory_space<vmem>>, vector<1x8x128xbf16>
    %105 = vector.shape_cast %104 : vector<1x8x128xbf16> to vector<8x128xbf16>
    %106 = vector.shape_cast %103 : vector<8x128xbf16> to vector<1x8x128xbf16>
    tpu.vector_store %arg12[%c6_94, %c0_95, %c0_96], %106 {strides = array<i32>} : memref<12x8x128xbf16, #tpu.memory_space<vmem>>, vector<1x8x128xbf16>,
    %c0_97 = arith.constant 0 : index
    %c7 = arith.constant 7 : index
    %c0_98 = arith.constant 0 : index
    %c0_99 = arith.constant 0 : index
    %107 = vector.load %arg11[%c0_97, %c7, %c0_98, %c0_99] : memref<2x12x8x256xbf16, #tpu.memory_space<vmem>>, vector<1x1x8x256xbf16>
    %108 = vector.shape_cast %107 : vector<1x1x8x256xbf16> to vector<8x256xbf16>
    %c1_100 = arith.constant 1 : index
    %c7_101 = arith.constant 7 : index
    %c0_102 = arith.constant 0 : index
    %c0_103 = arith.constant 0 : index
    %109 = vector.load %arg11[%c1_100, %c7_101, %c0_102, %c0_103] : memref<2x12x8x256xbf16, #tpu.memory_space<vmem>>, vector<1x1x8x256xbf16>
    %110 = vector.shape_cast %109 : vector<1x1x8x256xbf16> to vector<8x256xbf16>
    %111 = arith.maximumf %108, %110 : vector<8x256xbf16>
    %112 = vector.extract_strided_slice %111 {offsets = [0, 0], sizes = [8, 128], strides = [1, 1]} : vector<8x256xbf16> to vector<8x128xbf16>
    %113 = vector.extract_strided_slice %111 {offsets = [0, 128], sizes = [8, 128], strides = [1, 1]} : vector<8x256xbf16> to vector<8x128xbf16>
    %114 = arith.maximumf %112, %113 : vector<8x128xbf16>
    %c7_104 = arith.constant 7 : index
    %c0_105 = arith.constant 0 : index
    %c0_106 = arith.constant 0 : index
    %115 = vector.load %arg12[%c7_104, %c0_105, %c0_106] : memref<12x8x128xbf16, #tpu.memory_space<vmem>>, vector<1x8x128xbf16>
    %116 = vector.shape_cast %115 : vector<1x8x128xbf16> to vector<8x128xbf16>
    %117 = vector.shape_cast %114 : vector<8x128xbf16> to vector<1x8x128xbf16>
    tpu.vector_store %arg12[%c7_104, %c0_105, %c0_106], %117 {strides = array<i32>} : memref<12x8x128xbf16, #tpu.memory_space<vmem>>, vector<1x8x128xbf16>,
    %c0_107 = arith.constant 0 : index
    %c8 = arith.constant 8 : index
    %c0_108 = arith.constant 0 : index
    %c0_109 = arith.constant 0 : index
    %118 = vector.load %arg11[%c0_107, %c8, %c0_108, %c0_109] : memref<2x12x8x256xbf16, #tpu.memory_space<vmem>>, vector<1x1x8x256xbf16>
    %119 = vector.shape_cast %118 : vector<1x1x8x256xbf16> to vector<8x256xbf16>
    %c1_110 = arith.constant 1 : index
    %c8_111 = arith.constant 8 : index
    %c0_112 = arith.constant 0 : index
    %c0_113 = arith.constant 0 : index
    %120 = vector.load %arg11[%c1_110, %c8_111, %c0_112, %c0_113] : memref<2x12x8x256xbf16, #tpu.memory_space<vmem>>, vector<1x1x8x256xbf16>
    %121 = vector.shape_cast %120 : vector<1x1x8x256xbf16> to vector<8x256xbf16>
    %122 = arith.maximumf %119, %121 : vector<8x256xbf16>
    %123 = vector.extract_strided_slice %122 {offsets = [0, 0], sizes = [8, 128], strides = [1, 1]} : vector<8x256xbf16> to vector<8x128xbf16>
    %124 = vector.extract_strided_slice %122 {offsets = [0, 128], sizes = [8, 128], strides = [1, 1]} : vector<8x256xbf16> to vector<8x128xbf16>
    %125 = arith.maximumf %123, %124 : vector<8x128xbf16>
    %c8_114 = arith.constant 8 : index
    %c0_115 = arith.constant 0 : index
    %c0_116 = arith.constant 0 : index
    %126 = vector.load %arg12[%c8_114, %c0_115, %c0_116] : memref<12x8x128xbf16, #tpu.memory_space<vmem>>, vector<1x8x128xbf16>
    %127 = vector.shape_cast %126 : vector<1x8x128xbf16> to vector<8x128xbf16>
    %128 = vector.shape_cast %125 : vector<8x128xbf16> to vector<1x8x128xbf16>
    tpu.vector_store %arg12[%c8_114, %c0_115, %c0_116], %128 {strides = array<i32>} : memref<12x8x128xbf16, #tpu.memory_space<vmem>>, vector<1x8x128xbf16>,
    %c0_117 = arith.constant 0 : index
    %c9 = arith.constant 9 : index
    %c0_118 = arith.constant 0 : index
    %c0_119 = arith.constant 0 : index
    %129 = vector.load %arg11[%c0_117, %c9, %c0_118, %c0_119] : memref<2x12x8x256xbf16, #tpu.memory_space<vmem>>, vector<1x1x8x256xbf16>
    %130 = vector.shape_cast %129 : vector<1x1x8x256xbf16> to vector<8x256xbf16>
    %c1_120 = arith.constant 1 : index
    %c9_121 = arith.constant 9 : index
    %c0_122 = arith.constant 0 : index
    %c0_123 = arith.constant 0 : index
    %131 = vector.load %arg11[%c1_120, %c9_121, %c0_122, %c0_123] : memref<2x12x8x256xbf16, #tpu.memory_space<vmem>>, vector<1x1x8x256xbf16>
    %132 = vector.shape_cast %131 : vector<1x1x8x256xbf16> to vector<8x256xbf16>
    %133 = arith.maximumf %130, %132 : vector<8x256xbf16>
    %134 = vector.extract_strided_slice %133 {offsets = [0, 0], sizes = [8, 128], strides = [1, 1]} : vector<8x256xbf16> to vector<8x128xbf16>
    %135 = vector.extract_strided_slice %133 {offsets = [0, 128], sizes = [8, 128], strides = [1, 1]} : vector<8x256xbf16> to vector<8x128xbf16>
    %136 = arith.maximumf %134, %135 : vector<8x128xbf16>
    %c9_124 = arith.constant 9 : index
    %c0_125 = arith.constant 0 : index
    %c0_126 = arith.constant 0 : index
    %137 = vector.load %arg12[%c9_124, %c0_125, %c0_126] : memref<12x8x128xbf16, #tpu.memory_space<vmem>>, vector<1x8x128xbf16>
    %138 = vector.shape_cast %137 : vector<1x8x128xbf16> to vector<8x128xbf16>
    %139 = vector.shape_cast %136 : vector<8x128xbf16> to vector<1x8x128xbf16>
    tpu.vector_store %arg12[%c9_124, %c0_125, %c0_126], %139 {strides = array<i32>} : memref<12x8x128xbf16, #tpu.memory_space<vmem>>, vector<1x8x128xbf16>,
    %c0_127 = arith.constant 0 : index
    %c10 = arith.constant 10 : index
    %c0_128 = arith.constant 0 : index
    %c0_129 = arith.constant 0 : index
    %140 = vector.load %arg11[%c0_127, %c10, %c0_128, %c0_129] : memref<2x12x8x256xbf16, #tpu.memory_space<vmem>>, vector<1x1x8x256xbf16>
    %141 = vector.shape_cast %140 : vector<1x1x8x256xbf16> to vector<8x256xbf16>
    %c1_130 = arith.constant 1 : index
    %c10_131 = arith.constant 10 : index
    %c0_132 = arith.constant 0 : index
    %c0_133 = arith.constant 0 : index
    %142 = vector.load %arg11[%c1_130, %c10_131, %c0_132, %c0_133] : memref<2x12x8x256xbf16, #tpu.memory_space<vmem>>, vector<1x1x8x256xbf16>
    %143 = vector.shape_cast %142 : vector<1x1x8x256xbf16> to vector<8x256xbf16>
    %144 = arith.maximumf %141, %143 : vector<8x256xbf16>
    %145 = vector.extract_strided_slice %144 {offsets = [0, 0], sizes = [8, 128], strides = [1, 1]} : vector<8x256xbf16> to vector<8x128xbf16>
    %146 = vector.extract_strided_slice %144 {offsets = [0, 128], sizes = [8, 128], strides = [1, 1]} : vector<8x256xbf16> to vector<8x128xbf16>
    %147 = arith.maximumf %145, %146 : vector<8x128xbf16>
    %c10_134 = arith.constant 10 : index
    %c0_135 = arith.constant 0 : index
    %c0_136 = arith.constant 0 : index
    %148 = vector.load %arg12[%c10_134, %c0_135, %c0_136] : memref<12x8x128xbf16, #tpu.memory_space<vmem>>, vector<1x8x128xbf16>
    %149 = vector.shape_cast %148 : vector<1x8x128xbf16> to vector<8x128xbf16>
    %150 = vector.shape_cast %147 : vector<8x128xbf16> to vector<1x8x128xbf16>
    tpu.vector_store %arg12[%c10_134, %c0_135, %c0_136], %150 {strides = array<i32>} : memref<12x8x128xbf16, #tpu.memory_space<vmem>>, vector<1x8x128xbf16>,
    %c0_137 = arith.constant 0 : index
    %c11 = arith.constant 11 : index
    %c0_138 = arith.constant 0 : index
    %c0_139 = arith.constant 0 : index
    %151 = vector.load %arg11[%c0_137, %c11, %c0_138, %c0_139] : memref<2x12x8x256xbf16, #tpu.memory_space<vmem>>, vector<1x1x8x256xbf16>
    %152 = vector.shape_cast %151 : vector<1x1x8x256xbf16> to vector<8x256xbf16>
    %c1_140 = arith.constant 1 : index
    %c11_141 = arith.constant 11 : index
    %c0_142 = arith.constant 0 : index
    %c0_143 = arith.constant 0 : index
    %153 = vector.load %arg11[%c1_140, %c11_141, %c0_142, %c0_143] : memref<2x12x8x256xbf16, #tpu.memory_space<vmem>>, vector<1x1x8x256xbf16>
    %154 = vector.shape_cast %153 : vector<1x1x8x256xbf16> to vector<8x256xbf16>
    %155 = arith.maximumf %152, %154 : vector<8x256xbf16>
    %156 = vector.extract_strided_slice %155 {offsets = [0, 0], sizes = [8, 128], strides = [1, 1]} : vector<8x256xbf16> to vector<8x128xbf16>
    %157 = vector.extract_strided_slice %155 {offsets = [0, 128], sizes = [8, 128], strides = [1, 1]} : vector<8x256xbf16> to vector<8x128xbf16>
    %158 = arith.maximumf %156, %157 : vector<8x128xbf16>
    %c11_144 = arith.constant 11 : index
    %c0_145 = arith.constant 0 : index
    %c0_146 = arith.constant 0 : index
    %159 = vector.load %arg12[%c11_144, %c0_145, %c0_146] : memref<12x8x128xbf16, #tpu.memory_space<vmem>>, vector<1x8x128xbf16>
    %160 = vector.shape_cast %159 : vector<1x8x128xbf16> to vector<8x128xbf16>
    %161 = vector.shape_cast %158 : vector<8x128xbf16> to vector<1x8x128xbf16>
    tpu.vector_store %arg12[%c11_144, %c0_145, %c0_146], %161 {strides = array<i32>} : memref<12x8x128xbf16, #tpu.memory_space<vmem>>, vector<1x8x128xbf16>,
    %c0_147 = arith.constant 0 : index
    %c0_148 = arith.constant 0 : index
    %c0_149 = arith.constant 0 : index
    %162 = vector.load %arg12[%c0_147, %c0_148, %c0_149] : memref<12x8x128xbf16, #tpu.memory_space<vmem>>, vector<1x8x128xbf16>
    %163 = vector.shape_cast %162 : vector<1x8x128xbf16> to vector<8x128xbf16>
    %c1_150 = arith.constant 1 : index
    %c0_151 = arith.constant 0 : index
    %c0_152 = arith.constant 0 : index
    %164 = vector.load %arg12[%c1_150, %c0_151, %c0_152] : memref<12x8x128xbf16, #tpu.memory_space<vmem>>, vector<1x8x128xbf16>
    %165 = vector.shape_cast %164 : vector<1x8x128xbf16> to vector<8x128xbf16>
    %c2_153 = arith.constant 2 : index
    %c0_154 = arith.constant 0 : index
    %c0_155 = arith.constant 0 : index
    %166 = vector.load %arg12[%c2_153, %c0_154, %c0_155] : memref<12x8x128xbf16, #tpu.memory_space<vmem>>, vector<1x8x128xbf16>
    %167 = vector.shape_cast %166 : vector<1x8x128xbf16> to vector<8x128xbf16>
    %168 = tpu.concatenate %163, %165, %167 in 1 : vector<8x128xbf16>, vector<8x128xbf16>, vector<8x128xbf16> -> vector<8x384xbf16>
    %c0_156 = arith.constant 0 : index
    %c0_157 = arith.constant 0 : index
    %169 = vector.load %arg4[%c0_156, %c0_157] : memref<384x256xbf16, #tpu.memory_space<vmem>>, vector<384x256xbf16>
    %cst_158 = arith.constant dense<0.000000e+00> : vector<8x256xf32>
    %170 = tpu.matmul %168, %169, %cst_158 {dimension_numbers = #tpu.dot_dimension_numbers<[1], [0], [0], [1], [0, 0, 1, 1], [], []>} : vector<8x384xbf16>, vector<384x256xbf16>, vector<8x256xf32> -> vector<8x256xf32>
    %c0_159 = arith.constant 0 : index
    %c0_160 = arith.constant 0 : index
    %171 = vector.load %arg5[%c0_159, %c0_160] : memref<1x256xf32, #tpu.memory_space<vmem>>, vector<1x256xf32>
    %172 = vector.broadcast %171 : vector<1x256xf32> to vector<8x256xf32>
    %173 = arith.addf %170, %172 : vector<8x256xf32>
    %cst_161 = arith.constant 0.000000e+00 : f32
    %174 = vector.broadcast %cst_161 : f32 to vector<8x256xf32>
    %175 = arith.maximumf %173, %174 : vector<8x256xf32>
    %176 = arith.truncf %175 : vector<8x256xf32> to vector<8x256xbf16>
    %c0_162 = arith.constant 0 : index
    %c0_163 = arith.constant 0 : index
    %177 = vector.load %arg13[%c0_162, %c0_163] : memref<8x2560xbf16, #tpu.memory_space<vmem>>, vector<8x256xbf16>
    tpu.vector_store %arg13[%c0_162, %c0_163], %176 {strides = array<i32>} : memref<8x2560xbf16, #tpu.memory_space<vmem>>, vector<8x256xbf16>,
    %c1_164 = arith.constant 1 : index
    %c0_165 = arith.constant 0 : index
    %c0_166 = arith.constant 0 : index
    %178 = vector.load %arg12[%c1_164, %c0_165, %c0_166] : memref<12x8x128xbf16, #tpu.memory_space<vmem>>, vector<1x8x128xbf16>
    %179 = vector.shape_cast %178 : vector<1x8x128xbf16> to vector<8x128xbf16>
    %c2_167 = arith.constant 2 : index
    %c0_168 = arith.constant 0 : index
    %c0_169 = arith.constant 0 : index
    %180 = vector.load %arg12[%c2_167, %c0_168, %c0_169] : memref<12x8x128xbf16, #tpu.memory_space<vmem>>, vector<1x8x128xbf16>
    %181 = vector.shape_cast %180 : vector<1x8x128xbf16> to vector<8x128xbf16>
    %c3_170 = arith.constant 3 : index
    %c0_171 = arith.constant 0 : index
    %c0_172 = arith.constant 0 : index
    %182 = vector.load %arg12[%c3_170, %c0_171, %c0_172] : memref<12x8x128xbf16, #tpu.memory_space<vmem>>, vector<1x8x128xbf16>
    %183 = vector.shape_cast %182 : vector<1x8x128xbf16> to vector<8x128xbf16>
    %184 = tpu.concatenate %179, %181, %183 in 1 : vector<8x128xbf16>, vector<8x128xbf16>, vector<8x128xbf16> -> vector<8x384xbf16>
    %c0_173 = arith.constant 0 : index
    %c0_174 = arith.constant 0 : index
    %185 = vector.load %arg4[%c0_173, %c0_174] : memref<384x256xbf16, #tpu.memory_space<vmem>>, vector<384x256xbf16>
    %cst_175 = arith.constant dense<0.000000e+00> : vector<8x256xf32>
    %186 = tpu.matmul %184, %185, %cst_175 {dimension_numbers = #tpu.dot_dimension_numbers<[1], [0], [0], [1], [0, 0, 1, 1], [], []>} : vector<8x384xbf16>, vector<384x256xbf16>, vector<8x256xf32> -> vector<8x256xf32>
    %c0_176 = arith.constant 0 : index
    %c0_177 = arith.constant 0 : index
    %187 = vector.load %arg5[%c0_176, %c0_177] : memref<1x256xf32, #tpu.memory_space<vmem>>, vector<1x256xf32>
    %188 = vector.broadcast %187 : vector<1x256xf32> to vector<8x256xf32>
    %189 = arith.addf %186, %188 : vector<8x256xf32>
    %cst_178 = arith.constant 0.000000e+00 : f32
    %190 = vector.broadcast %cst_178 : f32 to vector<8x256xf32>
    %191 = arith.maximumf %189, %190 : vector<8x256xf32>
    %192 = arith.truncf %191 : vector<8x256xf32> to vector<8x256xbf16>
    %c0_179 = arith.constant 0 : index
    %c256 = arith.constant 256 : index
    %193 = vector.load %arg13[%c0_179, %c256] : memref<8x2560xbf16, #tpu.memory_space<vmem>>, vector<8x256xbf16>
    tpu.vector_store %arg13[%c0_179, %c256], %192 {strides = array<i32>} : memref<8x2560xbf16, #tpu.memory_space<vmem>>, vector<8x256xbf16>,
    %c2_180 = arith.constant 2 : index
    %c0_181 = arith.constant 0 : index
    %c0_182 = arith.constant 0 : index
    %194 = vector.load %arg12[%c2_180, %c0_181, %c0_182] : memref<12x8x128xbf16, #tpu.memory_space<vmem>>, vector<1x8x128xbf16>
    %195 = vector.shape_cast %194 : vector<1x8x128xbf16> to vector<8x128xbf16>
    %c3_183 = arith.constant 3 : index
    %c0_184 = arith.constant 0 : index
    %c0_185 = arith.constant 0 : index
    %196 = vector.load %arg12[%c3_183, %c0_184, %c0_185] : memref<12x8x128xbf16, #tpu.memory_space<vmem>>, vector<1x8x128xbf16>
    %197 = vector.shape_cast %196 : vector<1x8x128xbf16> to vector<8x128xbf16>
    %c4_186 = arith.constant 4 : index
    %c0_187 = arith.constant 0 : index
    %c0_188 = arith.constant 0 : index
    %198 = vector.load %arg12[%c4_186, %c0_187, %c0_188] : memref<12x8x128xbf16, #tpu.memory_space<vmem>>, vector<1x8x128xbf16>
    %199 = vector.shape_cast %198 : vector<1x8x128xbf16> to vector<8x128xbf16>
    %200 = tpu.concatenate %195, %197, %199 in 1 : vector<8x128xbf16>, vector<8x128xbf16>, vector<8x128xbf16> -> vector<8x384xbf16>
    %c0_189 = arith.constant 0 : index
    %c0_190 = arith.constant 0 : index
    %201 = vector.load %arg4[%c0_189, %c0_190] : memref<384x256xbf16, #tpu.memory_space<vmem>>, vector<384x256xbf16>
    %cst_191 = arith.constant dense<0.000000e+00> : vector<8x256xf32>
    %202 = tpu.matmul %200, %201, %cst_191 {dimension_numbers = #tpu.dot_dimension_numbers<[1], [0], [0], [1], [0, 0, 1, 1], [], []>} : vector<8x384xbf16>, vector<384x256xbf16>, vector<8x256xf32> -> vector<8x256xf32>
    %c0_192 = arith.constant 0 : index
    %c0_193 = arith.constant 0 : index
    %203 = vector.load %arg5[%c0_192, %c0_193] : memref<1x256xf32, #tpu.memory_space<vmem>>, vector<1x256xf32>
    %204 = vector.broadcast %203 : vector<1x256xf32> to vector<8x256xf32>
    %205 = arith.addf %202, %204 : vector<8x256xf32>
    %cst_194 = arith.constant 0.000000e+00 : f32
    %206 = vector.broadcast %cst_194 : f32 to vector<8x256xf32>
    %207 = arith.maximumf %205, %206 : vector<8x256xf32>
    %208 = arith.truncf %207 : vector<8x256xf32> to vector<8x256xbf16>
    %c0_195 = arith.constant 0 : index
    %c512 = arith.constant 512 : index
    %209 = vector.load %arg13[%c0_195, %c512] : memref<8x2560xbf16, #tpu.memory_space<vmem>>, vector<8x256xbf16>
    tpu.vector_store %arg13[%c0_195, %c512], %208 {strides = array<i32>} : memref<8x2560xbf16, #tpu.memory_space<vmem>>, vector<8x256xbf16>,
    %c3_196 = arith.constant 3 : index
    %c0_197 = arith.constant 0 : index
    %c0_198 = arith.constant 0 : index
    %210 = vector.load %arg12[%c3_196, %c0_197, %c0_198] : memref<12x8x128xbf16, #tpu.memory_space<vmem>>, vector<1x8x128xbf16>
    %211 = vector.shape_cast %210 : vector<1x8x128xbf16> to vector<8x128xbf16>
    %c4_199 = arith.constant 4 : index
    %c0_200 = arith.constant 0 : index
    %c0_201 = arith.constant 0 : index
    %212 = vector.load %arg12[%c4_199, %c0_200, %c0_201] : memref<12x8x128xbf16, #tpu.memory_space<vmem>>, vector<1x8x128xbf16>
    %213 = vector.shape_cast %212 : vector<1x8x128xbf16> to vector<8x128xbf16>
    %c5_202 = arith.constant 5 : index
    %c0_203 = arith.constant 0 : index
    %c0_204 = arith.constant 0 : index
    %214 = vector.load %arg12[%c5_202, %c0_203, %c0_204] : memref<12x8x128xbf16, #tpu.memory_space<vmem>>, vector<1x8x128xbf16>
    %215 = vector.shape_cast %214 : vector<1x8x128xbf16> to vector<8x128xbf16>
    %216 = tpu.concatenate %211, %213, %215 in 1 : vector<8x128xbf16>, vector<8x128xbf16>, vector<8x128xbf16> -> vector<8x384xbf16>
    %c0_205 = arith.constant 0 : index
    %c0_206 = arith.constant 0 : index
    %217 = vector.load %arg4[%c0_205, %c0_206] : memref<384x256xbf16, #tpu.memory_space<vmem>>, vector<384x256xbf16>
    %cst_207 = arith.constant dense<0.000000e+00> : vector<8x256xf32>
    %218 = tpu.matmul %216, %217, %cst_207 {dimension_numbers = #tpu.dot_dimension_numbers<[1], [0], [0], [1], [0, 0, 1, 1], [], []>} : vector<8x384xbf16>, vector<384x256xbf16>, vector<8x256xf32> -> vector<8x256xf32>
    %c0_208 = arith.constant 0 : index
    %c0_209 = arith.constant 0 : index
    %219 = vector.load %arg5[%c0_208, %c0_209] : memref<1x256xf32, #tpu.memory_space<vmem>>, vector<1x256xf32>
    %220 = vector.broadcast %219 : vector<1x256xf32> to vector<8x256xf32>
    %221 = arith.addf %218, %220 : vector<8x256xf32>
    %cst_210 = arith.constant 0.000000e+00 : f32
    %222 = vector.broadcast %cst_210 : f32 to vector<8x256xf32>
    %223 = arith.maximumf %221, %222 : vector<8x256xf32>
    %224 = arith.truncf %223 : vector<8x256xf32> to vector<8x256xbf16>
    %c0_211 = arith.constant 0 : index
    %c768 = arith.constant 768 : index
    %225 = vector.load %arg13[%c0_211, %c768] : memref<8x2560xbf16, #tpu.memory_space<vmem>>, vector<8x256xbf16>
    tpu.vector_store %arg13[%c0_211, %c768], %224 {strides = array<i32>} : memref<8x2560xbf16, #tpu.memory_space<vmem>>, vector<8x256xbf16>,
    %c4_212 = arith.constant 4 : index
    %c0_213 = arith.constant 0 : index
    %c0_214 = arith.constant 0 : index
    %226 = vector.load %arg12[%c4_212, %c0_213, %c0_214] : memref<12x8x128xbf16, #tpu.memory_space<vmem>>, vector<1x8x128xbf16>
    %227 = vector.shape_cast %226 : vector<1x8x128xbf16> to vector<8x128xbf16>
    %c5_215 = arith.constant 5 : index
    %c0_216 = arith.constant 0 : index
    %c0_217 = arith.constant 0 : index
    %228 = vector.load %arg12[%c5_215, %c0_216, %c0_217] : memref<12x8x128xbf16, #tpu.memory_space<vmem>>, vector<1x8x128xbf16>
    %229 = vector.shape_cast %228 : vector<1x8x128xbf16> to vector<8x128xbf16>
    %c6_218 = arith.constant 6 : index
    %c0_219 = arith.constant 0 : index
    %c0_220 = arith.constant 0 : index
    %230 = vector.load %arg12[%c6_218, %c0_219, %c0_220] : memref<12x8x128xbf16, #tpu.memory_space<vmem>>, vector<1x8x128xbf16>
    %231 = vector.shape_cast %230 : vector<1x8x128xbf16> to vector<8x128xbf16>
    %232 = tpu.concatenate %227, %229, %231 in 1 : vector<8x128xbf16>, vector<8x128xbf16>, vector<8x128xbf16> -> vector<8x384xbf16>
    %c0_221 = arith.constant 0 : index
    %c0_222 = arith.constant 0 : index
    %233 = vector.load %arg4[%c0_221, %c0_222] : memref<384x256xbf16, #tpu.memory_space<vmem>>, vector<384x256xbf16>
    %cst_223 = arith.constant dense<0.000000e+00> : vector<8x256xf32>
    %234 = tpu.matmul %232, %233, %cst_223 {dimension_numbers = #tpu.dot_dimension_numbers<[1], [0], [0], [1], [0, 0, 1, 1], [], []>} : vector<8x384xbf16>, vector<384x256xbf16>, vector<8x256xf32> -> vector<8x256xf32>
    %c0_224 = arith.constant 0 : index
    %c0_225 = arith.constant 0 : index
    %235 = vector.load %arg5[%c0_224, %c0_225] : memref<1x256xf32, #tpu.memory_space<vmem>>, vector<1x256xf32>
    %236 = vector.broadcast %235 : vector<1x256xf32> to vector<8x256xf32>
    %237 = arith.addf %234, %236 : vector<8x256xf32>
    %cst_226 = arith.constant 0.000000e+00 : f32
    %238 = vector.broadcast %cst_226 : f32 to vector<8x256xf32>
    %239 = arith.maximumf %237, %238 : vector<8x256xf32>
    %240 = arith.truncf %239 : vector<8x256xf32> to vector<8x256xbf16>
    %c0_227 = arith.constant 0 : index
    %c1024 = arith.constant 1024 : index
    %241 = vector.load %arg13[%c0_227, %c1024] : memref<8x2560xbf16, #tpu.memory_space<vmem>>, vector<8x256xbf16>
    tpu.vector_store %arg13[%c0_227, %c1024], %240 {strides = array<i32>} : memref<8x2560xbf16, #tpu.memory_space<vmem>>, vector<8x256xbf16>,
    %c5_228 = arith.constant 5 : index
    %c0_229 = arith.constant 0 : index
    %c0_230 = arith.constant 0 : index
    %242 = vector.load %arg12[%c5_228, %c0_229, %c0_230] : memref<12x8x128xbf16, #tpu.memory_space<vmem>>, vector<1x8x128xbf16>
    %243 = vector.shape_cast %242 : vector<1x8x128xbf16> to vector<8x128xbf16>
    %c6_231 = arith.constant 6 : index
    %c0_232 = arith.constant 0 : index
    %c0_233 = arith.constant 0 : index
    %244 = vector.load %arg12[%c6_231, %c0_232, %c0_233] : memref<12x8x128xbf16, #tpu.memory_space<vmem>>, vector<1x8x128xbf16>
    %245 = vector.shape_cast %244 : vector<1x8x128xbf16> to vector<8x128xbf16>
    %c7_234 = arith.constant 7 : index
    %c0_235 = arith.constant 0 : index
    %c0_236 = arith.constant 0 : index
    %246 = vector.load %arg12[%c7_234, %c0_235, %c0_236] : memref<12x8x128xbf16, #tpu.memory_space<vmem>>, vector<1x8x128xbf16>
    %247 = vector.shape_cast %246 : vector<1x8x128xbf16> to vector<8x128xbf16>
    %248 = tpu.concatenate %243, %245, %247 in 1 : vector<8x128xbf16>, vector<8x128xbf16>, vector<8x128xbf16> -> vector<8x384xbf16>
    %c0_237 = arith.constant 0 : index
    %c0_238 = arith.constant 0 : index
    %249 = vector.load %arg4[%c0_237, %c0_238] : memref<384x256xbf16, #tpu.memory_space<vmem>>, vector<384x256xbf16>
    %cst_239 = arith.constant dense<0.000000e+00> : vector<8x256xf32>
    %250 = tpu.matmul %248, %249, %cst_239 {dimension_numbers = #tpu.dot_dimension_numbers<[1], [0], [0], [1], [0, 0, 1, 1], [], []>} : vector<8x384xbf16>, vector<384x256xbf16>, vector<8x256xf32> -> vector<8x256xf32>
    %c0_240 = arith.constant 0 : index
    %c0_241 = arith.constant 0 : index
    %251 = vector.load %arg5[%c0_240, %c0_241] : memref<1x256xf32, #tpu.memory_space<vmem>>, vector<1x256xf32>
    %252 = vector.broadcast %251 : vector<1x256xf32> to vector<8x256xf32>
    %253 = arith.addf %250, %252 : vector<8x256xf32>
    %cst_242 = arith.constant 0.000000e+00 : f32
    %254 = vector.broadcast %cst_242 : f32 to vector<8x256xf32>
    %255 = arith.maximumf %253, %254 : vector<8x256xf32>
    %256 = arith.truncf %255 : vector<8x256xf32> to vector<8x256xbf16>
    %c0_243 = arith.constant 0 : index
    %c1280 = arith.constant 1280 : index
    %257 = vector.load %arg13[%c0_243, %c1280] : memref<8x2560xbf16, #tpu.memory_space<vmem>>, vector<8x256xbf16>
    tpu.vector_store %arg13[%c0_243, %c1280], %256 {strides = array<i32>} : memref<8x2560xbf16, #tpu.memory_space<vmem>>, vector<8x256xbf16>,
    %c6_244 = arith.constant 6 : index
    %c0_245 = arith.constant 0 : index
    %c0_246 = arith.constant 0 : index
    %258 = vector.load %arg12[%c6_244, %c0_245, %c0_246] : memref<12x8x128xbf16, #tpu.memory_space<vmem>>, vector<1x8x128xbf16>
    %259 = vector.shape_cast %258 : vector<1x8x128xbf16> to vector<8x128xbf16>
    %c7_247 = arith.constant 7 : index
    %c0_248 = arith.constant 0 : index
    %c0_249 = arith.constant 0 : index
    %260 = vector.load %arg12[%c7_247, %c0_248, %c0_249] : memref<12x8x128xbf16, #tpu.memory_space<vmem>>, vector<1x8x128xbf16>
    %261 = vector.shape_cast %260 : vector<1x8x128xbf16> to vector<8x128xbf16>
    %c8_250 = arith.constant 8 : index
    %c0_251 = arith.constant 0 : index
    %c0_252 = arith.constant 0 : index
    %262 = vector.load %arg12[%c8_250, %c0_251, %c0_252] : memref<12x8x128xbf16, #tpu.memory_space<vmem>>, vector<1x8x128xbf16>
    %263 = vector.shape_cast %262 : vector<1x8x128xbf16> to vector<8x128xbf16>
    %264 = tpu.concatenate %259, %261, %263 in 1 : vector<8x128xbf16>, vector<8x128xbf16>, vector<8x128xbf16> -> vector<8x384xbf16>
    %c0_253 = arith.constant 0 : index
    %c0_254 = arith.constant 0 : index
    %265 = vector.load %arg4[%c0_253, %c0_254] : memref<384x256xbf16, #tpu.memory_space<vmem>>, vector<384x256xbf16>
    %cst_255 = arith.constant dense<0.000000e+00> : vector<8x256xf32>
    %266 = tpu.matmul %264, %265, %cst_255 {dimension_numbers = #tpu.dot_dimension_numbers<[1], [0], [0], [1], [0, 0, 1, 1], [], []>} : vector<8x384xbf16>, vector<384x256xbf16>, vector<8x256xf32> -> vector<8x256xf32>
    %c0_256 = arith.constant 0 : index
    %c0_257 = arith.constant 0 : index
    %267 = vector.load %arg5[%c0_256, %c0_257] : memref<1x256xf32, #tpu.memory_space<vmem>>, vector<1x256xf32>
    %268 = vector.broadcast %267 : vector<1x256xf32> to vector<8x256xf32>
    %269 = arith.addf %266, %268 : vector<8x256xf32>
    %cst_258 = arith.constant 0.000000e+00 : f32
    %270 = vector.broadcast %cst_258 : f32 to vector<8x256xf32>
    %271 = arith.maximumf %269, %270 : vector<8x256xf32>
    %272 = arith.truncf %271 : vector<8x256xf32> to vector<8x256xbf16>
    %c0_259 = arith.constant 0 : index
    %c1536 = arith.constant 1536 : index
    %273 = vector.load %arg13[%c0_259, %c1536] : memref<8x2560xbf16, #tpu.memory_space<vmem>>, vector<8x256xbf16>
    tpu.vector_store %arg13[%c0_259, %c1536], %272 {strides = array<i32>} : memref<8x2560xbf16, #tpu.memory_space<vmem>>, vector<8x256xbf16>,
    %c7_260 = arith.constant 7 : index
    %c0_261 = arith.constant 0 : index
    %c0_262 = arith.constant 0 : index
    %274 = vector.load %arg12[%c7_260, %c0_261, %c0_262] : memref<12x8x128xbf16, #tpu.memory_space<vmem>>, vector<1x8x128xbf16>
    %275 = vector.shape_cast %274 : vector<1x8x128xbf16> to vector<8x128xbf16>
    %c8_263 = arith.constant 8 : index
    %c0_264 = arith.constant 0 : index
    %c0_265 = arith.constant 0 : index
    %276 = vector.load %arg12[%c8_263, %c0_264, %c0_265] : memref<12x8x128xbf16, #tpu.memory_space<vmem>>, vector<1x8x128xbf16>
    %277 = vector.shape_cast %276 : vector<1x8x128xbf16> to vector<8x128xbf16>
    %c9_266 = arith.constant 9 : index
    %c0_267 = arith.constant 0 : index
    %c0_268 = arith.constant 0 : index
    %278 = vector.load %arg12[%c9_266, %c0_267, %c0_268] : memref<12x8x128xbf16, #tpu.memory_space<vmem>>, vector<1x8x128xbf16>
    %279 = vector.shape_cast %278 : vector<1x8x128xbf16> to vector<8x128xbf16>
    %280 = tpu.concatenate %275, %277, %279 in 1 : vector<8x128xbf16>, vector<8x128xbf16>, vector<8x128xbf16> -> vector<8x384xbf16>
    %c0_269 = arith.constant 0 : index
    %c0_270 = arith.constant 0 : index
    %281 = vector.load %arg4[%c0_269, %c0_270] : memref<384x256xbf16, #tpu.memory_space<vmem>>, vector<384x256xbf16>
    %cst_271 = arith.constant dense<0.000000e+00> : vector<8x256xf32>
    %282 = tpu.matmul %280, %281, %cst_271 {dimension_numbers = #tpu.dot_dimension_numbers<[1], [0], [0], [1], [0, 0, 1, 1], [], []>} : vector<8x384xbf16>, vector<384x256xbf16>, vector<8x256xf32> -> vector<8x256xf32>
    %c0_272 = arith.constant 0 : index
    %c0_273 = arith.constant 0 : index
    %283 = vector.load %arg5[%c0_272, %c0_273] : memref<1x256xf32, #tpu.memory_space<vmem>>, vector<1x256xf32>
    %284 = vector.broadcast %283 : vector<1x256xf32> to vector<8x256xf32>
    %285 = arith.addf %282, %284 : vector<8x256xf32>
    %cst_274 = arith.constant 0.000000e+00 : f32
    %286 = vector.broadcast %cst_274 : f32 to vector<8x256xf32>
    %287 = arith.maximumf %285, %286 : vector<8x256xf32>
    %288 = arith.truncf %287 : vector<8x256xf32> to vector<8x256xbf16>
    %c0_275 = arith.constant 0 : index
    %c1792 = arith.constant 1792 : index
    %289 = vector.load %arg13[%c0_275, %c1792] : memref<8x2560xbf16, #tpu.memory_space<vmem>>, vector<8x256xbf16>
    tpu.vector_store %arg13[%c0_275, %c1792], %288 {strides = array<i32>} : memref<8x2560xbf16, #tpu.memory_space<vmem>>, vector<8x256xbf16>,
    %c8_276 = arith.constant 8 : index
    %c0_277 = arith.constant 0 : index
    %c0_278 = arith.constant 0 : index
    %290 = vector.load %arg12[%c8_276, %c0_277, %c0_278] : memref<12x8x128xbf16, #tpu.memory_space<vmem>>, vector<1x8x128xbf16>
    %291 = vector.shape_cast %290 : vector<1x8x128xbf16> to vector<8x128xbf16>
    %c9_279 = arith.constant 9 : index
    %c0_280 = arith.constant 0 : index
    %c0_281 = arith.constant 0 : index
    %292 = vector.load %arg12[%c9_279, %c0_280, %c0_281] : memref<12x8x128xbf16, #tpu.memory_space<vmem>>, vector<1x8x128xbf16>
    %293 = vector.shape_cast %292 : vector<1x8x128xbf16> to vector<8x128xbf16>
    %c10_282 = arith.constant 10 : index
    %c0_283 = arith.constant 0 : index
    %c0_284 = arith.constant 0 : index
    %294 = vector.load %arg12[%c10_282, %c0_283, %c0_284] : memref<12x8x128xbf16, #tpu.memory_space<vmem>>, vector<1x8x128xbf16>
    %295 = vector.shape_cast %294 : vector<1x8x128xbf16> to vector<8x128xbf16>
    %296 = tpu.concatenate %291, %293, %295 in 1 : vector<8x128xbf16>, vector<8x128xbf16>, vector<8x128xbf16> -> vector<8x384xbf16>
    %c0_285 = arith.constant 0 : index
    %c0_286 = arith.constant 0 : index
    %297 = vector.load %arg4[%c0_285, %c0_286] : memref<384x256xbf16, #tpu.memory_space<vmem>>, vector<384x256xbf16>
    %cst_287 = arith.constant dense<0.000000e+00> : vector<8x256xf32>
    %298 = tpu.matmul %296, %297, %cst_287 {dimension_numbers = #tpu.dot_dimension_numbers<[1], [0], [0], [1], [0, 0, 1, 1], [], []>} : vector<8x384xbf16>, vector<384x256xbf16>, vector<8x256xf32> -> vector<8x256xf32>
    %c0_288 = arith.constant 0 : index
    %c0_289 = arith.constant 0 : index
    %299 = vector.load %arg5[%c0_288, %c0_289] : memref<1x256xf32, #tpu.memory_space<vmem>>, vector<1x256xf32>
    %300 = vector.broadcast %299 : vector<1x256xf32> to vector<8x256xf32>
    %301 = arith.addf %298, %300 : vector<8x256xf32>
    %cst_290 = arith.constant 0.000000e+00 : f32
    %302 = vector.broadcast %cst_290 : f32 to vector<8x256xf32>
    %303 = arith.maximumf %301, %302 : vector<8x256xf32>
    %304 = arith.truncf %303 : vector<8x256xf32> to vector<8x256xbf16>
    %c0_291 = arith.constant 0 : index
    %c2048 = arith.constant 2048 : index
    %305 = vector.load %arg13[%c0_291, %c2048] : memref<8x2560xbf16, #tpu.memory_space<vmem>>, vector<8x256xbf16>
    tpu.vector_store %arg13[%c0_291, %c2048], %304 {strides = array<i32>} : memref<8x2560xbf16, #tpu.memory_space<vmem>>, vector<8x256xbf16>,
    %c9_292 = arith.constant 9 : index
    %c0_293 = arith.constant 0 : index
    %c0_294 = arith.constant 0 : index
    %306 = vector.load %arg12[%c9_292, %c0_293, %c0_294] : memref<12x8x128xbf16, #tpu.memory_space<vmem>>, vector<1x8x128xbf16>
    %307 = vector.shape_cast %306 : vector<1x8x128xbf16> to vector<8x128xbf16>
    %c10_295 = arith.constant 10 : index
    %c0_296 = arith.constant 0 : index
    %c0_297 = arith.constant 0 : index
    %308 = vector.load %arg12[%c10_295, %c0_296, %c0_297] : memref<12x8x128xbf16, #tpu.memory_space<vmem>>, vector<1x8x128xbf16>
    %309 = vector.shape_cast %308 : vector<1x8x128xbf16> to vector<8x128xbf16>
    %c11_298 = arith.constant 11 : index
    %c0_299 = arith.constant 0 : index
    %c0_300 = arith.constant 0 : index
    %310 = vector.load %arg12[%c11_298, %c0_299, %c0_300] : memref<12x8x128xbf16, #tpu.memory_space<vmem>>, vector<1x8x128xbf16>
    %311 = vector.shape_cast %310 : vector<1x8x128xbf16> to vector<8x128xbf16>
    %312 = tpu.concatenate %307, %309, %311 in 1 : vector<8x128xbf16>, vector<8x128xbf16>, vector<8x128xbf16> -> vector<8x384xbf16>
    %c0_301 = arith.constant 0 : index
    %c0_302 = arith.constant 0 : index
    %313 = vector.load %arg4[%c0_301, %c0_302] : memref<384x256xbf16, #tpu.memory_space<vmem>>, vector<384x256xbf16>
    %cst_303 = arith.constant dense<0.000000e+00> : vector<8x256xf32>
    %314 = tpu.matmul %312, %313, %cst_303 {dimension_numbers = #tpu.dot_dimension_numbers<[1], [0], [0], [1], [0, 0, 1, 1], [], []>} : vector<8x384xbf16>, vector<384x256xbf16>, vector<8x256xf32> -> vector<8x256xf32>
    %c0_304 = arith.constant 0 : index
    %c0_305 = arith.constant 0 : index
    %315 = vector.load %arg5[%c0_304, %c0_305] : memref<1x256xf32, #tpu.memory_space<vmem>>, vector<1x256xf32>
    %316 = vector.broadcast %315 : vector<1x256xf32> to vector<8x256xf32>
    %317 = arith.addf %314, %316 : vector<8x256xf32>
    %cst_306 = arith.constant 0.000000e+00 : f32
    %318 = vector.broadcast %cst_306 : f32 to vector<8x256xf32>
    %319 = arith.maximumf %317, %318 : vector<8x256xf32>
    %320 = arith.truncf %319 : vector<8x256xf32> to vector<8x256xbf16>
    %c0_307 = arith.constant 0 : index
    %c2304 = arith.constant 2304 : index
    %321 = vector.load %arg13[%c0_307, %c2304] : memref<8x2560xbf16, #tpu.memory_space<vmem>>, vector<8x256xbf16>
    tpu.vector_store %arg13[%c0_307, %c2304], %320 {strides = array<i32>} : memref<8x2560xbf16, #tpu.memory_space<vmem>>, vector<8x256xbf16>,
    %c0_308 = arith.constant 0 : index
    %c0_309 = arith.constant 0 : index
    %322 = vector.load %arg13[%c0_308, %c0_309] : memref<8x2560xbf16, #tpu.memory_space<vmem>>, vector<8x2560xbf16>
    %c0_310 = arith.constant 0 : index
    %c0_311 = arith.constant 0 : index
    %323 = vector.load %arg6[%c0_310, %c0_311] : memref<2560x512xbf16, #tpu.memory_space<vmem>>, vector<2560x512xbf16>
    %cst_312 = arith.constant dense<0.000000e+00> : vector<8x512xf32>
    %324 = tpu.matmul %322, %323, %cst_312 {dimension_numbers = #tpu.dot_dimension_numbers<[1], [0], [0], [1], [0, 0, 1, 1], [], []>} : vector<8x2560xbf16>, vector<2560x512xbf16>, vector<8x512xf32> -> vector<8x512xf32>
    %c0_313 = arith.constant 0 : index
    %c0_314 = arith.constant 0 : index
    %325 = vector.load %arg7[%c0_313, %c0_314] : memref<1x512xf32, #tpu.memory_space<vmem>>, vector<1x512xf32>
    %326 = vector.broadcast %325 : vector<1x512xf32> to vector<8x512xf32>
    %327 = arith.addf %324, %326 : vector<8x512xf32>
    %cst_315 = arith.constant 0.000000e+00 : f32
    %328 = vector.broadcast %cst_315 : f32 to vector<8x512xf32>
    %329 = arith.maximumf %327, %328 : vector<8x512xf32>
    %330 = arith.truncf %329 : vector<8x512xf32> to vector<8x512xbf16>
    %c0_316 = arith.constant 0 : index
    %c0_317 = arith.constant 0 : index
    %331 = vector.load %arg8[%c0_316, %c0_317] : memref<512x128xbf16, #tpu.memory_space<vmem>>, vector<512x128xbf16>
    %cst_318 = arith.constant dense<0.000000e+00> : vector<8x128xf32>
    %332 = tpu.matmul %330, %331, %cst_318 {dimension_numbers = #tpu.dot_dimension_numbers<[1], [0], [0], [1], [0, 0, 1, 1], [], []>} : vector<8x512xbf16>, vector<512x128xbf16>, vector<8x128xf32> -> vector<8x128xf32>
    %c0_319 = arith.constant 0 : index
    %c0_320 = arith.constant 0 : index
    %333 = vector.load %arg9[%c0_319, %c0_320] : memref<1x128xf32, #tpu.memory_space<vmem>>, vector<1x128xf32>
    %334 = vector.broadcast %333 : vector<1x128xf32> to vector<8x128xf32>
    %335 = arith.addf %332, %334 : vector<8x128xf32>
    %336 = tpu.iota {dimensions = array<i32: 1>} : vector<1x128xi32>
    %c10_i32 = arith.constant 10 : i32
    %337 = vector.broadcast %c10_i32 : i32 to vector<1x128xi32>
    %338 = arith.cmpi slt, %336, %337 : vector<1x128xi32>
    %cst_321 = arith.constant -1.000000e+30 : f32
    %339 = vector.shape_cast %338 : vector<1x128xi1> to vector<1x128xi1>
    %340 = vector.broadcast %339 : vector<1x128xi1> to vector<8x128xi1>
    %341 = vector.broadcast %cst_321 : f32 to vector<8x128xf32>
    %342 = arith.select %340, %335, %341 : vector<8x128xi1>, vector<8x128xf32>
    %cst_322 = arith.constant dense<0xFF800000> : vector<8xf32>
    %343 = vector.multi_reduction <maximumf>, %342, %cst_322 [1] : vector<8x128xf32> to vector<8xf32>
    %344 = vector.shape_cast %343 : vector<8xf32> to vector<8x1xf32>
    %345 = vector.broadcast %344 : vector<8x1xf32> to vector<8x128xf32>
    %346 = arith.subf %342, %345 : vector<8x128xf32>
    %347 = math.exp %346 : vector<8x128xf32>
    %cst_323 = arith.constant 0.000000e+00 : f32
    %348 = vector.shape_cast %338 : vector<1x128xi1> to vector<1x128xi1>
    %349 = vector.broadcast %348 : vector<1x128xi1> to vector<8x128xi1>
    %350 = vector.broadcast %cst_323 : f32 to vector<8x128xf32>
    %351 = arith.select %349, %347, %350 : vector<8x128xi1>, vector<8x128xf32>
    %cst_324 = arith.constant dense<0.000000e+00> : vector<8xf32>
    %352 = vector.multi_reduction <add>, %351, %cst_324 [1] : vector<8x128xf32> to vector<8xf32>
    %353 = vector.shape_cast %352 : vector<8xf32> to vector<8x1xf32>
    %354 = math.log %353 : vector<8x1xf32>
    %355 = vector.broadcast %354 : vector<8x1xf32> to vector<8x128xf32>
    %356 = arith.subf %346, %355 : vector<8x128xf32>
    %c0_325 = arith.constant 0 : index
    %c0_326 = arith.constant 0 : index
    %357 = vector.load %arg10[%c0_325, %c0_326] : memref<8x128xf32, #tpu.memory_space<vmem>>, vector<8x128xf32>
    tpu.vector_store %arg10[%c0_325, %c0_326], %356 {strides = array<i32>} : memref<8x128xf32, #tpu.memory_space<vmem>>, vector<8x128xf32>,
    return
  }
  func.func @transform_0(%arg0: i32) -> (i32, i32, i32, i32) {
    %c0_i32 = arith.constant 0 : i32
    %c0_i32_0 = arith.constant 0 : i32
    %c0_i32_1 = arith.constant 0 : i32
    %c0_i32_2 = arith.constant 0 : i32
    return %c0_i32, %c0_i32_0, %arg0, %c0_i32_1 : i32, i32, i32, i32
  }
  func.func @transform_1(%arg0: i32) -> (i32, i32) {
    %c0_i32 = arith.constant 0 : i32
    %c0_i32_0 = arith.constant 0 : i32
    %c0_i32_1 = arith.constant 0 : i32
    return %c0_i32, %c0_i32_0 : i32, i32
  }
  func.func @transform_2(%arg0: i32) -> (i32, i32) {
    %c0_i32 = arith.constant 0 : i32
    %c0_i32_0 = arith.constant 0 : i32
    %c0_i32_1 = arith.constant 0 : i32
    return %c0_i32, %c0_i32_0 : i32, i32
  }
  func.func @transform_3(%arg0: i32) -> (i32, i32) {
    %c0_i32 = arith.constant 0 : i32
    %c0_i32_0 = arith.constant 0 : i32
    %c0_i32_1 = arith.constant 0 : i32
    return %c0_i32, %c0_i32_0 : i32, i32
  }
  func.func @transform_4(%arg0: i32) -> (i32, i32) {
    %c0_i32 = arith.constant 0 : i32
    %c0_i32_0 = arith.constant 0 : i32
    %c0_i32_1 = arith.constant 0 : i32
    return %c0_i32, %c0_i32_0 : i32, i32
  }
  func.func @transform_5(%arg0: i32) -> (i32, i32) {
    %c0_i32 = arith.constant 0 : i32
    %c0_i32_0 = arith.constant 0 : i32
    %c0_i32_1 = arith.constant 0 : i32
    return %c0_i32, %c0_i32_0 : i32, i32
  }
  func.func @transform_6(%arg0: i32) -> (i32, i32) {
    %c0_i32 = arith.constant 0 : i32
    %c0_i32_0 = arith.constant 0 : i32
    %c0_i32_1 = arith.constant 0 : i32
    return %c0_i32, %c0_i32_0 : i32, i32
  }
  func.func @transform_7(%arg0: i32) -> (i32, i32) {
    %c0_i32 = arith.constant 0 : i32
    %c0_i32_0 = arith.constant 0 : i32
    %c0_i32_1 = arith.constant 0 : i32
    return %c0_i32, %c0_i32_0 : i32, i32
  }
  func.func @transform_8(%arg0: i32) -> (i32, i32) {
    %c0_i32 = arith.constant 0 : i32
    %c0_i32_0 = arith.constant 0 : i32
    %c0_i32_1 = arith.constant 0 : i32
    return %c0_i32, %c0_i32_0 : i32, i32
  }
  func.func @transform_9(%arg0: i32) -> (i32, i32) {
    %c0_i32 = arith.constant 0 : i32
    %c0_i32_0 = arith.constant 0 : i32
    return %arg0, %c0_i32 : i32, i32
  }
}

</mosaic_0001>

<llo_original>
// kernel: tile.18
$region0: #{tile.18}
  #allocation0 [shape = 's32[1]{0}', space=sflag, size = 0x4, scoped, tag = 'scoped memory for tile.18']
  %s0 = inlined_call_operand.vmem [shape: f32[10], index: 0, kind: input, shape index: {}]
  %s1 = inlined_call_operand.vmem [shape: f32[12,10], index: 1, kind: output, shape index: {}]
  // Predicated region
  $region2: #{tile.18} parent=0 // pred_check
    _
  $region3: #{tile.18} parent=0 // pred_check_branch
    %3 = sbr.rel (0) target = $region5
  $region4: #{tile.18} parent=0 // pred_region
    _
  $region5: #{tile.18} parent=0 // pred_fallthru
    _
  %v4 = vld [vmem:[%s0] ss:$0 sm:$0xff]
  %5 = vst [vmem:[%s1] sm:$0xff] %v4
  %s6 = scalar_lea.vmem %s1, 8
  %7 = vst [vmem:[%s6] sm:$0xff] %v4

// kernel: tile.19
$region0: #{tile.19}
  %s0 = inlined_call_operand.vmem [shape: f32[12,10], index: 0, kind: input, shape index: {}]
  %s1 = inlined_call_operand.vmem [shape: f32[120], index: 1, kind: output, shape index: {}]
  $region1: #{tile.19} parent=0
    #allocation0 [shape = 'u8[4096]{0}', space=vmem, size = 0x1000, scoped, tag = 'scoped mem for output reshape']
    %v2 = vld [vmem:[%s0] sm:$0x1]
    %vm3 = vcmask 80896
    %4 = vst.msk [vmem:[#allocation0] sm:$0x1] %vm3, %v2
    %s5 = scalar_lea.vmem %s0, 11
    %v6 = vld [vmem:[%s5] sm:$0x1]
    %7 = vrot.lane.b32.xlu0 %v6, 110
    %v8 = vpop.permute.xlu0 %7
    %vm9 = vcmask 982896
    %10 = vst.msk [vmem:[#allocation0] sm:$0x1] %vm9, %v8
    %s11 = scalar_lea.vmem %s0, 10
    %v12 = vld [vmem:[%s11] sm:$0x1]
    %13 = vrot.lane.b32.xlu0 %v12, 100
    %v14 = vpop.permute.xlu0 %13
    %vm15 = vcmask 900896
    %16 = vst.msk [vmem:[#allocation0] sm:$0x1] %vm15, %v14
    %s17 = scalar_lea.vmem %s0, 9
    %v18 = vld [vmem:[%s17] sm:$0x1]
    %19 = vrot.lane.b32.xlu0 %v18, 90
    %v20 = vpop.permute.xlu0 %19
    %vm21 = vcmask 818896
    %22 = vst.msk [vmem:[#allocation0] sm:$0x1] %vm21, %v20
    %s23 = scalar_lea.vmem %s0, 8
    %v24 = vld [vmem:[%s23] sm:$0x1]
    %25 = vrot.lane.b32.xlu0 %v24, 80
    %v26 = vpop.permute.xlu0 %25
    %vm27 = vcmask 736896
    %28 = vst.msk [vmem:[#allocation0] sm:$0x1] %vm27, %v26
    %s29 = scalar_lea.vmem %s0, 7
    %v30 = vld [vmem:[%s29] sm:$0x1]
    %31 = vrot.lane.b32.xlu0 %v30, 70
    %v32 = vpop.permute.xlu0 %31
    %vm33 = vcmask 654896
    %34 = vst.msk [vmem:[#allocation0] sm:$0x1] %vm33, %v32
    %s35 = scalar_lea.vmem %s0, 6
    %v36 = vld [vmem:[%s35] sm:$0x1]
    %37 = vrot.lane.b32.xlu0 %v36, 60
    %v38 = vpop.permute.xlu0 %37
    %vm39 = vcmask 572896
    %40 = vst.msk [vmem:[#allocation0] sm:$0x1] %vm39, %v38
    %s41 = scalar_lea.vmem %s0, 5
    %v42 = vld [vmem:[%s41] sm:$0x1]
    %43 = vrot.lane.b32.xlu0 %v42, 50
    %v44 = vpop.permute.xlu0 %43
    %vm45 = vcmask 490896
    %46 = vst.msk [vmem:[#allocation0] sm:$0x1] %vm45, %v44
    %s47 = scalar_lea.vmem %s0, 4
    %v48 = vld [vmem:[%s47] sm:$0x1]
    %49 = vrot.lane.b32.xlu0 %v48, 40
    %v50 = vpop.permute.xlu0 %49
    %vm51 = vcmask 408896
    %52 = vst.msk [vmem:[#allocation0] sm:$0x1] %vm51, %v50
    %s53 = scalar_lea.vmem %s0, 3
    %v54 = vld [vmem:[%s53] sm:$0x1]
    %55 = vrot.lane.b32.xlu0 %v54, 30
    %v56 = vpop.permute.xlu0 %55
    %vm57 = vcmask 326896
    %58 = vst.msk [vmem:[#allocation0] sm:$0x1] %vm57, %v56
    %s59 = scalar_lea.vmem %s0, 2
    %v60 = vld [vmem:[%s59] sm:$0x1]
    %61 = vrot.lane.b32.xlu0 %v60, 20
    %v62 = vpop.permute.xlu0 %61
    %vm63 = vcmask 244896
    %64 = vst.msk [vmem:[#allocation0] sm:$0x1] %vm63, %v62
    %s65 = scalar_lea.vmem %s0, 1
    %v66 = vld [vmem:[%s65] sm:$0x1]
    %67 = vrot.lane.b32.xlu0 %v66, 10
    %v68 = vpop.permute.xlu0 %67
    %vm69 = vcmask 162896
    %70 = vst.msk [vmem:[#allocation0] sm:$0x1] %vm69, %v68
    %s72 = ssub.s32 2, 1
    %v73 = vld [vmem:[#allocation0] sm:%s72]
    %s75 = ssub.s32 2, 1
    %76 = vst [vmem:[%s1] sm:%s75] %v73

// kernel: tile.28
$region0: #{tile.28}
  #allocation0 [shape = 's32[1]{0}', space=sflag, size = 0x4, scoped, tag = 'scoped memory for tile.28']
  %s0 = inlined_call_operand.vmem [shape: f32[20], index: 0, kind: input, shape index: {}]
  %s1 = inlined_call_operand.vmem [shape: f32[10,20], index: 1, kind: output, shape index: {}]
  // Predicated region
  $region2: #{tile.28} parent=0 // pred_check
    _
  $region3: #{tile.28} parent=0 // pred_check_branch
    %3 = sbr.rel (0) target = $region5
  $region4: #{tile.28} parent=0 // pred_region
    _
  $region5: #{tile.28} parent=0 // pred_fallthru
    _
  %v4 = vld [vmem:[%s0] ss:$0 sm:$0xff]
  %5 = vst [vmem:[%s1] sm:$0xff] %v4
  %s6 = scalar_lea.vmem %s1, 8
  %7 = vst [vmem:[%s6] sm:$0xff] %v4

// kernel: tile.29
$region0: #{tile.29}
  %s0 = inlined_call_operand.vmem [shape: f32[10,20], index: 0, kind: input, shape index: {}]
  %s1 = inlined_call_operand.vmem [shape: f32[200], index: 1, kind: output, shape index: {}]
  $region1: #{tile.29} parent=0
    #allocation0 [shape = 'u8[4096]{0}', space=vmem, size = 0x1000, scoped, tag = 'scoped mem for output reshape']
    %v2 = vld [vmem:[%s0] sm:$0x1]
    %vm3 = vcmask 162816
    %4 = vst.msk [vmem:[#allocation0] sm:$0x1] %vm3, %v2
    %s5 = scalar_lea.vmem %s0, 6
    %v6 = vld [vmem:[%s5] sm:$0x1]
    %s7 = scalar_lea.vmem %s0, 6
    %v8 = vld [vmem:[%s7] sm:$0x1]
    %vm9 = vcmask 64512
    %v10 = vsel %vm9, %v8, %v6
    %11 = vrot.lane.b32.xlu0 %v10, 120
    %v12 = vpop.permute.xlu0 %11
    %vm13 = vcmask 97280
    %s14 = scalar_lea.vmem [#allocation0], 1
    %15 = vst.msk [vmem:[%s14] sm:$0x1] %vm13, %v12
    %vm16 = vcmask 1048512
    %17 = vst.msk [vmem:[#allocation0] sm:$0x1] %vm16, %v12
    %s18 = scalar_lea.vmem %s0, 5
    %v19 = vld [vmem:[%s18] sm:$0x1]
    %20 = vrot.lane.b32.xlu0 %v19, 100
    %v21 = vpop.permute.xlu0 %20
    %vm22 = vcmask 982816
    %23 = vst.msk [vmem:[#allocation0] sm:$0x1] %vm22, %v21
    %s24 = scalar_lea.vmem %s0, 4
    %v25 = vld [vmem:[%s24] sm:$0x1]
    %26 = vrot.lane.b32.xlu0 %v25, 80
    %v27 = vpop.permute.xlu0 %26
    %vm28 = vcmask 818816
    %29 = vst.msk [vmem:[#allocation0] sm:$0x1] %vm28, %v27
    %s30 = scalar_lea.vmem %s0, 3
    %v31 = vld [vmem:[%s30] sm:$0x1]
    %32 = vrot.lane.b32.xlu0 %v31, 60
    %v33 = vpop.permute.xlu0 %32
    %vm34 = vcmask 654816
    %35 = vst.msk [vmem:[#allocation0] sm:$0x1] %vm34, %v33
    %s36 = scalar_lea.vmem %s0, 9
    %v37 = vld [vmem:[%s36] sm:$0x1]
    %38 = vrot.lane.b32.xlu0 %v37, 52
    %v39 = vpop.permute.xlu0 %38
    %vm40 = vcmask 589216
    %s41 = scalar_lea.vmem [#allocation0], 1
    %42 = vst.msk [vmem:[%s41] sm:$0x1] %vm40, %v39
    %s43 = scalar_lea.vmem %s0, 2
    %v44 = vld [vmem:[%s43] sm:$0x1]
    %45 = vrot.lane.b32.xlu0 %v44, 40
    %v46 = vpop.permute.xlu0 %45
    %vm47 = vcmask 490816
    %48 = vst.msk [vmem:[#allocation0] sm:$0x1] %vm47, %v46
    %s49 = scalar_lea.vmem %s0, 8
    %v50 = vld [vmem:[%s49] sm:$0x1]
    %51 = vrot.lane.b32.xlu0 %v50, 32
    %v52 = vpop.permute.xlu0 %51
    %vm53 = vcmask 425216
    %s54 = scalar_lea.vmem [#allocation0], 1
    %55 = vst.msk [vmem:[%s54] sm:$0x1] %vm53, %v52
    %s56 = scalar_lea.vmem %s0, 1
    %v57 = vld [vmem:[%s56] sm:$0x1]
    %58 = vrot.lane.b32.xlu0 %v57, 20
    %v59 = vpop.permute.xlu0 %58
    %vm60 = vcmask 326816
    %61 = vst.msk [vmem:[#allocation0] sm:$0x1] %vm60, %v59
    %s62 = scalar_lea.vmem %s0, 7
    %v63 = vld [vmem:[%s62] sm:$0x1]
    %64 = vrot.lane.b32.xlu0 %v63, 12
    %v65 = vpop.permute.xlu0 %64
    %vm66 = vcmask 261216
    %s67 = scalar_lea.vmem [#allocation0], 1
    %68 = vst.msk [vmem:[%s67] sm:$0x1] %vm66, %v65
    %s70 = ssub.s32 4, 1
    %v71 = vld [vmem:[#allocation0] sm:%s70]
    %s73 = ssub.s32 4, 1
    %74 = vst [vmem:[%s1] sm:%s73] %v71

// kernel: digit_forward.1
$region0: #{digit_forward.1}
  #allocation0 [shape = 'u32[]', space=smem, size = 0x4, offset = 0x4, fixed_abs, tag = 'smem constant byte address 0x4 - core index']
  #allocation1 [shape = 'u32[72,128]{1,0:T(1,128)}', space=vmem, size = 0x9000, scoped, tag = 'internal scratch']
  #allocation2 [shape = 'bf16[2,12,8,256]{3,2,1,0:T(8,128)(2,1)}', space=vmem, size = 0x18000, scoped, tag = 'scratch operand']
  #allocation3 [shape = 'bf16[12,8,128]{2,1,0:T(8,128)(2,1)}', space=vmem, size = 0x6000, scoped, tag = 'scratch operand']
  #allocation4 [shape = 'bf16[8,2560]{1,0:T(8,128)(2,1)}', space=vmem, size = 0xa000, scoped, tag = 'scratch operand']
  %s0 = inlined_call_operand.vmem [shape: bf16[2,12,16,140], index: 0, kind: input, shape index: {}]
  %s1 = inlined_call_operand.vmem [shape: bf16[140,256], index: 1, kind: input, shape index: {}]
  %s2 = inlined_call_operand.vmem [shape: f32[1,256], index: 2, kind: input, shape index: {}]
  %s3 = inlined_call_operand.vmem [shape: bf16[384,256], index: 3, kind: input, shape index: {}]
  %s4 = inlined_call_operand.vmem [shape: f32[1,256], index: 4, kind: input, shape index: {}]
  %s5 = inlined_call_operand.vmem [shape: bf16[2560,512], index: 5, kind: input, shape index: {}]
  %s6 = inlined_call_operand.vmem [shape: f32[1,512], index: 6, kind: input, shape index: {}]
  %s7 = inlined_call_operand.vmem [shape: bf16[512,128], index: 7, kind: input, shape index: {}]
  %s8 = inlined_call_operand.vmem [shape: f32[1,128], index: 8, kind: input, shape index: {}]
  %s9 = inlined_call_operand.vmem [shape: f32[16,128], index: 9, kind: output, shape index: {}]
  %s10 = sld [smem:[#allocation0]]
  $region107: #{digit_forward.1} parent=0
    _
  %s12 = ssub.s32 1, %s10
  %s13 = scalar_select 0, %s12, %s10
  $region1: #{digit_forward.1} parent=0
    #allocation5 [shape = 'u8[196608]{0}', space=vmem, size = 0x30000, scoped, tag = 'input window, operand 0']
    loop: start=0, step=1, limit=4
    $region2: #{digit_forward.1} parent=1 // loop_pre_header
      _
    $region3: #{digit_forward.1} parent=1 // loop_header
      %s15 = sphi 0, %s19
      %p16 = scmp.ge.s32.totalorder %s15, 4
      %s25 = sphi 0, %s27
      %s28 = sphi 0, %s25
      %s29 = sphi 0, %s28
      %s45 = sphi 0, %s29
      %s49 = sphi 0, %s49
      %s51 = sphi 0, %s49
      %s52 = sphi 0, %s51
      %s66 = sphi 0, %s52
      %s70 = sphi 0, %s70
      %s72 = sphi 0, %s70
      %s73 = sphi 0, %s72
      %s87 = sphi 0, %s73
      %s91 = sphi 0, %s91
      %s93 = sphi 0, %s91
      %s94 = sphi 0, %s93
      %s108 = sphi 0, %s94
      %s112 = sphi 0, %s112
      %s114 = sphi 0, %s112
      %s115 = sphi 0, %s114
      %s129 = sphi 0, %s115
      %s133 = sphi 0, %s133
      %s135 = sphi 0, %s133
      %s136 = sphi 0, %s135
      %s150 = sphi 0, %s136
      %s154 = sphi 0, %s154
      %s156 = sphi 0, %s154
      %s157 = sphi 0, %s156
      %s171 = sphi 0, %s157
      %s175 = sphi 0, %s175
      %s177 = sphi 0, %s175
      %s178 = sphi 0, %s177
      %s192 = sphi 0, %s178
      %s196 = sphi 0, %s196
      %s198 = sphi 0, %s196
      %s199 = sphi 0, %s198
      %s213 = sphi 0, %s199
      %s219 = sphi 0, %s221
      %s222 = sphi 0, %s219
      %s223 = sphi 0, %s222
      %s239 = sphi 0, %s223
    $region4: #{digit_forward.1} parent=1 // loop_header_branch
      %18 = sbr.rel (%p16) target = $region8
    $region5: #{digit_forward.1} parent=1 // loop_body
      %s20 = ssub.s32 %s15, 1
      %s21 = ssub.s32 %s15, 2
      %s22 = sadd.s32 %s15, 1
      %s23 = ssub.s32 %s15, %s22
      %p24 = scmp.eq.s32.totalorder %s23, 0
      %s26 = sadd.s32 %s25, 1
      %s27 = scalar_select %p24, %s25, %s26
      %p30 = pneg %p24
      %p31 = scmp.eq.s32.totalorder %s15, 1
      %p32 = por %p30, %p31
      %p33 = scmp.ne.s32.totalorder %s25, %s28
      %p34 = scmp.eq.s32.totalorder %s15, 0
      %p35 = por %p33, %p34
      %p36 = scmp.ne.s32.totalorder %s25, %s28
      %p37 = scmp.eq.s32.totalorder %s20, 1
      %p38 = por %p36, %p37
      %p39 = scmp.ne.s32.totalorder %s28, %s29
      %p40 = scmp.eq.s32.totalorder %s20, 0
      %p41 = por %p39, %p40
      %p42 = scmp.ne.s32.totalorder %s28, %s29
      %p43 = scmp.eq.s32.totalorder %s21, 1
      %p44 = por %p42, %p43
      %p46 = scmp.ne.s32.totalorder %s29, %s45
      %p47 = scmp.eq.s32.totalorder %s21, 0
      %p48 = por %p46, %p47
      %s50 = sadd.s32 %s49, 1
      %p53 = scmp.eq.s32.totalorder %s15, 1
      %p54 = scmp.ne.s32.totalorder %s49, %s51
      %p55 = scmp.eq.s32.totalorder %s15, 0
      %p56 = por %p54, %p55
      %p57 = scmp.ne.s32.totalorder %s49, %s51
      %p58 = scmp.eq.s32.totalorder %s20, 1
      %p59 = por %p57, %p58
      %p60 = scmp.ne.s32.totalorder %s51, %s52
      %p61 = scmp.eq.s32.totalorder %s20, 0
      %p62 = por %p60, %p61
      %p63 = scmp.ne.s32.totalorder %s51, %s52
      %p64 = scmp.eq.s32.totalorder %s21, 1
      %p65 = por %p63, %p64
      %p67 = scmp.ne.s32.totalorder %s52, %s66
      %p68 = scmp.eq.s32.totalorder %s21, 0
      %p69 = por %p67, %p68
      %s71 = sadd.s32 %s70, 1
      %p74 = scmp.eq.s32.totalorder %s15, 1
      %p75 = scmp.ne.s32.totalorder %s70, %s72
      %p76 = scmp.eq.s32.totalorder %s15, 0
      %p77 = por %p75, %p76
      %p78 = scmp.ne.s32.totalorder %s70, %s72
      %p79 = scmp.eq.s32.totalorder %s20, 1
      %p80 = por %p78, %p79
      %p81 = scmp.ne.s32.totalorder %s72, %s73
      %p82 = scmp.eq.s32.totalorder %s20, 0
      %p83 = por %p81, %p82
      %p84 = scmp.ne.s32.totalorder %s72, %s73
      %p85 = scmp.eq.s32.totalorder %s21, 1
      %p86 = por %p84, %p85
      %p88 = scmp.ne.s32.totalorder %s73, %s87
      %p89 = scmp.eq.s32.totalorder %s21, 0
      %p90 = por %p88, %p89
      %s92 = sadd.s32 %s91, 1
      %p95 = scmp.eq.s32.totalorder %s15, 1
      %p96 = scmp.ne.s32.totalorder %s91, %s93
      %p97 = scmp.eq.s32.totalorder %s15, 0
      %p98 = por %p96, %p97
      %p99 = scmp.ne.s32.totalorder %s91, %s93
      %p100 = scmp.eq.s32.totalorder %s20, 1
      %p101 = por %p99, %p100
      %p102 = scmp.ne.s32.totalorder %s93, %s94
      %p103 = scmp.eq.s32.totalorder %s20, 0
      %p104 = por %p102, %p103
      %p105 = scmp.ne.s32.totalorder %s93, %s94
      %p106 = scmp.eq.s32.totalorder %s21, 1
      %p107 = por %p105, %p106
      %p109 = scmp.ne.s32.totalorder %s94, %s108
      %p110 = scmp.eq.s32.totalorder %s21, 0
      %p111 = por %p109, %p110
      %s113 = sadd.s32 %s112, 1
      %p116 = scmp.eq.s32.totalorder %s15, 1
      %p117 = scmp.ne.s32.totalorder %s112, %s114
      %p118 = scmp.eq.s32.totalorder %s15, 0
      %p119 = por %p117, %p118
      %p120 = scmp.ne.s32.totalorder %s112, %s114
      %p121 = scmp.eq.s32.totalorder %s20, 1
      %p122 = por %p120, %p121
      %p123 = scmp.ne.s32.totalorder %s114, %s115
      %p124 = scmp.eq.s32.totalorder %s20, 0
      %p125 = por %p123, %p124
      %p126 = scmp.ne.s32.totalorder %s114, %s115
      %p127 = scmp.eq.s32.totalorder %s21, 1
      %p128 = por %p126, %p127
      %p130 = scmp.ne.s32.totalorder %s115, %s129
      %p131 = scmp.eq.s32.totalorder %s21, 0
      %p132 = por %p130, %p131
      %s134 = sadd.s32 %s133, 1
      %p137 = scmp.eq.s32.totalorder %s15, 1
      %p138 = scmp.ne.s32.totalorder %s133, %s135
      %p139 = scmp.eq.s32.totalorder %s15, 0
      %p140 = por %p138, %p139
      %p141 = scmp.ne.s32.totalorder %s133, %s135
      %p142 = scmp.eq.s32.totalorder %s20, 1
      %p143 = por %p141, %p142
      %p144 = scmp.ne.s32.totalorder %s135, %s136
      %p145 = scmp.eq.s32.totalorder %s20, 0
      %p146 = por %p144, %p145
      %p147 = scmp.ne.s32.totalorder %s135, %s136
      %p148 = scmp.eq.s32.totalorder %s21, 1
      %p149 = por %p147, %p148
      %p151 = scmp.ne.s32.totalorder %s136, %s150
      %p152 = scmp.eq.s32.totalorder %s21, 0
      %p153 = por %p151, %p152
      %s155 = sadd.s32 %s154, 1
      %p158 = scmp.eq.s32.totalorder %s15, 1
      %p159 = scmp.ne.s32.totalorder %s154, %s156
      %p160 = scmp.eq.s32.totalorder %s15, 0
      %p161 = por %p159, %p160
      %p162 = scmp.ne.s32.totalorder %s154, %s156
      %p163 = scmp.eq.s32.totalorder %s20, 1
      %p164 = por %p162, %p163
      %p165 = scmp.ne.s32.totalorder %s156, %s157
      %p166 = scmp.eq.s32.totalorder %s20, 0
      %p167 = por %p165, %p166
      %p168 = scmp.ne.s32.totalorder %s156, %s157
      %p169 = scmp.eq.s32.totalorder %s21, 1
      %p170 = por %p168, %p169
      %p172 = scmp.ne.s32.totalorder %s157, %s171
      %p173 = scmp.eq.s32.totalorder %s21, 0
      %p174 = por %p172, %p173
      %s176 = sadd.s32 %s175, 1
      %p179 = scmp.eq.s32.totalorder %s15, 1
      %p180 = scmp.ne.s32.totalorder %s175, %s177
      %p181 = scmp.eq.s32.totalorder %s15, 0
      %p182 = por %p180, %p181
      %p183 = scmp.ne.s32.totalorder %s175, %s177
      %p184 = scmp.eq.s32.totalorder %s20, 1
      %p185 = por %p183, %p184
      %p186 = scmp.ne.s32.totalorder %s177, %s178
      %p187 = scmp.eq.s32.totalorder %s20, 0
      %p188 = por %p186, %p187
      %p189 = scmp.ne.s32.totalorder %s177, %s178
      %p190 = scmp.eq.s32.totalorder %s21, 1
      %p191 = por %p189, %p190
      %p193 = scmp.ne.s32.totalorder %s178, %s192
      %p194 = scmp.eq.s32.totalorder %s21, 0
      %p195 = por %p193, %p194
      %s197 = sadd.s32 %s196, 1
      %p200 = scmp.eq.s32.totalorder %s15, 1
      %p201 = scmp.ne.s32.totalorder %s196, %s198
      %p202 = scmp.eq.s32.totalorder %s15, 0
      %p203 = por %p201, %p202
      %p204 = scmp.ne.s32.totalorder %s196, %s198
      %p205 = scmp.eq.s32.totalorder %s20, 1
      %p206 = por %p204, %p205
      %p207 = scmp.ne.s32.totalorder %s198, %s199
      %p208 = scmp.eq.s32.totalorder %s20, 0
      %p209 = por %p207, %p208
      %p210 = scmp.ne.s32.totalorder %s198, %s199
      %p211 = scmp.eq.s32.totalorder %s21, 1
      %p212 = por %p210, %p211
      %p214 = scmp.ne.s32.totalorder %s199, %s213
      %p215 = scmp.eq.s32.totalorder %s21, 0
      %p216 = por %p214, %p215
      %s217 = ssub.s32 %s15, %s22
      %p218 = scmp.eq.s32.totalorder %s217, 0
      %s220 = sadd.s32 %s219, 1
      %s221 = scalar_select %p218, %s219, %s220
      %p224 = pneg %p218
      %p225 = scmp.eq.s32.totalorder %s15, 1
      %p226 = por %p224, %p225
      %p227 = scmp.ne.s32.totalorder %s219, %s222
      %p228 = scmp.eq.s32.totalorder %s15, 0
      %p229 = por %p227, %p228
      %p230 = scmp.ne.s32.totalorder %s219, %s222
      %p231 = scmp.eq.s32.totalorder %s20, 1
      %p232 = por %p230, %p231
      %p233 = scmp.ne.s32.totalorder %s222, %s223
      %p234 = scmp.eq.s32.totalorder %s20, 0
      %p235 = por %p233, %p234
      %p236 = scmp.ne.s32.totalorder %s222, %s223
      %p237 = scmp.eq.s32.totalorder %s21, 1
      %p238 = por %p236, %p237
      %p240 = scmp.ne.s32.totalorder %s223, %s239
      %p241 = scmp.eq.s32.totalorder %s21, 0
      %p242 = por %p240, %p241
      %p243 = scmp.le.s32.totalorder 1, %s15
      %p244 = scmp.lt.s32.totalorder %s15, 3
      %p245 = pnand %p243, %p244
      %p246 = pneg %p245
      // Predicated region
      $region9: #{digit_forward.1} parent=5 // pred_check
        _
      $region10: #{digit_forward.1} parent=5 // pred_check_branch
        %248 = sbr.rel (%p245) target = $region12
      $region11: #{digit_forward.1} parent=5 // pred_region
        %s249 = ssub.s32 %s15, 1
        // Predicated region
        $region13: #{digit_forward.1} parent=11 // pred_check
          %p250 = pneg %p62
        $region14: #{digit_forward.1} parent=11 // pred_check_branch
          %252 = sbr.rel (%p250) target = $region16
        $region15: #{digit_forward.1} parent=11 // pred_region
          _
        $region16: #{digit_forward.1} parent=11 // pred_fallthru
          _
        // Predicated region
        $region17: #{digit_forward.1} parent=11 // pred_check
          %p253 = pneg %p83
        $region18: #{digit_forward.1} parent=11 // pred_check_branch
          %255 = sbr.rel (%p253) target = $region20
        $region19: #{digit_forward.1} parent=11 // pred_region
          _
        $region20: #{digit_forward.1} parent=11 // pred_fallthru
          _
        // Predicated region
        $region21: #{digit_forward.1} parent=11 // pred_check
          %p256 = pneg %p104
        $region22: #{digit_forward.1} parent=11 // pred_check_branch
          %258 = sbr.rel (%p256) target = $region24
        $region23: #{digit_forward.1} parent=11 // pred_region
          _
        $region24: #{digit_forward.1} parent=11 // pred_fallthru
          _
        // Predicated region
        $region25: #{digit_forward.1} parent=11 // pred_check
          %p259 = pneg %p125
        $region26: #{digit_forward.1} parent=11 // pred_check_branch
          %261 = sbr.rel (%p259) target = $region28
        $region27: #{digit_forward.1} parent=11 // pred_region
          _
        $region28: #{digit_forward.1} parent=11 // pred_fallthru
          _
        // Predicated region
        $region29: #{digit_forward.1} parent=11 // pred_check
          %p262 = pneg %p146
        $region30: #{digit_forward.1} parent=11 // pred_check_branch
          %264 = sbr.rel (%p262) target = $region32
        $region31: #{digit_forward.1} parent=11 // pred_region
          _
        $region32: #{digit_forward.1} parent=11 // pred_fallthru
          _
        // Predicated region
        $region33: #{digit_forward.1} parent=11 // pred_check
          %p265 = pneg %p167
        $region34: #{digit_forward.1} parent=11 // pred_check_branch
          %267 = sbr.rel (%p265) target = $region36
        $region35: #{digit_forward.1} parent=11 // pred_region
          _
        $region36: #{digit_forward.1} parent=11 // pred_fallthru
          _
        // Predicated region
        $region37: #{digit_forward.1} parent=11 // pred_check
          %p268 = pneg %p188
        $region38: #{digit_forward.1} parent=11 // pred_check_branch
          %270 = sbr.rel (%p268) target = $region40
        $region39: #{digit_forward.1} parent=11 // pred_region
          _
        $region40: #{digit_forward.1} parent=11 // pred_fallthru
          _
        // Predicated region
        $region41: #{digit_forward.1} parent=11 // pred_check
          %p271 = pneg %p209
        $region42: #{digit_forward.1} parent=11 // pred_check_branch
          %273 = sbr.rel (%p271) target = $region44
        $region43: #{digit_forward.1} parent=11 // pred_region
          _
        $region44: #{digit_forward.1} parent=11 // pred_fallthru
          _
      $region12: #{digit_forward.1} parent=5 // pred_fallthru
        _
      %p274 = scmp.lt.s32.totalorder %s15, 2
      // Predicated region
      $region45: #{digit_forward.1} parent=5 // pred_check
        %p275 = pneg %p274
      $region46: #{digit_forward.1} parent=5 // pred_check_branch
        %277 = sbr.rel (%p275) target = $region48
      $region47: #{digit_forward.1} parent=5 // pred_region
        // Predicated region
        $region49: #{digit_forward.1} parent=47 // pred_check
          %p278 = pneg %p35
        $region50: #{digit_forward.1} parent=47 // pred_check_branch
          %280 = sbr.rel (%p278) target = $region52
        $region51: #{digit_forward.1} parent=47 // pred_region
          %s281 = sand.u32 %s25, 1
          %s282 = sand.u32 %s25, 1
          %s283 = smul.addr %s282, 192
          %s284 = scalar_lea.vmem [#allocation5], %s283
          %s285 = smul.addr %s15, 2
          %s286 = smul.addr %s285, 4
          %s287 = scalar_lea.vmem %s0, %s286
          // Predicated region
          $region53: #{digit_forward.1} parent=51 // pred_check
            _
          $region54: #{digit_forward.1} parent=51 // pred_check_branch
            %289 = sbr.rel (0) target = $region56
          $region55: #{digit_forward.1} parent=51 // pred_region
            // Predicated region
            $region57: #{digit_forward.1} parent=55 // pred_check
              _
            $region58: #{digit_forward.1} parent=55 // pred_check_branch
              %291 = sbr.rel (0) target = $region60
            $region59: #{digit_forward.1} parent=55 // pred_region
              // Predicated region
              $region72: #{digit_forward.1} parent=59 // pred_check
                _
              $region73: #{digit_forward.1} parent=59 // pred_check_branch
                %353 = sbr.rel (0) target = $region75
              $region74: #{digit_forward.1} parent=59 // pred_region
                loop: start=0, step=1, limit=1
                $region76: #{digit_forward.1} parent=74 // loop_pre_header
                  _
                $region77: #{digit_forward.1} parent=74 // loop_header
                  %s355 = sphi 0, %s359
                  %p356 = scmp.ge.s32.totalorder %s355, 1
                  %s360 = sphi %s287, %s287
                  %s361 = sphi %s284, %s284
                $region78: #{digit_forward.1} parent=74 // loop_header_branch
                  %358 = sbr.rel (%p356) target = $region82
                $region79: #{digit_forward.1} parent=74 // loop_body
                  %v362 = vld [vmem:[%s360] sm:$0xff]
                  %363 = vst [vmem:[%s361] sm:$0xff] %v362
                  %v364 = vld [vmem:[%s360 + $0x10] sm:$0xff]
                  %365 = vst [vmem:[%s361 + $0x8] sm:$0xff] %v364
                  %v366 = vld [vmem:[%s360 + $0x20] sm:$0xff]
                  %367 = vst [vmem:[%s361 + $0x10] sm:$0xff] %v366
                  %v368 = vld [vmem:[%s360 + $0x30] sm:$0xff]
                  %369 = vst [vmem:[%s361 + $0x18] sm:$0xff] %v368
                  %v370 = vld [vmem:[%s360 + $0x40] sm:$0xff]
                  %371 = vst [vmem:[%s361 + $0x20] sm:$0xff] %v370
                  %v372 = vld [vmem:[%s360 + $0x50] sm:$0xff]
                  %373 = vst [vmem:[%s361 + $0x28] sm:$0xff] %v372
                  %v374 = vld [vmem:[%s360 + $0x60] sm:$0xff]
                  %375 = vst [vmem:[%s361 + $0x30] sm:$0xff] %v374
                  %v376 = vld [vmem:[%s360 + $0x70] sm:$0xff]
                  %377 = vst [vmem:[%s361 + $0x38] sm:$0xff] %v376
                  %v378 = vld [vmem:[%s360 + $0x80] sm:$0xff]
                  %379 = vst [vmem:[%s361 + $0x40] sm:$0xff] %v378
                  %v380 = vld [vmem:[%s360 + $0x90] sm:$0xff]
                  %381 = vst [vmem:[%s361 + $0x48] sm:$0xff] %v380
                  %v382 = vld [vmem:[%s360 + $0xa0] sm:$0xff]
                  %383 = vst [vmem:[%s361 + $0x50] sm:$0xff] %v382
                  %v384 = vld [vmem:[%s360 + $0xb0] sm:$0xff]
                  %385 = vst [vmem:[%s361 + $0x58] sm:$0xff] %v384
                  %v386 = vld [vmem:[%s360 + $0xc0] sm:$0xff]
                  %387 = vst [vmem:[%s361 + $0x60] sm:$0xff] %v386
                  %v388 = vld [vmem:[%s360 + $0xd0] sm:$0xff]
                  %389 = vst [vmem:[%s361 + $0x68] sm:$0xff] %v388
                  %v390 = vld [vmem:[%s360 + $0xe0] sm:$0xff]
                  %391 = vst [vmem:[%s361 + $0x70] sm:$0xff] %v390
                  %v392 = vld [vmem:[%s360 + $0xf0] sm:$0xff]
                  %393 = vst [vmem:[%s361 + $0x78] sm:$0xff] %v392
                  %v394 = vld [vmem:[%s360 + $0x100] sm:$0xff]
                  %395 = vst [vmem:[%s361 + $0x80] sm:$0xff] %v394
                  %v396 = vld [vmem:[%s360 + $0x110] sm:$0xff]
                  %397 = vst [vmem:[%s361 + $0x88] sm:$0xff] %v396
                  %v398 = vld [vmem:[%s360 + $0x120] sm:$0xff]
                  %399 = vst [vmem:[%s361 + $0x90] sm:$0xff] %v398
                  %v400 = vld [vmem:[%s360 + $0x130] sm:$0xff]
                  %401 = vst [vmem:[%s361 + $0x98] sm:$0xff] %v400
                  %v402 = vld [vmem:[%s360 + $0x140] sm:$0xff]
                  %403 = vst [vmem:[%s361 + $0xa0] sm:$0xff] %v402
                  %v404 = vld [vmem:[%s360 + $0x150] sm:$0xff]
                  %405 = vst [vmem:[%s361 + $0xa8] sm:$0xff] %v404
                  %v406 = vld [vmem:[%s360 + $0x160] sm:$0xff]
                  %407 = vst [vmem:[%s361 + $0xb0] sm:$0xff] %v406
                  %v408 = vld [vmem:[%s360 + $0x170] sm:$0xff]
                  %409 = vst [vmem:[%s361 + $0xb8] sm:$0xff] %v408
                $region80: #{digit_forward.1} parent=74 // loop_footer
                  %s359 = sadd.s32 1, %s355
                $region81: #{digit_forward.1} parent=74 // loop_footer_branch
                  %354 = sbr.rel target = $region77
                $region82: #{digit_forward.1} parent=74 // loop_exit
                  _
              $region75: #{digit_forward.1} parent=59 // pred_fallthru
                _
              // Predicated region
              $region83: #{digit_forward.1} parent=59 // pred_check
                _
              $region84: #{digit_forward.1} parent=59 // pred_check_branch
                %411 = sbr.rel target = $region86
              $region85: #{digit_forward.1} parent=59 // pred_region
                _
              $region86: #{digit_forward.1} parent=59 // pred_fallthru
                _
            $region60: #{digit_forward.1} parent=55 // pred_fallthru
              _
            // Predicated region
            $region61: #{digit_forward.1} parent=55 // pred_check
              _
            $region62: #{digit_forward.1} parent=55 // pred_check_branch
              %293 = sbr.rel target = $region64
            $region63: #{digit_forward.1} parent=55 // pred_region
              %s295 = ssub.s32 256, 1
              loop: start=0, step=1, limit=1
              $region65: #{digit_forward.1} parent=63 // loop_pre_header
                _
              $region66: #{digit_forward.1} parent=63 // loop_header
                %s297 = sphi 0, %s301
                %p298 = scmp.ge.s32.totalorder %s297, 1
                %s302 = sphi %s287, %s287
                %s303 = sphi %s284, %s284
              $region67: #{digit_forward.1} parent=63 // loop_header_branch
                %300 = sbr.rel (%p298) target = $region71
              $region68: #{digit_forward.1} parent=63 // loop_body
                %v304 = vld [vmem:[%s302] sm:%s295]
                %305 = vst [vmem:[%s303] sm:%s295] %v304
                %v306 = vld [vmem:[%s302 + $0x10] sm:%s295]
                %307 = vst [vmem:[%s303 + $0x8] sm:%s295] %v306
                %v308 = vld [vmem:[%s302 + $0x20] sm:%s295]
                %309 = vst [vmem:[%s303 + $0x10] sm:%s295] %v308
                %v310 = vld [vmem:[%s302 + $0x30] sm:%s295]
                %311 = vst [vmem:[%s303 + $0x18] sm:%s295] %v310
                %v312 = vld [vmem:[%s302 + $0x40] sm:%s295]
                %313 = vst [vmem:[%s303 + $0x20] sm:%s295] %v312
                %v314 = vld [vmem:[%s302 + $0x50] sm:%s295]
                %315 = vst [vmem:[%s303 + $0x28] sm:%s295] %v314
                %v316 = vld [vmem:[%s302 + $0x60] sm:%s295]
                %317 = vst [vmem:[%s303 + $0x30] sm:%s295] %v316
                %v318 = vld [vmem:[%s302 + $0x70] sm:%s295]
                %319 = vst [vmem:[%s303 + $0x38] sm:%s295] %v318
                %v320 = vld [vmem:[%s302 + $0x80] sm:%s295]
                %321 = vst [vmem:[%s303 + $0x40] sm:%s295] %v320
                %v322 = vld [vmem:[%s302 + $0x90] sm:%s295]
                %323 = vst [vmem:[%s303 + $0x48] sm:%s295] %v322
                %v324 = vld [vmem:[%s302 + $0xa0] sm:%s295]
                %325 = vst [vmem:[%s303 + $0x50] sm:%s295] %v324
                %v326 = vld [vmem:[%s302 + $0xb0] sm:%s295]
                %327 = vst [vmem:[%s303 + $0x58] sm:%s295] %v326
                %v328 = vld [vmem:[%s302 + $0xc0] sm:%s295]
                %329 = vst [vmem:[%s303 + $0x60] sm:%s295] %v328
                %v330 = vld [vmem:[%s302 + $0xd0] sm:%s295]
                %331 = vst [vmem:[%s303 + $0x68] sm:%s295] %v330
                %v332 = vld [vmem:[%s302 + $0xe0] sm:%s295]
                %333 = vst [vmem:[%s303 + $0x70] sm:%s295] %v332
                %v334 = vld [vmem:[%s302 + $0xf0] sm:%s295]
                %335 = vst [vmem:[%s303 + $0x78] sm:%s295] %v334
                %v336 = vld [vmem:[%s302 + $0x100] sm:%s295]
                %337 = vst [vmem:[%s303 + $0x80] sm:%s295] %v336
                %v338 = vld [vmem:[%s302 + $0x110] sm:%s295]
                %339 = vst [vmem:[%s303 + $0x88] sm:%s295] %v338
                %v340 = vld [vmem:[%s302 + $0x120] sm:%s295]
                %341 = vst [vmem:[%s303 + $0x90] sm:%s295] %v340
                %v342 = vld [vmem:[%s302 + $0x130] sm:%s295]
                %343 = vst [vmem:[%s303 + $0x98] sm:%s295] %v342
                %v344 = vld [vmem:[%s302 + $0x140] sm:%s295]
                %345 = vst [vmem:[%s303 + $0xa0] sm:%s295] %v344
                %v346 = vld [vmem:[%s302 + $0x150] sm:%s295]
                %347 = vst [vmem:[%s303 + $0xa8] sm:%s295] %v346
                %v348 = vld [vmem:[%s302 + $0x160] sm:%s295]
                %349 = vst [vmem:[%s303 + $0xb0] sm:%s295] %v348
                %v350 = vld [vmem:[%s302 + $0x170] sm:%s295]
                %351 = vst [vmem:[%s303 + $0xb8] sm:%s295] %v350
              $region69: #{digit_forward.1} parent=63 // loop_footer
                %s301 = sadd.s32 1, %s297
              $region70: #{digit_forward.1} parent=63 // loop_footer_branch
                %296 = sbr.rel target = $region66
              $region71: #{digit_forward.1} parent=63 // loop_exit
                _
            $region64: #{digit_forward.1} parent=55 // pred_fallthru
              _
          $region56: #{digit_forward.1} parent=51 // pred_fallthru
            _
          %412 = vnop
        $region52: #{digit_forward.1} parent=47 // pred_fallthru
          _
      $region48: #{digit_forward.1} parent=5 // pred_fallthru
        _
      %p413 = scmp.le.s32.totalorder 1, %s15
      %p414 = scmp.lt.s32.totalorder %s15, 3
      %p415 = pnand %p413, %p414
      %p416 = pneg %p415
      // Predicated region
      $region87: #{digit_forward.1} parent=5 // pred_check
        _
      $region88: #{digit_forward.1} parent=5 // pred_check_branch
        %418 = sbr.rel (%p415) target = $region90
      $region89: #{digit_forward.1} parent=5 // pred_region
        %s419 = ssub.s32 %s15, 1
        %s420 = sand.u32 %s28, 1
        %s421 = sand.u32 %s28, 1
        %s422 = smul.addr %s421, 192
        %s423 = scalar_lea.vmem [#allocation5], %s422
        // Predicated region
        $region91: #{digit_forward.1} parent=89 // pred_check
          %p424 = pneg %p41
        $region92: #{digit_forward.1} parent=89 // pred_check_branch
          %426 = sbr.rel (%p424) target = $region94
        $region93: #{digit_forward.1} parent=89 // pred_region
          _
        $region94: #{digit_forward.1} parent=89 // pred_fallthru
          _
        %s427 = sand.u32 %s28, 1
        %s428 = sand.u32 %s28, 1
        %s429 = smul.addr %s428, 192
        %s430 = scalar_lea.vmem [#allocation5], %s429
        %p431 = pneg %p41
        %p432 = pneg %p38
        %p433 = pneg %p62
        %p434 = pneg %p59
        %p435 = pneg %p83
        %p436 = pneg %p80
        %p437 = pneg %p104
        %p438 = pneg %p101
        %p439 = pneg %p125
        %p440 = pneg %p122
        %p441 = pneg %p146
        %p442 = pneg %p143
        %p443 = pneg %p167
        %p444 = pneg %p164
        %p445 = pneg %p188
        %p446 = pneg %p185
        %p447 = pneg %p209
        %p448 = pneg %p206
        %p449 = pneg %p235
        %p450 = pneg %p232
        %p451 = scmp.lt.s32.totalorder %s20, 1
        %s452 = scalar_select %p451, %s20, 1
        %s453 = smul.addr %s452, 8
        %s454 = scalar_lea.vmem %s9, %s453
        %p455 = scmp.lt.s32.totalorder %s20, 1
        %s456 = scalar_select %p455, %s20, 1
        %s457 = smul.addr %s456, 8
        %s458 = scalar_lea.vmem %s9, %s457
        %v460 = vld [vmem:[%s423] sm:$0xff]
        %v461 = vld [vmem:[%s423 + $0x8] sm:$0xff]
        %v462 = vld [vmem:[%s423 + $0x10] sm:$0xff]
        %v463 = vld [vmem:[%s423 + $0x18] sm:$0xff]
        %v464 = vld [vmem:[%s423 + $0x20] sm:$0xff]
        %v465 = vld [vmem:[%s423 + $0x28] sm:$0xff]
        %v466 = vld [vmem:[%s423 + $0x30] sm:$0xff]
        %v467 = vld [vmem:[%s423 + $0x38] sm:$0xff]
        %v468 = vld [vmem:[%s423 + $0x40] sm:$0xff]
        %v469 = vld [vmem:[%s423 + $0x48] sm:$0xff]
        %v470 = vld [vmem:[%s423 + $0x50] sm:$0xff]
        %v471 = vld [vmem:[%s423 + $0x58] sm:$0xff]
        %v472 = vld [vmem:[%s1] sm:$0xff]
        %v473 = vld [vmem:[%s1 + $0x8] sm:$0xff]
        %v474 = vld [vmem:[%s1 + $0x10] sm:$0xff]
        %v475 = vld [vmem:[%s1 + $0x18] sm:$0xff]
        %v476 = vld [vmem:[%s1 + $0x20] sm:$0xff]
        %v477 = vld [vmem:[%s1 + $0x28] sm:$0xff]
        %v478 = vld [vmem:[%s1 + $0x30] sm:$0xff]
        %v479 = vld [vmem:[%s1 + $0x38] sm:$0xff]
        %v480 = vld [vmem:[%s1 + $0x40] sm:$0xff]
        %v481 = vld [vmem:[%s1 + $0x48] sm:$0xff]
        %v482 = vld [vmem:[%s1 + $0x50] sm:$0xff]
        %v483 = vld [vmem:[%s1 + $0x58] sm:$0xff]
        %v484 = vld [vmem:[%s1 + $0x60] sm:$0xff]
        %v485 = vld [vmem:[%s1 + $0x68] sm:$0xff]
        %v486 = vld [vmem:[%s1 + $0x70] sm:$0xff]
        %v487 = vld [vmem:[%s1 + $0x78] sm:$0xff]
        %v488 = vld [vmem:[%s1 + $0x80] sm:$0xff]
        %v489 = vld [vmem:[%s1 + $0x88] sm:$0x33]
        %v490 = vld [vmem:[%s2] sm:$0x3]
        %v492 = vperm.slane %v490, 0
        %v493 = vperm.slane %v490, 1
        %v508 = vunpack.c.l.b16 %v460
        %v509 = vunpack.c.h.b16 %v460
        %v510 = vunpack.c.l.b16 %v461
        %v511 = vunpack.c.h.b16 %v461
        %v512 = vunpack.c.l.b16 %v462
        %v513 = vunpack.c.h.b16 %v462
        %v514 = vunpack.c.l.b16 %v463
        %v515 = vunpack.c.h.b16 %v463
        %v516 = vunpack.c.l.b16 %v464
        %v517 = vunpack.c.h.b16 %v464
        %v518 = vunpack.c.l.b16 %v465
        %v519 = vunpack.c.h.b16 %v465
        %v520 = vunpack.c.l.b16 %v466
        %v521 = vunpack.c.h.b16 %v466
        %v522 = vunpack.c.l.b16 %v467
        %v523 = vunpack.c.h.b16 %v467
        %v524 = vunpack.c.l.b16 %v468
        %v525 = vunpack.c.h.b16 %v468
        %v526 = vunpack.c.l.b16 %v469
        %v527 = vunpack.c.h.b16 %v469
        %v528 = vunpack.c.l.b16 %v470
        %v529 = vunpack.c.h.b16 %v470
        %v530 = vunpack.c.l.b16 %v471
        %v531 = vunpack.c.h.b16 %v471
        %v532 = vpack.c.b16 %v510, %v508
        %v533 = vpack.c.b16 %v511, %v509
        %v534 = vpack.c.b16 %v514, %v512
        %v535 = vpack.c.b16 %v515, %v513
        %v536 = vpack.c.b16 %v518, %v516
        %v537 = vpack.c.b16 %v519, %v517
        %v538 = vpack.c.b16 %v522, %v520
        %v539 = vpack.c.b16 %v523, %v521
        %v540 = vpack.c.b16 %v526, %v524
        %v541 = vpack.c.b16 %v527, %v525
        %v542 = vpack.c.b16 %v530, %v528
        %v543 = vpack.c.b16 %v531, %v529
        %v568 = vunpack.c.l.b16 %v472
        %v569 = vunpack.c.h.b16 %v472
        %v570 = vunpack.c.l.b16 %v473
        %v571 = vunpack.c.h.b16 %v473
        %v572 = vunpack.c.l.b16 %v474
        %v573 = vunpack.c.h.b16 %v474
        %v574 = vunpack.c.l.b16 %v475
        %v575 = vunpack.c.h.b16 %v475
        %v576 = vunpack.c.l.b16 %v476
        %v577 = vunpack.c.h.b16 %v476
        %v578 = vunpack.c.l.b16 %v477
        %v579 = vunpack.c.h.b16 %v477
        %v580 = vunpack.c.l.b16 %v478
        %v581 = vunpack.c.h.b16 %v478
        %v582 = vunpack.c.l.b16 %v479
        %v583 = vunpack.c.h.b16 %v479
        %v584 = vunpack.c.l.b16 %v480
        %v585 = vunpack.c.h.b16 %v480
        %v586 = vunpack.c.l.b16 %v481
        %v587 = vunpack.c.h.b16 %v481
        %v588 = vunpack.c.l.b16 %v482
        %v589 = vunpack.c.h.b16 %v482
        %v590 = vunpack.c.l.b16 %v483
        %v591 = vunpack.c.h.b16 %v483
        %v592 = vunpack.c.l.b16 %v484
        %v593 = vunpack.c.h.b16 %v484
        %v594 = vunpack.c.l.b16 %v485
        %v595 = vunpack.c.h.b16 %v485
        %v596 = vunpack.c.l.b16 %v486
        %v597 = vunpack.c.h.b16 %v486
        %v598 = vunpack.c.l.b16 %v487
        %v599 = vunpack.c.h.b16 %v487
        %v600 = vunpack.c.l.b16 %v488
        %v601 = vunpack.c.h.b16 %v488
        %v602 = vunpack.c.l.b16 %v489
        %v603 = vunpack.c.h.b16 %v489
        %v604 = vpack.c.b16 %v570, %v568
        %v605 = vpack.c.b16 %v571, %v569
        %v606 = vpack.c.b16 %v574, %v572
        %v607 = vpack.c.b16 %v575, %v573
        %v608 = vpack.c.b16 %v578, %v576
        %v609 = vpack.c.b16 %v579, %v577
        %v610 = vpack.c.b16 %v582, %v580
        %v611 = vpack.c.b16 %v583, %v581
        %v612 = vpack.c.b16 %v586, %v584
        %v613 = vpack.c.b16 %v587, %v585
        %v614 = vpack.c.b16 %v590, %v588
        %v615 = vpack.c.b16 %v591, %v589
        %v616 = vpack.c.b16 %v594, %v592
        %v617 = vpack.c.b16 %v595, %v593
        %v618 = vpack.c.b16 %v598, %v596
        %v619 = vpack.c.b16 %v599, %v597
        %v620 = vpack.c.b16 %v602, %v600
        %v621 = vpack.c.b16 %v603, %v601
        %vm638 = vcmask 97280
        %v640 = vsel %vm638, %v533, 0
        %v643 = vsel %vm638, %v535, 0
        %v646 = vsel %vm638, %v537, 0
        %v649 = vsel %vm638, %v539, 0
        %v652 = vsel %vm638, %v541, 0
        %v655 = vsel %vm638, %v543, 0
        %vm657 = vcmask 1045504
        %v659 = vsel %vm657, %v620, 0
        %v662 = vsel %vm657, %v621, 0
        %664 = vmatpush.bf16.msra.mxu0 %v618
        %665 = vmatpush.bf16.msra.mxu0 %v616
        %666 = vmatpush.bf16.msra.mxu0 %v614
        %667 = vmatpush.bf16.msra.mxu0 %v612
        %668 = vmatpush.bf16.msra.mxu0 %v610
        %669 = vmatpush.bf16.msra.mxu0 %v608
        %670 = vmatpush.bf16.msra.mxu0 %v606
        %671 = vmatpush.bf16.msra.mxu0 %v604
        %672 = vmatmul.bf16.gmra.mxu0 %v532
        %v673 = vpop.f32.mrf.mxu0
        %v674 = vadd.f32 %v492, %v673
        %v675 = vpop.f32.mrf.mxu0
        %v676 = vadd.f32 %v492, %v675
        %677 = vmatmul.bf16.gmra.mxu0 %v534
        %v678 = vpop.f32.mrf.mxu0
        %v679 = vadd.f32 %v492, %v678
        %v680 = vpop.f32.mrf.mxu0
        %v681 = vadd.f32 %v492, %v680
        %682 = vmatmul.bf16.gmra.mxu0 %v536
        %v683 = vpop.f32.mrf.mxu0
        %v684 = vadd.f32 %v492, %v683
        %v685 = vpop.f32.mrf.mxu0
        %v686 = vadd.f32 %v492, %v685
        %687 = vmatmul.bf16.gmra.mxu0 %v538
        %v688 = vpop.f32.mrf.mxu0
        %v689 = vadd.f32 %v492, %v688
        %v690 = vpop.f32.mrf.mxu0
        %v691 = vadd.f32 %v492, %v690
        %692 = vmatmul.bf16.gmra.mxu0 %v540
        %v693 = vpop.f32.mrf.mxu0
        %v694 = vadd.f32 %v492, %v693
        %v695 = vpop.f32.mrf.mxu0
        %v696 = vadd.f32 %v492, %v695
        %697 = vmatmul.bf16.gmra.mxu0 %v542
        %v698 = vpop.f32.mrf.mxu0
        %v699 = vadd.f32 %v492, %v698
        %v700 = vpop.f32.mrf.mxu0
        %v701 = vadd.f32 %v492, %v700
        %702 = vdwg.mxu0
        %703 = vmatpush.bf16.msra.mxu0 0
        %704 = vmatpush.bf16.msra.mxu0 0
        %705 = vmatpush.bf16.msra.mxu0 0
        %706 = vmatpush.bf16.msra.mxu0 0
        %707 = vmatpush.bf16.msra.mxu0 0
        %708 = vmatpush.bf16.msra.mxu0 0
        %709 = vmatpush.bf16.msra.mxu0 0
        %710 = vmatpush.bf16.msra.mxu0 %v659
        %711 = vmatmul.bf16.gmra.mxu0 %v640
        %v712 = vpop.f32.mrf.mxu0
        %v713 = vadd.f32 %v674, %v712
        %v714 = vpop.f32.mrf.mxu0
        %v715 = vadd.f32 %v676, %v714
        %716 = vmatmul.bf16.gmra.mxu0 %v643
        %v717 = vpop.f32.mrf.mxu0
        %v718 = vadd.f32 %v679, %v717
        %v719 = vpop.f32.mrf.mxu0
        %v720 = vadd.f32 %v681, %v719
        %721 = vmatmul.bf16.gmra.mxu0 %v646
        %v722 = vpop.f32.mrf.mxu0
        %v723 = vadd.f32 %v684, %v722
        %v724 = vpop.f32.mrf.mxu0
        %v725 = vadd.f32 %v686, %v724
        %726 = vmatmul.bf16.gmra.mxu0 %v649
        %v727 = vpop.f32.mrf.mxu0
        %v728 = vadd.f32 %v689, %v727
        %v729 = vpop.f32.mrf.mxu0
        %v730 = vadd.f32 %v691, %v729
        %731 = vmatmul.bf16.gmra.mxu0 %v652
        %v732 = vpop.f32.mrf.mxu0
        %v733 = vadd.f32 %v694, %v732
        %v734 = vpop.f32.mrf.mxu0
        %v735 = vadd.f32 %v696, %v734
        %736 = vmatmul.bf16.gmra.mxu0 %v655
        %v737 = vpop.f32.mrf.mxu0
        %v738 = vadd.f32 %v699, %v737
        %v739 = vpop.f32.mrf.mxu0
        %v740 = vadd.f32 %v701, %v739
        %741 = vdwg.mxu0
        %742 = vmatpush.bf16.msra.mxu0 %v619
        %743 = vmatpush.bf16.msra.mxu0 %v617
        %744 = vmatpush.bf16.msra.mxu0 %v615
        %745 = vmatpush.bf16.msra.mxu0 %v613
        %746 = vmatpush.bf16.msra.mxu0 %v611
        %747 = vmatpush.bf16.msra.mxu0 %v609
        %748 = vmatpush.bf16.msra.mxu0 %v607
        %749 = vmatpush.bf16.msra.mxu0 %v605
        %750 = vmatmul.bf16.gmra.mxu0 %v532
        %v751 = vpop.f32.mrf.mxu0
        %v752 = vadd.f32 %v493, %v751
        %v753 = vpop.f32.mrf.mxu0
        %v754 = vadd.f32 %v493, %v753
        %755 = vmatmul.bf16.gmra.mxu0 %v534
        %v756 = vpop.f32.mrf.mxu0
        %v757 = vadd.f32 %v493, %v756
        %v758 = vpop.f32.mrf.mxu0
        %v759 = vadd.f32 %v493, %v758
        %760 = vmatmul.bf16.gmra.mxu0 %v536
        %v761 = vpop.f32.mrf.mxu0
        %v762 = vadd.f32 %v493, %v761
        %v763 = vpop.f32.mrf.mxu0
        %v764 = vadd.f32 %v493, %v763
        %765 = vmatmul.bf16.gmra.mxu0 %v538
        %v766 = vpop.f32.mrf.mxu0
        %v767 = vadd.f32 %v493, %v766
        %v768 = vpop.f32.mrf.mxu0
        %v769 = vadd.f32 %v493, %v768
        %770 = vmatmul.bf16.gmra.mxu0 %v540
        %v771 = vpop.f32.mrf.mxu0
        %v772 = vadd.f32 %v493, %v771
        %v773 = vpop.f32.mrf.mxu0
        %v774 = vadd.f32 %v493, %v773
        %775 = vmatmul.bf16.gmra.mxu0 %v542
        %v776 = vpop.f32.mrf.mxu0
        %v777 = vadd.f32 %v493, %v776
        %v778 = vpop.f32.mrf.mxu0
        %v779 = vadd.f32 %v493, %v778
        %780 = vdwg.mxu0
        %781 = vmatpush.bf16.msra.mxu0 0
        %782 = vmatpush.bf16.msra.mxu0 0
        %783 = vmatpush.bf16.msra.mxu0 0
        %784 = vmatpush.bf16.msra.mxu0 0
        %785 = vmatpush.bf16.msra.mxu0 0
        %786 = vmatpush.bf16.msra.mxu0 0
        %787 = vmatpush.bf16.msra.mxu0 0
        %788 = vmatpush.bf16.msra.mxu0 %v662
        %789 = vmatmul.bf16.gmra.mxu0 %v640
        %v790 = vpop.f32.mrf.mxu0
        %v791 = vadd.f32 %v752, %v790
        %v792 = vpop.f32.mrf.mxu0
        %v793 = vadd.f32 %v754, %v792
        %794 = vmatmul.bf16.gmra.mxu0 %v643
        %v795 = vpop.f32.mrf.mxu0
        %v796 = vadd.f32 %v757, %v795
        %v797 = vpop.f32.mrf.mxu0
        %v798 = vadd.f32 %v759, %v797
        %799 = vmatmul.bf16.gmra.mxu0 %v646
        %v800 = vpop.f32.mrf.mxu0
        %v801 = vadd.f32 %v762, %v800
        %v802 = vpop.f32.mrf.mxu0
        %v803 = vadd.f32 %v764, %v802
        %804 = vmatmul.bf16.gmra.mxu0 %v649
        %v805 = vpop.f32.mrf.mxu0
        %v806 = vadd.f32 %v767, %v805
        %v807 = vpop.f32.mrf.mxu0
        %v808 = vadd.f32 %v769, %v807
        %809 = vmatmul.bf16.gmra.mxu0 %v652
        %v810 = vpop.f32.mrf.mxu0
        %v811 = vadd.f32 %v772, %v810
        %v812 = vpop.f32.mrf.mxu0
        %v813 = vadd.f32 %v774, %v812
        %814 = vmatmul.bf16.gmra.mxu0 %v655
        %v815 = vpop.f32.mrf.mxu0
        %v816 = vadd.f32 %v777, %v815
        %v817 = vpop.f32.mrf.mxu0
        %v818 = vadd.f32 %v779, %v817
        %819 = vdwg.mxu0
        %v820 = vmax.f32 %v713, 0.0
        %v821 = vmax.f32 %v791, 0.0
        %v822 = vmax.f32 %v715, 0.0
        %v823 = vmax.f32 %v793, 0.0
        %v824 = vmax.f32 %v718, 0.0
        %v825 = vmax.f32 %v796, 0.0
        %v826 = vmax.f32 %v720, 0.0
        %v827 = vmax.f32 %v798, 0.0
        %v828 = vmax.f32 %v723, 0.0
        %v829 = vmax.f32 %v801, 0.0
        %v830 = vmax.f32 %v725, 0.0
        %v831 = vmax.f32 %v803, 0.0
        %v832 = vmax.f32 %v728, 0.0
        %v833 = vmax.f32 %v806, 0.0
        %v834 = vmax.f32 %v730, 0.0
        %v835 = vmax.f32 %v808, 0.0
        %v836 = vmax.f32 %v733, 0.0
        %v837 = vmax.f32 %v811, 0.0
        %v838 = vmax.f32 %v735, 0.0
        %v839 = vmax.f32 %v813, 0.0
        %v840 = vmax.f32 %v738, 0.0
        %v841 = vmax.f32 %v816, 0.0
        %v842 = vmax.f32 %v740, 0.0
        %v843 = vmax.f32 %v818, 0.0
        %v844 = vpack.c.bf16 %v821, %v820
        %v845 = vpack.c.bf16 %v823, %v822
        %v846 = vpack.c.bf16 %v825, %v824
        %v847 = vpack.c.bf16 %v827, %v826
        %v848 = vpack.c.bf16 %v829, %v828
        %v849 = vpack.c.bf16 %v831, %v830
        %v850 = vpack.c.bf16 %v833, %v832
        %v851 = vpack.c.bf16 %v835, %v834
        %v852 = vpack.c.bf16 %v837, %v836
        %v853 = vpack.c.bf16 %v839, %v838
        %v854 = vpack.c.bf16 %v841, %v840
        %v855 = vpack.c.bf16 %v843, %v842
        %856 = vst [vmem:[#allocation2] sm:$0xff] %v844
        %857 = vst [vmem:[#allocation2 + $0x8] sm:$0xff] %v845
        %858 = vst [vmem:[#allocation2 + $0x10] sm:$0xff] %v846
        %859 = vst [vmem:[#allocation2 + $0x18] sm:$0xff] %v847
        %860 = vst [vmem:[#allocation2 + $0x20] sm:$0xff] %v848
        %861 = vst [vmem:[#allocation2 + $0x28] sm:$0xff] %v849
        %862 = vst [vmem:[#allocation2 + $0x30] sm:$0xff] %v850
        %863 = vst [vmem:[#allocation2 + $0x38] sm:$0xff] %v851
        %864 = vst [vmem:[#allocation2 + $0x40] sm:$0xff] %v852
        %865 = vst [vmem:[#allocation2 + $0x48] sm:$0xff] %v853
        %866 = vst [vmem:[#allocation2 + $0x50] sm:$0xff] %v854
        %867 = vst [vmem:[#allocation2 + $0x58] sm:$0xff] %v855
        %s868 = scalar_lea.vmem %s423, 96 [#allocation5]
        %v869 = vld [vmem:[%s868] sm:$0xff]
        %v870 = vld [vmem:[%s868 + $0x8] sm:$0xff]
        %v871 = vld [vmem:[%s868 + $0x10] sm:$0xff]
        %v872 = vld [vmem:[%s868 + $0x18] sm:$0xff]
        %v873 = vld [vmem:[%s868 + $0x20] sm:$0xff]
        %v874 = vld [vmem:[%s868 + $0x28] sm:$0xff]
        %v875 = vld [vmem:[%s868 + $0x30] sm:$0xff]
        %v876 = vld [vmem:[%s868 + $0x38] sm:$0xff]
        %v877 = vld [vmem:[%s868 + $0x40] sm:$0xff]
        %v878 = vld [vmem:[%s868 + $0x48] sm:$0xff]
        %v879 = vld [vmem:[%s868 + $0x50] sm:$0xff]
        %v880 = vld [vmem:[%s868 + $0x58] sm:$0xff]
        %v881 = vld [vmem:[%s1] sm:$0xff]
        %v882 = vld [vmem:[%s1 + $0x8] sm:$0xff]
        %v883 = vld [vmem:[%s1 + $0x10] sm:$0xff]
        %v884 = vld [vmem:[%s1 + $0x18] sm:$0xff]
        %v885 = vld [vmem:[%s1 + $0x20] sm:$0xff]
        %v886 = vld [vmem:[%s1 + $0x28] sm:$0xff]
        %v887 = vld [vmem:[%s1 + $0x30] sm:$0xff]
        %v888 = vld [vmem:[%s1 + $0x38] sm:$0xff]
        %v889 = vld [vmem:[%s1 + $0x40] sm:$0xff]
        %v890 = vld [vmem:[%s1 + $0x48] sm:$0xff]
        %v891 = vld [vmem:[%s1 + $0x50] sm:$0xff]
        %v892 = vld [vmem:[%s1 + $0x58] sm:$0xff]
        %v893 = vld [vmem:[%s1 + $0x60] sm:$0xff]
        %v894 = vld [vmem:[%s1 + $0x68] sm:$0xff]
        %v895 = vld [vmem:[%s1 + $0x70] sm:$0xff]
        %v896 = vld [vmem:[%s1 + $0x78] sm:$0xff]
        %v897 = vld [vmem:[%s1 + $0x80] sm:$0xff]
        %v898 = vld [vmem:[%s1 + $0x88] sm:$0x33]
        %v899 = vld [vmem:[%s2] sm:$0x3]
        %v901 = vperm.slane %v899, 0
        %v902 = vperm.slane %v899, 1
        %v917 = vunpack.c.l.b16 %v869
        %v918 = vunpack.c.h.b16 %v869
        %v919 = vunpack.c.l.b16 %v870
        %v920 = vunpack.c.h.b16 %v870
        %v921 = vunpack.c.l.b16 %v871
        %v922 = vunpack.c.h.b16 %v871
        %v923 = vunpack.c.l.b16 %v872
        %v924 = vunpack.c.h.b16 %v872
        %v925 = vunpack.c.l.b16 %v873
        %v926 = vunpack.c.h.b16 %v873
        %v927 = vunpack.c.l.b16 %v874
        %v928 = vunpack.c.h.b16 %v874
        %v929 = vunpack.c.l.b16 %v875
        %v930 = vunpack.c.h.b16 %v875
        %v931 = vunpack.c.l.b16 %v876
        %v932 = vunpack.c.h.b16 %v876
        %v933 = vunpack.c.l.b16 %v877
        %v934 = vunpack.c.h.b16 %v877
        %v935 = vunpack.c.l.b16 %v878
        %v936 = vunpack.c.h.b16 %v878
        %v937 = vunpack.c.l.b16 %v879
        %v938 = vunpack.c.h.b16 %v879
        %v939 = vunpack.c.l.b16 %v880
        %v940 = vunpack.c.h.b16 %v880
        %v941 = vpack.c.b16 %v919, %v917
        %v942 = vpack.c.b16 %v920, %v918
        %v943 = vpack.c.b16 %v923, %v921
        %v944 = vpack.c.b16 %v924, %v922
        %v945 = vpack.c.b16 %v927, %v925
        %v946 = vpack.c.b16 %v928, %v926
        %v947 = vpack.c.b16 %v931, %v929
        %v948 = vpack.c.b16 %v932, %v930
        %v949 = vpack.c.b16 %v935, %v933
        %v950 = vpack.c.b16 %v936, %v934
        %v951 = vpack.c.b16 %v939, %v937
        %v952 = vpack.c.b16 %v940, %v938
        %v977 = vunpack.c.l.b16 %v881
        %v978 = vunpack.c.h.b16 %v881
        %v979 = vunpack.c.l.b16 %v882
        %v980 = vunpack.c.h.b16 %v882
        %v981 = vunpack.c.l.b16 %v883
        %v982 = vunpack.c.h.b16 %v883
        %v983 = vunpack.c.l.b16 %v884
        %v984 = vunpack.c.h.b16 %v884
        %v985 = vunpack.c.l.b16 %v885
        %v986 = vunpack.c.h.b16 %v885
        %v987 = vunpack.c.l.b16 %v886
        %v988 = vunpack.c.h.b16 %v886
        %v989 = vunpack.c.l.b16 %v887
        %v990 = vunpack.c.h.b16 %v887
        %v991 = vunpack.c.l.b16 %v888
        %v992 = vunpack.c.h.b16 %v888
        %v993 = vunpack.c.l.b16 %v889
        %v994 = vunpack.c.h.b16 %v889
        %v995 = vunpack.c.l.b16 %v890
        %v996 = vunpack.c.h.b16 %v890
        %v997 = vunpack.c.l.b16 %v891
        %v998 = vunpack.c.h.b16 %v891
        %v999 = vunpack.c.l.b16 %v892
        %v1000 = vunpack.c.h.b16 %v892
        %v1001 = vunpack.c.l.b16 %v893
        %v1002 = vunpack.c.h.b16 %v893
        %v1003 = vunpack.c.l.b16 %v894
        %v1004 = vunpack.c.h.b16 %v894
        %v1005 = vunpack.c.l.b16 %v895
        %v1006 = vunpack.c.h.b16 %v895
        %v1007 = vunpack.c.l.b16 %v896
        %v1008 = vunpack.c.h.b16 %v896
        %v1009 = vunpack.c.l.b16 %v897
        %v1010 = vunpack.c.h.b16 %v897
        %v1011 = vunpack.c.l.b16 %v898
        %v1012 = vunpack.c.h.b16 %v898
        %v1013 = vpack.c.b16 %v979, %v977
        %v1014 = vpack.c.b16 %v980, %v978
        %v1015 = vpack.c.b16 %v983, %v981
        %v1016 = vpack.c.b16 %v984, %v982
        %v1017 = vpack.c.b16 %v987, %v985
        %v1018 = vpack.c.b16 %v988, %v986
        %v1019 = vpack.c.b16 %v991, %v989
        %v1020 = vpack.c.b16 %v992, %v990
        %v1021 = vpack.c.b16 %v995, %v993
        %v1022 = vpack.c.b16 %v996, %v994
        %v1023 = vpack.c.b16 %v999, %v997
        %v1024 = vpack.c.b16 %v1000, %v998
        %v1025 = vpack.c.b16 %v1003, %v1001
        %v1026 = vpack.c.b16 %v1004, %v1002
        %v1027 = vpack.c.b16 %v1007, %v1005
        %v1028 = vpack.c.b16 %v1008, %v1006
        %v1029 = vpack.c.b16 %v1011, %v1009
        %v1030 = vpack.c.b16 %v1012, %v1010
        %v1048 = vsel %vm638, %v942, 0
        %v1051 = vsel %vm638, %v944, 0
        %v1054 = vsel %vm638, %v946, 0
        %v1057 = vsel %vm638, %v948, 0
        %v1060 = vsel %vm638, %v950, 0
        %v1063 = vsel %vm638, %v952, 0
        %v1066 = vsel %vm657, %v1029, 0
        %v1069 = vsel %vm657, %v1030, 0
        %1071 = vmatpush.bf16.msra.mxu0 %v1027
        %1072 = vmatpush.bf16.msra.mxu0 %v1025
        %1073 = vmatpush.bf16.msra.mxu0 %v1023
        %1074 = vmatpush.bf16.msra.mxu0 %v1021
        %1075 = vmatpush.bf16.msra.mxu0 %v1019
        %1076 = vmatpush.bf16.msra.mxu0 %v1017
        %1077 = vmatpush.bf16.msra.mxu0 %v1015
        %1078 = vmatpush.bf16.msra.mxu0 %v1013
        %1079 = vmatmul.bf16.gmra.mxu0 %v941
        %v1080 = vpop.f32.mrf.mxu0
        %v1081 = vadd.f32 %v901, %v1080
        %v1082 = vpop.f32.mrf.mxu0
        %v1083 = vadd.f32 %v901, %v1082
        %1084 = vmatmul.bf16.gmra.mxu0 %v943
        %v1085 = vpop.f32.mrf.mxu0
        %v1086 = vadd.f32 %v901, %v1085
        %v1087 = vpop.f32.mrf.mxu0
        %v1088 = vadd.f32 %v901, %v1087
        %1089 = vmatmul.bf16.gmra.mxu0 %v945
        %v1090 = vpop.f32.mrf.mxu0
        %v1091 = vadd.f32 %v901, %v1090
        %v1092 = vpop.f32.mrf.mxu0
        %v1093 = vadd.f32 %v901, %v1092
        %1094 = vmatmul.bf16.gmra.mxu0 %v947
        %v1095 = vpop.f32.mrf.mxu0
        %v1096 = vadd.f32 %v901, %v1095
        %v1097 = vpop.f32.mrf.mxu0
        %v1098 = vadd.f32 %v901, %v1097
        %1099 = vmatmul.bf16.gmra.mxu0 %v949
        %v1100 = vpop.f32.mrf.mxu0
        %v1101 = vadd.f32 %v901, %v1100
        %v1102 = vpop.f32.mrf.mxu0
        %v1103 = vadd.f32 %v901, %v1102
        %1104 = vmatmul.bf16.gmra.mxu0 %v951
        %v1105 = vpop.f32.mrf.mxu0
        %v1106 = vadd.f32 %v901, %v1105
        %v1107 = vpop.f32.mrf.mxu0
        %v1108 = vadd.f32 %v901, %v1107
        %1109 = vdwg.mxu0
        %1110 = vmatpush.bf16.msra.mxu0 0
        %1111 = vmatpush.bf16.msra.mxu0 0
        %1112 = vmatpush.bf16.msra.mxu0 0
        %1113 = vmatpush.bf16.msra.mxu0 0
        %1114 = vmatpush.bf16.msra.mxu0 0
        %1115 = vmatpush.bf16.msra.mxu0 0
        %1116 = vmatpush.bf16.msra.mxu0 0
        %1117 = vmatpush.bf16.msra.mxu0 %v1066
        %1118 = vmatmul.bf16.gmra.mxu0 %v1048
        %v1119 = vpop.f32.mrf.mxu0
        %v1120 = vadd.f32 %v1081, %v1119
        %v1121 = vpop.f32.mrf.mxu0
        %v1122 = vadd.f32 %v1083, %v1121
        %1123 = vmatmul.bf16.gmra.mxu0 %v1051
        %v1124 = vpop.f32.mrf.mxu0
        %v1125 = vadd.f32 %v1086, %v1124
        %v1126 = vpop.f32.mrf.mxu0
        %v1127 = vadd.f32 %v1088, %v1126
        %1128 = vmatmul.bf16.gmra.mxu0 %v1054
        %v1129 = vpop.f32.mrf.mxu0
        %v1130 = vadd.f32 %v1091, %v1129
        %v1131 = vpop.f32.mrf.mxu0
        %v1132 = vadd.f32 %v1093, %v1131
        %1133 = vmatmul.bf16.gmra.mxu0 %v1057
        %v1134 = vpop.f32.mrf.mxu0
        %v1135 = vadd.f32 %v1096, %v1134
        %v1136 = vpop.f32.mrf.mxu0
        %v1137 = vadd.f32 %v1098, %v1136
        %1138 = vmatmul.bf16.gmra.mxu0 %v1060
        %v1139 = vpop.f32.mrf.mxu0
        %v1140 = vadd.f32 %v1101, %v1139
        %v1141 = vpop.f32.mrf.mxu0
        %v1142 = vadd.f32 %v1103, %v1141
        %1143 = vmatmul.bf16.gmra.mxu0 %v1063
        %v1144 = vpop.f32.mrf.mxu0
        %v1145 = vadd.f32 %v1106, %v1144
        %v1146 = vpop.f32.mrf.mxu0
        %v1147 = vadd.f32 %v1108, %v1146
        %1148 = vdwg.mxu0
        %1149 = vmatpush.bf16.msra.mxu0 %v1028
        %1150 = vmatpush.bf16.msra.mxu0 %v1026
        %1151 = vmatpush.bf16.msra.mxu0 %v1024
        %1152 = vmatpush.bf16.msra.mxu0 %v1022
        %1153 = vmatpush.bf16.msra.mxu0 %v1020
        %1154 = vmatpush.bf16.msra.mxu0 %v1018
        %1155 = vmatpush.bf16.msra.mxu0 %v1016
        %1156 = vmatpush.bf16.msra.mxu0 %v1014
        %1157 = vmatmul.bf16.gmra.mxu0 %v941
        %v1158 = vpop.f32.mrf.mxu0
        %v1159 = vadd.f32 %v902, %v1158
        %v1160 = vpop.f32.mrf.mxu0
        %v1161 = vadd.f32 %v902, %v1160
        %1162 = vmatmul.bf16.gmra.mxu0 %v943
        %v1163 = vpop.f32.mrf.mxu0
        %v1164 = vadd.f32 %v902, %v1163
        %v1165 = vpop.f32.mrf.mxu0
        %v1166 = vadd.f32 %v902, %v1165
        %1167 = vmatmul.bf16.gmra.mxu0 %v945
        %v1168 = vpop.f32.mrf.mxu0
        %v1169 = vadd.f32 %v902, %v1168
        %v1170 = vpop.f32.mrf.mxu0
        %v1171 = vadd.f32 %v902, %v1170
        %1172 = vmatmul.bf16.gmra.mxu0 %v947
        %v1173 = vpop.f32.mrf.mxu0
        %v1174 = vadd.f32 %v902, %v1173
        %v1175 = vpop.f32.mrf.mxu0
        %v1176 = vadd.f32 %v902, %v1175
        %1177 = vmatmul.bf16.gmra.mxu0 %v949
        %v1178 = vpop.f32.mrf.mxu0
        %v1179 = vadd.f32 %v902, %v1178
        %v1180 = vpop.f32.mrf.mxu0
        %v1181 = vadd.f32 %v902, %v1180
        %1182 = vmatmul.bf16.gmra.mxu0 %v951
        %v1183 = vpop.f32.mrf.mxu0
        %v1184 = vadd.f32 %v902, %v1183
        %v1185 = vpop.f32.mrf.mxu0
        %v1186 = vadd.f32 %v902, %v1185
        %1187 = vdwg.mxu0
        %1188 = vmatpush.bf16.msra.mxu0 0
        %1189 = vmatpush.bf16.msra.mxu0 0
        %1190 = vmatpush.bf16.msra.mxu0 0
        %1191 = vmatpush.bf16.msra.mxu0 0
        %1192 = vmatpush.bf16.msra.mxu0 0
        %1193 = vmatpush.bf16.msra.mxu0 0
        %1194 = vmatpush.bf16.msra.mxu0 0
        %1195 = vmatpush.bf16.msra.mxu0 %v1069
        %1196 = vmatmul.bf16.gmra.mxu0 %v1048
        %v1197 = vpop.f32.mrf.mxu0
        %v1198 = vadd.f32 %v1159, %v1197
        %v1199 = vpop.f32.mrf.mxu0
        %v1200 = vadd.f32 %v1161, %v1199
        %1201 = vmatmul.bf16.gmra.mxu0 %v1051
        %v1202 = vpop.f32.mrf.mxu0
        %v1203 = vadd.f32 %v1164, %v1202
        %v1204 = vpop.f32.mrf.mxu0
        %v1205 = vadd.f32 %v1166, %v1204
        %1206 = vmatmul.bf16.gmra.mxu0 %v1054
        %v1207 = vpop.f32.mrf.mxu0
        %v1208 = vadd.f32 %v1169, %v1207
        %v1209 = vpop.f32.mrf.mxu0
        %v1210 = vadd.f32 %v1171, %v1209
        %1211 = vmatmul.bf16.gmra.mxu0 %v1057
        %v1212 = vpop.f32.mrf.mxu0
        %v1213 = vadd.f32 %v1174, %v1212
        %v1214 = vpop.f32.mrf.mxu0
        %v1215 = vadd.f32 %v1176, %v1214
        %1216 = vmatmul.bf16.gmra.mxu0 %v1060
        %v1217 = vpop.f32.mrf.mxu0
        %v1218 = vadd.f32 %v1179, %v1217
        %v1219 = vpop.f32.mrf.mxu0
        %v1220 = vadd.f32 %v1181, %v1219
        %1221 = vmatmul.bf16.gmra.mxu0 %v1063
        %v1222 = vpop.f32.mrf.mxu0
        %v1223 = vadd.f32 %v1184, %v1222
        %v1224 = vpop.f32.mrf.mxu0
        %v1225 = vadd.f32 %v1186, %v1224
        %1226 = vdwg.mxu0
        %v1227 = vmax.f32 %v1120, 0.0
        %v1228 = vmax.f32 %v1198, 0.0
        %v1229 = vmax.f32 %v1122, 0.0
        %v1230 = vmax.f32 %v1200, 0.0
        %v1231 = vmax.f32 %v1125, 0.0
        %v1232 = vmax.f32 %v1203, 0.0
        %v1233 = vmax.f32 %v1127, 0.0
        %v1234 = vmax.f32 %v1205, 0.0
        %v1235 = vmax.f32 %v1130, 0.0
        %v1236 = vmax.f32 %v1208, 0.0
        %v1237 = vmax.f32 %v1132, 0.0
        %v1238 = vmax.f32 %v1210, 0.0
        %v1239 = vmax.f32 %v1135, 0.0
        %v1240 = vmax.f32 %v1213, 0.0
        %v1241 = vmax.f32 %v1137, 0.0
        %v1242 = vmax.f32 %v1215, 0.0
        %v1243 = vmax.f32 %v1140, 0.0
        %v1244 = vmax.f32 %v1218, 0.0
        %v1245 = vmax.f32 %v1142, 0.0
        %v1246 = vmax.f32 %v1220, 0.0
        %v1247 = vmax.f32 %v1145, 0.0
        %v1248 = vmax.f32 %v1223, 0.0
        %v1249 = vmax.f32 %v1147, 0.0
        %v1250 = vmax.f32 %v1225, 0.0
        %v1251 = vpack.c.bf16 %v1228, %v1227
        %v1252 = vpack.c.bf16 %v1230, %v1229
        %v1253 = vpack.c.bf16 %v1232, %v1231
        %v1254 = vpack.c.bf16 %v1234, %v1233
        %v1255 = vpack.c.bf16 %v1236, %v1235
        %v1256 = vpack.c.bf16 %v1238, %v1237
        %v1257 = vpack.c.bf16 %v1240, %v1239
        %v1258 = vpack.c.bf16 %v1242, %v1241
        %v1259 = vpack.c.bf16 %v1244, %v1243
        %v1260 = vpack.c.bf16 %v1246, %v1245
        %v1261 = vpack.c.bf16 %v1248, %v1247
        %v1262 = vpack.c.bf16 %v1250, %v1249
        %s1263 = scalar_lea.vmem [#allocation2], 96
        %1264 = vst [vmem:[%s1263] sm:$0xff] %v1251
        %1265 = vst [vmem:[%s1263 + $0x8] sm:$0xff] %v1252
        %1266 = vst [vmem:[%s1263 + $0x10] sm:$0xff] %v1253
        %1267 = vst [vmem:[%s1263 + $0x18] sm:$0xff] %v1254
        %1268 = vst [vmem:[%s1263 + $0x20] sm:$0xff] %v1255
        %1269 = vst [vmem:[%s1263 + $0x28] sm:$0xff] %v1256
        %1270 = vst [vmem:[%s1263 + $0x30] sm:$0xff] %v1257
        %1271 = vst [vmem:[%s1263 + $0x38] sm:$0xff] %v1258
        %1272 = vst [vmem:[%s1263 + $0x40] sm:$0xff] %v1259
        %1273 = vst [vmem:[%s1263 + $0x48] sm:$0xff] %v1260
        %1274 = vst [vmem:[%s1263 + $0x50] sm:$0xff] %v1261
        %1275 = vst [vmem:[%s1263 + $0x58] sm:$0xff] %v1262
        %v1276 = vld [vmem:[#allocation2] sm:$0xff]
        %v1277 = vld [vmem:[%s1263] sm:$0xff]
        %v1278 = vunpack.c.l.bf16 %v1276
        %v1279 = vunpack.c.h.bf16 %v1276
        %v1280 = vunpack.c.l.bf16 %v1277
        %v1281 = vunpack.c.h.bf16 %v1277
        %v1282 = vmax.f32 %v1278, %v1280
        %v1283 = vmax.f32 %v1279, %v1281
        %v1284 = vpack.c.bf16 %v1283, %v1282
        %v1285 = vunpack.c.l.bf16 %v1284
        %v1287 = vrot.slane %v1284, 4
        %v1289 = vunpack.c.l.bf16 %v1287
        %v1290 = vmax.f32 %v1285, %v1289
        %v1291 = vpack.c.bf16 %v1290, %v1290
        %1292 = vst [vmem:[#allocation3] sm:$0xf] %v1291
        %s1293 = scalar_lea.vmem [#allocation2], 8
        %v1294 = vld [vmem:[%s1293] sm:$0xff]
        %s1295 = scalar_lea.vmem [#allocation2], 104
        %v1296 = vld [vmem:[%s1295] sm:$0xff]
        %v1297 = vunpack.c.l.bf16 %v1294
        %v1298 = vunpack.c.h.bf16 %v1294
        %v1299 = vunpack.c.l.bf16 %v1296
        %v1300 = vunpack.c.h.bf16 %v1296
        %v1301 = vmax.f32 %v1297, %v1299
        %v1302 = vmax.f32 %v1298, %v1300
        %v1303 = vpack.c.bf16 %v1302, %v1301
        %v1304 = vunpack.c.l.bf16 %v1303
        %v1306 = vrot.slane %v1303, 4
        %v1308 = vunpack.c.l.bf16 %v1306
        %v1309 = vmax.f32 %v1304, %v1308
        %v1310 = vpack.c.bf16 %v1309, %v1309
        %s1311 = scalar_lea.vmem [#allocation3], 4
        %1312 = vst [vmem:[%s1311] sm:$0xf] %v1310
        %s1313 = scalar_lea.vmem [#allocation2], 16
        %v1314 = vld [vmem:[%s1313] sm:$0xff]
        %s1315 = scalar_lea.vmem [#allocation2], 112
        %v1316 = vld [vmem:[%s1315] sm:$0xff]
        %v1317 = vunpack.c.l.bf16 %v1314
        %v1318 = vunpack.c.h.bf16 %v1314
        %v1319 = vunpack.c.l.bf16 %v1316
        %v1320 = vunpack.c.h.bf16 %v1316
        %v1321 = vmax.f32 %v1317, %v1319
        %v1322 = vmax.f32 %v1318, %v1320
        %v1323 = vpack.c.bf16 %v1322, %v1321
        %v1324 = vunpack.c.l.bf16 %v1323
        %v1326 = vrot.slane %v1323, 4
        %v1328 = vunpack.c.l.bf16 %v1326
        %v1329 = vmax.f32 %v1324, %v1328
        %v1330 = vpack.c.bf16 %v1329, %v1329
        %s1331 = scalar_lea.vmem [#allocation3], 8
        %1332 = vst [vmem:[%s1331] sm:$0xf] %v1330
        %s1333 = scalar_lea.vmem [#allocation2], 24
        %v1334 = vld [vmem:[%s1333] sm:$0xff]
        %s1335 = scalar_lea.vmem [#allocation2], 120
        %v1336 = vld [vmem:[%s1335] sm:$0xff]
        %v1337 = vunpack.c.l.bf16 %v1334
        %v1338 = vunpack.c.h.bf16 %v1334
        %v1339 = vunpack.c.l.bf16 %v1336
        %v1340 = vunpack.c.h.bf16 %v1336
        %v1341 = vmax.f32 %v1337, %v1339
        %v1342 = vmax.f32 %v1338, %v1340
        %v1343 = vpack.c.bf16 %v1342, %v1341
        %v1344 = vunpack.c.l.bf16 %v1343
        %v1346 = vrot.slane %v1343, 4
        %v1348 = vunpack.c.l.bf16 %v1346
        %v1349 = vmax.f32 %v1344, %v1348
        %v1350 = vpack.c.bf16 %v1349, %v1349
        %s1351 = scalar_lea.vmem [#allocation3], 12
        %1352 = vst [vmem:[%s1351] sm:$0xf] %v1350
        %s1353 = scalar_lea.vmem [#allocation2], 32
        %v1354 = vld [vmem:[%s1353] sm:$0xff]
        %s1355 = scalar_lea.vmem [#allocation2], 128
        %v1356 = vld [vmem:[%s1355] sm:$0xff]
        %v1357 = vunpack.c.l.bf16 %v1354
        %v1358 = vunpack.c.h.bf16 %v1354
        %v1359 = vunpack.c.l.bf16 %v1356
        %v1360 = vunpack.c.h.bf16 %v1356
        %v1361 = vmax.f32 %v1357, %v1359
        %v1362 = vmax.f32 %v1358, %v1360
        %v1363 = vpack.c.bf16 %v1362, %v1361
        %v1364 = vunpack.c.l.bf16 %v1363
        %v1366 = vrot.slane %v1363, 4
        %v1368 = vunpack.c.l.bf16 %v1366
        %v1369 = vmax.f32 %v1364, %v1368
        %v1370 = vpack.c.bf16 %v1369, %v1369
        %s1371 = scalar_lea.vmem [#allocation3], 16
        %1372 = vst [vmem:[%s1371] sm:$0xf] %v1370
        %s1373 = scalar_lea.vmem [#allocation2], 40
        %v1374 = vld [vmem:[%s1373] sm:$0xff]
        %s1375 = scalar_lea.vmem [#allocation2], 136
        %v1376 = vld [vmem:[%s1375] sm:$0xff]
        %v1377 = vunpack.c.l.bf16 %v1374
        %v1378 = vunpack.c.h.bf16 %v1374
        %v1379 = vunpack.c.l.bf16 %v1376
        %v1380 = vunpack.c.h.bf16 %v1376
        %v1381 = vmax.f32 %v1377, %v1379
        %v1382 = vmax.f32 %v1378, %v1380
        %v1383 = vpack.c.bf16 %v1382, %v1381
        %v1384 = vunpack.c.l.bf16 %v1383
        %v1386 = vrot.slane %v1383, 4
        %v1388 = vunpack.c.l.bf16 %v1386
        %v1389 = vmax.f32 %v1384, %v1388
        %v1390 = vpack.c.bf16 %v1389, %v1389
        %s1391 = scalar_lea.vmem [#allocation3], 20
        %1392 = vst [vmem:[%s1391] sm:$0xf] %v1390
        %s1393 = scalar_lea.vmem [#allocation2], 48
        %v1394 = vld [vmem:[%s1393] sm:$0xff]
        %s1395 = scalar_lea.vmem [#allocation2], 144
        %v1396 = vld [vmem:[%s1395] sm:$0xff]
        %v1397 = vunpack.c.l.bf16 %v1394
        %v1398 = vunpack.c.h.bf16 %v1394
        %v1399 = vunpack.c.l.bf16 %v1396
        %v1400 = vunpack.c.h.bf16 %v1396
        %v1401 = vmax.f32 %v1397, %v1399
        %v1402 = vmax.f32 %v1398, %v1400
        %v1403 = vpack.c.bf16 %v1402, %v1401
        %v1404 = vunpack.c.l.bf16 %v1403
        %v1406 = vrot.slane %v1403, 4
        %v1408 = vunpack.c.l.bf16 %v1406
        %v1409 = vmax.f32 %v1404, %v1408
        %v1410 = vpack.c.bf16 %v1409, %v1409
        %s1411 = scalar_lea.vmem [#allocation3], 24
        %1412 = vst [vmem:[%s1411] sm:$0xf] %v1410
        %s1413 = scalar_lea.vmem [#allocation2], 56
        %v1414 = vld [vmem:[%s1413] sm:$0xff]
        %s1415 = scalar_lea.vmem [#allocation2], 152
        %v1416 = vld [vmem:[%s1415] sm:$0xff]
        %v1417 = vunpack.c.l.bf16 %v1414
        %v1418 = vunpack.c.h.bf16 %v1414
        %v1419 = vunpack.c.l.bf16 %v1416
        %v1420 = vunpack.c.h.bf16 %v1416
        %v1421 = vmax.f32 %v1417, %v1419
        %v1422 = vmax.f32 %v1418, %v1420
        %v1423 = vpack.c.bf16 %v1422, %v1421
        %v1424 = vunpack.c.l.bf16 %v1423
        %v1426 = vrot.slane %v1423, 4
        %v1428 = vunpack.c.l.bf16 %v1426
        %v1429 = vmax.f32 %v1424, %v1428
        %v1430 = vpack.c.bf16 %v1429, %v1429
        %s1431 = scalar_lea.vmem [#allocation3], 28
        %1432 = vst [vmem:[%s1431] sm:$0xf] %v1430
        %s1433 = scalar_lea.vmem [#allocation2], 64
        %v1434 = vld [vmem:[%s1433] sm:$0xff]
        %s1435 = scalar_lea.vmem [#allocation2], 160
        %v1436 = vld [vmem:[%s1435] sm:$0xff]
        %v1437 = vunpack.c.l.bf16 %v1434
        %v1438 = vunpack.c.h.bf16 %v1434
        %v1439 = vunpack.c.l.bf16 %v1436
        %v1440 = vunpack.c.h.bf16 %v1436
        %v1441 = vmax.f32 %v1437, %v1439
        %v1442 = vmax.f32 %v1438, %v1440
        %v1443 = vpack.c.bf16 %v1442, %v1441
        %v1444 = vunpack.c.l.bf16 %v1443
        %v1446 = vrot.slane %v1443, 4
        %v1448 = vunpack.c.l.bf16 %v1446
        %v1449 = vmax.f32 %v1444, %v1448
        %v1450 = vpack.c.bf16 %v1449, %v1449
        %s1451 = scalar_lea.vmem [#allocation3], 32
        %1452 = vst [vmem:[%s1451] sm:$0xf] %v1450
        %s1453 = scalar_lea.vmem [#allocation2], 72
        %v1454 = vld [vmem:[%s1453] sm:$0xff]
        %s1455 = scalar_lea.vmem [#allocation2], 168
        %v1456 = vld [vmem:[%s1455] sm:$0xff]
        %v1457 = vunpack.c.l.bf16 %v1454
        %v1458 = vunpack.c.h.bf16 %v1454
        %v1459 = vunpack.c.l.bf16 %v1456
        %v1460 = vunpack.c.h.bf16 %v1456
        %v1461 = vmax.f32 %v1457, %v1459
        %v1462 = vmax.f32 %v1458, %v1460
        %v1463 = vpack.c.bf16 %v1462, %v1461
        %v1464 = vunpack.c.l.bf16 %v1463
        %v1466 = vrot.slane %v1463, 4
        %v1468 = vunpack.c.l.bf16 %v1466
        %v1469 = vmax.f32 %v1464, %v1468
        %v1470 = vpack.c.bf16 %v1469, %v1469
        %s1471 = scalar_lea.vmem [#allocation3], 36
        %1472 = vst [vmem:[%s1471] sm:$0xf] %v1470
        %s1473 = scalar_lea.vmem [#allocation2], 80
        %v1474 = vld [vmem:[%s1473] sm:$0xff]
        %s1475 = scalar_lea.vmem [#allocation2], 176
        %v1476 = vld [vmem:[%s1475] sm:$0xff]
        %v1477 = vunpack.c.l.bf16 %v1474
        %v1478 = vunpack.c.h.bf16 %v1474
        %v1479 = vunpack.c.l.bf16 %v1476
        %v1480 = vunpack.c.h.bf16 %v1476
        %v1481 = vmax.f32 %v1477, %v1479
        %v1482 = vmax.f32 %v1478, %v1480
        %v1483 = vpack.c.bf16 %v1482, %v1481
        %v1484 = vunpack.c.l.bf16 %v1483
        %v1486 = vrot.slane %v1483, 4
        %v1488 = vunpack.c.l.bf16 %v1486
        %v1489 = vmax.f32 %v1484, %v1488
        %v1490 = vpack.c.bf16 %v1489, %v1489
        %s1491 = scalar_lea.vmem [#allocation3], 40
        %1492 = vst [vmem:[%s1491] sm:$0xf] %v1490
        %s1493 = scalar_lea.vmem [#allocation2], 88
        %v1494 = vld [vmem:[%s1493] sm:$0xff]
        %s1495 = scalar_lea.vmem [#allocation2], 184
        %v1496 = vld [vmem:[%s1495] sm:$0xff]
        %v1497 = vunpack.c.l.bf16 %v1494
        %v1498 = vunpack.c.h.bf16 %v1494
        %v1499 = vunpack.c.l.bf16 %v1496
        %v1500 = vunpack.c.h.bf16 %v1496
        %v1501 = vmax.f32 %v1497, %v1499
        %v1502 = vmax.f32 %v1498, %v1500
        %v1503 = vpack.c.bf16 %v1502, %v1501
        %v1504 = vunpack.c.l.bf16 %v1503
        %v1506 = vrot.slane %v1503, 4
        %v1508 = vunpack.c.l.bf16 %v1506
        %v1509 = vmax.f32 %v1504, %v1508
        %v1510 = vpack.c.bf16 %v1509, %v1509
        %s1511 = scalar_lea.vmem [#allocation3], 44
        %1512 = vst [vmem:[%s1511] sm:$0xf] %v1510
        %v1513 = vld [vmem:[#allocation3] sm:$0xf]
        %v1514 = vld [vmem:[%s1311] sm:$0xf]
        %v1515 = vld [vmem:[%s1331] sm:$0xf]
        %v1516 = vld [vmem:[%s3] sm:$0xff]
        %v1517 = vld [vmem:[%s3 + $0x8] sm:$0xff]
        %v1518 = vld [vmem:[%s3 + $0x10] sm:$0xff]
        %v1519 = vld [vmem:[%s3 + $0x18] sm:$0xff]
        %v1520 = vld [vmem:[%s3 + $0x20] sm:$0xff]
        %v1521 = vld [vmem:[%s3 + $0x28] sm:$0xff]
        %v1522 = vld [vmem:[%s3 + $0x30] sm:$0xff]
        %v1523 = vld [vmem:[%s3 + $0x38] sm:$0xff]
        %v1524 = vld [vmem:[%s3 + $0x40] sm:$0xff]
        %v1525 = vld [vmem:[%s3 + $0x48] sm:$0xff]
        %v1526 = vld [vmem:[%s3 + $0x50] sm:$0xff]
        %v1527 = vld [vmem:[%s3 + $0x58] sm:$0xff]
        %v1528 = vld [vmem:[%s3 + $0x60] sm:$0xff]
        %v1529 = vld [vmem:[%s3 + $0x68] sm:$0xff]
        %v1530 = vld [vmem:[%s3 + $0x70] sm:$0xff]
        %v1531 = vld [vmem:[%s3 + $0x78] sm:$0xff]
        %v1532 = vld [vmem:[%s3 + $0x80] sm:$0xff]
        %v1533 = vld [vmem:[%s3 + $0x88] sm:$0xff]
        %v1534 = vld [vmem:[%s3 + $0x90] sm:$0xff]
        %v1535 = vld [vmem:[%s3 + $0x98] sm:$0xff]
        %v1536 = vld [vmem:[%s3 + $0xa0] sm:$0xff]
        %v1537 = vld [vmem:[%s3 + $0xa8] sm:$0xff]
        %v1538 = vld [vmem:[%s3 + $0xb0] sm:$0xff]
        %v1539 = vld [vmem:[%s3 + $0xb8] sm:$0xff]
        %v1540 = vld [vmem:[%s3 + $0xc0] sm:$0xff]
        %v1541 = vld [vmem:[%s3 + $0xc8] sm:$0xff]
        %v1542 = vld [vmem:[%s3 + $0xd0] sm:$0xff]
        %v1543 = vld [vmem:[%s3 + $0xd8] sm:$0xff]
        %v1544 = vld [vmem:[%s3 + $0xe0] sm:$0xff]
        %v1545 = vld [vmem:[%s3 + $0xe8] sm:$0xff]
        %v1546 = vld [vmem:[%s3 + $0xf0] sm:$0xff]
        %v1547 = vld [vmem:[%s3 + $0xf8] sm:$0xff]
        %v1548 = vld [vmem:[%s3 + $0x100] sm:$0xff]
        %v1549 = vld [vmem:[%s3 + $0x108] sm:$0xff]
        %v1550 = vld [vmem:[%s3 + $0x110] sm:$0xff]
        %v1551 = vld [vmem:[%s3 + $0x118] sm:$0xff]
        %v1552 = vld [vmem:[%s3 + $0x120] sm:$0xff]
        %v1553 = vld [vmem:[%s3 + $0x128] sm:$0xff]
        %v1554 = vld [vmem:[%s3 + $0x130] sm:$0xff]
        %v1555 = vld [vmem:[%s3 + $0x138] sm:$0xff]
        %v1556 = vld [vmem:[%s3 + $0x140] sm:$0xff]
        %v1557 = vld [vmem:[%s3 + $0x148] sm:$0xff]
        %v1558 = vld [vmem:[%s3 + $0x150] sm:$0xff]
        %v1559 = vld [vmem:[%s3 + $0x158] sm:$0xff]
        %v1560 = vld [vmem:[%s3 + $0x160] sm:$0xff]
        %v1561 = vld [vmem:[%s3 + $0x168] sm:$0xff]
        %v1562 = vld [vmem:[%s3 + $0x170] sm:$0xff]
        %v1563 = vld [vmem:[%s3 + $0x178] sm:$0xff]
        %v1564 = vld [vmem:[%s4] sm:$0x3]
        %v1566 = vperm.slane %v1564, 0
        %v1567 = vperm.slane %v1564, 1
        %v1618 = vunpack.c.l.b16 %v1516
        %v1619 = vunpack.c.h.b16 %v1516
        %v1620 = vunpack.c.l.b16 %v1517
        %v1621 = vunpack.c.h.b16 %v1517
        %v1622 = vunpack.c.l.b16 %v1518
        %v1623 = vunpack.c.h.b16 %v1518
        %v1624 = vunpack.c.l.b16 %v1519
        %v1625 = vunpack.c.h.b16 %v1519
        %v1626 = vunpack.c.l.b16 %v1520
        %v1627 = vunpack.c.h.b16 %v1520
        %v1628 = vunpack.c.l.b16 %v1521
        %v1629 = vunpack.c.h.b16 %v1521
        %v1630 = vunpack.c.l.b16 %v1522
        %v1631 = vunpack.c.h.b16 %v1522
        %v1632 = vunpack.c.l.b16 %v1523
        %v1633 = vunpack.c.h.b16 %v1523
        %v1634 = vunpack.c.l.b16 %v1524
        %v1635 = vunpack.c.h.b16 %v1524
        %v1636 = vunpack.c.l.b16 %v1525
        %v1637 = vunpack.c.h.b16 %v1525
        %v1638 = vunpack.c.l.b16 %v1526
        %v1639 = vunpack.c.h.b16 %v1526
        %v1640 = vunpack.c.l.b16 %v1527
        %v1641 = vunpack.c.h.b16 %v1527
        %v1642 = vunpack.c.l.b16 %v1528
        %v1643 = vunpack.c.h.b16 %v1528
        %v1644 = vunpack.c.l.b16 %v1529
        %v1645 = vunpack.c.h.b16 %v1529
        %v1646 = vunpack.c.l.b16 %v1530
        %v1647 = vunpack.c.h.b16 %v1530
        %v1648 = vunpack.c.l.b16 %v1531
        %v1649 = vunpack.c.h.b16 %v1531
        %v1650 = vunpack.c.l.b16 %v1532
        %v1651 = vunpack.c.h.b16 %v1532
        %v1652 = vunpack.c.l.b16 %v1533
        %v1653 = vunpack.c.h.b16 %v1533
        %v1654 = vunpack.c.l.b16 %v1534
        %v1655 = vunpack.c.h.b16 %v1534
        %v1656 = vunpack.c.l.b16 %v1535
        %v1657 = vunpack.c.h.b16 %v1535
        %v1658 = vunpack.c.l.b16 %v1536
        %v1659 = vunpack.c.h.b16 %v1536
        %v1660 = vunpack.c.l.b16 %v1537
        %v1661 = vunpack.c.h.b16 %v1537
        %v1662 = vunpack.c.l.b16 %v1538
        %v1663 = vunpack.c.h.b16 %v1538
        %v1664 = vunpack.c.l.b16 %v1539
        %v1665 = vunpack.c.h.b16 %v1539
        %v1666 = vunpack.c.l.b16 %v1540
        %v1667 = vunpack.c.h.b16 %v1540
        %v1668 = vunpack.c.l.b16 %v1541
        %v1669 = vunpack.c.h.b16 %v1541
        %v1670 = vunpack.c.l.b16 %v1542
        %v1671 = vunpack.c.h.b16 %v1542
        %v1672 = vunpack.c.l.b16 %v1543
        %v1673 = vunpack.c.h.b16 %v1543
        %v1674 = vunpack.c.l.b16 %v1544
        %v1675 = vunpack.c.h.b16 %v1544
        %v1676 = vunpack.c.l.b16 %v1545
        %v1677 = vunpack.c.h.b16 %v1545
        %v1678 = vunpack.c.l.b16 %v1546
        %v1679 = vunpack.c.h.b16 %v1546
        %v1680 = vunpack.c.l.b16 %v1547
        %v1681 = vunpack.c.h.b16 %v1547
        %v1682 = vunpack.c.l.b16 %v1548
        %v1683 = vunpack.c.h.b16 %v1548
        %v1684 = vunpack.c.l.b16 %v1549
        %v1685 = vunpack.c.h.b16 %v1549
        %v1686 = vunpack.c.l.b16 %v1550
        %v1687 = vunpack.c.h.b16 %v1550
        %v1688 = vunpack.c.l.b16 %v1551
        %v1689 = vunpack.c.h.b16 %v1551
        %v1690 = vunpack.c.l.b16 %v1552
        %v1691 = vunpack.c.h.b16 %v1552
        %v1692 = vunpack.c.l.b16 %v1553
        %v1693 = vunpack.c.h.b16 %v1553
        %v1694 = vunpack.c.l.b16 %v1554
        %v1695 = vunpack.c.h.b16 %v1554
        %v1696 = vunpack.c.l.b16 %v1555
        %v1697 = vunpack.c.h.b16 %v1555
        %v1698 = vunpack.c.l.b16 %v1556
        %v1699 = vunpack.c.h.b16 %v1556
        %v1700 = vunpack.c.l.b16 %v1557
        %v1701 = vunpack.c.h.b16 %v1557
        %v1702 = vunpack.c.l.b16 %v1558
        %v1703 = vunpack.c.h.b16 %v1558
        %v1704 = vunpack.c.l.b16 %v1559
        %v1705 = vunpack.c.h.b16 %v1559
        %v1706 = vunpack.c.l.b16 %v1560
        %v1707 = vunpack.c.h.b16 %v1560
        %v1708 = vunpack.c.l.b16 %v1561
        %v1709 = vunpack.c.h.b16 %v1561
        %v1710 = vunpack.c.l.b16 %v1562
        %v1711 = vunpack.c.h.b16 %v1562
        %v1712 = vunpack.c.l.b16 %v1563
        %v1713 = vunpack.c.h.b16 %v1563
        %v1714 = vpack.c.b16 %v1620, %v1618
        %v1715 = vpack.c.b16 %v1621, %v1619
        %v1716 = vpack.c.b16 %v1624, %v1622
        %v1717 = vpack.c.b16 %v1625, %v1623
        %v1718 = vpack.c.b16 %v1628, %v1626
        %v1719 = vpack.c.b16 %v1629, %v1627
        %v1720 = vpack.c.b16 %v1632, %v1630
        %v1721 = vpack.c.b16 %v1633, %v1631
        %v1722 = vpack.c.b16 %v1636, %v1634
        %v1723 = vpack.c.b16 %v1637, %v1635
        %v1724 = vpack.c.b16 %v1640, %v1638
        %v1725 = vpack.c.b16 %v1641, %v1639
        %v1726 = vpack.c.b16 %v1644, %v1642
        %v1727 = vpack.c.b16 %v1645, %v1643
        %v1728 = vpack.c.b16 %v1648, %v1646
        %v1729 = vpack.c.b16 %v1649, %v1647
        %v1730 = vpack.c.b16 %v1652, %v1650
        %v1731 = vpack.c.b16 %v1653, %v1651
        %v1732 = vpack.c.b16 %v1656, %v1654
        %v1733 = vpack.c.b16 %v1657, %v1655
        %v1734 = vpack.c.b16 %v1660, %v1658
        %v1735 = vpack.c.b16 %v1661, %v1659
        %v1736 = vpack.c.b16 %v1664, %v1662
        %v1737 = vpack.c.b16 %v1665, %v1663
        %v1738 = vpack.c.b16 %v1668, %v1666
        %v1739 = vpack.c.b16 %v1669, %v1667
        %v1740 = vpack.c.b16 %v1672, %v1670
        %v1741 = vpack.c.b16 %v1673, %v1671
        %v1742 = vpack.c.b16 %v1676, %v1674
        %v1743 = vpack.c.b16 %v1677, %v1675
        %v1744 = vpack.c.b16 %v1680, %v1678
        %v1745 = vpack.c.b16 %v1681, %v1679
        %v1746 = vpack.c.b16 %v1684, %v1682
        %v1747 = vpack.c.b16 %v1685, %v1683
        %v1748 = vpack.c.b16 %v1688, %v1686
        %v1749 = vpack.c.b16 %v1689, %v1687
        %v1750 = vpack.c.b16 %v1692, %v1690
        %v1751 = vpack.c.b16 %v1693, %v1691
        %v1752 = vpack.c.b16 %v1696, %v1694
        %v1753 = vpack.c.b16 %v1697, %v1695
        %v1754 = vpack.c.b16 %v1700, %v1698
        %v1755 = vpack.c.b16 %v1701, %v1699
        %v1756 = vpack.c.b16 %v1704, %v1702
        %v1757 = vpack.c.b16 %v1705, %v1703
        %v1758 = vpack.c.b16 %v1708, %v1706
        %v1759 = vpack.c.b16 %v1709, %v1707
        %v1760 = vpack.c.b16 %v1712, %v1710
        %v1761 = vpack.c.b16 %v1713, %v1711
        %1810 = vmatpush.bf16.msra.mxu0 %v1728
        %1811 = vmatpush.bf16.msra.mxu0 %v1726
        %1812 = vmatpush.bf16.msra.mxu0 %v1724
        %1813 = vmatpush.bf16.msra.mxu0 %v1722
        %1814 = vmatpush.bf16.msra.mxu0 %v1720
        %1815 = vmatpush.bf16.msra.mxu0 %v1718
        %1816 = vmatpush.bf16.msra.mxu0 %v1716
        %1817 = vmatpush.bf16.msra.mxu0 %v1714
        %1818 = vmatmul.bf16.gmra.mxu0 %v1513
        %v1819 = vpop.f32.mrf.mxu0
        %v1820 = vadd.f32 %v1566, %v1819
        %v1821 = vpop.f32.mrf.mxu0
        %1822 = vdwg.mxu0
        %1823 = vmatpush.bf16.msra.mxu0 %v1744
        %1824 = vmatpush.bf16.msra.mxu0 %v1742
        %1825 = vmatpush.bf16.msra.mxu0 %v1740
        %1826 = vmatpush.bf16.msra.mxu0 %v1738
        %1827 = vmatpush.bf16.msra.mxu0 %v1736
        %1828 = vmatpush.bf16.msra.mxu0 %v1734
        %1829 = vmatpush.bf16.msra.mxu0 %v1732
        %1830 = vmatpush.bf16.msra.mxu0 %v1730
        %1831 = vmatmul.bf16.gmra.mxu0 %v1514
        %v1832 = vpop.f32.mrf.mxu0
        %v1833 = vadd.f32 %v1820, %v1832
        %v1834 = vpop.f32.mrf.mxu0
        %1835 = vdwg.mxu0
        %1836 = vmatpush.bf16.msra.mxu0 %v1760
        %1837 = vmatpush.bf16.msra.mxu0 %v1758
        %1838 = vmatpush.bf16.msra.mxu0 %v1756
        %1839 = vmatpush.bf16.msra.mxu0 %v1754
        %1840 = vmatpush.bf16.msra.mxu0 %v1752
        %1841 = vmatpush.bf16.msra.mxu0 %v1750
        %1842 = vmatpush.bf16.msra.mxu0 %v1748
        %1843 = vmatpush.bf16.msra.mxu0 %v1746
        %1844 = vmatmul.bf16.gmra.mxu0 %v1515
        %v1845 = vpop.f32.mrf.mxu0
        %v1846 = vadd.f32 %v1833, %v1845
        %v1847 = vpop.f32.mrf.mxu0
        %1848 = vdwg.mxu0
        %1849 = vmatpush.bf16.msra.mxu0 %v1729
        %1850 = vmatpush.bf16.msra.mxu0 %v1727
        %1851 = vmatpush.bf16.msra.mxu0 %v1725
        %1852 = vmatpush.bf16.msra.mxu0 %v1723
        %1853 = vmatpush.bf16.msra.mxu0 %v1721
        %1854 = vmatpush.bf16.msra.mxu0 %v1719
        %1855 = vmatpush.bf16.msra.mxu0 %v1717
        %1856 = vmatpush.bf16.msra.mxu0 %v1715
        %1857 = vmatmul.bf16.gmra.mxu0 %v1513
        %v1858 = vpop.f32.mrf.mxu0
        %v1859 = vadd.f32 %v1567, %v1858
        %v1860 = vpop.f32.mrf.mxu0
        %1861 = vdwg.mxu0
        %1862 = vmatpush.bf16.msra.mxu0 %v1745
        %1863 = vmatpush.bf16.msra.mxu0 %v1743
        %1864 = vmatpush.bf16.msra.mxu0 %v1741
        %1865 = vmatpush.bf16.msra.mxu0 %v1739
        %1866 = vmatpush.bf16.msra.mxu0 %v1737
        %1867 = vmatpush.bf16.msra.mxu0 %v1735
        %1868 = vmatpush.bf16.msra.mxu0 %v1733
        %1869 = vmatpush.bf16.msra.mxu0 %v1731
        %1870 = vmatmul.bf16.gmra.mxu0 %v1514
        %v1871 = vpop.f32.mrf.mxu0
        %v1872 = vadd.f32 %v1859, %v1871
        %v1873 = vpop.f32.mrf.mxu0
        %1874 = vdwg.mxu0
        %1875 = vmatpush.bf16.msra.mxu0 %v1761
        %1876 = vmatpush.bf16.msra.mxu0 %v1759
        %1877 = vmatpush.bf16.msra.mxu0 %v1757
        %1878 = vmatpush.bf16.msra.mxu0 %v1755
        %1879 = vmatpush.bf16.msra.mxu0 %v1753
        %1880 = vmatpush.bf16.msra.mxu0 %v1751
        %1881 = vmatpush.bf16.msra.mxu0 %v1749
        %1882 = vmatpush.bf16.msra.mxu0 %v1747
        %1883 = vmatmul.bf16.gmra.mxu0 %v1515
        %v1884 = vpop.f32.mrf.mxu0
        %v1885 = vadd.f32 %v1872, %v1884
        %v1886 = vpop.f32.mrf.mxu0
        %1887 = vdwg.mxu0
        %v1888 = vmax.f32 %v1846, 0.0
        %v1889 = vmax.f32 %v1885, 0.0
        %v1890 = vpack.c.bf16 %v1889, %v1888
        %1891 = vst [vmem:[#allocation4] sm:$0xff] %v1890
        %v1892 = vld [vmem:[%s1311] sm:$0xf]
        %v1893 = vld [vmem:[%s1331] sm:$0xf]
        %v1894 = vld [vmem:[%s1351] sm:$0xf]
        %v1895 = vld [vmem:[%s3] sm:$0xff]
        %v1896 = vld [vmem:[%s3 + $0x8] sm:$0xff]
        %v1897 = vld [vmem:[%s3 + $0x10] sm:$0xff]
        %v1898 = vld [vmem:[%s3 + $0x18] sm:$0xff]
        %v1899 = vld [vmem:[%s3 + $0x20] sm:$0xff]
        %v1900 = vld [vmem:[%s3 + $0x28] sm:$0xff]
        %v1901 = vld [vmem:[%s3 + $0x30] sm:$0xff]
        %v1902 = vld [vmem:[%s3 + $0x38] sm:$0xff]
        %v1903 = vld [vmem:[%s3 + $0x40] sm:$0xff]
        %v1904 = vld [vmem:[%s3 + $0x48] sm:$0xff]
        %v1905 = vld [vmem:[%s3 + $0x50] sm:$0xff]
        %v1906 = vld [vmem:[%s3 + $0x58] sm:$0xff]
        %v1907 = vld [vmem:[%s3 + $0x60] sm:$0xff]
        %v1908 = vld [vmem:[%s3 + $0x68] sm:$0xff]
        %v1909 = vld [vmem:[%s3 + $0x70] sm:$0xff]
        %v1910 = vld [vmem:[%s3 + $0x78] sm:$0xff]
        %v1911 = vld [vmem:[%s3 + $0x80] sm:$0xff]
        %v1912 = vld [vmem:[%s3 + $0x88] sm:$0xff]
        %v1913 = vld [vmem:[%s3 + $0x90] sm:$0xff]
        %v1914 = vld [vmem:[%s3 + $0x98] sm:$0xff]
        %v1915 = vld [vmem:[%s3 + $0xa0] sm:$0xff]
        %v1916 = vld [vmem:[%s3 + $0xa8] sm:$0xff]
        %v1917 = vld [vmem:[%s3 + $0xb0] sm:$0xff]
        %v1918 = vld [vmem:[%s3 + $0xb8] sm:$0xff]
        %v1919 = vld [vmem:[%s3 + $0xc0] sm:$0xff]
        %v1920 = vld [vmem:[%s3 + $0xc8] sm:$0xff]
        %v1921 = vld [vmem:[%s3 + $0xd0] sm:$0xff]
        %v1922 = vld [vmem:[%s3 + $0xd8] sm:$0xff]
        %v1923 = vld [vmem:[%s3 + $0xe0] sm:$0xff]
        %v1924 = vld [vmem:[%s3 + $0xe8] sm:$0xff]
        %v1925 = vld [vmem:[%s3 + $0xf0] sm:$0xff]
        %v1926 = vld [vmem:[%s3 + $0xf8] sm:$0xff]
        %v1927 = vld [vmem:[%s3 + $0x100] sm:$0xff]
        %v1928 = vld [vmem:[%s3 + $0x108] sm:$0xff]
        %v1929 = vld [vmem:[%s3 + $0x110] sm:$0xff]
        %v1930 = vld [vmem:[%s3 + $0x118] sm:$0xff]
        %v1931 = vld [vmem:[%s3 + $0x120] sm:$0xff]
        %v1932 = vld [vmem:[%s3 + $0x128] sm:$0xff]
        %v1933 = vld [vmem:[%s3 + $0x130] sm:$0xff]
        %v1934 = vld [vmem:[%s3 + $0x138] sm:$0xff]
        %v1935 = vld [vmem:[%s3 + $0x140] sm:$0xff]
        %v1936 = vld [vmem:[%s3 + $0x148] sm:$0xff]
        %v1937 = vld [vmem:[%s3 + $0x150] sm:$0xff]
        %v1938 = vld [vmem:[%s3 + $0x158] sm:$0xff]
        %v1939 = vld [vmem:[%s3 + $0x160] sm:$0xff]
        %v1940 = vld [vmem:[%s3 + $0x168] sm:$0xff]
        %v1941 = vld [vmem:[%s3 + $0x170] sm:$0xff]
        %v1942 = vld [vmem:[%s3 + $0x178] sm:$0xff]
        %v1943 = vld [vmem:[%s4] sm:$0x3]
        %v1945 = vperm.slane %v1943, 0
        %v1946 = vperm.slane %v1943, 1
        %v1997 = vunpack.c.l.b16 %v1895
        %v1998 = vunpack.c.h.b16 %v1895
        %v1999 = vunpack.c.l.b16 %v1896
        %v2000 = vunpack.c.h.b16 %v1896
        %v2001 = vunpack.c.l.b16 %v1897
        %v2002 = vunpack.c.h.b16 %v1897
        %v2003 = vunpack.c.l.b16 %v1898
        %v2004 = vunpack.c.h.b16 %v1898
        %v2005 = vunpack.c.l.b16 %v1899
        %v2006 = vunpack.c.h.b16 %v1899
        %v2007 = vunpack.c.l.b16 %v1900
        %v2008 = vunpack.c.h.b16 %v1900
        %v2009 = vunpack.c.l.b16 %v1901
        %v2010 = vunpack.c.h.b16 %v1901
        %v2011 = vunpack.c.l.b16 %v1902
        %v2012 = vunpack.c.h.b16 %v1902
        %v2013 = vunpack.c.l.b16 %v1903
        %v2014 = vunpack.c.h.b16 %v1903
        %v2015 = vunpack.c.l.b16 %v1904
        %v2016 = vunpack.c.h.b16 %v1904
        %v2017 = vunpack.c.l.b16 %v1905
        %v2018 = vunpack.c.h.b16 %v1905
        %v2019 = vunpack.c.l.b16 %v1906
        %v2020 = vunpack.c.h.b16 %v1906
        %v2021 = vunpack.c.l.b16 %v1907
        %v2022 = vunpack.c.h.b16 %v1907
        %v2023 = vunpack.c.l.b16 %v1908
        %v2024 = vunpack.c.h.b16 %v1908
        %v2025 = vunpack.c.l.b16 %v1909
        %v2026 = vunpack.c.h.b16 %v1909
        %v2027 = vunpack.c.l.b16 %v1910
        %v2028 = vunpack.c.h.b16 %v1910
        %v2029 = vunpack.c.l.b16 %v1911
        %v2030 = vunpack.c.h.b16 %v1911
        %v2031 = vunpack.c.l.b16 %v1912
        %v2032 = vunpack.c.h.b16 %v1912
        %v2033 = vunpack.c.l.b16 %v1913
        %v2034 = vunpack.c.h.b16 %v1913
        %v2035 = vunpack.c.l.b16 %v1914
        %v2036 = vunpack.c.h.b16 %v1914
        %v2037 = vunpack.c.l.b16 %v1915
        %v2038 = vunpack.c.h.b16 %v1915
        %v2039 = vunpack.c.l.b16 %v1916
        %v2040 = vunpack.c.h.b16 %v1916
        %v2041 = vunpack.c.l.b16 %v1917
        %v2042 = vunpack.c.h.b16 %v1917
        %v2043 = vunpack.c.l.b16 %v1918
        %v2044 = vunpack.c.h.b16 %v1918
        %v2045 = vunpack.c.l.b16 %v1919
        %v2046 = vunpack.c.h.b16 %v1919
        %v2047 = vunpack.c.l.b16 %v1920
        %v2048 = vunpack.c.h.b16 %v1920
        %v2049 = vunpack.c.l.b16 %v1921
        %v2050 = vunpack.c.h.b16 %v1921
        %v2051 = vunpack.c.l.b16 %v1922
        %v2052 = vunpack.c.h.b16 %v1922
        %v2053 = vunpack.c.l.b16 %v1923
        %v2054 = vunpack.c.h.b16 %v1923
        %v2055 = vunpack.c.l.b16 %v1924
        %v2056 = vunpack.c.h.b16 %v1924
        %v2057 = vunpack.c.l.b16 %v1925
        %v2058 = vunpack.c.h.b16 %v1925
        %v2059 = vunpack.c.l.b16 %v1926
        %v2060 = vunpack.c.h.b16 %v1926
        %v2061 = vunpack.c.l.b16 %v1927
        %v2062 = vunpack.c.h.b16 %v1927
        %v2063 = vunpack.c.l.b16 %v1928
        %v2064 = vunpack.c.h.b16 %v1928
        %v2065 = vunpack.c.l.b16 %v1929
        %v2066 = vunpack.c.h.b16 %v1929
        %v2067 = vunpack.c.l.b16 %v1930
        %v2068 = vunpack.c.h.b16 %v1930
        %v2069 = vunpack.c.l.b16 %v1931
        %v2070 = vunpack.c.h.b16 %v1931
        %v2071 = vunpack.c.l.b16 %v1932
        %v2072 = vunpack.c.h.b16 %v1932
        %v2073 = vunpack.c.l.b16 %v1933
        %v2074 = vunpack.c.h.b16 %v1933
        %v2075 = vunpack.c.l.b16 %v1934
        %v2076 = vunpack.c.h.b16 %v1934
        %v2077 = vunpack.c.l.b16 %v1935
        %v2078 = vunpack.c.h.b16 %v1935
        %v2079 = vunpack.c.l.b16 %v1936
        %v2080 = vunpack.c.h.b16 %v1936
        %v2081 = vunpack.c.l.b16 %v1937
        %v2082 = vunpack.c.h.b16 %v1937
        %v2083 = vunpack.c.l.b16 %v1938
        %v2084 = vunpack.c.h.b16 %v1938
        %v2085 = vunpack.c.l.b16 %v1939
        %v2086 = vunpack.c.h.b16 %v1939
        %v2087 = vunpack.c.l.b16 %v1940
        %v2088 = vunpack.c.h.b16 %v1940
        %v2089 = vunpack.c.l.b16 %v1941
        %v2090 = vunpack.c.h.b16 %v1941
        %v2091 = vunpack.c.l.b16 %v1942
        %v2092 = vunpack.c.h.b16 %v1942
        %v2093 = vpack.c.b16 %v1999, %v1997
        %v2094 = vpack.c.b16 %v2000, %v1998
        %v2095 = vpack.c.b16 %v2003, %v2001
        %v2096 = vpack.c.b16 %v2004, %v2002
        %v2097 = vpack.c.b16 %v2007, %v2005
        %v2098 = vpack.c.b16 %v2008, %v2006
        %v2099 = vpack.c.b16 %v2011, %v2009
        %v2100 = vpack.c.b16 %v2012, %v2010
        %v2101 = vpack.c.b16 %v2015, %v2013
        %v2102 = vpack.c.b16 %v2016, %v2014
        %v2103 = vpack.c.b16 %v2019, %v2017
        %v2104 = vpack.c.b16 %v2020, %v2018
        %v2105 = vpack.c.b16 %v2023, %v2021
        %v2106 = vpack.c.b16 %v2024, %v2022
        %v2107 = vpack.c.b16 %v2027, %v2025
        %v2108 = vpack.c.b16 %v2028, %v2026
        %v2109 = vpack.c.b16 %v2031, %v2029
        %v2110 = vpack.c.b16 %v2032, %v2030
        %v2111 = vpack.c.b16 %v2035, %v2033
        %v2112 = vpack.c.b16 %v2036, %v2034
        %v2113 = vpack.c.b16 %v2039, %v2037
        %v2114 = vpack.c.b16 %v2040, %v2038
        %v2115 = vpack.c.b16 %v2043, %v2041
        %v2116 = vpack.c.b16 %v2044, %v2042
        %v2117 = vpack.c.b16 %v2047, %v2045
        %v2118 = vpack.c.b16 %v2048, %v2046
        %v2119 = vpack.c.b16 %v2051, %v2049
        %v2120 = vpack.c.b16 %v2052, %v2050
        %v2121 = vpack.c.b16 %v2055, %v2053
        %v2122 = vpack.c.b16 %v2056, %v2054
        %v2123 = vpack.c.b16 %v2059, %v2057
        %v2124 = vpack.c.b16 %v2060, %v2058
        %v2125 = vpack.c.b16 %v2063, %v2061
        %v2126 = vpack.c.b16 %v2064, %v2062
        %v2127 = vpack.c.b16 %v2067, %v2065
        %v2128 = vpack.c.b16 %v2068, %v2066
        %v2129 = vpack.c.b16 %v2071, %v2069
        %v2130 = vpack.c.b16 %v2072, %v2070
        %v2131 = vpack.c.b16 %v2075, %v2073
        %v2132 = vpack.c.b16 %v2076, %v2074
        %v2133 = vpack.c.b16 %v2079, %v2077
        %v2134 = vpack.c.b16 %v2080, %v2078
        %v2135 = vpack.c.b16 %v2083, %v2081
        %v2136 = vpack.c.b16 %v2084, %v2082
        %v2137 = vpack.c.b16 %v2087, %v2085
        %v2138 = vpack.c.b16 %v2088, %v2086
        %v2139 = vpack.c.b16 %v2091, %v2089
        %v2140 = vpack.c.b16 %v2092, %v2090
        %2189 = vmatpush.bf16.msra.mxu0 %v2107
        %2190 = vmatpush.bf16.msra.mxu0 %v2105
        %2191 = vmatpush.bf16.msra.mxu0 %v2103
        %2192 = vmatpush.bf16.msra.mxu0 %v2101
        %2193 = vmatpush.bf16.msra.mxu0 %v2099
        %2194 = vmatpush.bf16.msra.mxu0 %v2097
        %2195 = vmatpush.bf16.msra.mxu0 %v2095
        %2196 = vmatpush.bf16.msra.mxu0 %v2093
        %2197 = vmatmul.bf16.gmra.mxu0 %v1892
        %v2198 = vpop.f32.mrf.mxu0
        %v2199 = vadd.f32 %v1945, %v2198
        %v2200 = vpop.f32.mrf.mxu0
        %2201 = vdwg.mxu0
        %2202 = vmatpush.bf16.msra.mxu0 %v2123
        %2203 = vmatpush.bf16.msra.mxu0 %v2121
        %2204 = vmatpush.bf16.msra.mxu0 %v2119
        %2205 = vmatpush.bf16.msra.mxu0 %v2117
        %2206 = vmatpush.bf16.msra.mxu0 %v2115
        %2207 = vmatpush.bf16.msra.mxu0 %v2113
        %2208 = vmatpush.bf16.msra.mxu0 %v2111
        %2209 = vmatpush.bf16.msra.mxu0 %v2109
        %2210 = vmatmul.bf16.gmra.mxu0 %v1893
        %v2211 = vpop.f32.mrf.mxu0
        %v2212 = vadd.f32 %v2199, %v2211
        %v2213 = vpop.f32.mrf.mxu0
        %2214 = vdwg.mxu0
        %2215 = vmatpush.bf16.msra.mxu0 %v2139
        %2216 = vmatpush.bf16.msra.mxu0 %v2137
        %2217 = vmatpush.bf16.msra.mxu0 %v2135
        %2218 = vmatpush.bf16.msra.mxu0 %v2133
        %2219 = vmatpush.bf16.msra.mxu0 %v2131
        %2220 = vmatpush.bf16.msra.mxu0 %v2129
        %2221 = vmatpush.bf16.msra.mxu0 %v2127
        %2222 = vmatpush.bf16.msra.mxu0 %v2125
        %2223 = vmatmul.bf16.gmra.mxu0 %v1894
        %v2224 = vpop.f32.mrf.mxu0
        %v2225 = vadd.f32 %v2212, %v2224
        %v2226 = vpop.f32.mrf.mxu0
        %2227 = vdwg.mxu0
        %2228 = vmatpush.bf16.msra.mxu0 %v2108
        %2229 = vmatpush.bf16.msra.mxu0 %v2106
        %2230 = vmatpush.bf16.msra.mxu0 %v2104
        %2231 = vmatpush.bf16.msra.mxu0 %v2102
        %2232 = vmatpush.bf16.msra.mxu0 %v2100
        %2233 = vmatpush.bf16.msra.mxu0 %v2098
        %2234 = vmatpush.bf16.msra.mxu0 %v2096
        %2235 = vmatpush.bf16.msra.mxu0 %v2094
        %2236 = vmatmul.bf16.gmra.mxu0 %v1892
        %v2237 = vpop.f32.mrf.mxu0
        %v2238 = vadd.f32 %v1946, %v2237
        %v2239 = vpop.f32.mrf.mxu0
        %2240 = vdwg.mxu0
        %2241 = vmatpush.bf16.msra.mxu0 %v2124
        %2242 = vmatpush.bf16.msra.mxu0 %v2122
        %2243 = vmatpush.bf16.msra.mxu0 %v2120
        %2244 = vmatpush.bf16.msra.mxu0 %v2118
        %2245 = vmatpush.bf16.msra.mxu0 %v2116
        %2246 = vmatpush.bf16.msra.mxu0 %v2114
        %2247 = vmatpush.bf16.msra.mxu0 %v2112
        %2248 = vmatpush.bf16.msra.mxu0 %v2110
        %2249 = vmatmul.bf16.gmra.mxu0 %v1893
        %v2250 = vpop.f32.mrf.mxu0
        %v2251 = vadd.f32 %v2238, %v2250
        %v2252 = vpop.f32.mrf.mxu0
        %2253 = vdwg.mxu0
        %2254 = vmatpush.bf16.msra.mxu0 %v2140
        %2255 = vmatpush.bf16.msra.mxu0 %v2138
        %2256 = vmatpush.bf16.msra.mxu0 %v2136
        %2257 = vmatpush.bf16.msra.mxu0 %v2134
        %2258 = vmatpush.bf16.msra.mxu0 %v2132
        %2259 = vmatpush.bf16.msra.mxu0 %v2130
        %2260 = vmatpush.bf16.msra.mxu0 %v2128
        %2261 = vmatpush.bf16.msra.mxu0 %v2126
        %2262 = vmatmul.bf16.gmra.mxu0 %v1894
        %v2263 = vpop.f32.mrf.mxu0
        %v2264 = vadd.f32 %v2251, %v2263
        %v2265 = vpop.f32.mrf.mxu0
        %2266 = vdwg.mxu0
        %v2267 = vmax.f32 %v2225, 0.0
        %v2268 = vmax.f32 %v2264, 0.0
        %v2269 = vpack.c.bf16 %v2268, %v2267
        %2270 = vst [vmem:[#allocation4 + $0x8] sm:$0xff] %v2269
        %v2271 = vld [vmem:[%s1331] sm:$0xf]
        %v2272 = vld [vmem:[%s1351] sm:$0xf]
        %v2273 = vld [vmem:[%s1371] sm:$0xf]
        %v2274 = vld [vmem:[%s3] sm:$0xff]
        %v2275 = vld [vmem:[%s3 + $0x8] sm:$0xff]
        %v2276 = vld [vmem:[%s3 + $0x10] sm:$0xff]
        %v2277 = vld [vmem:[%s3 + $0x18] sm:$0xff]
        %v2278 = vld [vmem:[%s3 + $0x20] sm:$0xff]
        %v2279 = vld [vmem:[%s3 + $0x28] sm:$0xff]
        %v2280 = vld [vmem:[%s3 + $0x30] sm:$0xff]
        %v2281 = vld [vmem:[%s3 + $0x38] sm:$0xff]
        %v2282 = vld [vmem:[%s3 + $0x40] sm:$0xff]
        %v2283 = vld [vmem:[%s3 + $0x48] sm:$0xff]
        %v2284 = vld [vmem:[%s3 + $0x50] sm:$0xff]
        %v2285 = vld [vmem:[%s3 + $0x58] sm:$0xff]
        %v2286 = vld [vmem:[%s3 + $0x60] sm:$0xff]
        %v2287 = vld [vmem:[%s3 + $0x68] sm:$0xff]
        %v2288 = vld [vmem:[%s3 + $0x70] sm:$0xff]
        %v2289 = vld [vmem:[%s3 + $0x78] sm:$0xff]
        %v2290 = vld [vmem:[%s3 + $0x80] sm:$0xff]
        %v2291 = vld [vmem:[%s3 + $0x88] sm:$0xff]
        %v2292 = vld [vmem:[%s3 + $0x90] sm:$0xff]
        %v2293 = vld [vmem:[%s3 + $0x98] sm:$0xff]
        %v2294 = vld [vmem:[%s3 + $0xa0] sm:$0xff]
        %v2295 = vld [vmem:[%s3 + $0xa8] sm:$0xff]
        %v2296 = vld [vmem:[%s3 + $0xb0] sm:$0xff]
        %v2297 = vld [vmem:[%s3 + $0xb8] sm:$0xff]
        %v2298 = vld [vmem:[%s3 + $0xc0] sm:$0xff]
        %v2299 = vld [vmem:[%s3 + $0xc8] sm:$0xff]
        %v2300 = vld [vmem:[%s3 + $0xd0] sm:$0xff]
        %v2301 = vld [vmem:[%s3 + $0xd8] sm:$0xff]
        %v2302 = vld [vmem:[%s3 + $0xe0] sm:$0xff]
        %v2303 = vld [vmem:[%s3 + $0xe8] sm:$0xff]
        %v2304 = vld [vmem:[%s3 + $0xf0] sm:$0xff]
        %v2305 = vld [vmem:[%s3 + $0xf8] sm:$0xff]
        %v2306 = vld [vmem:[%s3 + $0x100] sm:$0xff]
        %v2307 = vld [vmem:[%s3 + $0x108] sm:$0xff]
        %v2308 = vld [vmem:[%s3 + $0x110] sm:$0xff]
        %v2309 = vld [vmem:[%s3 + $0x118] sm:$0xff]
        %v2310 = vld [vmem:[%s3 + $0x120] sm:$0xff]
        %v2311 = vld [vmem:[%s3 + $0x128] sm:$0xff]
        %v2312 = vld [vmem:[%s3 + $0x130] sm:$0xff]
        %v2313 = vld [vmem:[%s3 + $0x138] sm:$0xff]
        %v2314 = vld [vmem:[%s3 + $0x140] sm:$0xff]
        %v2315 = vld [vmem:[%s3 + $0x148] sm:$0xff]
        %v2316 = vld [vmem:[%s3 + $0x150] sm:$0xff]
        %v2317 = vld [vmem:[%s3 + $0x158] sm:$0xff]
        %v2318 = vld [vmem:[%s3 + $0x160] sm:$0xff]
        %v2319 = vld [vmem:[%s3 + $0x168] sm:$0xff]
        %v2320 = vld [vmem:[%s3 + $0x170] sm:$0xff]
        %v2321 = vld [vmem:[%s3 + $0x178] sm:$0xff]
        %v2322 = vld [vmem:[%s4] sm:$0x3]
        %v2324 = vperm.slane %v2322, 0
        %v2325 = vperm.slane %v2322, 1
        %v2376 = vunpack.c.l.b16 %v2274
        %v2377 = vunpack.c.h.b16 %v2274
        %v2378 = vunpack.c.l.b16 %v2275
        %v2379 = vunpack.c.h.b16 %v2275
        %v2380 = vunpack.c.l.b16 %v2276
        %v2381 = vunpack.c.h.b16 %v2276
        %v2382 = vunpack.c.l.b16 %v2277
        %v2383 = vunpack.c.h.b16 %v2277
        %v2384 = vunpack.c.l.b16 %v2278
        %v2385 = vunpack.c.h.b16 %v2278
        %v2386 = vunpack.c.l.b16 %v2279
        %v2387 = vunpack.c.h.b16 %v2279
        %v2388 = vunpack.c.l.b16 %v2280
        %v2389 = vunpack.c.h.b16 %v2280
        %v2390 = vunpack.c.l.b16 %v2281
        %v2391 = vunpack.c.h.b16 %v2281
        %v2392 = vunpack.c.l.b16 %v2282
        %v2393 = vunpack.c.h.b16 %v2282
        %v2394 = vunpack.c.l.b16 %v2283
        %v2395 = vunpack.c.h.b16 %v2283
        %v2396 = vunpack.c.l.b16 %v2284
        %v2397 = vunpack.c.h.b16 %v2284
        %v2398 = vunpack.c.l.b16 %v2285
        %v2399 = vunpack.c.h.b16 %v2285
        %v2400 = vunpack.c.l.b16 %v2286
        %v2401 = vunpack.c.h.b16 %v2286
        %v2402 = vunpack.c.l.b16 %v2287
        %v2403 = vunpack.c.h.b16 %v2287
        %v2404 = vunpack.c.l.b16 %v2288
        %v2405 = vunpack.c.h.b16 %v2288
        %v2406 = vunpack.c.l.b16 %v2289
        %v2407 = vunpack.c.h.b16 %v2289
        %v2408 = vunpack.c.l.b16 %v2290
        %v2409 = vunpack.c.h.b16 %v2290
        %v2410 = vunpack.c.l.b16 %v2291
        %v2411 = vunpack.c.h.b16 %v2291
        %v2412 = vunpack.c.l.b16 %v2292
        %v2413 = vunpack.c.h.b16 %v2292
        %v2414 = vunpack.c.l.b16 %v2293
        %v2415 = vunpack.c.h.b16 %v2293
        %v2416 = vunpack.c.l.b16 %v2294
        %v2417 = vunpack.c.h.b16 %v2294
        %v2418 = vunpack.c.l.b16 %v2295
        %v2419 = vunpack.c.h.b16 %v2295
        %v2420 = vunpack.c.l.b16 %v2296
        %v2421 = vunpack.c.h.b16 %v2296
        %v2422 = vunpack.c.l.b16 %v2297
        %v2423 = vunpack.c.h.b16 %v2297
        %v2424 = vunpack.c.l.b16 %v2298
        %v2425 = vunpack.c.h.b16 %v2298
        %v2426 = vunpack.c.l.b16 %v2299
        %v2427 = vunpack.c.h.b16 %v2299
        %v2428 = vunpack.c.l.b16 %v2300
        %v2429 = vunpack.c.h.b16 %v2300
        %v2430 = vunpack.c.l.b16 %v2301
        %v2431 = vunpack.c.h.b16 %v2301
        %v2432 = vunpack.c.l.b16 %v2302
        %v2433 = vunpack.c.h.b16 %v2302
        %v2434 = vunpack.c.l.b16 %v2303
        %v2435 = vunpack.c.h.b16 %v2303
        %v2436 = vunpack.c.l.b16 %v2304
        %v2437 = vunpack.c.h.b16 %v2304
        %v2438 = vunpack.c.l.b16 %v2305
        %v2439 = vunpack.c.h.b16 %v2305
        %v2440 = vunpack.c.l.b16 %v2306
        %v2441 = vunpack.c.h.b16 %v2306
        %v2442 = vunpack.c.l.b16 %v2307
        %v2443 = vunpack.c.h.b16 %v2307
        %v2444 = vunpack.c.l.b16 %v2308
        %v2445 = vunpack.c.h.b16 %v2308
        %v2446 = vunpack.c.l.b16 %v2309
        %v2447 = vunpack.c.h.b16 %v2309
        %v2448 = vunpack.c.l.b16 %v2310
        %v2449 = vunpack.c.h.b16 %v2310
        %v2450 = vunpack.c.l.b16 %v2311
        %v2451 = vunpack.c.h.b16 %v2311
        %v2452 = vunpack.c.l.b16 %v2312
        %v2453 = vunpack.c.h.b16 %v2312
        %v2454 = vunpack.c.l.b16 %v2313
        %v2455 = vunpack.c.h.b16 %v2313
        %v2456 = vunpack.c.l.b16 %v2314
        %v2457 = vunpack.c.h.b16 %v2314
        %v2458 = vunpack.c.l.b16 %v2315
        %v2459 = vunpack.c.h.b16 %v2315
        %v2460 = vunpack.c.l.b16 %v2316
        %v2461 = vunpack.c.h.b16 %v2316
        %v2462 = vunpack.c.l.b16 %v2317
        %v2463 = vunpack.c.h.b16 %v2317
        %v2464 = vunpack.c.l.b16 %v2318
        %v2465 = vunpack.c.h.b16 %v2318
        %v2466 = vunpack.c.l.b16 %v2319
        %v2467 = vunpack.c.h.b16 %v2319
        %v2468 = vunpack.c.l.b16 %v2320
        %v2469 = vunpack.c.h.b16 %v2320
        %v2470 = vunpack.c.l.b16 %v2321
        %v2471 = vunpack.c.h.b16 %v2321
        %v2472 = vpack.c.b16 %v2378, %v2376
        %v2473 = vpack.c.b16 %v2379, %v2377
        %v2474 = vpack.c.b16 %v2382, %v2380
        %v2475 = vpack.c.b16 %v2383, %v2381
        %v2476 = vpack.c.b16 %v2386, %v2384
        %v2477 = vpack.c.b16 %v2387, %v2385
        %v2478 = vpack.c.b16 %v2390, %v2388
        %v2479 = vpack.c.b16 %v2391, %v2389
        %v2480 = vpack.c.b16 %v2394, %v2392
        %v2481 = vpack.c.b16 %v2395, %v2393
        %v2482 = vpack.c.b16 %v2398, %v2396
        %v2483 = vpack.c.b16 %v2399, %v2397
        %v2484 = vpack.c.b16 %v2402, %v2400
        %v2485 = vpack.c.b16 %v2403, %v2401
        %v2486 = vpack.c.b16 %v2406, %v2404
        %v2487 = vpack.c.b16 %v2407, %v2405
        %v2488 = vpack.c.b16 %v2410, %v2408
        %v2489 = vpack.c.b16 %v2411, %v2409
        %v2490 = vpack.c.b16 %v2414, %v2412
        %v2491 = vpack.c.b16 %v2415, %v2413
        %v2492 = vpack.c.b16 %v2418, %v2416
        %v2493 = vpack.c.b16 %v2419, %v2417
        %v2494 = vpack.c.b16 %v2422, %v2420
        %v2495 = vpack.c.b16 %v2423, %v2421
        %v2496 = vpack.c.b16 %v2426, %v2424
        %v2497 = vpack.c.b16 %v2427, %v2425
        %v2498 = vpack.c.b16 %v2430, %v2428
        %v2499 = vpack.c.b16 %v2431, %v2429
        %v2500 = vpack.c.b16 %v2434, %v2432
        %v2501 = vpack.c.b16 %v2435, %v2433
        %v2502 = vpack.c.b16 %v2438, %v2436
        %v2503 = vpack.c.b16 %v2439, %v2437
        %v2504 = vpack.c.b16 %v2442, %v2440
        %v2505 = vpack.c.b16 %v2443, %v2441
        %v2506 = vpack.c.b16 %v2446, %v2444
        %v2507 = vpack.c.b16 %v2447, %v2445
        %v2508 = vpack.c.b16 %v2450, %v2448
        %v2509 = vpack.c.b16 %v2451, %v2449
        %v2510 = vpack.c.b16 %v2454, %v2452
        %v2511 = vpack.c.b16 %v2455, %v2453
        %v2512 = vpack.c.b16 %v2458, %v2456
        %v2513 = vpack.c.b16 %v2459, %v2457
        %v2514 = vpack.c.b16 %v2462, %v2460
        %v2515 = vpack.c.b16 %v2463, %v2461
        %v2516 = vpack.c.b16 %v2466, %v2464
        %v2517 = vpack.c.b16 %v2467, %v2465
        %v2518 = vpack.c.b16 %v2470, %v2468
        %v2519 = vpack.c.b16 %v2471, %v2469
        %2568 = vmatpush.bf16.msra.mxu0 %v2486
        %2569 = vmatpush.bf16.msra.mxu0 %v2484
        %2570 = vmatpush.bf16.msra.mxu0 %v2482
        %2571 = vmatpush.bf16.msra.mxu0 %v2480
        %2572 = vmatpush.bf16.msra.mxu0 %v2478
        %2573 = vmatpush.bf16.msra.mxu0 %v2476
        %2574 = vmatpush.bf16.msra.mxu0 %v2474
        %2575 = vmatpush.bf16.msra.mxu0 %v2472
        %2576 = vmatmul.bf16.gmra.mxu0 %v2271
        %v2577 = vpop.f32.mrf.mxu0
        %v2578 = vadd.f32 %v2324, %v2577
        %v2579 = vpop.f32.mrf.mxu0
        %2580 = vdwg.mxu0
        %2581 = vmatpush.bf16.msra.mxu0 %v2502
        %2582 = vmatpush.bf16.msra.mxu0 %v2500
        %2583 = vmatpush.bf16.msra.mxu0 %v2498
        %2584 = vmatpush.bf16.msra.mxu0 %v2496
        %2585 = vmatpush.bf16.msra.mxu0 %v2494
        %2586 = vmatpush.bf16.msra.mxu0 %v2492
        %2587 = vmatpush.bf16.msra.mxu0 %v2490
        %2588 = vmatpush.bf16.msra.mxu0 %v2488
        %2589 = vmatmul.bf16.gmra.mxu0 %v2272
        %v2590 = vpop.f32.mrf.mxu0
        %v2591 = vadd.f32 %v2578, %v2590
        %v2592 = vpop.f32.mrf.mxu0
        %2593 = vdwg.mxu0
        %2594 = vmatpush.bf16.msra.mxu0 %v2518
        %2595 = vmatpush.bf16.msra.mxu0 %v2516
        %2596 = vmatpush.bf16.msra.mxu0 %v2514
        %2597 = vmatpush.bf16.msra.mxu0 %v2512
        %2598 = vmatpush.bf16.msra.mxu0 %v2510
        %2599 = vmatpush.bf16.msra.mxu0 %v2508
        %2600 = vmatpush.bf16.msra.mxu0 %v2506
        %2601 = vmatpush.bf16.msra.mxu0 %v2504
        %2602 = vmatmul.bf16.gmra.mxu0 %v2273
        %v2603 = vpop.f32.mrf.mxu0
        %v2604 = vadd.f32 %v2591, %v2603
        %v2605 = vpop.f32.mrf.mxu0
        %2606 = vdwg.mxu0
        %2607 = vmatpush.bf16.msra.mxu0 %v2487
        %2608 = vmatpush.bf16.msra.mxu0 %v2485
        %2609 = vmatpush.bf16.msra.mxu0 %v2483
        %2610 = vmatpush.bf16.msra.mxu0 %v2481
        %2611 = vmatpush.bf16.msra.mxu0 %v2479
        %2612 = vmatpush.bf16.msra.mxu0 %v2477
        %2613 = vmatpush.bf16.msra.mxu0 %v2475
        %2614 = vmatpush.bf16.msra.mxu0 %v2473
        %2615 = vmatmul.bf16.gmra.mxu0 %v2271
        %v2616 = vpop.f32.mrf.mxu0
        %v2617 = vadd.f32 %v2325, %v2616
        %v2618 = vpop.f32.mrf.mxu0
        %2619 = vdwg.mxu0
        %2620 = vmatpush.bf16.msra.mxu0 %v2503
        %2621 = vmatpush.bf16.msra.mxu0 %v2501
        %2622 = vmatpush.bf16.msra.mxu0 %v2499
        %2623 = vmatpush.bf16.msra.mxu0 %v2497
        %2624 = vmatpush.bf16.msra.mxu0 %v2495
        %2625 = vmatpush.bf16.msra.mxu0 %v2493
        %2626 = vmatpush.bf16.msra.mxu0 %v2491
        %2627 = vmatpush.bf16.msra.mxu0 %v2489
        %2628 = vmatmul.bf16.gmra.mxu0 %v2272
        %v2629 = vpop.f32.mrf.mxu0
        %v2630 = vadd.f32 %v2617, %v2629
        %v2631 = vpop.f32.mrf.mxu0
        %2632 = vdwg.mxu0
        %2633 = vmatpush.bf16.msra.mxu0 %v2519
        %2634 = vmatpush.bf16.msra.mxu0 %v2517
        %2635 = vmatpush.bf16.msra.mxu0 %v2515
        %2636 = vmatpush.bf16.msra.mxu0 %v2513
        %2637 = vmatpush.bf16.msra.mxu0 %v2511
        %2638 = vmatpush.bf16.msra.mxu0 %v2509
        %2639 = vmatpush.bf16.msra.mxu0 %v2507
        %2640 = vmatpush.bf16.msra.mxu0 %v2505
        %2641 = vmatmul.bf16.gmra.mxu0 %v2273
        %v2642 = vpop.f32.mrf.mxu0
        %v2643 = vadd.f32 %v2630, %v2642
        %v2644 = vpop.f32.mrf.mxu0
        %2645 = vdwg.mxu0
        %v2646 = vmax.f32 %v2604, 0.0
        %v2647 = vmax.f32 %v2643, 0.0
        %v2648 = vpack.c.bf16 %v2647, %v2646
        %2649 = vst [vmem:[#allocation4 + $0x10] sm:$0xff] %v2648
        %v2650 = vld [vmem:[%s1351] sm:$0xf]
        %v2651 = vld [vmem:[%s1371] sm:$0xf]
        %v2652 = vld [vmem:[%s1391] sm:$0xf]
        %v2653 = vld [vmem:[%s3] sm:$0xff]
        %v2654 = vld [vmem:[%s3 + $0x8] sm:$0xff]
        %v2655 = vld [vmem:[%s3 + $0x10] sm:$0xff]
        %v2656 = vld [vmem:[%s3 + $0x18] sm:$0xff]
        %v2657 = vld [vmem:[%s3 + $0x20] sm:$0xff]
        %v2658 = vld [vmem:[%s3 + $0x28] sm:$0xff]
        %v2659 = vld [vmem:[%s3 + $0x30] sm:$0xff]
        %v2660 = vld [vmem:[%s3 + $0x38] sm:$0xff]
        %v2661 = vld [vmem:[%s3 + $0x40] sm:$0xff]
        %v2662 = vld [vmem:[%s3 + $0x48] sm:$0xff]
        %v2663 = vld [vmem:[%s3 + $0x50] sm:$0xff]
        %v2664 = vld [vmem:[%s3 + $0x58] sm:$0xff]
        %v2665 = vld [vmem:[%s3 + $0x60] sm:$0xff]
        %v2666 = vld [vmem:[%s3 + $0x68] sm:$0xff]
        %v2667 = vld [vmem:[%s3 + $0x70] sm:$0xff]
        %v2668 = vld [vmem:[%s3 + $0x78] sm:$0xff]
        %v2669 = vld [vmem:[%s3 + $0x80] sm:$0xff]
        %v2670 = vld [vmem:[%s3 + $0x88] sm:$0xff]
        %v2671 = vld [vmem:[%s3 + $0x90] sm:$0xff]
        %v2672 = vld [vmem:[%s3 + $0x98] sm:$0xff]
        %v2673 = vld [vmem:[%s3 + $0xa0] sm:$0xff]
        %v2674 = vld [vmem:[%s3 + $0xa8] sm:$0xff]
        %v2675 = vld [vmem:[%s3 + $0xb0] sm:$0xff]
        %v2676 = vld [vmem:[%s3 + $0xb8] sm:$0xff]
        %v2677 = vld [vmem:[%s3 + $0xc0] sm:$0xff]
        %v2678 = vld [vmem:[%s3 + $0xc8] sm:$0xff]
        %v2679 = vld [vmem:[%s3 + $0xd0] sm:$0xff]
        %v2680 = vld [vmem:[%s3 + $0xd8] sm:$0xff]
        %v2681 = vld [vmem:[%s3 + $0xe0] sm:$0xff]
        %v2682 = vld [vmem:[%s3 + $0xe8] sm:$0xff]
        %v2683 = vld [vmem:[%s3 + $0xf0] sm:$0xff]
        %v2684 = vld [vmem:[%s3 + $0xf8] sm:$0xff]
        %v2685 = vld [vmem:[%s3 + $0x100] sm:$0xff]
        %v2686 = vld [vmem:[%s3 + $0x108] sm:$0xff]
        %v2687 = vld [vmem:[%s3 + $0x110] sm:$0xff]
        %v2688 = vld [vmem:[%s3 + $0x118] sm:$0xff]
        %v2689 = vld [vmem:[%s3 + $0x120] sm:$0xff]
        %v2690 = vld [vmem:[%s3 + $0x128] sm:$0xff]
        %v2691 = vld [vmem:[%s3 + $0x130] sm:$0xff]
        %v2692 = vld [vmem:[%s3 + $0x138] sm:$0xff]
        %v2693 = vld [vmem:[%s3 + $0x140] sm:$0xff]
        %v2694 = vld [vmem:[%s3 + $0x148] sm:$0xff]
        %v2695 = vld [vmem:[%s3 + $0x150] sm:$0xff]
        %v2696 = vld [vmem:[%s3 + $0x158] sm:$0xff]
        %v2697 = vld [vmem:[%s3 + $0x160] sm:$0xff]
        %v2698 = vld [vmem:[%s3 + $0x168] sm:$0xff]
        %v2699 = vld [vmem:[%s3 + $0x170] sm:$0xff]
        %v2700 = vld [vmem:[%s3 + $0x178] sm:$0xff]
        %v2701 = vld [vmem:[%s4] sm:$0x3]
        %v2703 = vperm.slane %v2701, 0
        %v2704 = vperm.slane %v2701, 1
        %v2755 = vunpack.c.l.b16 %v2653
        %v2756 = vunpack.c.h.b16 %v2653
        %v2757 = vunpack.c.l.b16 %v2654
        %v2758 = vunpack.c.h.b16 %v2654
        %v2759 = vunpack.c.l.b16 %v2655
        %v2760 = vunpack.c.h.b16 %v2655
        %v2761 = vunpack.c.l.b16 %v2656
        %v2762 = vunpack.c.h.b16 %v2656
        %v2763 = vunpack.c.l.b16 %v2657
        %v2764 = vunpack.c.h.b16 %v2657
        %v2765 = vunpack.c.l.b16 %v2658
        %v2766 = vunpack.c.h.b16 %v2658
        %v2767 = vunpack.c.l.b16 %v2659
        %v2768 = vunpack.c.h.b16 %v2659
        %v2769 = vunpack.c.l.b16 %v2660
        %v2770 = vunpack.c.h.b16 %v2660
        %v2771 = vunpack.c.l.b16 %v2661
        %v2772 = vunpack.c.h.b16 %v2661
        %v2773 = vunpack.c.l.b16 %v2662
        %v2774 = vunpack.c.h.b16 %v2662
        %v2775 = vunpack.c.l.b16 %v2663
        %v2776 = vunpack.c.h.b16 %v2663
        %v2777 = vunpack.c.l.b16 %v2664
        %v2778 = vunpack.c.h.b16 %v2664
        %v2779 = vunpack.c.l.b16 %v2665
        %v2780 = vunpack.c.h.b16 %v2665
        %v2781 = vunpack.c.l.b16 %v2666
        %v2782 = vunpack.c.h.b16 %v2666
        %v2783 = vunpack.c.l.b16 %v2667
        %v2784 = vunpack.c.h.b16 %v2667
        %v2785 = vunpack.c.l.b16 %v2668
        %v2786 = vunpack.c.h.b16 %v2668
        %v2787 = vunpack.c.l.b16 %v2669
        %v2788 = vunpack.c.h.b16 %v2669
        %v2789 = vunpack.c.l.b16 %v2670
        %v2790 = vunpack.c.h.b16 %v2670
        %v2791 = vunpack.c.l.b16 %v2671
        %v2792 = vunpack.c.h.b16 %v2671
        %v2793 = vunpack.c.l.b16 %v2672
        %v2794 = vunpack.c.h.b16 %v2672
        %v2795 = vunpack.c.l.b16 %v2673
        %v2796 = vunpack.c.h.b16 %v2673
        %v2797 = vunpack.c.l.b16 %v2674
        %v2798 = vunpack.c.h.b16 %v2674
        %v2799 = vunpack.c.l.b16 %v2675
        %v2800 = vunpack.c.h.b16 %v2675
        %v2801 = vunpack.c.l.b16 %v2676
        %v2802 = vunpack.c.h.b16 %v2676
        %v2803 = vunpack.c.l.b16 %v2677
        %v2804 = vunpack.c.h.b16 %v2677
        %v2805 = vunpack.c.l.b16 %v2678
        %v2806 = vunpack.c.h.b16 %v2678
        %v2807 = vunpack.c.l.b16 %v2679
        %v2808 = vunpack.c.h.b16 %v2679
        %v2809 = vunpack.c.l.b16 %v2680
        %v2810 = vunpack.c.h.b16 %v2680
        %v2811 = vunpack.c.l.b16 %v2681
        %v2812 = vunpack.c.h.b16 %v2681
        %v2813 = vunpack.c.l.b16 %v2682
        %v2814 = vunpack.c.h.b16 %v2682
        %v2815 = vunpack.c.l.b16 %v2683
        %v2816 = vunpack.c.h.b16 %v2683
        %v2817 = vunpack.c.l.b16 %v2684
        %v2818 = vunpack.c.h.b16 %v2684
        %v2819 = vunpack.c.l.b16 %v2685
        %v2820 = vunpack.c.h.b16 %v2685
        %v2821 = vunpack.c.l.b16 %v2686
        %v2822 = vunpack.c.h.b16 %v2686
        %v2823 = vunpack.c.l.b16 %v2687
        %v2824 = vunpack.c.h.b16 %v2687
        %v2825 = vunpack.c.l.b16 %v2688
        %v2826 = vunpack.c.h.b16 %v2688
        %v2827 = vunpack.c.l.b16 %v2689
        %v2828 = vunpack.c.h.b16 %v2689
        %v2829 = vunpack.c.l.b16 %v2690
        %v2830 = vunpack.c.h.b16 %v2690
        %v2831 = vunpack.c.l.b16 %v2691
        %v2832 = vunpack.c.h.b16 %v2691
        %v2833 = vunpack.c.l.b16 %v2692
        %v2834 = vunpack.c.h.b16 %v2692
        %v2835 = vunpack.c.l.b16 %v2693
        %v2836 = vunpack.c.h.b16 %v2693
        %v2837 = vunpack.c.l.b16 %v2694
        %v2838 = vunpack.c.h.b16 %v2694
        %v2839 = vunpack.c.l.b16 %v2695
        %v2840 = vunpack.c.h.b16 %v2695
        %v2841 = vunpack.c.l.b16 %v2696
        %v2842 = vunpack.c.h.b16 %v2696
        %v2843 = vunpack.c.l.b16 %v2697
        %v2844 = vunpack.c.h.b16 %v2697
        %v2845 = vunpack.c.l.b16 %v2698
        %v2846 = vunpack.c.h.b16 %v2698
        %v2847 = vunpack.c.l.b16 %v2699
        %v2848 = vunpack.c.h.b16 %v2699
        %v2849 = vunpack.c.l.b16 %v2700
        %v2850 = vunpack.c.h.b16 %v2700
        %v2851 = vpack.c.b16 %v2757, %v2755
        %v2852 = vpack.c.b16 %v2758, %v2756
        %v2853 = vpack.c.b16 %v2761, %v2759
        %v2854 = vpack.c.b16 %v2762, %v2760
        %v2855 = vpack.c.b16 %v2765, %v2763
        %v2856 = vpack.c.b16 %v2766, %v2764
        %v2857 = vpack.c.b16 %v2769, %v2767
        %v2858 = vpack.c.b16 %v2770, %v2768
        %v2859 = vpack.c.b16 %v2773, %v2771
        %v2860 = vpack.c.b16 %v2774, %v2772
        %v2861 = vpack.c.b16 %v2777, %v2775
        %v2862 = vpack.c.b16 %v2778, %v2776
        %v2863 = vpack.c.b16 %v2781, %v2779
        %v2864 = vpack.c.b16 %v2782, %v2780
        %v2865 = vpack.c.b16 %v2785, %v2783
        %v2866 = vpack.c.b16 %v2786, %v2784
        %v2867 = vpack.c.b16 %v2789, %v2787
        %v2868 = vpack.c.b16 %v2790, %v2788
        %v2869 = vpack.c.b16 %v2793, %v2791
        %v2870 = vpack.c.b16 %v2794, %v2792
        %v2871 = vpack.c.b16 %v2797, %v2795
        %v2872 = vpack.c.b16 %v2798, %v2796
        %v2873 = vpack.c.b16 %v2801, %v2799
        %v2874 = vpack.c.b16 %v2802, %v2800
        %v2875 = vpack.c.b16 %v2805, %v2803
        %v2876 = vpack.c.b16 %v2806, %v2804
        %v2877 = vpack.c.b16 %v2809, %v2807
        %v2878 = vpack.c.b16 %v2810, %v2808
        %v2879 = vpack.c.b16 %v2813, %v2811
        %v2880 = vpack.c.b16 %v2814, %v2812
        %v2881 = vpack.c.b16 %v2817, %v2815
        %v2882 = vpack.c.b16 %v2818, %v2816
        %v2883 = vpack.c.b16 %v2821, %v2819
        %v2884 = vpack.c.b16 %v2822, %v2820
        %v2885 = vpack.c.b16 %v2825, %v2823
        %v2886 = vpack.c.b16 %v2826, %v2824
        %v2887 = vpack.c.b16 %v2829, %v2827
        %v2888 = vpack.c.b16 %v2830, %v2828
        %v2889 = vpack.c.b16 %v2833, %v2831
        %v2890 = vpack.c.b16 %v2834, %v2832
        %v2891 = vpack.c.b16 %v2837, %v2835
        %v2892 = vpack.c.b16 %v2838, %v2836
        %v2893 = vpack.c.b16 %v2841, %v2839
        %v2894 = vpack.c.b16 %v2842, %v2840
        %v2895 = vpack.c.b16 %v2845, %v2843
        %v2896 = vpack.c.b16 %v2846, %v2844
        %v2897 = vpack.c.b16 %v2849, %v2847
        %v2898 = vpack.c.b16 %v2850, %v2848
        %2947 = vmatpush.bf16.msra.mxu0 %v2865
        %2948 = vmatpush.bf16.msra.mxu0 %v2863
        %2949 = vmatpush.bf16.msra.mxu0 %v2861
        %2950 = vmatpush.bf16.msra.mxu0 %v2859
        %2951 = vmatpush.bf16.msra.mxu0 %v2857
        %2952 = vmatpush.bf16.msra.mxu0 %v2855
        %2953 = vmatpush.bf16.msra.mxu0 %v2853
        %2954 = vmatpush.bf16.msra.mxu0 %v2851
        %2955 = vmatmul.bf16.gmra.mxu0 %v2650
        %v2956 = vpop.f32.mrf.mxu0
        %v2957 = vadd.f32 %v2703, %v2956
        %v2958 = vpop.f32.mrf.mxu0
        %2959 = vdwg.mxu0
        %2960 = vmatpush.bf16.msra.mxu0 %v2881
        %2961 = vmatpush.bf16.msra.mxu0 %v2879
        %2962 = vmatpush.bf16.msra.mxu0 %v2877
        %2963 = vmatpush.bf16.msra.mxu0 %v2875
        %2964 = vmatpush.bf16.msra.mxu0 %v2873
        %2965 = vmatpush.bf16.msra.mxu0 %v2871
        %2966 = vmatpush.bf16.msra.mxu0 %v2869
        %2967 = vmatpush.bf16.msra.mxu0 %v2867
        %2968 = vmatmul.bf16.gmra.mxu0 %v2651
        %v2969 = vpop.f32.mrf.mxu0
        %v2970 = vadd.f32 %v2957, %v2969
        %v2971 = vpop.f32.mrf.mxu0
        %2972 = vdwg.mxu0
        %2973 = vmatpush.bf16.msra.mxu0 %v2897
        %2974 = vmatpush.bf16.msra.mxu0 %v2895
        %2975 = vmatpush.bf16.msra.mxu0 %v2893
        %2976 = vmatpush.bf16.msra.mxu0 %v2891
        %2977 = vmatpush.bf16.msra.mxu0 %v2889
        %2978 = vmatpush.bf16.msra.mxu0 %v2887
        %2979 = vmatpush.bf16.msra.mxu0 %v2885
        %2980 = vmatpush.bf16.msra.mxu0 %v2883
        %2981 = vmatmul.bf16.gmra.mxu0 %v2652
        %v2982 = vpop.f32.mrf.mxu0
        %v2983 = vadd.f32 %v2970, %v2982
        %v2984 = vpop.f32.mrf.mxu0
        %2985 = vdwg.mxu0
        %2986 = vmatpush.bf16.msra.mxu0 %v2866
        %2987 = vmatpush.bf16.msra.mxu0 %v2864
        %2988 = vmatpush.bf16.msra.mxu0 %v2862
        %2989 = vmatpush.bf16.msra.mxu0 %v2860
        %2990 = vmatpush.bf16.msra.mxu0 %v2858
        %2991 = vmatpush.bf16.msra.mxu0 %v2856
        %2992 = vmatpush.bf16.msra.mxu0 %v2854
        %2993 = vmatpush.bf16.msra.mxu0 %v2852
        %2994 = vmatmul.bf16.gmra.mxu0 %v2650
        %v2995 = vpop.f32.mrf.mxu0
        %v2996 = vadd.f32 %v2704, %v2995
        %v2997 = vpop.f32.mrf.mxu0
        %2998 = vdwg.mxu0
        %2999 = vmatpush.bf16.msra.mxu0 %v2882
        %3000 = vmatpush.bf16.msra.mxu0 %v2880
        %3001 = vmatpush.bf16.msra.mxu0 %v2878
        %3002 = vmatpush.bf16.msra.mxu0 %v2876
        %3003 = vmatpush.bf16.msra.mxu0 %v2874
        %3004 = vmatpush.bf16.msra.mxu0 %v2872
        %3005 = vmatpush.bf16.msra.mxu0 %v2870
        %3006 = vmatpush.bf16.msra.mxu0 %v2868
        %3007 = vmatmul.bf16.gmra.mxu0 %v2651
        %v3008 = vpop.f32.mrf.mxu0
        %v3009 = vadd.f32 %v2996, %v3008
        %v3010 = vpop.f32.mrf.mxu0
        %3011 = vdwg.mxu0
        %3012 = vmatpush.bf16.msra.mxu0 %v2898
        %3013 = vmatpush.bf16.msra.mxu0 %v2896
        %3014 = vmatpush.bf16.msra.mxu0 %v2894
        %3015 = vmatpush.bf16.msra.mxu0 %v2892
        %3016 = vmatpush.bf16.msra.mxu0 %v2890
        %3017 = vmatpush.bf16.msra.mxu0 %v2888
        %3018 = vmatpush.bf16.msra.mxu0 %v2886
        %3019 = vmatpush.bf16.msra.mxu0 %v2884
        %3020 = vmatmul.bf16.gmra.mxu0 %v2652
        %v3021 = vpop.f32.mrf.mxu0
        %v3022 = vadd.f32 %v3009, %v3021
        %v3023 = vpop.f32.mrf.mxu0
        %3024 = vdwg.mxu0
        %v3025 = vmax.f32 %v2983, 0.0
        %v3026 = vmax.f32 %v3022, 0.0
        %v3027 = vpack.c.bf16 %v3026, %v3025
        %3028 = vst [vmem:[#allocation4 + $0x18] sm:$0xff] %v3027
        %v3029 = vld [vmem:[%s1371] sm:$0xf]
        %v3030 = vld [vmem:[%s1391] sm:$0xf]
        %v3031 = vld [vmem:[%s1411] sm:$0xf]
        %v3032 = vld [vmem:[%s3] sm:$0xff]
        %v3033 = vld [vmem:[%s3 + $0x8] sm:$0xff]
        %v3034 = vld [vmem:[%s3 + $0x10] sm:$0xff]
        %v3035 = vld [vmem:[%s3 + $0x18] sm:$0xff]
        %v3036 = vld [vmem:[%s3 + $0x20] sm:$0xff]
        %v3037 = vld [vmem:[%s3 + $0x28] sm:$0xff]
        %v3038 = vld [vmem:[%s3 + $0x30] sm:$0xff]
        %v3039 = vld [vmem:[%s3 + $0x38] sm:$0xff]
        %v3040 = vld [vmem:[%s3 + $0x40] sm:$0xff]
        %v3041 = vld [vmem:[%s3 + $0x48] sm:$0xff]
        %v3042 = vld [vmem:[%s3 + $0x50] sm:$0xff]
        %v3043 = vld [vmem:[%s3 + $0x58] sm:$0xff]
        %v3044 = vld [vmem:[%s3 + $0x60] sm:$0xff]
        %v3045 = vld [vmem:[%s3 + $0x68] sm:$0xff]
        %v3046 = vld [vmem:[%s3 + $0x70] sm:$0xff]
        %v3047 = vld [vmem:[%s3 + $0x78] sm:$0xff]
        %v3048 = vld [vmem:[%s3 + $0x80] sm:$0xff]
        %v3049 = vld [vmem:[%s3 + $0x88] sm:$0xff]
        %v3050 = vld [vmem:[%s3 + $0x90] sm:$0xff]
        %v3051 = vld [vmem:[%s3 + $0x98] sm:$0xff]
        %v3052 = vld [vmem:[%s3 + $0xa0] sm:$0xff]
        %v3053 = vld [vmem:[%s3 + $0xa8] sm:$0xff]
        %v3054 = vld [vmem:[%s3 + $0xb0] sm:$0xff]
        %v3055 = vld [vmem:[%s3 + $0xb8] sm:$0xff]
        %v3056 = vld [vmem:[%s3 + $0xc0] sm:$0xff]
        %v3057 = vld [vmem:[%s3 + $0xc8] sm:$0xff]
        %v3058 = vld [vmem:[%s3 + $0xd0] sm:$0xff]
        %v3059 = vld [vmem:[%s3 + $0xd8] sm:$0xff]
        %v3060 = vld [vmem:[%s3 + $0xe0] sm:$0xff]
        %v3061 = vld [vmem:[%s3 + $0xe8] sm:$0xff]
        %v3062 = vld [vmem:[%s3 + $0xf0] sm:$0xff]
        %v3063 = vld [vmem:[%s3 + $0xf8] sm:$0xff]
        %v3064 = vld [vmem:[%s3 + $0x100] sm:$0xff]
        %v3065 = vld [vmem:[%s3 + $0x108] sm:$0xff]
        %v3066 = vld [vmem:[%s3 + $0x110] sm:$0xff]
        %v3067 = vld [vmem:[%s3 + $0x118] sm:$0xff]
        %v3068 = vld [vmem:[%s3 + $0x120] sm:$0xff]
        %v3069 = vld [vmem:[%s3 + $0x128] sm:$0xff]
        %v3070 = vld [vmem:[%s3 + $0x130] sm:$0xff]
        %v3071 = vld [vmem:[%s3 + $0x138] sm:$0xff]
        %v3072 = vld [vmem:[%s3 + $0x140] sm:$0xff]
        %v3073 = vld [vmem:[%s3 + $0x148] sm:$0xff]
        %v3074 = vld [vmem:[%s3 + $0x150] sm:$0xff]
        %v3075 = vld [vmem:[%s3 + $0x158] sm:$0xff]
        %v3076 = vld [vmem:[%s3 + $0x160] sm:$0xff]
        %v3077 = vld [vmem:[%s3 + $0x168] sm:$0xff]
        %v3078 = vld [vmem:[%s3 + $0x170] sm:$0xff]
        %v3079 = vld [vmem:[%s3 + $0x178] sm:$0xff]
        %v3080 = vld [vmem:[%s4] sm:$0x3]
        %v3082 = vperm.slane %v3080, 0
        %v3083 = vperm.slane %v3080, 1
        %v3134 = vunpack.c.l.b16 %v3032
        %v3135 = vunpack.c.h.b16 %v3032
        %v3136 = vunpack.c.l.b16 %v3033
        %v3137 = vunpack.c.h.b16 %v3033
        %v3138 = vunpack.c.l.b16 %v3034
        %v3139 = vunpack.c.h.b16 %v3034
        %v3140 = vunpack.c.l.b16 %v3035
        %v3141 = vunpack.c.h.b16 %v3035
        %v3142 = vunpack.c.l.b16 %v3036
        %v3143 = vunpack.c.h.b16 %v3036
        %v3144 = vunpack.c.l.b16 %v3037
        %v3145 = vunpack.c.h.b16 %v3037
        %v3146 = vunpack.c.l.b16 %v3038
        %v3147 = vunpack.c.h.b16 %v3038
        %v3148 = vunpack.c.l.b16 %v3039
        %v3149 = vunpack.c.h.b16 %v3039
        %v3150 = vunpack.c.l.b16 %v3040
        %v3151 = vunpack.c.h.b16 %v3040
        %v3152 = vunpack.c.l.b16 %v3041
        %v3153 = vunpack.c.h.b16 %v3041
        %v3154 = vunpack.c.l.b16 %v3042
        %v3155 = vunpack.c.h.b16 %v3042
        %v3156 = vunpack.c.l.b16 %v3043
        %v3157 = vunpack.c.h.b16 %v3043
        %v3158 = vunpack.c.l.b16 %v3044
        %v3159 = vunpack.c.h.b16 %v3044
        %v3160 = vunpack.c.l.b16 %v3045
        %v3161 = vunpack.c.h.b16 %v3045
        %v3162 = vunpack.c.l.b16 %v3046
        %v3163 = vunpack.c.h.b16 %v3046
        %v3164 = vunpack.c.l.b16 %v3047
        %v3165 = vunpack.c.h.b16 %v3047
        %v3166 = vunpack.c.l.b16 %v3048
        %v3167 = vunpack.c.h.b16 %v3048
        %v3168 = vunpack.c.l.b16 %v3049
        %v3169 = vunpack.c.h.b16 %v3049
        %v3170 = vunpack.c.l.b16 %v3050
        %v3171 = vunpack.c.h.b16 %v3050
        %v3172 = vunpack.c.l.b16 %v3051
        %v3173 = vunpack.c.h.b16 %v3051
        %v3174 = vunpack.c.l.b16 %v3052
        %v3175 = vunpack.c.h.b16 %v3052
        %v3176 = vunpack.c.l.b16 %v3053
        %v3177 = vunpack.c.h.b16 %v3053
        %v3178 = vunpack.c.l.b16 %v3054
        %v3179 = vunpack.c.h.b16 %v3054
        %v3180 = vunpack.c.l.b16 %v3055
        %v3181 = vunpack.c.h.b16 %v3055
        %v3182 = vunpack.c.l.b16 %v3056
        %v3183 = vunpack.c.h.b16 %v3056
        %v3184 = vunpack.c.l.b16 %v3057
        %v3185 = vunpack.c.h.b16 %v3057
        %v3186 = vunpack.c.l.b16 %v3058
        %v3187 = vunpack.c.h.b16 %v3058
        %v3188 = vunpack.c.l.b16 %v3059
        %v3189 = vunpack.c.h.b16 %v3059
        %v3190 = vunpack.c.l.b16 %v3060
        %v3191 = vunpack.c.h.b16 %v3060
        %v3192 = vunpack.c.l.b16 %v3061
        %v3193 = vunpack.c.h.b16 %v3061
        %v3194 = vunpack.c.l.b16 %v3062
        %v3195 = vunpack.c.h.b16 %v3062
        %v3196 = vunpack.c.l.b16 %v3063
        %v3197 = vunpack.c.h.b16 %v3063
        %v3198 = vunpack.c.l.b16 %v3064
        %v3199 = vunpack.c.h.b16 %v3064
        %v3200 = vunpack.c.l.b16 %v3065
        %v3201 = vunpack.c.h.b16 %v3065
        %v3202 = vunpack.c.l.b16 %v3066
        %v3203 = vunpack.c.h.b16 %v3066
        %v3204 = vunpack.c.l.b16 %v3067
        %v3205 = vunpack.c.h.b16 %v3067
        %v3206 = vunpack.c.l.b16 %v3068
        %v3207 = vunpack.c.h.b16 %v3068
        %v3208 = vunpack.c.l.b16 %v3069
        %v3209 = vunpack.c.h.b16 %v3069
        %v3210 = vunpack.c.l.b16 %v3070
        %v3211 = vunpack.c.h.b16 %v3070
        %v3212 = vunpack.c.l.b16 %v3071
        %v3213 = vunpack.c.h.b16 %v3071
        %v3214 = vunpack.c.l.b16 %v3072
        %v3215 = vunpack.c.h.b16 %v3072
        %v3216 = vunpack.c.l.b16 %v3073
        %v3217 = vunpack.c.h.b16 %v3073
        %v3218 = vunpack.c.l.b16 %v3074
        %v3219 = vunpack.c.h.b16 %v3074
        %v3220 = vunpack.c.l.b16 %v3075
        %v3221 = vunpack.c.h.b16 %v3075
        %v3222 = vunpack.c.l.b16 %v3076
        %v3223 = vunpack.c.h.b16 %v3076
        %v3224 = vunpack.c.l.b16 %v3077
        %v3225 = vunpack.c.h.b16 %v3077
        %v3226 = vunpack.c.l.b16 %v3078
        %v3227 = vunpack.c.h.b16 %v3078
        %v3228 = vunpack.c.l.b16 %v3079
        %v3229 = vunpack.c.h.b16 %v3079
        %v3230 = vpack.c.b16 %v3136, %v3134
        %v3231 = vpack.c.b16 %v3137, %v3135
        %v3232 = vpack.c.b16 %v3140, %v3138
        %v3233 = vpack.c.b16 %v3141, %v3139
        %v3234 = vpack.c.b16 %v3144, %v3142
        %v3235 = vpack.c.b16 %v3145, %v3143
        %v3236 = vpack.c.b16 %v3148, %v3146
        %v3237 = vpack.c.b16 %v3149, %v3147
        %v3238 = vpack.c.b16 %v3152, %v3150
        %v3239 = vpack.c.b16 %v3153, %v3151
        %v3240 = vpack.c.b16 %v3156, %v3154
        %v3241 = vpack.c.b16 %v3157, %v3155
        %v3242 = vpack.c.b16 %v3160, %v3158
        %v3243 = vpack.c.b16 %v3161, %v3159
        %v3244 = vpack.c.b16 %v3164, %v3162
        %v3245 = vpack.c.b16 %v3165, %v3163
        %v3246 = vpack.c.b16 %v3168, %v3166
        %v3247 = vpack.c.b16 %v3169, %v3167
        %v3248 = vpack.c.b16 %v3172, %v3170
        %v3249 = vpack.c.b16 %v3173, %v3171
        %v3250 = vpack.c.b16 %v3176, %v3174
        %v3251 = vpack.c.b16 %v3177, %v3175
        %v3252 = vpack.c.b16 %v3180, %v3178
        %v3253 = vpack.c.b16 %v3181, %v3179
        %v3254 = vpack.c.b16 %v3184, %v3182
        %v3255 = vpack.c.b16 %v3185, %v3183
        %v3256 = vpack.c.b16 %v3188, %v3186
        %v3257 = vpack.c.b16 %v3189, %v3187
        %v3258 = vpack.c.b16 %v3192, %v3190
        %v3259 = vpack.c.b16 %v3193, %v3191
        %v3260 = vpack.c.b16 %v3196, %v3194
        %v3261 = vpack.c.b16 %v3197, %v3195
        %v3262 = vpack.c.b16 %v3200, %v3198
        %v3263 = vpack.c.b16 %v3201, %v3199
        %v3264 = vpack.c.b16 %v3204, %v3202
        %v3265 = vpack.c.b16 %v3205, %v3203
        %v3266 = vpack.c.b16 %v3208, %v3206
        %v3267 = vpack.c.b16 %v3209, %v3207
        %v3268 = vpack.c.b16 %v3212, %v3210
        %v3269 = vpack.c.b16 %v3213, %v3211
        %v3270 = vpack.c.b16 %v3216, %v3214
        %v3271 = vpack.c.b16 %v3217, %v3215
        %v3272 = vpack.c.b16 %v3220, %v3218
        %v3273 = vpack.c.b16 %v3221, %v3219
        %v3274 = vpack.c.b16 %v3224, %v3222
        %v3275 = vpack.c.b16 %v3225, %v3223
        %v3276 = vpack.c.b16 %v3228, %v3226
        %v3277 = vpack.c.b16 %v3229, %v3227
        %3326 = vmatpush.bf16.msra.mxu0 %v3244
        %3327 = vmatpush.bf16.msra.mxu0 %v3242
        %3328 = vmatpush.bf16.msra.mxu0 %v3240
        %3329 = vmatpush.bf16.msra.mxu0 %v3238
        %3330 = vmatpush.bf16.msra.mxu0 %v3236
        %3331 = vmatpush.bf16.msra.mxu0 %v3234
        %3332 = vmatpush.bf16.msra.mxu0 %v3232
        %3333 = vmatpush.bf16.msra.mxu0 %v3230
        %3334 = vmatmul.bf16.gmra.mxu0 %v3029
        %v3335 = vpop.f32.mrf.mxu0
        %v3336 = vadd.f32 %v3082, %v3335
        %v3337 = vpop.f32.mrf.mxu0
        %3338 = vdwg.mxu0
        %3339 = vmatpush.bf16.msra.mxu0 %v3260
        %3340 = vmatpush.bf16.msra.mxu0 %v3258
        %3341 = vmatpush.bf16.msra.mxu0 %v3256
        %3342 = vmatpush.bf16.msra.mxu0 %v3254
        %3343 = vmatpush.bf16.msra.mxu0 %v3252
        %3344 = vmatpush.bf16.msra.mxu0 %v3250
        %3345 = vmatpush.bf16.msra.mxu0 %v3248
        %3346 = vmatpush.bf16.msra.mxu0 %v3246
        %3347 = vmatmul.bf16.gmra.mxu0 %v3030
        %v3348 = vpop.f32.mrf.mxu0
        %v3349 = vadd.f32 %v3336, %v3348
        %v3350 = vpop.f32.mrf.mxu0
        %3351 = vdwg.mxu0
        %3352 = vmatpush.bf16.msra.mxu0 %v3276
        %3353 = vmatpush.bf16.msra.mxu0 %v3274
        %3354 = vmatpush.bf16.msra.mxu0 %v3272
        %3355 = vmatpush.bf16.msra.mxu0 %v3270
        %3356 = vmatpush.bf16.msra.mxu0 %v3268
        %3357 = vmatpush.bf16.msra.mxu0 %v3266
        %3358 = vmatpush.bf16.msra.mxu0 %v3264
        %3359 = vmatpush.bf16.msra.mxu0 %v3262
        %3360 = vmatmul.bf16.gmra.mxu0 %v3031
        %v3361 = vpop.f32.mrf.mxu0
        %v3362 = vadd.f32 %v3349, %v3361
        %v3363 = vpop.f32.mrf.mxu0
        %3364 = vdwg.mxu0
        %3365 = vmatpush.bf16.msra.mxu0 %v3245
        %3366 = vmatpush.bf16.msra.mxu0 %v3243
        %3367 = vmatpush.bf16.msra.mxu0 %v3241
        %3368 = vmatpush.bf16.msra.mxu0 %v3239
        %3369 = vmatpush.bf16.msra.mxu0 %v3237
        %3370 = vmatpush.bf16.msra.mxu0 %v3235
        %3371 = vmatpush.bf16.msra.mxu0 %v3233
        %3372 = vmatpush.bf16.msra.mxu0 %v3231
        %3373 = vmatmul.bf16.gmra.mxu0 %v3029
        %v3374 = vpop.f32.mrf.mxu0
        %v3375 = vadd.f32 %v3083, %v3374
        %v3376 = vpop.f32.mrf.mxu0
        %3377 = vdwg.mxu0
        %3378 = vmatpush.bf16.msra.mxu0 %v3261
        %3379 = vmatpush.bf16.msra.mxu0 %v3259
        %3380 = vmatpush.bf16.msra.mxu0 %v3257
        %3381 = vmatpush.bf16.msra.mxu0 %v3255
        %3382 = vmatpush.bf16.msra.mxu0 %v3253
        %3383 = vmatpush.bf16.msra.mxu0 %v3251
        %3384 = vmatpush.bf16.msra.mxu0 %v3249
        %3385 = vmatpush.bf16.msra.mxu0 %v3247
        %3386 = vmatmul.bf16.gmra.mxu0 %v3030
        %v3387 = vpop.f32.mrf.mxu0
        %v3388 = vadd.f32 %v3375, %v3387
        %v3389 = vpop.f32.mrf.mxu0
        %3390 = vdwg.mxu0
        %3391 = vmatpush.bf16.msra.mxu0 %v3277
        %3392 = vmatpush.bf16.msra.mxu0 %v3275
        %3393 = vmatpush.bf16.msra.mxu0 %v3273
        %3394 = vmatpush.bf16.msra.mxu0 %v3271
        %3395 = vmatpush.bf16.msra.mxu0 %v3269
        %3396 = vmatpush.bf16.msra.mxu0 %v3267
        %3397 = vmatpush.bf16.msra.mxu0 %v3265
        %3398 = vmatpush.bf16.msra.mxu0 %v3263
        %3399 = vmatmul.bf16.gmra.mxu0 %v3031
        %v3400 = vpop.f32.mrf.mxu0
        %v3401 = vadd.f32 %v3388, %v3400
        %v3402 = vpop.f32.mrf.mxu0
        %3403 = vdwg.mxu0
        %v3404 = vmax.f32 %v3362, 0.0
        %v3405 = vmax.f32 %v3401, 0.0
        %v3406 = vpack.c.bf16 %v3405, %v3404
        %3407 = vst [vmem:[#allocation4 + $0x20] sm:$0xff] %v3406
        %v3408 = vld [vmem:[%s1391] sm:$0xf]
        %v3409 = vld [vmem:[%s1411] sm:$0xf]
        %v3410 = vld [vmem:[%s1431] sm:$0xf]
        %v3411 = vld [vmem:[%s3] sm:$0xff]
        %v3412 = vld [vmem:[%s3 + $0x8] sm:$0xff]
        %v3413 = vld [vmem:[%s3 + $0x10] sm:$0xff]
        %v3414 = vld [vmem:[%s3 + $0x18] sm:$0xff]
        %v3415 = vld [vmem:[%s3 + $0x20] sm:$0xff]
        %v3416 = vld [vmem:[%s3 + $0x28] sm:$0xff]
        %v3417 = vld [vmem:[%s3 + $0x30] sm:$0xff]
        %v3418 = vld [vmem:[%s3 + $0x38] sm:$0xff]
        %v3419 = vld [vmem:[%s3 + $0x40] sm:$0xff]
        %v3420 = vld [vmem:[%s3 + $0x48] sm:$0xff]
        %v3421 = vld [vmem:[%s3 + $0x50] sm:$0xff]
        %v3422 = vld [vmem:[%s3 + $0x58] sm:$0xff]
        %v3423 = vld [vmem:[%s3 + $0x60] sm:$0xff]
        %v3424 = vld [vmem:[%s3 + $0x68] sm:$0xff]
        %v3425 = vld [vmem:[%s3 + $0x70] sm:$0xff]
        %v3426 = vld [vmem:[%s3 + $0x78] sm:$0xff]
        %v3427 = vld [vmem:[%s3 + $0x80] sm:$0xff]
        %v3428 = vld [vmem:[%s3 + $0x88] sm:$0xff]
        %v3429 = vld [vmem:[%s3 + $0x90] sm:$0xff]
        %v3430 = vld [vmem:[%s3 + $0x98] sm:$0xff]
        %v3431 = vld [vmem:[%s3 + $0xa0] sm:$0xff]
        %v3432 = vld [vmem:[%s3 + $0xa8] sm:$0xff]
        %v3433 = vld [vmem:[%s3 + $0xb0] sm:$0xff]
        %v3434 = vld [vmem:[%s3 + $0xb8] sm:$0xff]
        %v3435 = vld [vmem:[%s3 + $0xc0] sm:$0xff]
        %v3436 = vld [vmem:[%s3 + $0xc8] sm:$0xff]
        %v3437 = vld [vmem:[%s3 + $0xd0] sm:$0xff]
        %v3438 = vld [vmem:[%s3 + $0xd8] sm:$0xff]
        %v3439 = vld [vmem:[%s3 + $0xe0] sm:$0xff]
        %v3440 = vld [vmem:[%s3 + $0xe8] sm:$0xff]
        %v3441 = vld [vmem:[%s3 + $0xf0] sm:$0xff]
        %v3442 = vld [vmem:[%s3 + $0xf8] sm:$0xff]
        %v3443 = vld [vmem:[%s3 + $0x100] sm:$0xff]
        %v3444 = vld [vmem:[%s3 + $0x108] sm:$0xff]
        %v3445 = vld [vmem:[%s3 + $0x110] sm:$0xff]
        %v3446 = vld [vmem:[%s3 + $0x118] sm:$0xff]
        %v3447 = vld [vmem:[%s3 + $0x120] sm:$0xff]
        %v3448 = vld [vmem:[%s3 + $0x128] sm:$0xff]
        %v3449 = vld [vmem:[%s3 + $0x130] sm:$0xff]
        %v3450 = vld [vmem:[%s3 + $0x138] sm:$0xff]
        %v3451 = vld [vmem:[%s3 + $0x140] sm:$0xff]
        %v3452 = vld [vmem:[%s3 + $0x148] sm:$0xff]
        %v3453 = vld [vmem:[%s3 + $0x150] sm:$0xff]
        %v3454 = vld [vmem:[%s3 + $0x158] sm:$0xff]
        %v3455 = vld [vmem:[%s3 + $0x160] sm:$0xff]
        %v3456 = vld [vmem:[%s3 + $0x168] sm:$0xff]
        %v3457 = vld [vmem:[%s3 + $0x170] sm:$0xff]
        %v3458 = vld [vmem:[%s3 + $0x178] sm:$0xff]
        %v3459 = vld [vmem:[%s4] sm:$0x3]
        %v3461 = vperm.slane %v3459, 0
        %v3462 = vperm.slane %v3459, 1
        %v3513 = vunpack.c.l.b16 %v3411
        %v3514 = vunpack.c.h.b16 %v3411
        %v3515 = vunpack.c.l.b16 %v3412
        %v3516 = vunpack.c.h.b16 %v3412
        %v3517 = vunpack.c.l.b16 %v3413
        %v3518 = vunpack.c.h.b16 %v3413
        %v3519 = vunpack.c.l.b16 %v3414
        %v3520 = vunpack.c.h.b16 %v3414
        %v3521 = vunpack.c.l.b16 %v3415
        %v3522 = vunpack.c.h.b16 %v3415
        %v3523 = vunpack.c.l.b16 %v3416
        %v3524 = vunpack.c.h.b16 %v3416
        %v3525 = vunpack.c.l.b16 %v3417
        %v3526 = vunpack.c.h.b16 %v3417
        %v3527 = vunpack.c.l.b16 %v3418
        %v3528 = vunpack.c.h.b16 %v3418
        %v3529 = vunpack.c.l.b16 %v3419
        %v3530 = vunpack.c.h.b16 %v3419
        %v3531 = vunpack.c.l.b16 %v3420
        %v3532 = vunpack.c.h.b16 %v3420
        %v3533 = vunpack.c.l.b16 %v3421
        %v3534 = vunpack.c.h.b16 %v3421
        %v3535 = vunpack.c.l.b16 %v3422
        %v3536 = vunpack.c.h.b16 %v3422
        %v3537 = vunpack.c.l.b16 %v3423
        %v3538 = vunpack.c.h.b16 %v3423
        %v3539 = vunpack.c.l.b16 %v3424
        %v3540 = vunpack.c.h.b16 %v3424
        %v3541 = vunpack.c.l.b16 %v3425
        %v3542 = vunpack.c.h.b16 %v3425
        %v3543 = vunpack.c.l.b16 %v3426
        %v3544 = vunpack.c.h.b16 %v3426
        %v3545 = vunpack.c.l.b16 %v3427
        %v3546 = vunpack.c.h.b16 %v3427
        %v3547 = vunpack.c.l.b16 %v3428
        %v3548 = vunpack.c.h.b16 %v3428
        %v3549 = vunpack.c.l.b16 %v3429
        %v3550 = vunpack.c.h.b16 %v3429
        %v3551 = vunpack.c.l.b16 %v3430
        %v3552 = vunpack.c.h.b16 %v3430
        %v3553 = vunpack.c.l.b16 %v3431
        %v3554 = vunpack.c.h.b16 %v3431
        %v3555 = vunpack.c.l.b16 %v3432
        %v3556 = vunpack.c.h.b16 %v3432
        %v3557 = vunpack.c.l.b16 %v3433
        %v3558 = vunpack.c.h.b16 %v3433
        %v3559 = vunpack.c.l.b16 %v3434
        %v3560 = vunpack.c.h.b16 %v3434
        %v3561 = vunpack.c.l.b16 %v3435
        %v3562 = vunpack.c.h.b16 %v3435
        %v3563 = vunpack.c.l.b16 %v3436
        %v3564 = vunpack.c.h.b16 %v3436
        %v3565 = vunpack.c.l.b16 %v3437
        %v3566 = vunpack.c.h.b16 %v3437
        %v3567 = vunpack.c.l.b16 %v3438
        %v3568 = vunpack.c.h.b16 %v3438
        %v3569 = vunpack.c.l.b16 %v3439
        %v3570 = vunpack.c.h.b16 %v3439
        %v3571 = vunpack.c.l.b16 %v3440
        %v3572 = vunpack.c.h.b16 %v3440
        %v3573 = vunpack.c.l.b16 %v3441
        %v3574 = vunpack.c.h.b16 %v3441
        %v3575 = vunpack.c.l.b16 %v3442
        %v3576 = vunpack.c.h.b16 %v3442
        %v3577 = vunpack.c.l.b16 %v3443
        %v3578 = vunpack.c.h.b16 %v3443
        %v3579 = vunpack.c.l.b16 %v3444
        %v3580 = vunpack.c.h.b16 %v3444
        %v3581 = vunpack.c.l.b16 %v3445
        %v3582 = vunpack.c.h.b16 %v3445
        %v3583 = vunpack.c.l.b16 %v3446
        %v3584 = vunpack.c.h.b16 %v3446
        %v3585 = vunpack.c.l.b16 %v3447
        %v3586 = vunpack.c.h.b16 %v3447
        %v3587 = vunpack.c.l.b16 %v3448
        %v3588 = vunpack.c.h.b16 %v3448
        %v3589 = vunpack.c.l.b16 %v3449
        %v3590 = vunpack.c.h.b16 %v3449
        %v3591 = vunpack.c.l.b16 %v3450
        %v3592 = vunpack.c.h.b16 %v3450
        %v3593 = vunpack.c.l.b16 %v3451
        %v3594 = vunpack.c.h.b16 %v3451
        %v3595 = vunpack.c.l.b16 %v3452
        %v3596 = vunpack.c.h.b16 %v3452
        %v3597 = vunpack.c.l.b16 %v3453
        %v3598 = vunpack.c.h.b16 %v3453
        %v3599 = vunpack.c.l.b16 %v3454
        %v3600 = vunpack.c.h.b16 %v3454
        %v3601 = vunpack.c.l.b16 %v3455
        %v3602 = vunpack.c.h.b16 %v3455
        %v3603 = vunpack.c.l.b16 %v3456
        %v3604 = vunpack.c.h.b16 %v3456
        %v3605 = vunpack.c.l.b16 %v3457
        %v3606 = vunpack.c.h.b16 %v3457
        %v3607 = vunpack.c.l.b16 %v3458
        %v3608 = vunpack.c.h.b16 %v3458
        %v3609 = vpack.c.b16 %v3515, %v3513
        %v3610 = vpack.c.b16 %v3516, %v3514
        %v3611 = vpack.c.b16 %v3519, %v3517
        %v3612 = vpack.c.b16 %v3520, %v3518
        %v3613 = vpack.c.b16 %v3523, %v3521
        %v3614 = vpack.c.b16 %v3524, %v3522
        %v3615 = vpack.c.b16 %v3527, %v3525
        %v3616 = vpack.c.b16 %v3528, %v3526
        %v3617 = vpack.c.b16 %v3531, %v3529
        %v3618 = vpack.c.b16 %v3532, %v3530
        %v3619 = vpack.c.b16 %v3535, %v3533
        %v3620 = vpack.c.b16 %v3536, %v3534
        %v3621 = vpack.c.b16 %v3539, %v3537
        %v3622 = vpack.c.b16 %v3540, %v3538
        %v3623 = vpack.c.b16 %v3543, %v3541
        %v3624 = vpack.c.b16 %v3544, %v3542
        %v3625 = vpack.c.b16 %v3547, %v3545
        %v3626 = vpack.c.b16 %v3548, %v3546
        %v3627 = vpack.c.b16 %v3551, %v3549
        %v3628 = vpack.c.b16 %v3552, %v3550
        %v3629 = vpack.c.b16 %v3555, %v3553
        %v3630 = vpack.c.b16 %v3556, %v3554
        %v3631 = vpack.c.b16 %v3559, %v3557
        %v3632 = vpack.c.b16 %v3560, %v3558
        %v3633 = vpack.c.b16 %v3563, %v3561
        %v3634 = vpack.c.b16 %v3564, %v3562
        %v3635 = vpack.c.b16 %v3567, %v3565
        %v3636 = vpack.c.b16 %v3568, %v3566
        %v3637 = vpack.c.b16 %v3571, %v3569
        %v3638 = vpack.c.b16 %v3572, %v3570
        %v3639 = vpack.c.b16 %v3575, %v3573
        %v3640 = vpack.c.b16 %v3576, %v3574
        %v3641 = vpack.c.b16 %v3579, %v3577
        %v3642 = vpack.c.b16 %v3580, %v3578
        %v3643 = vpack.c.b16 %v3583, %v3581
        %v3644 = vpack.c.b16 %v3584, %v3582
        %v3645 = vpack.c.b16 %v3587, %v3585
        %v3646 = vpack.c.b16 %v3588, %v3586
        %v3647 = vpack.c.b16 %v3591, %v3589
        %v3648 = vpack.c.b16 %v3592, %v3590
        %v3649 = vpack.c.b16 %v3595, %v3593
        %v3650 = vpack.c.b16 %v3596, %v3594
        %v3651 = vpack.c.b16 %v3599, %v3597
        %v3652 = vpack.c.b16 %v3600, %v3598
        %v3653 = vpack.c.b16 %v3603, %v3601
        %v3654 = vpack.c.b16 %v3604, %v3602
        %v3655 = vpack.c.b16 %v3607, %v3605
        %v3656 = vpack.c.b16 %v3608, %v3606
        %3705 = vmatpush.bf16.msra.mxu0 %v3623
        %3706 = vmatpush.bf16.msra.mxu0 %v3621
        %3707 = vmatpush.bf16.msra.mxu0 %v3619
        %3708 = vmatpush.bf16.msra.mxu0 %v3617
        %3709 = vmatpush.bf16.msra.mxu0 %v3615
        %3710 = vmatpush.bf16.msra.mxu0 %v3613
        %3711 = vmatpush.bf16.msra.mxu0 %v3611
        %3712 = vmatpush.bf16.msra.mxu0 %v3609
        %3713 = vmatmul.bf16.gmra.mxu0 %v3408
        %v3714 = vpop.f32.mrf.mxu0
        %v3715 = vadd.f32 %v3461, %v3714
        %v3716 = vpop.f32.mrf.mxu0
        %3717 = vdwg.mxu0
        %3718 = vmatpush.bf16.msra.mxu0 %v3639
        %3719 = vmatpush.bf16.msra.mxu0 %v3637
        %3720 = vmatpush.bf16.msra.mxu0 %v3635
        %3721 = vmatpush.bf16.msra.mxu0 %v3633
        %3722 = vmatpush.bf16.msra.mxu0 %v3631
        %3723 = vmatpush.bf16.msra.mxu0 %v3629
        %3724 = vmatpush.bf16.msra.mxu0 %v3627
        %3725 = vmatpush.bf16.msra.mxu0 %v3625
        %3726 = vmatmul.bf16.gmra.mxu0 %v3409
        %v3727 = vpop.f32.mrf.mxu0
        %v3728 = vadd.f32 %v3715, %v3727
        %v3729 = vpop.f32.mrf.mxu0
        %3730 = vdwg.mxu0
        %3731 = vmatpush.bf16.msra.mxu0 %v3655
        %3732 = vmatpush.bf16.msra.mxu0 %v3653
        %3733 = vmatpush.bf16.msra.mxu0 %v3651
        %3734 = vmatpush.bf16.msra.mxu0 %v3649
        %3735 = vmatpush.bf16.msra.mxu0 %v3647
        %3736 = vmatpush.bf16.msra.mxu0 %v3645
        %3737 = vmatpush.bf16.msra.mxu0 %v3643
        %3738 = vmatpush.bf16.msra.mxu0 %v3641
        %3739 = vmatmul.bf16.gmra.mxu0 %v3410
        %v3740 = vpop.f32.mrf.mxu0
        %v3741 = vadd.f32 %v3728, %v3740
        %v3742 = vpop.f32.mrf.mxu0
        %3743 = vdwg.mxu0
        %3744 = vmatpush.bf16.msra.mxu0 %v3624
        %3745 = vmatpush.bf16.msra.mxu0 %v3622
        %3746 = vmatpush.bf16.msra.mxu0 %v3620
        %3747 = vmatpush.bf16.msra.mxu0 %v3618
        %3748 = vmatpush.bf16.msra.mxu0 %v3616
        %3749 = vmatpush.bf16.msra.mxu0 %v3614
        %3750 = vmatpush.bf16.msra.mxu0 %v3612
        %3751 = vmatpush.bf16.msra.mxu0 %v3610
        %3752 = vmatmul.bf16.gmra.mxu0 %v3408
        %v3753 = vpop.f32.mrf.mxu0
        %v3754 = vadd.f32 %v3462, %v3753
        %v3755 = vpop.f32.mrf.mxu0
        %3756 = vdwg.mxu0
        %3757 = vmatpush.bf16.msra.mxu0 %v3640
        %3758 = vmatpush.bf16.msra.mxu0 %v3638
        %3759 = vmatpush.bf16.msra.mxu0 %v3636
        %3760 = vmatpush.bf16.msra.mxu0 %v3634
        %3761 = vmatpush.bf16.msra.mxu0 %v3632
        %3762 = vmatpush.bf16.msra.mxu0 %v3630
        %3763 = vmatpush.bf16.msra.mxu0 %v3628
        %3764 = vmatpush.bf16.msra.mxu0 %v3626
        %3765 = vmatmul.bf16.gmra.mxu0 %v3409
        %v3766 = vpop.f32.mrf.mxu0
        %v3767 = vadd.f32 %v3754, %v3766
        %v3768 = vpop.f32.mrf.mxu0
        %3769 = vdwg.mxu0
        %3770 = vmatpush.bf16.msra.mxu0 %v3656
        %3771 = vmatpush.bf16.msra.mxu0 %v3654
        %3772 = vmatpush.bf16.msra.mxu0 %v3652
        %3773 = vmatpush.bf16.msra.mxu0 %v3650
        %3774 = vmatpush.bf16.msra.mxu0 %v3648
        %3775 = vmatpush.bf16.msra.mxu0 %v3646
        %3776 = vmatpush.bf16.msra.mxu0 %v3644
        %3777 = vmatpush.bf16.msra.mxu0 %v3642
        %3778 = vmatmul.bf16.gmra.mxu0 %v3410
        %v3779 = vpop.f32.mrf.mxu0
        %v3780 = vadd.f32 %v3767, %v3779
        %v3781 = vpop.f32.mrf.mxu0
        %3782 = vdwg.mxu0
        %v3783 = vmax.f32 %v3741, 0.0
        %v3784 = vmax.f32 %v3780, 0.0
        %v3785 = vpack.c.bf16 %v3784, %v3783
        %3786 = vst [vmem:[#allocation4 + $0x28] sm:$0xff] %v3785
        %v3787 = vld [vmem:[%s1411] sm:$0xf]
        %v3788 = vld [vmem:[%s1431] sm:$0xf]
        %v3789 = vld [vmem:[%s1451] sm:$0xf]
        %v3790 = vld [vmem:[%s3] sm:$0xff]
        %v3791 = vld [vmem:[%s3 + $0x8] sm:$0xff]
        %v3792 = vld [vmem:[%s3 + $0x10] sm:$0xff]
        %v3793 = vld [vmem:[%s3 + $0x18] sm:$0xff]
        %v3794 = vld [vmem:[%s3 + $0x20] sm:$0xff]
        %v3795 = vld [vmem:[%s3 + $0x28] sm:$0xff]
        %v3796 = vld [vmem:[%s3 + $0x30] sm:$0xff]
        %v3797 = vld [vmem:[%s3 + $0x38] sm:$0xff]
        %v3798 = vld [vmem:[%s3 + $0x40] sm:$0xff]
        %v3799 = vld [vmem:[%s3 + $0x48] sm:$0xff]
        %v3800 = vld [vmem:[%s3 + $0x50] sm:$0xff]
        %v3801 = vld [vmem:[%s3 + $0x58] sm:$0xff]
        %v3802 = vld [vmem:[%s3 + $0x60] sm:$0xff]
        %v3803 = vld [vmem:[%s3 + $0x68] sm:$0xff]
        %v3804 = vld [vmem:[%s3 + $0x70] sm:$0xff]
        %v3805 = vld [vmem:[%s3 + $0x78] sm:$0xff]
        %v3806 = vld [vmem:[%s3 + $0x80] sm:$0xff]
        %v3807 = vld [vmem:[%s3 + $0x88] sm:$0xff]
        %v3808 = vld [vmem:[%s3 + $0x90] sm:$0xff]
        %v3809 = vld [vmem:[%s3 + $0x98] sm:$0xff]
        %v3810 = vld [vmem:[%s3 + $0xa0] sm:$0xff]
        %v3811 = vld [vmem:[%s3 + $0xa8] sm:$0xff]
        %v3812 = vld [vmem:[%s3 + $0xb0] sm:$0xff]
        %v3813 = vld [vmem:[%s3 + $0xb8] sm:$0xff]
        %v3814 = vld [vmem:[%s3 + $0xc0] sm:$0xff]
        %v3815 = vld [vmem:[%s3 + $0xc8] sm:$0xff]
        %v3816 = vld [vmem:[%s3 + $0xd0] sm:$0xff]
        %v3817 = vld [vmem:[%s3 + $0xd8] sm:$0xff]
        %v3818 = vld [vmem:[%s3 + $0xe0] sm:$0xff]
        %v3819 = vld [vmem:[%s3 + $0xe8] sm:$0xff]
        %v3820 = vld [vmem:[%s3 + $0xf0] sm:$0xff]
        %v3821 = vld [vmem:[%s3 + $0xf8] sm:$0xff]
        %v3822 = vld [vmem:[%s3 + $0x100] sm:$0xff]
        %v3823 = vld [vmem:[%s3 + $0x108] sm:$0xff]
        %v3824 = vld [vmem:[%s3 + $0x110] sm:$0xff]
        %v3825 = vld [vmem:[%s3 + $0x118] sm:$0xff]
        %v3826 = vld [vmem:[%s3 + $0x120] sm:$0xff]
        %v3827 = vld [vmem:[%s3 + $0x128] sm:$0xff]
        %v3828 = vld [vmem:[%s3 + $0x130] sm:$0xff]
        %v3829 = vld [vmem:[%s3 + $0x138] sm:$0xff]
        %v3830 = vld [vmem:[%s3 + $0x140] sm:$0xff]
        %v3831 = vld [vmem:[%s3 + $0x148] sm:$0xff]
        %v3832 = vld [vmem:[%s3 + $0x150] sm:$0xff]
        %v3833 = vld [vmem:[%s3 + $0x158] sm:$0xff]
        %v3834 = vld [vmem:[%s3 + $0x160] sm:$0xff]
        %v3835 = vld [vmem:[%s3 + $0x168] sm:$0xff]
        %v3836 = vld [vmem:[%s3 + $0x170] sm:$0xff]
        %v3837 = vld [vmem:[%s3 + $0x178] sm:$0xff]
        %v3838 = vld [vmem:[%s4] sm:$0x3]
        %v3840 = vperm.slane %v3838, 0
        %v3841 = vperm.slane %v3838, 1
        %v3892 = vunpack.c.l.b16 %v3790
        %v3893 = vunpack.c.h.b16 %v3790
        %v3894 = vunpack.c.l.b16 %v3791
        %v3895 = vunpack.c.h.b16 %v3791
        %v3896 = vunpack.c.l.b16 %v3792
        %v3897 = vunpack.c.h.b16 %v3792
        %v3898 = vunpack.c.l.b16 %v3793
        %v3899 = vunpack.c.h.b16 %v3793
        %v3900 = vunpack.c.l.b16 %v3794
        %v3901 = vunpack.c.h.b16 %v3794
        %v3902 = vunpack.c.l.b16 %v3795
        %v3903 = vunpack.c.h.b16 %v3795
        %v3904 = vunpack.c.l.b16 %v3796
        %v3905 = vunpack.c.h.b16 %v3796
        %v3906 = vunpack.c.l.b16 %v3797
        %v3907 = vunpack.c.h.b16 %v3797
        %v3908 = vunpack.c.l.b16 %v3798
        %v3909 = vunpack.c.h.b16 %v3798
        %v3910 = vunpack.c.l.b16 %v3799
        %v3911 = vunpack.c.h.b16 %v3799
        %v3912 = vunpack.c.l.b16 %v3800
        %v3913 = vunpack.c.h.b16 %v3800
        %v3914 = vunpack.c.l.b16 %v3801
        %v3915 = vunpack.c.h.b16 %v3801
        %v3916 = vunpack.c.l.b16 %v3802
        %v3917 = vunpack.c.h.b16 %v3802
        %v3918 = vunpack.c.l.b16 %v3803
        %v3919 = vunpack.c.h.b16 %v3803
        %v3920 = vunpack.c.l.b16 %v3804
        %v3921 = vunpack.c.h.b16 %v3804
        %v3922 = vunpack.c.l.b16 %v3805
        %v3923 = vunpack.c.h.b16 %v3805
        %v3924 = vunpack.c.l.b16 %v3806
        %v3925 = vunpack.c.h.b16 %v3806
        %v3926 = vunpack.c.l.b16 %v3807
        %v3927 = vunpack.c.h.b16 %v3807
        %v3928 = vunpack.c.l.b16 %v3808
        %v3929 = vunpack.c.h.b16 %v3808
        %v3930 = vunpack.c.l.b16 %v3809
        %v3931 = vunpack.c.h.b16 %v3809
        %v3932 = vunpack.c.l.b16 %v3810
        %v3933 = vunpack.c.h.b16 %v3810
        %v3934 = vunpack.c.l.b16 %v3811
        %v3935 = vunpack.c.h.b16 %v3811
        %v3936 = vunpack.c.l.b16 %v3812
        %v3937 = vunpack.c.h.b16 %v3812
        %v3938 = vunpack.c.l.b16 %v3813
        %v3939 = vunpack.c.h.b16 %v3813
        %v3940 = vunpack.c.l.b16 %v3814
        %v3941 = vunpack.c.h.b16 %v3814
        %v3942 = vunpack.c.l.b16 %v3815
        %v3943 = vunpack.c.h.b16 %v3815
        %v3944 = vunpack.c.l.b16 %v3816
        %v3945 = vunpack.c.h.b16 %v3816
        %v3946 = vunpack.c.l.b16 %v3817
        %v3947 = vunpack.c.h.b16 %v3817
        %v3948 = vunpack.c.l.b16 %v3818
        %v3949 = vunpack.c.h.b16 %v3818
        %v3950 = vunpack.c.l.b16 %v3819
        %v3951 = vunpack.c.h.b16 %v3819
        %v3952 = vunpack.c.l.b16 %v3820
        %v3953 = vunpack.c.h.b16 %v3820
        %v3954 = vunpack.c.l.b16 %v3821
        %v3955 = vunpack.c.h.b16 %v3821
        %v3956 = vunpack.c.l.b16 %v3822
        %v3957 = vunpack.c.h.b16 %v3822
        %v3958 = vunpack.c.l.b16 %v3823
        %v3959 = vunpack.c.h.b16 %v3823
        %v3960 = vunpack.c.l.b16 %v3824
        %v3961 = vunpack.c.h.b16 %v3824
        %v3962 = vunpack.c.l.b16 %v3825
        %v3963 = vunpack.c.h.b16 %v3825
        %v3964 = vunpack.c.l.b16 %v3826
        %v3965 = vunpack.c.h.b16 %v3826
        %v3966 = vunpack.c.l.b16 %v3827
        %v3967 = vunpack.c.h.b16 %v3827
        %v3968 = vunpack.c.l.b16 %v3828
        %v3969 = vunpack.c.h.b16 %v3828
        %v3970 = vunpack.c.l.b16 %v3829
        %v3971 = vunpack.c.h.b16 %v3829
        %v3972 = vunpack.c.l.b16 %v3830
        %v3973 = vunpack.c.h.b16 %v3830
        %v3974 = vunpack.c.l.b16 %v3831
        %v3975 = vunpack.c.h.b16 %v3831
        %v3976 = vunpack.c.l.b16 %v3832
        %v3977 = vunpack.c.h.b16 %v3832
        %v3978 = vunpack.c.l.b16 %v3833
        %v3979 = vunpack.c.h.b16 %v3833
        %v3980 = vunpack.c.l.b16 %v3834
        %v3981 = vunpack.c.h.b16 %v3834
        %v3982 = vunpack.c.l.b16 %v3835
        %v3983 = vunpack.c.h.b16 %v3835
        %v3984 = vunpack.c.l.b16 %v3836
        %v3985 = vunpack.c.h.b16 %v3836
        %v3986 = vunpack.c.l.b16 %v3837
        %v3987 = vunpack.c.h.b16 %v3837
        %v3988 = vpack.c.b16 %v3894, %v3892
        %v3989 = vpack.c.b16 %v3895, %v3893
        %v3990 = vpack.c.b16 %v3898, %v3896
        %v3991 = vpack.c.b16 %v3899, %v3897
        %v3992 = vpack.c.b16 %v3902, %v3900
        %v3993 = vpack.c.b16 %v3903, %v3901
        %v3994 = vpack.c.b16 %v3906, %v3904
        %v3995 = vpack.c.b16 %v3907, %v3905
        %v3996 = vpack.c.b16 %v3910, %v3908
        %v3997 = vpack.c.b16 %v3911, %v3909
        %v3998 = vpack.c.b16 %v3914, %v3912
        %v3999 = vpack.c.b16 %v3915, %v3913
        %v4000 = vpack.c.b16 %v3918, %v3916
        %v4001 = vpack.c.b16 %v3919, %v3917
        %v4002 = vpack.c.b16 %v3922, %v3920
        %v4003 = vpack.c.b16 %v3923, %v3921
        %v4004 = vpack.c.b16 %v3926, %v3924
        %v4005 = vpack.c.b16 %v3927, %v3925
        %v4006 = vpack.c.b16 %v3930, %v3928
        %v4007 = vpack.c.b16 %v3931, %v3929
        %v4008 = vpack.c.b16 %v3934, %v3932
        %v4009 = vpack.c.b16 %v3935, %v3933
        %v4010 = vpack.c.b16 %v3938, %v3936
        %v4011 = vpack.c.b16 %v3939, %v3937
        %v4012 = vpack.c.b16 %v3942, %v3940
        %v4013 = vpack.c.b16 %v3943, %v3941
        %v4014 = vpack.c.b16 %v3946, %v3944
        %v4015 = vpack.c.b16 %v3947, %v3945
        %v4016 = vpack.c.b16 %v3950, %v3948
        %v4017 = vpack.c.b16 %v3951, %v3949
        %v4018 = vpack.c.b16 %v3954, %v3952
        %v4019 = vpack.c.b16 %v3955, %v3953
        %v4020 = vpack.c.b16 %v3958, %v3956
        %v4021 = vpack.c.b16 %v3959, %v3957
        %v4022 = vpack.c.b16 %v3962, %v3960
        %v4023 = vpack.c.b16 %v3963, %v3961
        %v4024 = vpack.c.b16 %v3966, %v3964
        %v4025 = vpack.c.b16 %v3967, %v3965
        %v4026 = vpack.c.b16 %v3970, %v3968
        %v4027 = vpack.c.b16 %v3971, %v3969
        %v4028 = vpack.c.b16 %v3974, %v3972
        %v4029 = vpack.c.b16 %v3975, %v3973
        %v4030 = vpack.c.b16 %v3978, %v3976
        %v4031 = vpack.c.b16 %v3979, %v3977
        %v4032 = vpack.c.b16 %v3982, %v3980
        %v4033 = vpack.c.b16 %v3983, %v3981
        %v4034 = vpack.c.b16 %v3986, %v3984
        %v4035 = vpack.c.b16 %v3987, %v3985
        %4084 = vmatpush.bf16.msra.mxu0 %v4002
        %4085 = vmatpush.bf16.msra.mxu0 %v4000
        %4086 = vmatpush.bf16.msra.mxu0 %v3998
        %4087 = vmatpush.bf16.msra.mxu0 %v3996
        %4088 = vmatpush.bf16.msra.mxu0 %v3994
        %4089 = vmatpush.bf16.msra.mxu0 %v3992
        %4090 = vmatpush.bf16.msra.mxu0 %v3990
        %4091 = vmatpush.bf16.msra.mxu0 %v3988
        %4092 = vmatmul.bf16.gmra.mxu0 %v3787
        %v4093 = vpop.f32.mrf.mxu0
        %v4094 = vadd.f32 %v3840, %v4093
        %v4095 = vpop.f32.mrf.mxu0
        %4096 = vdwg.mxu0
        %4097 = vmatpush.bf16.msra.mxu0 %v4018
        %4098 = vmatpush.bf16.msra.mxu0 %v4016
        %4099 = vmatpush.bf16.msra.mxu0 %v4014
        %4100 = vmatpush.bf16.msra.mxu0 %v4012
        %4101 = vmatpush.bf16.msra.mxu0 %v4010
        %4102 = vmatpush.bf16.msra.mxu0 %v4008
        %4103 = vmatpush.bf16.msra.mxu0 %v4006
        %4104 = vmatpush.bf16.msra.mxu0 %v4004
        %4105 = vmatmul.bf16.gmra.mxu0 %v3788
        %v4106 = vpop.f32.mrf.mxu0
        %v4107 = vadd.f32 %v4094, %v4106
        %v4108 = vpop.f32.mrf.mxu0
        %4109 = vdwg.mxu0
        %4110 = vmatpush.bf16.msra.mxu0 %v4034
        %4111 = vmatpush.bf16.msra.mxu0 %v4032
        %4112 = vmatpush.bf16.msra.mxu0 %v4030
        %4113 = vmatpush.bf16.msra.mxu0 %v4028
        %4114 = vmatpush.bf16.msra.mxu0 %v4026
        %4115 = vmatpush.bf16.msra.mxu0 %v4024
        %4116 = vmatpush.bf16.msra.mxu0 %v4022
        %4117 = vmatpush.bf16.msra.mxu0 %v4020
        %4118 = vmatmul.bf16.gmra.mxu0 %v3789
        %v4119 = vpop.f32.mrf.mxu0
        %v4120 = vadd.f32 %v4107, %v4119
        %v4121 = vpop.f32.mrf.mxu0
        %4122 = vdwg.mxu0
        %4123 = vmatpush.bf16.msra.mxu0 %v4003
        %4124 = vmatpush.bf16.msra.mxu0 %v4001
        %4125 = vmatpush.bf16.msra.mxu0 %v3999
        %4126 = vmatpush.bf16.msra.mxu0 %v3997
        %4127 = vmatpush.bf16.msra.mxu0 %v3995
        %4128 = vmatpush.bf16.msra.mxu0 %v3993
        %4129 = vmatpush.bf16.msra.mxu0 %v3991
        %4130 = vmatpush.bf16.msra.mxu0 %v3989
        %4131 = vmatmul.bf16.gmra.mxu0 %v3787
        %v4132 = vpop.f32.mrf.mxu0
        %v4133 = vadd.f32 %v3841, %v4132
        %v4134 = vpop.f32.mrf.mxu0
        %4135 = vdwg.mxu0
        %4136 = vmatpush.bf16.msra.mxu0 %v4019
        %4137 = vmatpush.bf16.msra.mxu0 %v4017
        %4138 = vmatpush.bf16.msra.mxu0 %v4015
        %4139 = vmatpush.bf16.msra.mxu0 %v4013
        %4140 = vmatpush.bf16.msra.mxu0 %v4011
        %4141 = vmatpush.bf16.msra.mxu0 %v4009
        %4142 = vmatpush.bf16.msra.mxu0 %v4007
        %4143 = vmatpush.bf16.msra.mxu0 %v4005
        %4144 = vmatmul.bf16.gmra.mxu0 %v3788
        %v4145 = vpop.f32.mrf.mxu0
        %v4146 = vadd.f32 %v4133, %v4145
        %v4147 = vpop.f32.mrf.mxu0
        %4148 = vdwg.mxu0
        %4149 = vmatpush.bf16.msra.mxu0 %v4035
        %4150 = vmatpush.bf16.msra.mxu0 %v4033
        %4151 = vmatpush.bf16.msra.mxu0 %v4031
        %4152 = vmatpush.bf16.msra.mxu0 %v4029
        %4153 = vmatpush.bf16.msra.mxu0 %v4027
        %4154 = vmatpush.bf16.msra.mxu0 %v4025
        %4155 = vmatpush.bf16.msra.mxu0 %v4023
        %4156 = vmatpush.bf16.msra.mxu0 %v4021
        %4157 = vmatmul.bf16.gmra.mxu0 %v3789
        %v4158 = vpop.f32.mrf.mxu0
        %v4159 = vadd.f32 %v4146, %v4158
        %v4160 = vpop.f32.mrf.mxu0
        %4161 = vdwg.mxu0
        %v4162 = vmax.f32 %v4120, 0.0
        %v4163 = vmax.f32 %v4159, 0.0
        %v4164 = vpack.c.bf16 %v4163, %v4162
        %4165 = vst [vmem:[#allocation4 + $0x30] sm:$0xff] %v4164
        %v4166 = vld [vmem:[%s1431] sm:$0xf]
        %v4167 = vld [vmem:[%s1451] sm:$0xf]
        %v4168 = vld [vmem:[%s1471] sm:$0xf]
        %v4169 = vld [vmem:[%s3] sm:$0xff]
        %v4170 = vld [vmem:[%s3 + $0x8] sm:$0xff]
        %v4171 = vld [vmem:[%s3 + $0x10] sm:$0xff]
        %v4172 = vld [vmem:[%s3 + $0x18] sm:$0xff]
        %v4173 = vld [vmem:[%s3 + $0x20] sm:$0xff]
        %v4174 = vld [vmem:[%s3 + $0x28] sm:$0xff]
        %v4175 = vld [vmem:[%s3 + $0x30] sm:$0xff]
        %v4176 = vld [vmem:[%s3 + $0x38] sm:$0xff]
        %v4177 = vld [vmem:[%s3 + $0x40] sm:$0xff]
        %v4178 = vld [vmem:[%s3 + $0x48] sm:$0xff]
        %v4179 = vld [vmem:[%s3 + $0x50] sm:$0xff]
        %v4180 = vld [vmem:[%s3 + $0x58] sm:$0xff]
        %v4181 = vld [vmem:[%s3 + $0x60] sm:$0xff]
        %v4182 = vld [vmem:[%s3 + $0x68] sm:$0xff]
        %v4183 = vld [vmem:[%s3 + $0x70] sm:$0xff]
        %v4184 = vld [vmem:[%s3 + $0x78] sm:$0xff]
        %v4185 = vld [vmem:[%s3 + $0x80] sm:$0xff]
        %v4186 = vld [vmem:[%s3 + $0x88] sm:$0xff]
        %v4187 = vld [vmem:[%s3 + $0x90] sm:$0xff]
        %v4188 = vld [vmem:[%s3 + $0x98] sm:$0xff]
        %v4189 = vld [vmem:[%s3 + $0xa0] sm:$0xff]
        %v4190 = vld [vmem:[%s3 + $0xa8] sm:$0xff]
        %v4191 = vld [vmem:[%s3 + $0xb0] sm:$0xff]
        %v4192 = vld [vmem:[%s3 + $0xb8] sm:$0xff]
        %v4193 = vld [vmem:[%s3 + $0xc0] sm:$0xff]
        %v4194 = vld [vmem:[%s3 + $0xc8] sm:$0xff]
        %v4195 = vld [vmem:[%s3 + $0xd0] sm:$0xff]
        %v4196 = vld [vmem:[%s3 + $0xd8] sm:$0xff]
        %v4197 = vld [vmem:[%s3 + $0xe0] sm:$0xff]
        %v4198 = vld [vmem:[%s3 + $0xe8] sm:$0xff]
        %v4199 = vld [vmem:[%s3 + $0xf0] sm:$0xff]
        %v4200 = vld [vmem:[%s3 + $0xf8] sm:$0xff]
        %v4201 = vld [vmem:[%s3 + $0x100] sm:$0xff]
        %v4202 = vld [vmem:[%s3 + $0x108] sm:$0xff]
        %v4203 = vld [vmem:[%s3 + $0x110] sm:$0xff]
        %v4204 = vld [vmem:[%s3 + $0x118] sm:$0xff]
        %v4205 = vld [vmem:[%s3 + $0x120] sm:$0xff]
        %v4206 = vld [vmem:[%s3 + $0x128] sm:$0xff]
        %v4207 = vld [vmem:[%s3 + $0x130] sm:$0xff]
        %v4208 = vld [vmem:[%s3 + $0x138] sm:$0xff]
        %v4209 = vld [vmem:[%s3 + $0x140] sm:$0xff]
        %v4210 = vld [vmem:[%s3 + $0x148] sm:$0xff]
        %v4211 = vld [vmem:[%s3 + $0x150] sm:$0xff]
        %v4212 = vld [vmem:[%s3 + $0x158] sm:$0xff]
        %v4213 = vld [vmem:[%s3 + $0x160] sm:$0xff]
        %v4214 = vld [vmem:[%s3 + $0x168] sm:$0xff]
        %v4215 = vld [vmem:[%s3 + $0x170] sm:$0xff]
        %v4216 = vld [vmem:[%s3 + $0x178] sm:$0xff]
        %v4217 = vld [vmem:[%s4] sm:$0x3]
        %v4219 = vperm.slane %v4217, 0
        %v4220 = vperm.slane %v4217, 1
        %v4271 = vunpack.c.l.b16 %v4169
        %v4272 = vunpack.c.h.b16 %v4169
        %v4273 = vunpack.c.l.b16 %v4170
        %v4274 = vunpack.c.h.b16 %v4170
        %v4275 = vunpack.c.l.b16 %v4171
        %v4276 = vunpack.c.h.b16 %v4171
        %v4277 = vunpack.c.l.b16 %v4172
        %v4278 = vunpack.c.h.b16 %v4172
        %v4279 = vunpack.c.l.b16 %v4173
        %v4280 = vunpack.c.h.b16 %v4173
        %v4281 = vunpack.c.l.b16 %v4174
        %v4282 = vunpack.c.h.b16 %v4174
        %v4283 = vunpack.c.l.b16 %v4175
        %v4284 = vunpack.c.h.b16 %v4175
        %v4285 = vunpack.c.l.b16 %v4176
        %v4286 = vunpack.c.h.b16 %v4176
        %v4287 = vunpack.c.l.b16 %v4177
        %v4288 = vunpack.c.h.b16 %v4177
        %v4289 = vunpack.c.l.b16 %v4178
        %v4290 = vunpack.c.h.b16 %v4178
        %v4291 = vunpack.c.l.b16 %v4179
        %v4292 = vunpack.c.h.b16 %v4179
        %v4293 = vunpack.c.l.b16 %v4180
        %v4294 = vunpack.c.h.b16 %v4180
        %v4295 = vunpack.c.l.b16 %v4181
        %v4296 = vunpack.c.h.b16 %v4181
        %v4297 = vunpack.c.l.b16 %v4182
        %v4298 = vunpack.c.h.b16 %v4182
        %v4299 = vunpack.c.l.b16 %v4183
        %v4300 = vunpack.c.h.b16 %v4183
        %v4301 = vunpack.c.l.b16 %v4184
        %v4302 = vunpack.c.h.b16 %v4184
        %v4303 = vunpack.c.l.b16 %v4185
        %v4304 = vunpack.c.h.b16 %v4185
        %v4305 = vunpack.c.l.b16 %v4186
        %v4306 = vunpack.c.h.b16 %v4186
        %v4307 = vunpack.c.l.b16 %v4187
        %v4308 = vunpack.c.h.b16 %v4187
        %v4309 = vunpack.c.l.b16 %v4188
        %v4310 = vunpack.c.h.b16 %v4188
        %v4311 = vunpack.c.l.b16 %v4189
        %v4312 = vunpack.c.h.b16 %v4189
        %v4313 = vunpack.c.l.b16 %v4190
        %v4314 = vunpack.c.h.b16 %v4190
        %v4315 = vunpack.c.l.b16 %v4191
        %v4316 = vunpack.c.h.b16 %v4191
        %v4317 = vunpack.c.l.b16 %v4192
        %v4318 = vunpack.c.h.b16 %v4192
        %v4319 = vunpack.c.l.b16 %v4193
        %v4320 = vunpack.c.h.b16 %v4193
        %v4321 = vunpack.c.l.b16 %v4194
        %v4322 = vunpack.c.h.b16 %v4194
        %v4323 = vunpack.c.l.b16 %v4195
        %v4324 = vunpack.c.h.b16 %v4195
        %v4325 = vunpack.c.l.b16 %v4196
        %v4326 = vunpack.c.h.b16 %v4196
        %v4327 = vunpack.c.l.b16 %v4197
        %v4328 = vunpack.c.h.b16 %v4197
        %v4329 = vunpack.c.l.b16 %v4198
        %v4330 = vunpack.c.h.b16 %v4198
        %v4331 = vunpack.c.l.b16 %v4199
        %v4332 = vunpack.c.h.b16 %v4199
        %v4333 = vunpack.c.l.b16 %v4200
        %v4334 = vunpack.c.h.b16 %v4200
        %v4335 = vunpack.c.l.b16 %v4201
        %v4336 = vunpack.c.h.b16 %v4201
        %v4337 = vunpack.c.l.b16 %v4202
        %v4338 = vunpack.c.h.b16 %v4202
        %v4339 = vunpack.c.l.b16 %v4203
        %v4340 = vunpack.c.h.b16 %v4203
        %v4341 = vunpack.c.l.b16 %v4204
        %v4342 = vunpack.c.h.b16 %v4204
        %v4343 = vunpack.c.l.b16 %v4205
        %v4344 = vunpack.c.h.b16 %v4205
        %v4345 = vunpack.c.l.b16 %v4206
        %v4346 = vunpack.c.h.b16 %v4206
        %v4347 = vunpack.c.l.b16 %v4207
        %v4348 = vunpack.c.h.b16 %v4207
        %v4349 = vunpack.c.l.b16 %v4208
        %v4350 = vunpack.c.h.b16 %v4208
        %v4351 = vunpack.c.l.b16 %v4209
        %v4352 = vunpack.c.h.b16 %v4209
        %v4353 = vunpack.c.l.b16 %v4210
        %v4354 = vunpack.c.h.b16 %v4210
        %v4355 = vunpack.c.l.b16 %v4211
        %v4356 = vunpack.c.h.b16 %v4211
        %v4357 = vunpack.c.l.b16 %v4212
        %v4358 = vunpack.c.h.b16 %v4212
        %v4359 = vunpack.c.l.b16 %v4213
        %v4360 = vunpack.c.h.b16 %v4213
        %v4361 = vunpack.c.l.b16 %v4214
        %v4362 = vunpack.c.h.b16 %v4214
        %v4363 = vunpack.c.l.b16 %v4215
        %v4364 = vunpack.c.h.b16 %v4215
        %v4365 = vunpack.c.l.b16 %v4216
        %v4366 = vunpack.c.h.b16 %v4216
        %v4367 = vpack.c.b16 %v4273, %v4271
        %v4368 = vpack.c.b16 %v4274, %v4272
        %v4369 = vpack.c.b16 %v4277, %v4275
        %v4370 = vpack.c.b16 %v4278, %v4276
        %v4371 = vpack.c.b16 %v4281, %v4279
        %v4372 = vpack.c.b16 %v4282, %v4280
        %v4373 = vpack.c.b16 %v4285, %v4283
        %v4374 = vpack.c.b16 %v4286, %v4284
        %v4375 = vpack.c.b16 %v4289, %v4287
        %v4376 = vpack.c.b16 %v4290, %v4288
        %v4377 = vpack.c.b16 %v4293, %v4291
        %v4378 = vpack.c.b16 %v4294, %v4292
        %v4379 = vpack.c.b16 %v4297, %v4295
        %v4380 = vpack.c.b16 %v4298, %v4296
        %v4381 = vpack.c.b16 %v4301, %v4299
        %v4382 = vpack.c.b16 %v4302, %v4300
        %v4383 = vpack.c.b16 %v4305, %v4303
        %v4384 = vpack.c.b16 %v4306, %v4304
        %v4385 = vpack.c.b16 %v4309, %v4307
        %v4386 = vpack.c.b16 %v4310, %v4308
        %v4387 = vpack.c.b16 %v4313, %v4311
        %v4388 = vpack.c.b16 %v4314, %v4312
        %v4389 = vpack.c.b16 %v4317, %v4315
        %v4390 = vpack.c.b16 %v4318, %v4316
        %v4391 = vpack.c.b16 %v4321, %v4319
        %v4392 = vpack.c.b16 %v4322, %v4320
        %v4393 = vpack.c.b16 %v4325, %v4323
        %v4394 = vpack.c.b16 %v4326, %v4324
        %v4395 = vpack.c.b16 %v4329, %v4327
        %v4396 = vpack.c.b16 %v4330, %v4328
        %v4397 = vpack.c.b16 %v4333, %v4331
        %v4398 = vpack.c.b16 %v4334, %v4332
        %v4399 = vpack.c.b16 %v4337, %v4335
        %v4400 = vpack.c.b16 %v4338, %v4336
        %v4401 = vpack.c.b16 %v4341, %v4339
        %v4402 = vpack.c.b16 %v4342, %v4340
        %v4403 = vpack.c.b16 %v4345, %v4343
        %v4404 = vpack.c.b16 %v4346, %v4344
        %v4405 = vpack.c.b16 %v4349, %v4347
        %v4406 = vpack.c.b16 %v4350, %v4348
        %v4407 = vpack.c.b16 %v4353, %v4351
        %v4408 = vpack.c.b16 %v4354, %v4352
        %v4409 = vpack.c.b16 %v4357, %v4355
        %v4410 = vpack.c.b16 %v4358, %v4356
        %v4411 = vpack.c.b16 %v4361, %v4359
        %v4412 = vpack.c.b16 %v4362, %v4360
        %v4413 = vpack.c.b16 %v4365, %v4363
        %v4414 = vpack.c.b16 %v4366, %v4364
        %4463 = vmatpush.bf16.msra.mxu0 %v4381
        %4464 = vmatpush.bf16.msra.mxu0 %v4379
        %4465 = vmatpush.bf16.msra.mxu0 %v4377
        %4466 = vmatpush.bf16.msra.mxu0 %v4375
        %4467 = vmatpush.bf16.msra.mxu0 %v4373
        %4468 = vmatpush.bf16.msra.mxu0 %v4371
        %4469 = vmatpush.bf16.msra.mxu0 %v4369
        %4470 = vmatpush.bf16.msra.mxu0 %v4367
        %4471 = vmatmul.bf16.gmra.mxu0 %v4166
        %v4472 = vpop.f32.mrf.mxu0
        %v4473 = vadd.f32 %v4219, %v4472
        %v4474 = vpop.f32.mrf.mxu0
        %4475 = vdwg.mxu0
        %4476 = vmatpush.bf16.msra.mxu0 %v4397
        %4477 = vmatpush.bf16.msra.mxu0 %v4395
        %4478 = vmatpush.bf16.msra.mxu0 %v4393
        %4479 = vmatpush.bf16.msra.mxu0 %v4391
        %4480 = vmatpush.bf16.msra.mxu0 %v4389
        %4481 = vmatpush.bf16.msra.mxu0 %v4387
        %4482 = vmatpush.bf16.msra.mxu0 %v4385
        %4483 = vmatpush.bf16.msra.mxu0 %v4383
        %4484 = vmatmul.bf16.gmra.mxu0 %v4167
        %v4485 = vpop.f32.mrf.mxu0
        %v4486 = vadd.f32 %v4473, %v4485
        %v4487 = vpop.f32.mrf.mxu0
        %4488 = vdwg.mxu0
        %4489 = vmatpush.bf16.msra.mxu0 %v4413
        %4490 = vmatpush.bf16.msra.mxu0 %v4411
        %4491 = vmatpush.bf16.msra.mxu0 %v4409
        %4492 = vmatpush.bf16.msra.mxu0 %v4407
        %4493 = vmatpush.bf16.msra.mxu0 %v4405
        %4494 = vmatpush.bf16.msra.mxu0 %v4403
        %4495 = vmatpush.bf16.msra.mxu0 %v4401
        %4496 = vmatpush.bf16.msra.mxu0 %v4399
        %4497 = vmatmul.bf16.gmra.mxu0 %v4168
        %v4498 = vpop.f32.mrf.mxu0
        %v4499 = vadd.f32 %v4486, %v4498
        %v4500 = vpop.f32.mrf.mxu0
        %4501 = vdwg.mxu0
        %4502 = vmatpush.bf16.msra.mxu0 %v4382
        %4503 = vmatpush.bf16.msra.mxu0 %v4380
        %4504 = vmatpush.bf16.msra.mxu0 %v4378
        %4505 = vmatpush.bf16.msra.mxu0 %v4376
        %4506 = vmatpush.bf16.msra.mxu0 %v4374
        %4507 = vmatpush.bf16.msra.mxu0 %v4372
        %4508 = vmatpush.bf16.msra.mxu0 %v4370
        %4509 = vmatpush.bf16.msra.mxu0 %v4368
        %4510 = vmatmul.bf16.gmra.mxu0 %v4166
        %v4511 = vpop.f32.mrf.mxu0
        %v4512 = vadd.f32 %v4220, %v4511
        %v4513 = vpop.f32.mrf.mxu0
        %4514 = vdwg.mxu0
        %4515 = vmatpush.bf16.msra.mxu0 %v4398
        %4516 = vmatpush.bf16.msra.mxu0 %v4396
        %4517 = vmatpush.bf16.msra.mxu0 %v4394
        %4518 = vmatpush.bf16.msra.mxu0 %v4392
        %4519 = vmatpush.bf16.msra.mxu0 %v4390
        %4520 = vmatpush.bf16.msra.mxu0 %v4388
        %4521 = vmatpush.bf16.msra.mxu0 %v4386
        %4522 = vmatpush.bf16.msra.mxu0 %v4384
        %4523 = vmatmul.bf16.gmra.mxu0 %v4167
        %v4524 = vpop.f32.mrf.mxu0
        %v4525 = vadd.f32 %v4512, %v4524
        %v4526 = vpop.f32.mrf.mxu0
        %4527 = vdwg.mxu0
        %4528 = vmatpush.bf16.msra.mxu0 %v4414
        %4529 = vmatpush.bf16.msra.mxu0 %v4412
        %4530 = vmatpush.bf16.msra.mxu0 %v4410
        %4531 = vmatpush.bf16.msra.mxu0 %v4408
        %4532 = vmatpush.bf16.msra.mxu0 %v4406
        %4533 = vmatpush.bf16.msra.mxu0 %v4404
        %4534 = vmatpush.bf16.msra.mxu0 %v4402
        %4535 = vmatpush.bf16.msra.mxu0 %v4400
        %4536 = vmatmul.bf16.gmra.mxu0 %v4168
        %v4537 = vpop.f32.mrf.mxu0
        %v4538 = vadd.f32 %v4525, %v4537
        %v4539 = vpop.f32.mrf.mxu0
        %4540 = vdwg.mxu0
        %v4541 = vmax.f32 %v4499, 0.0
        %v4542 = vmax.f32 %v4538, 0.0
        %v4543 = vpack.c.bf16 %v4542, %v4541
        %4544 = vst [vmem:[#allocation4 + $0x38] sm:$0xff] %v4543
        %v4545 = vld [vmem:[%s1451] sm:$0xf]
        %v4546 = vld [vmem:[%s1471] sm:$0xf]
        %v4547 = vld [vmem:[%s1491] sm:$0xf]
        %v4548 = vld [vmem:[%s3] sm:$0xff]
        %v4549 = vld [vmem:[%s3 + $0x8] sm:$0xff]
        %v4550 = vld [vmem:[%s3 + $0x10] sm:$0xff]
        %v4551 = vld [vmem:[%s3 + $0x18] sm:$0xff]
        %v4552 = vld [vmem:[%s3 + $0x20] sm:$0xff]
        %v4553 = vld [vmem:[%s3 + $0x28] sm:$0xff]
        %v4554 = vld [vmem:[%s3 + $0x30] sm:$0xff]
        %v4555 = vld [vmem:[%s3 + $0x38] sm:$0xff]
        %v4556 = vld [vmem:[%s3 + $0x40] sm:$0xff]
        %v4557 = vld [vmem:[%s3 + $0x48] sm:$0xff]
        %v4558 = vld [vmem:[%s3 + $0x50] sm:$0xff]
        %v4559 = vld [vmem:[%s3 + $0x58] sm:$0xff]
        %v4560 = vld [vmem:[%s3 + $0x60] sm:$0xff]
        %v4561 = vld [vmem:[%s3 + $0x68] sm:$0xff]
        %v4562 = vld [vmem:[%s3 + $0x70] sm:$0xff]
        %v4563 = vld [vmem:[%s3 + $0x78] sm:$0xff]
        %v4564 = vld [vmem:[%s3 + $0x80] sm:$0xff]
        %v4565 = vld [vmem:[%s3 + $0x88] sm:$0xff]
        %v4566 = vld [vmem:[%s3 + $0x90] sm:$0xff]
        %v4567 = vld [vmem:[%s3 + $0x98] sm:$0xff]
        %v4568 = vld [vmem:[%s3 + $0xa0] sm:$0xff]
        %v4569 = vld [vmem:[%s3 + $0xa8] sm:$0xff]
        %v4570 = vld [vmem:[%s3 + $0xb0] sm:$0xff]
        %v4571 = vld [vmem:[%s3 + $0xb8] sm:$0xff]
        %v4572 = vld [vmem:[%s3 + $0xc0] sm:$0xff]
        %v4573 = vld [vmem:[%s3 + $0xc8] sm:$0xff]
        %v4574 = vld [vmem:[%s3 + $0xd0] sm:$0xff]
        %v4575 = vld [vmem:[%s3 + $0xd8] sm:$0xff]
        %v4576 = vld [vmem:[%s3 + $0xe0] sm:$0xff]
        %v4577 = vld [vmem:[%s3 + $0xe8] sm:$0xff]
        %v4578 = vld [vmem:[%s3 + $0xf0] sm:$0xff]
        %v4579 = vld [vmem:[%s3 + $0xf8] sm:$0xff]
        %v4580 = vld [vmem:[%s3 + $0x100] sm:$0xff]
        %v4581 = vld [vmem:[%s3 + $0x108] sm:$0xff]
        %v4582 = vld [vmem:[%s3 + $0x110] sm:$0xff]
        %v4583 = vld [vmem:[%s3 + $0x118] sm:$0xff]
        %v4584 = vld [vmem:[%s3 + $0x120] sm:$0xff]
        %v4585 = vld [vmem:[%s3 + $0x128] sm:$0xff]
        %v4586 = vld [vmem:[%s3 + $0x130] sm:$0xff]
        %v4587 = vld [vmem:[%s3 + $0x138] sm:$0xff]
        %v4588 = vld [vmem:[%s3 + $0x140] sm:$0xff]
        %v4589 = vld [vmem:[%s3 + $0x148] sm:$0xff]
        %v4590 = vld [vmem:[%s3 + $0x150] sm:$0xff]
        %v4591 = vld [vmem:[%s3 + $0x158] sm:$0xff]
        %v4592 = vld [vmem:[%s3 + $0x160] sm:$0xff]
        %v4593 = vld [vmem:[%s3 + $0x168] sm:$0xff]
        %v4594 = vld [vmem:[%s3 + $0x170] sm:$0xff]
        %v4595 = vld [vmem:[%s3 + $0x178] sm:$0xff]
        %v4596 = vld [vmem:[%s4] sm:$0x3]
        %v4598 = vperm.slane %v4596, 0
        %v4599 = vperm.slane %v4596, 1
        %v4650 = vunpack.c.l.b16 %v4548
        %v4651 = vunpack.c.h.b16 %v4548
        %v4652 = vunpack.c.l.b16 %v4549
        %v4653 = vunpack.c.h.b16 %v4549
        %v4654 = vunpack.c.l.b16 %v4550
        %v4655 = vunpack.c.h.b16 %v4550
        %v4656 = vunpack.c.l.b16 %v4551
        %v4657 = vunpack.c.h.b16 %v4551
        %v4658 = vunpack.c.l.b16 %v4552
        %v4659 = vunpack.c.h.b16 %v4552
        %v4660 = vunpack.c.l.b16 %v4553
        %v4661 = vunpack.c.h.b16 %v4553
        %v4662 = vunpack.c.l.b16 %v4554
        %v4663 = vunpack.c.h.b16 %v4554
        %v4664 = vunpack.c.l.b16 %v4555
        %v4665 = vunpack.c.h.b16 %v4555
        %v4666 = vunpack.c.l.b16 %v4556
        %v4667 = vunpack.c.h.b16 %v4556
        %v4668 = vunpack.c.l.b16 %v4557
        %v4669 = vunpack.c.h.b16 %v4557
        %v4670 = vunpack.c.l.b16 %v4558
        %v4671 = vunpack.c.h.b16 %v4558
        %v4672 = vunpack.c.l.b16 %v4559
        %v4673 = vunpack.c.h.b16 %v4559
        %v4674 = vunpack.c.l.b16 %v4560
        %v4675 = vunpack.c.h.b16 %v4560
        %v4676 = vunpack.c.l.b16 %v4561
        %v4677 = vunpack.c.h.b16 %v4561
        %v4678 = vunpack.c.l.b16 %v4562
        %v4679 = vunpack.c.h.b16 %v4562
        %v4680 = vunpack.c.l.b16 %v4563
        %v4681 = vunpack.c.h.b16 %v4563
        %v4682 = vunpack.c.l.b16 %v4564
        %v4683 = vunpack.c.h.b16 %v4564
        %v4684 = vunpack.c.l.b16 %v4565
        %v4685 = vunpack.c.h.b16 %v4565
        %v4686 = vunpack.c.l.b16 %v4566
        %v4687 = vunpack.c.h.b16 %v4566
        %v4688 = vunpack.c.l.b16 %v4567
        %v4689 = vunpack.c.h.b16 %v4567
        %v4690 = vunpack.c.l.b16 %v4568
        %v4691 = vunpack.c.h.b16 %v4568
        %v4692 = vunpack.c.l.b16 %v4569
        %v4693 = vunpack.c.h.b16 %v4569
        %v4694 = vunpack.c.l.b16 %v4570
        %v4695 = vunpack.c.h.b16 %v4570
        %v4696 = vunpack.c.l.b16 %v4571
        %v4697 = vunpack.c.h.b16 %v4571
        %v4698 = vunpack.c.l.b16 %v4572
        %v4699 = vunpack.c.h.b16 %v4572
        %v4700 = vunpack.c.l.b16 %v4573
        %v4701 = vunpack.c.h.b16 %v4573
        %v4702 = vunpack.c.l.b16 %v4574
        %v4703 = vunpack.c.h.b16 %v4574
        %v4704 = vunpack.c.l.b16 %v4575
        %v4705 = vunpack.c.h.b16 %v4575
        %v4706 = vunpack.c.l.b16 %v4576
        %v4707 = vunpack.c.h.b16 %v4576
        %v4708 = vunpack.c.l.b16 %v4577
        %v4709 = vunpack.c.h.b16 %v4577
        %v4710 = vunpack.c.l.b16 %v4578
        %v4711 = vunpack.c.h.b16 %v4578
        %v4712 = vunpack.c.l.b16 %v4579
        %v4713 = vunpack.c.h.b16 %v4579
        %v4714 = vunpack.c.l.b16 %v4580
        %v4715 = vunpack.c.h.b16 %v4580
        %v4716 = vunpack.c.l.b16 %v4581
        %v4717 = vunpack.c.h.b16 %v4581
        %v4718 = vunpack.c.l.b16 %v4582
        %v4719 = vunpack.c.h.b16 %v4582
        %v4720 = vunpack.c.l.b16 %v4583
        %v4721 = vunpack.c.h.b16 %v4583
        %v4722 = vunpack.c.l.b16 %v4584
        %v4723 = vunpack.c.h.b16 %v4584
        %v4724 = vunpack.c.l.b16 %v4585
        %v4725 = vunpack.c.h.b16 %v4585
        %v4726 = vunpack.c.l.b16 %v4586
        %v4727 = vunpack.c.h.b16 %v4586
        %v4728 = vunpack.c.l.b16 %v4587
        %v4729 = vunpack.c.h.b16 %v4587
        %v4730 = vunpack.c.l.b16 %v4588
        %v4731 = vunpack.c.h.b16 %v4588
        %v4732 = vunpack.c.l.b16 %v4589
        %v4733 = vunpack.c.h.b16 %v4589
        %v4734 = vunpack.c.l.b16 %v4590
        %v4735 = vunpack.c.h.b16 %v4590
        %v4736 = vunpack.c.l.b16 %v4591
        %v4737 = vunpack.c.h.b16 %v4591
        %v4738 = vunpack.c.l.b16 %v4592
        %v4739 = vunpack.c.h.b16 %v4592
        %v4740 = vunpack.c.l.b16 %v4593
        %v4741 = vunpack.c.h.b16 %v4593
        %v4742 = vunpack.c.l.b16 %v4594
        %v4743 = vunpack.c.h.b16 %v4594
        %v4744 = vunpack.c.l.b16 %v4595
        %v4745 = vunpack.c.h.b16 %v4595
        %v4746 = vpack.c.b16 %v4652, %v4650
        %v4747 = vpack.c.b16 %v4653, %v4651
        %v4748 = vpack.c.b16 %v4656, %v4654
        %v4749 = vpack.c.b16 %v4657, %v4655
        %v4750 = vpack.c.b16 %v4660, %v4658
        %v4751 = vpack.c.b16 %v4661, %v4659
        %v4752 = vpack.c.b16 %v4664, %v4662
        %v4753 = vpack.c.b16 %v4665, %v4663
        %v4754 = vpack.c.b16 %v4668, %v4666
        %v4755 = vpack.c.b16 %v4669, %v4667
        %v4756 = vpack.c.b16 %v4672, %v4670
        %v4757 = vpack.c.b16 %v4673, %v4671
        %v4758 = vpack.c.b16 %v4676, %v4674
        %v4759 = vpack.c.b16 %v4677, %v4675
        %v4760 = vpack.c.b16 %v4680, %v4678
        %v4761 = vpack.c.b16 %v4681, %v4679
        %v4762 = vpack.c.b16 %v4684, %v4682
        %v4763 = vpack.c.b16 %v4685, %v4683
        %v4764 = vpack.c.b16 %v4688, %v4686
        %v4765 = vpack.c.b16 %v4689, %v4687
        %v4766 = vpack.c.b16 %v4692, %v4690
        %v4767 = vpack.c.b16 %v4693, %v4691
        %v4768 = vpack.c.b16 %v4696, %v4694
        %v4769 = vpack.c.b16 %v4697, %v4695
        %v4770 = vpack.c.b16 %v4700, %v4698
        %v4771 = vpack.c.b16 %v4701, %v4699
        %v4772 = vpack.c.b16 %v4704, %v4702
        %v4773 = vpack.c.b16 %v4705, %v4703
        %v4774 = vpack.c.b16 %v4708, %v4706
        %v4775 = vpack.c.b16 %v4709, %v4707
        %v4776 = vpack.c.b16 %v4712, %v4710
        %v4777 = vpack.c.b16 %v4713, %v4711
        %v4778 = vpack.c.b16 %v4716, %v4714
        %v4779 = vpack.c.b16 %v4717, %v4715
        %v4780 = vpack.c.b16 %v4720, %v4718
        %v4781 = vpack.c.b16 %v4721, %v4719
        %v4782 = vpack.c.b16 %v4724, %v4722
        %v4783 = vpack.c.b16 %v4725, %v4723
        %v4784 = vpack.c.b16 %v4728, %v4726
        %v4785 = vpack.c.b16 %v4729, %v4727
        %v4786 = vpack.c.b16 %v4732, %v4730
        %v4787 = vpack.c.b16 %v4733, %v4731
        %v4788 = vpack.c.b16 %v4736, %v4734
        %v4789 = vpack.c.b16 %v4737, %v4735
        %v4790 = vpack.c.b16 %v4740, %v4738
        %v4791 = vpack.c.b16 %v4741, %v4739
        %v4792 = vpack.c.b16 %v4744, %v4742
        %v4793 = vpack.c.b16 %v4745, %v4743
        %4842 = vmatpush.bf16.msra.mxu0 %v4760
        %4843 = vmatpush.bf16.msra.mxu0 %v4758
        %4844 = vmatpush.bf16.msra.mxu0 %v4756
        %4845 = vmatpush.bf16.msra.mxu0 %v4754
        %4846 = vmatpush.bf16.msra.mxu0 %v4752
        %4847 = vmatpush.bf16.msra.mxu0 %v4750
        %4848 = vmatpush.bf16.msra.mxu0 %v4748
        %4849 = vmatpush.bf16.msra.mxu0 %v4746
        %4850 = vmatmul.bf16.gmra.mxu0 %v4545
        %v4851 = vpop.f32.mrf.mxu0
        %v4852 = vadd.f32 %v4598, %v4851
        %v4853 = vpop.f32.mrf.mxu0
        %4854 = vdwg.mxu0
        %4855 = vmatpush.bf16.msra.mxu0 %v4776
        %4856 = vmatpush.bf16.msra.mxu0 %v4774
        %4857 = vmatpush.bf16.msra.mxu0 %v4772
        %4858 = vmatpush.bf16.msra.mxu0 %v4770
        %4859 = vmatpush.bf16.msra.mxu0 %v4768
        %4860 = vmatpush.bf16.msra.mxu0 %v4766
        %4861 = vmatpush.bf16.msra.mxu0 %v4764
        %4862 = vmatpush.bf16.msra.mxu0 %v4762
        %4863 = vmatmul.bf16.gmra.mxu0 %v4546
        %v4864 = vpop.f32.mrf.mxu0
        %v4865 = vadd.f32 %v4852, %v4864
        %v4866 = vpop.f32.mrf.mxu0
        %4867 = vdwg.mxu0
        %4868 = vmatpush.bf16.msra.mxu0 %v4792
        %4869 = vmatpush.bf16.msra.mxu0 %v4790
        %4870 = vmatpush.bf16.msra.mxu0 %v4788
        %4871 = vmatpush.bf16.msra.mxu0 %v4786
        %4872 = vmatpush.bf16.msra.mxu0 %v4784
        %4873 = vmatpush.bf16.msra.mxu0 %v4782
        %4874 = vmatpush.bf16.msra.mxu0 %v4780
        %4875 = vmatpush.bf16.msra.mxu0 %v4778
        %4876 = vmatmul.bf16.gmra.mxu0 %v4547
        %v4877 = vpop.f32.mrf.mxu0
        %v4878 = vadd.f32 %v4865, %v4877
        %v4879 = vpop.f32.mrf.mxu0
        %4880 = vdwg.mxu0
        %4881 = vmatpush.bf16.msra.mxu0 %v4761
        %4882 = vmatpush.bf16.msra.mxu0 %v4759
        %4883 = vmatpush.bf16.msra.mxu0 %v4757
        %4884 = vmatpush.bf16.msra.mxu0 %v4755
        %4885 = vmatpush.bf16.msra.mxu0 %v4753
        %4886 = vmatpush.bf16.msra.mxu0 %v4751
        %4887 = vmatpush.bf16.msra.mxu0 %v4749
        %4888 = vmatpush.bf16.msra.mxu0 %v4747
        %4889 = vmatmul.bf16.gmra.mxu0 %v4545
        %v4890 = vpop.f32.mrf.mxu0
        %v4891 = vadd.f32 %v4599, %v4890
        %v4892 = vpop.f32.mrf.mxu0
        %4893 = vdwg.mxu0
        %4894 = vmatpush.bf16.msra.mxu0 %v4777
        %4895 = vmatpush.bf16.msra.mxu0 %v4775
        %4896 = vmatpush.bf16.msra.mxu0 %v4773
        %4897 = vmatpush.bf16.msra.mxu0 %v4771
        %4898 = vmatpush.bf16.msra.mxu0 %v4769
        %4899 = vmatpush.bf16.msra.mxu0 %v4767
        %4900 = vmatpush.bf16.msra.mxu0 %v4765
        %4901 = vmatpush.bf16.msra.mxu0 %v4763
        %4902 = vmatmul.bf16.gmra.mxu0 %v4546
        %v4903 = vpop.f32.mrf.mxu0
        %v4904 = vadd.f32 %v4891, %v4903
        %v4905 = vpop.f32.mrf.mxu0
        %4906 = vdwg.mxu0
        %4907 = vmatpush.bf16.msra.mxu0 %v4793
        %4908 = vmatpush.bf16.msra.mxu0 %v4791
        %4909 = vmatpush.bf16.msra.mxu0 %v4789
        %4910 = vmatpush.bf16.msra.mxu0 %v4787
        %4911 = vmatpush.bf16.msra.mxu0 %v4785
        %4912 = vmatpush.bf16.msra.mxu0 %v4783
        %4913 = vmatpush.bf16.msra.mxu0 %v4781
        %4914 = vmatpush.bf16.msra.mxu0 %v4779
        %4915 = vmatmul.bf16.gmra.mxu0 %v4547
        %v4916 = vpop.f32.mrf.mxu0
        %v4917 = vadd.f32 %v4904, %v4916
        %v4918 = vpop.f32.mrf.mxu0
        %4919 = vdwg.mxu0
        %v4920 = vmax.f32 %v4878, 0.0
        %v4921 = vmax.f32 %v4917, 0.0
        %v4922 = vpack.c.bf16 %v4921, %v4920
        %4923 = vst [vmem:[#allocation4 + $0x40] sm:$0xff] %v4922
        %v4924 = vld [vmem:[%s1471] sm:$0xf]
        %v4925 = vld [vmem:[%s1491] sm:$0xf]
        %v4926 = vld [vmem:[%s1511] sm:$0xf]
        %v4927 = vld [vmem:[%s3] sm:$0xff]
        %v4928 = vld [vmem:[%s3 + $0x8] sm:$0xff]
        %v4929 = vld [vmem:[%s3 + $0x10] sm:$0xff]
        %v4930 = vld [vmem:[%s3 + $0x18] sm:$0xff]
        %v4931 = vld [vmem:[%s3 + $0x20] sm:$0xff]
        %v4932 = vld [vmem:[%s3 + $0x28] sm:$0xff]
        %v4933 = vld [vmem:[%s3 + $0x30] sm:$0xff]
        %v4934 = vld [vmem:[%s3 + $0x38] sm:$0xff]
        %v4935 = vld [vmem:[%s3 + $0x40] sm:$0xff]
        %v4936 = vld [vmem:[%s3 + $0x48] sm:$0xff]
        %v4937 = vld [vmem:[%s3 + $0x50] sm:$0xff]
        %v4938 = vld [vmem:[%s3 + $0x58] sm:$0xff]
        %v4939 = vld [vmem:[%s3 + $0x60] sm:$0xff]
        %v4940 = vld [vmem:[%s3 + $0x68] sm:$0xff]
        %v4941 = vld [vmem:[%s3 + $0x70] sm:$0xff]
        %v4942 = vld [vmem:[%s3 + $0x78] sm:$0xff]
        %v4943 = vld [vmem:[%s3 + $0x80] sm:$0xff]
        %v4944 = vld [vmem:[%s3 + $0x88] sm:$0xff]
        %v4945 = vld [vmem:[%s3 + $0x90] sm:$0xff]
        %v4946 = vld [vmem:[%s3 + $0x98] sm:$0xff]
        %v4947 = vld [vmem:[%s3 + $0xa0] sm:$0xff]
        %v4948 = vld [vmem:[%s3 + $0xa8] sm:$0xff]
        %v4949 = vld [vmem:[%s3 + $0xb0] sm:$0xff]
        %v4950 = vld [vmem:[%s3 + $0xb8] sm:$0xff]
        %v4951 = vld [vmem:[%s3 + $0xc0] sm:$0xff]
        %v4952 = vld [vmem:[%s3 + $0xc8] sm:$0xff]
        %v4953 = vld [vmem:[%s3 + $0xd0] sm:$0xff]
        %v4954 = vld [vmem:[%s3 + $0xd8] sm:$0xff]
        %v4955 = vld [vmem:[%s3 + $0xe0] sm:$0xff]
        %v4956 = vld [vmem:[%s3 + $0xe8] sm:$0xff]
        %v4957 = vld [vmem:[%s3 + $0xf0] sm:$0xff]
        %v4958 = vld [vmem:[%s3 + $0xf8] sm:$0xff]
        %v4959 = vld [vmem:[%s3 + $0x100] sm:$0xff]
        %v4960 = vld [vmem:[%s3 + $0x108] sm:$0xff]
        %v4961 = vld [vmem:[%s3 + $0x110] sm:$0xff]
        %v4962 = vld [vmem:[%s3 + $0x118] sm:$0xff]
        %v4963 = vld [vmem:[%s3 + $0x120] sm:$0xff]
        %v4964 = vld [vmem:[%s3 + $0x128] sm:$0xff]
        %v4965 = vld [vmem:[%s3 + $0x130] sm:$0xff]
        %v4966 = vld [vmem:[%s3 + $0x138] sm:$0xff]
        %v4967 = vld [vmem:[%s3 + $0x140] sm:$0xff]
        %v4968 = vld [vmem:[%s3 + $0x148] sm:$0xff]
        %v4969 = vld [vmem:[%s3 + $0x150] sm:$0xff]
        %v4970 = vld [vmem:[%s3 + $0x158] sm:$0xff]
        %v4971 = vld [vmem:[%s3 + $0x160] sm:$0xff]
        %v4972 = vld [vmem:[%s3 + $0x168] sm:$0xff]
        %v4973 = vld [vmem:[%s3 + $0x170] sm:$0xff]
        %v4974 = vld [vmem:[%s3 + $0x178] sm:$0xff]
        %v4975 = vld [vmem:[%s4] sm:$0x3]
        %v4977 = vperm.slane %v4975, 0
        %v4978 = vperm.slane %v4975, 1
        %v5029 = vunpack.c.l.b16 %v4927
        %v5030 = vunpack.c.h.b16 %v4927
        %v5031 = vunpack.c.l.b16 %v4928
        %v5032 = vunpack.c.h.b16 %v4928
        %v5033 = vunpack.c.l.b16 %v4929
        %v5034 = vunpack.c.h.b16 %v4929
        %v5035 = vunpack.c.l.b16 %v4930
        %v5036 = vunpack.c.h.b16 %v4930
        %v5037 = vunpack.c.l.b16 %v4931
        %v5038 = vunpack.c.h.b16 %v4931
        %v5039 = vunpack.c.l.b16 %v4932
        %v5040 = vunpack.c.h.b16 %v4932
        %v5041 = vunpack.c.l.b16 %v4933
        %v5042 = vunpack.c.h.b16 %v4933
        %v5043 = vunpack.c.l.b16 %v4934
        %v5044 = vunpack.c.h.b16 %v4934
        %v5045 = vunpack.c.l.b16 %v4935
        %v5046 = vunpack.c.h.b16 %v4935
        %v5047 = vunpack.c.l.b16 %v4936
        %v5048 = vunpack.c.h.b16 %v4936
        %v5049 = vunpack.c.l.b16 %v4937
        %v5050 = vunpack.c.h.b16 %v4937
        %v5051 = vunpack.c.l.b16 %v4938
        %v5052 = vunpack.c.h.b16 %v4938
        %v5053 = vunpack.c.l.b16 %v4939
        %v5054 = vunpack.c.h.b16 %v4939
        %v5055 = vunpack.c.l.b16 %v4940
        %v5056 = vunpack.c.h.b16 %v4940
        %v5057 = vunpack.c.l.b16 %v4941
        %v5058 = vunpack.c.h.b16 %v4941
        %v5059 = vunpack.c.l.b16 %v4942
        %v5060 = vunpack.c.h.b16 %v4942
        %v5061 = vunpack.c.l.b16 %v4943
        %v5062 = vunpack.c.h.b16 %v4943
        %v5063 = vunpack.c.l.b16 %v4944
        %v5064 = vunpack.c.h.b16 %v4944
        %v5065 = vunpack.c.l.b16 %v4945
        %v5066 = vunpack.c.h.b16 %v4945
        %v5067 = vunpack.c.l.b16 %v4946
        %v5068 = vunpack.c.h.b16 %v4946
        %v5069 = vunpack.c.l.b16 %v4947
        %v5070 = vunpack.c.h.b16 %v4947
        %v5071 = vunpack.c.l.b16 %v4948
        %v5072 = vunpack.c.h.b16 %v4948
        %v5073 = vunpack.c.l.b16 %v4949
        %v5074 = vunpack.c.h.b16 %v4949
        %v5075 = vunpack.c.l.b16 %v4950
        %v5076 = vunpack.c.h.b16 %v4950
        %v5077 = vunpack.c.l.b16 %v4951
        %v5078 = vunpack.c.h.b16 %v4951
        %v5079 = vunpack.c.l.b16 %v4952
        %v5080 = vunpack.c.h.b16 %v4952
        %v5081 = vunpack.c.l.b16 %v4953
        %v5082 = vunpack.c.h.b16 %v4953
        %v5083 = vunpack.c.l.b16 %v4954
        %v5084 = vunpack.c.h.b16 %v4954
        %v5085 = vunpack.c.l.b16 %v4955
        %v5086 = vunpack.c.h.b16 %v4955
        %v5087 = vunpack.c.l.b16 %v4956
        %v5088 = vunpack.c.h.b16 %v4956
        %v5089 = vunpack.c.l.b16 %v4957
        %v5090 = vunpack.c.h.b16 %v4957
        %v5091 = vunpack.c.l.b16 %v4958
        %v5092 = vunpack.c.h.b16 %v4958
        %v5093 = vunpack.c.l.b16 %v4959
        %v5094 = vunpack.c.h.b16 %v4959
        %v5095 = vunpack.c.l.b16 %v4960
        %v5096 = vunpack.c.h.b16 %v4960
        %v5097 = vunpack.c.l.b16 %v4961
        %v5098 = vunpack.c.h.b16 %v4961
        %v5099 = vunpack.c.l.b16 %v4962
        %v5100 = vunpack.c.h.b16 %v4962
        %v5101 = vunpack.c.l.b16 %v4963
        %v5102 = vunpack.c.h.b16 %v4963
        %v5103 = vunpack.c.l.b16 %v4964
        %v5104 = vunpack.c.h.b16 %v4964
        %v5105 = vunpack.c.l.b16 %v4965
        %v5106 = vunpack.c.h.b16 %v4965
        %v5107 = vunpack.c.l.b16 %v4966
        %v5108 = vunpack.c.h.b16 %v4966
        %v5109 = vunpack.c.l.b16 %v4967
        %v5110 = vunpack.c.h.b16 %v4967
        %v5111 = vunpack.c.l.b16 %v4968
        %v5112 = vunpack.c.h.b16 %v4968
        %v5113 = vunpack.c.l.b16 %v4969
        %v5114 = vunpack.c.h.b16 %v4969
        %v5115 = vunpack.c.l.b16 %v4970
        %v5116 = vunpack.c.h.b16 %v4970
        %v5117 = vunpack.c.l.b16 %v4971
        %v5118 = vunpack.c.h.b16 %v4971
        %v5119 = vunpack.c.l.b16 %v4972
        %v5120 = vunpack.c.h.b16 %v4972
        %v5121 = vunpack.c.l.b16 %v4973
        %v5122 = vunpack.c.h.b16 %v4973
        %v5123 = vunpack.c.l.b16 %v4974
        %v5124 = vunpack.c.h.b16 %v4974
        %v5125 = vpack.c.b16 %v5031, %v5029
        %v5126 = vpack.c.b16 %v5032, %v5030
        %v5127 = vpack.c.b16 %v5035, %v5033
        %v5128 = vpack.c.b16 %v5036, %v5034
        %v5129 = vpack.c.b16 %v5039, %v5037
        %v5130 = vpack.c.b16 %v5040, %v5038
        %v5131 = vpack.c.b16 %v5043, %v5041
        %v5132 = vpack.c.b16 %v5044, %v5042
        %v5133 = vpack.c.b16 %v5047, %v5045
        %v5134 = vpack.c.b16 %v5048, %v5046
        %v5135 = vpack.c.b16 %v5051, %v5049
        %v5136 = vpack.c.b16 %v5052, %v5050
        %v5137 = vpack.c.b16 %v5055, %v5053
        %v5138 = vpack.c.b16 %v5056, %v5054
        %v5139 = vpack.c.b16 %v5059, %v5057
        %v5140 = vpack.c.b16 %v5060, %v5058
        %v5141 = vpack.c.b16 %v5063, %v5061
        %v5142 = vpack.c.b16 %v5064, %v5062
        %v5143 = vpack.c.b16 %v5067, %v5065
        %v5144 = vpack.c.b16 %v5068, %v5066
        %v5145 = vpack.c.b16 %v5071, %v5069
        %v5146 = vpack.c.b16 %v5072, %v5070
        %v5147 = vpack.c.b16 %v5075, %v5073
        %v5148 = vpack.c.b16 %v5076, %v5074
        %v5149 = vpack.c.b16 %v5079, %v5077
        %v5150 = vpack.c.b16 %v5080, %v5078
        %v5151 = vpack.c.b16 %v5083, %v5081
        %v5152 = vpack.c.b16 %v5084, %v5082
        %v5153 = vpack.c.b16 %v5087, %v5085
        %v5154 = vpack.c.b16 %v5088, %v5086
        %v5155 = vpack.c.b16 %v5091, %v5089
        %v5156 = vpack.c.b16 %v5092, %v5090
        %v5157 = vpack.c.b16 %v5095, %v5093
        %v5158 = vpack.c.b16 %v5096, %v5094
        %v5159 = vpack.c.b16 %v5099, %v5097
        %v5160 = vpack.c.b16 %v5100, %v5098
        %v5161 = vpack.c.b16 %v5103, %v5101
        %v5162 = vpack.c.b16 %v5104, %v5102
        %v5163 = vpack.c.b16 %v5107, %v5105
        %v5164 = vpack.c.b16 %v5108, %v5106
        %v5165 = vpack.c.b16 %v5111, %v5109
        %v5166 = vpack.c.b16 %v5112, %v5110
        %v5167 = vpack.c.b16 %v5115, %v5113
        %v5168 = vpack.c.b16 %v5116, %v5114
        %v5169 = vpack.c.b16 %v5119, %v5117
        %v5170 = vpack.c.b16 %v5120, %v5118
        %v5171 = vpack.c.b16 %v5123, %v5121
        %v5172 = vpack.c.b16 %v5124, %v5122
        %5221 = vmatpush.bf16.msra.mxu0 %v5139
        %5222 = vmatpush.bf16.msra.mxu0 %v5137
        %5223 = vmatpush.bf16.msra.mxu0 %v5135
        %5224 = vmatpush.bf16.msra.mxu0 %v5133
        %5225 = vmatpush.bf16.msra.mxu0 %v5131
        %5226 = vmatpush.bf16.msra.mxu0 %v5129
        %5227 = vmatpush.bf16.msra.mxu0 %v5127
        %5228 = vmatpush.bf16.msra.mxu0 %v5125
        %5229 = vmatmul.bf16.gmra.mxu0 %v4924
        %v5230 = vpop.f32.mrf.mxu0
        %v5231 = vadd.f32 %v4977, %v5230
        %v5232 = vpop.f32.mrf.mxu0
        %5233 = vdwg.mxu0
        %5234 = vmatpush.bf16.msra.mxu0 %v5155
        %5235 = vmatpush.bf16.msra.mxu0 %v5153
        %5236 = vmatpush.bf16.msra.mxu0 %v5151
        %5237 = vmatpush.bf16.msra.mxu0 %v5149
        %5238 = vmatpush.bf16.msra.mxu0 %v5147
        %5239 = vmatpush.bf16.msra.mxu0 %v5145
        %5240 = vmatpush.bf16.msra.mxu0 %v5143
        %5241 = vmatpush.bf16.msra.mxu0 %v5141
        %5242 = vmatmul.bf16.gmra.mxu0 %v4925
        %v5243 = vpop.f32.mrf.mxu0
        %v5244 = vadd.f32 %v5231, %v5243
        %v5245 = vpop.f32.mrf.mxu0
        %5246 = vdwg.mxu0
        %5247 = vmatpush.bf16.msra.mxu0 %v5171
        %5248 = vmatpush.bf16.msra.mxu0 %v5169
        %5249 = vmatpush.bf16.msra.mxu0 %v5167
        %5250 = vmatpush.bf16.msra.mxu0 %v5165
        %5251 = vmatpush.bf16.msra.mxu0 %v5163
        %5252 = vmatpush.bf16.msra.mxu0 %v5161
        %5253 = vmatpush.bf16.msra.mxu0 %v5159
        %5254 = vmatpush.bf16.msra.mxu0 %v5157
        %5255 = vmatmul.bf16.gmra.mxu0 %v4926
        %v5256 = vpop.f32.mrf.mxu0
        %v5257 = vadd.f32 %v5244, %v5256
        %v5258 = vpop.f32.mrf.mxu0
        %5259 = vdwg.mxu0
        %5260 = vmatpush.bf16.msra.mxu0 %v5140
        %5261 = vmatpush.bf16.msra.mxu0 %v5138
        %5262 = vmatpush.bf16.msra.mxu0 %v5136
        %5263 = vmatpush.bf16.msra.mxu0 %v5134
        %5264 = vmatpush.bf16.msra.mxu0 %v5132
        %5265 = vmatpush.bf16.msra.mxu0 %v5130
        %5266 = vmatpush.bf16.msra.mxu0 %v5128
        %5267 = vmatpush.bf16.msra.mxu0 %v5126
        %5268 = vmatmul.bf16.gmra.mxu0 %v4924
        %v5269 = vpop.f32.mrf.mxu0
        %v5270 = vadd.f32 %v4978, %v5269
        %v5271 = vpop.f32.mrf.mxu0
        %5272 = vdwg.mxu0
        %5273 = vmatpush.bf16.msra.mxu0 %v5156
        %5274 = vmatpush.bf16.msra.mxu0 %v5154
        %5275 = vmatpush.bf16.msra.mxu0 %v5152
        %5276 = vmatpush.bf16.msra.mxu0 %v5150
        %5277 = vmatpush.bf16.msra.mxu0 %v5148
        %5278 = vmatpush.bf16.msra.mxu0 %v5146
        %5279 = vmatpush.bf16.msra.mxu0 %v5144
        %5280 = vmatpush.bf16.msra.mxu0 %v5142
        %5281 = vmatmul.bf16.gmra.mxu0 %v4925
        %v5282 = vpop.f32.mrf.mxu0
        %v5283 = vadd.f32 %v5270, %v5282
        %v5284 = vpop.f32.mrf.mxu0
        %5285 = vdwg.mxu0
        %5286 = vmatpush.bf16.msra.mxu0 %v5172
        %5287 = vmatpush.bf16.msra.mxu0 %v5170
        %5288 = vmatpush.bf16.msra.mxu0 %v5168
        %5289 = vmatpush.bf16.msra.mxu0 %v5166
        %5290 = vmatpush.bf16.msra.mxu0 %v5164
        %5291 = vmatpush.bf16.msra.mxu0 %v5162
        %5292 = vmatpush.bf16.msra.mxu0 %v5160
        %5293 = vmatpush.bf16.msra.mxu0 %v5158
        %5294 = vmatmul.bf16.gmra.mxu0 %v4926
        %v5295 = vpop.f32.mrf.mxu0
        %v5296 = vadd.f32 %v5283, %v5295
        %v5297 = vpop.f32.mrf.mxu0
        %5298 = vdwg.mxu0
        %v5299 = vmax.f32 %v5257, 0.0
        %v5300 = vmax.f32 %v5296, 0.0
        %v5301 = vpack.c.bf16 %v5300, %v5299
        %5302 = vst [vmem:[#allocation4 + $0x48] sm:$0xff] %v5301
        %v5303 = vld [vmem:[#allocation4] sm:$0xff]
        %v5304 = vld [vmem:[#allocation4 + $0x8] sm:$0xff]
        %v5305 = vld [vmem:[#allocation4 + $0x10] sm:$0xff]
        %v5306 = vld [vmem:[#allocation4 + $0x18] sm:$0xff]
        %v5307 = vld [vmem:[#allocation4 + $0x20] sm:$0xff]
        %v5308 = vld [vmem:[#allocation4 + $0x28] sm:$0xff]
        %v5309 = vld [vmem:[#allocation4 + $0x30] sm:$0xff]
        %v5310 = vld [vmem:[#allocation4 + $0x38] sm:$0xff]
        %v5311 = vld [vmem:[#allocation4 + $0x40] sm:$0xff]
        %v5312 = vld [vmem:[#allocation4 + $0x48] sm:$0xff]
        %v5313 = vld [vmem:[%s5] sm:$0xff]
        %v5314 = vld [vmem:[%s5 + $0x8] sm:$0xff]
        %v5315 = vld [vmem:[%s5 + $0x10] sm:$0xff]
        %v5316 = vld [vmem:[%s5 + $0x18] sm:$0xff]
        %v5317 = vld [vmem:[%s5 + $0x20] sm:$0xff]
        %v5318 = vld [vmem:[%s5 + $0x28] sm:$0xff]
        %v5319 = vld [vmem:[%s5 + $0x30] sm:$0xff]
        %v5320 = vld [vmem:[%s5 + $0x38] sm:$0xff]
        %v5321 = vld [vmem:[%s5 + $0x40] sm:$0xff]
        %v5322 = vld [vmem:[%s5 + $0x48] sm:$0xff]
        %v5323 = vld [vmem:[%s5 + $0x50] sm:$0xff]
        %v5324 = vld [vmem:[%s5 + $0x58] sm:$0xff]
        %v5325 = vld [vmem:[%s5 + $0x60] sm:$0xff]
        %v5326 = vld [vmem:[%s5 + $0x68] sm:$0xff]
        %v5327 = vld [vmem:[%s5 + $0x70] sm:$0xff]
        %v5328 = vld [vmem:[%s5 + $0x78] sm:$0xff]
        %v5329 = vld [vmem:[%s5 + $0x80] sm:$0xff]
        %v5330 = vld [vmem:[%s5 + $0x88] sm:$0xff]
        %v5331 = vld [vmem:[%s5 + $0x90] sm:$0xff]
        %v5332 = vld [vmem:[%s5 + $0x98] sm:$0xff]
        %v5333 = vld [vmem:[%s5 + $0xa0] sm:$0xff]
        %v5334 = vld [vmem:[%s5 + $0xa8] sm:$0xff]
        %v5335 = vld [vmem:[%s5 + $0xb0] sm:$0xff]
        %v5336 = vld [vmem:[%s5 + $0xb8] sm:$0xff]
        %v5337 = vld [vmem:[%s5 + $0xc0] sm:$0xff]
        %v5338 = vld [vmem:[%s5 + $0xc8] sm:$0xff]
        %v5339 = vld [vmem:[%s5 + $0xd0] sm:$0xff]
        %v5340 = vld [vmem:[%s5 + $0xd8] sm:$0xff]
        %v5341 = vld [vmem:[%s5 + $0xe0] sm:$0xff]
        %v5342 = vld [vmem:[%s5 + $0xe8] sm:$0xff]
        %v5343 = vld [vmem:[%s5 + $0xf0] sm:$0xff]
        %v5344 = vld [vmem:[%s5 + $0xf8] sm:$0xff]
        %v5345 = vld [vmem:[%s5 + $0x100] sm:$0xff]
        %v5346 = vld [vmem:[%s5 + $0x108] sm:$0xff]
        %v5347 = vld [vmem:[%s5 + $0x110] sm:$0xff]
        %v5348 = vld [vmem:[%s5 + $0x118] sm:$0xff]
        %v5349 = vld [vmem:[%s5 + $0x120] sm:$0xff]
        %v5350 = vld [vmem:[%s5 + $0x128] sm:$0xff]
        %v5351 = vld [vmem:[%s5 + $0x130] sm:$0xff]
        %v5352 = vld [vmem:[%s5 + $0x138] sm:$0xff]
        %v5353 = vld [vmem:[%s5 + $0x140] sm:$0xff]
        %v5354 = vld [vmem:[%s5 + $0x148] sm:$0xff]
        %v5355 = vld [vmem:[%s5 + $0x150] sm:$0xff]
        %v5356 = vld [vmem:[%s5 + $0x158] sm:$0xff]
        %v5357 = vld [vmem:[%s5 + $0x160] sm:$0xff]
        %v5358 = vld [vmem:[%s5 + $0x168] sm:$0xff]
        %v5359 = vld [vmem:[%s5 + $0x170] sm:$0xff]
        %v5360 = vld [vmem:[%s5 + $0x178] sm:$0xff]
        %v5361 = vld [vmem:[%s5 + $0x180] sm:$0xff]
        %v5362 = vld [vmem:[%s5 + $0x188] sm:$0xff]
        %v5363 = vld [vmem:[%s5 + $0x190] sm:$0xff]
        %v5364 = vld [vmem:[%s5 + $0x198] sm:$0xff]
        %v5365 = vld [vmem:[%s5 + $0x1a0] sm:$0xff]
        %v5366 = vld [vmem:[%s5 + $0x1a8] sm:$0xff]
        %v5367 = vld [vmem:[%s5 + $0x1b0] sm:$0xff]
        %v5368 = vld [vmem:[%s5 + $0x1b8] sm:$0xff]
        %v5369 = vld [vmem:[%s5 + $0x1c0] sm:$0xff]
        %v5370 = vld [vmem:[%s5 + $0x1c8] sm:$0xff]
        %v5371 = vld [vmem:[%s5 + $0x1d0] sm:$0xff]
        %v5372 = vld [vmem:[%s5 + $0x1d8] sm:$0xff]
        %v5373 = vld [vmem:[%s5 + $0x1e0] sm:$0xff]
        %v5374 = vld [vmem:[%s5 + $0x1e8] sm:$0xff]
        %v5375 = vld [vmem:[%s5 + $0x1f0] sm:$0xff]
        %v5376 = vld [vmem:[%s5 + $0x1f8] sm:$0xff]
        %v5377 = vld [vmem:[%s5 + $0x200] sm:$0xff]
        %v5378 = vld [vmem:[%s5 + $0x208] sm:$0xff]
        %v5379 = vld [vmem:[%s5 + $0x210] sm:$0xff]
        %v5380 = vld [vmem:[%s5 + $0x218] sm:$0xff]
        %v5381 = vld [vmem:[%s5 + $0x220] sm:$0xff]
        %v5382 = vld [vmem:[%s5 + $0x228] sm:$0xff]
        %v5383 = vld [vmem:[%s5 + $0x230] sm:$0xff]
        %v5384 = vld [vmem:[%s5 + $0x238] sm:$0xff]
        %v5385 = vld [vmem:[%s5 + $0x240] sm:$0xff]
        %v5386 = vld [vmem:[%s5 + $0x248] sm:$0xff]
        %v5387 = vld [vmem:[%s5 + $0x250] sm:$0xff]
        %v5388 = vld [vmem:[%s5 + $0x258] sm:$0xff]
        %v5389 = vld [vmem:[%s5 + $0x260] sm:$0xff]
        %v5390 = vld [vmem:[%s5 + $0x268] sm:$0xff]
        %v5391 = vld [vmem:[%s5 + $0x270] sm:$0xff]
        %v5392 = vld [vmem:[%s5 + $0x278] sm:$0xff]
        %v5393 = vld [vmem:[%s5 + $0x280] sm:$0xff]
        %v5394 = vld [vmem:[%s5 + $0x288] sm:$0xff]
        %v5395 = vld [vmem:[%s5 + $0x290] sm:$0xff]
        %v5396 = vld [vmem:[%s5 + $0x298] sm:$0xff]
        %v5397 = vld [vmem:[%s5 + $0x2a0] sm:$0xff]
        %v5398 = vld [vmem:[%s5 + $0x2a8] sm:$0xff]
        %v5399 = vld [vmem:[%s5 + $0x2b0] sm:$0xff]
        %v5400 = vld [vmem:[%s5 + $0x2b8] sm:$0xff]
        %v5401 = vld [vmem:[%s5 + $0x2c0] sm:$0xff]
        %v5402 = vld [vmem:[%s5 + $0x2c8] sm:$0xff]
        %v5403 = vld [vmem:[%s5 + $0x2d0] sm:$0xff]
        %v5404 = vld [vmem:[%s5 + $0x2d8] sm:$0xff]
        %v5405 = vld [vmem:[%s5 + $0x2e0] sm:$0xff]
        %v5406 = vld [vmem:[%s5 + $0x2e8] sm:$0xff]
        %v5407 = vld [vmem:[%s5 + $0x2f0] sm:$0xff]
        %v5408 = vld [vmem:[%s5 + $0x2f8] sm:$0xff]
        %v5409 = vld [vmem:[%s5 + $0x300] sm:$0xff]
        %v5410 = vld [vmem:[%s5 + $0x308] sm:$0xff]
        %v5411 = vld [vmem:[%s5 + $0x310] sm:$0xff]
        %v5412 = vld [vmem:[%s5 + $0x318] sm:$0xff]
        %v5413 = vld [vmem:[%s5 + $0x320] sm:$0xff]
        %v5414 = vld [vmem:[%s5 + $0x328] sm:$0xff]
        %v5415 = vld [vmem:[%s5 + $0x330] sm:$0xff]
        %v5416 = vld [vmem:[%s5 + $0x338] sm:$0xff]
        %v5417 = vld [vmem:[%s5 + $0x340] sm:$0xff]
        %v5418 = vld [vmem:[%s5 + $0x348] sm:$0xff]
        %v5419 = vld [vmem:[%s5 + $0x350] sm:$0xff]
        %v5420 = vld [vmem:[%s5 + $0x358] sm:$0xff]
        %v5421 = vld [vmem:[%s5 + $0x360] sm:$0xff]
        %v5422 = vld [vmem:[%s5 + $0x368] sm:$0xff]
        %v5423 = vld [vmem:[%s5 + $0x370] sm:$0xff]
        %v5424 = vld [vmem:[%s5 + $0x378] sm:$0xff]
        %v5425 = vld [vmem:[%s5 + $0x380] sm:$0xff]
        %v5426 = vld [vmem:[%s5 + $0x388] sm:$0xff]
        %v5427 = vld [vmem:[%s5 + $0x390] sm:$0xff]
        %v5428 = vld [vmem:[%s5 + $0x398] sm:$0xff]
        %v5429 = vld [vmem:[%s5 + $0x3a0] sm:$0xff]
        %v5430 = vld [vmem:[%s5 + $0x3a8] sm:$0xff]
        %v5431 = vld [vmem:[%s5 + $0x3b0] sm:$0xff]
        %v5432 = vld [vmem:[%s5 + $0x3b8] sm:$0xff]
        %v5433 = vld [vmem:[%s5 + $0x3c0] sm:$0xff]
        %v5434 = vld [vmem:[%s5 + $0x3c8] sm:$0xff]
        %v5435 = vld [vmem:[%s5 + $0x3d0] sm:$0xff]
        %v5436 = vld [vmem:[%s5 + $0x3d8] sm:$0xff]
        %v5437 = vld [vmem:[%s5 + $0x3e0] sm:$0xff]
        %v5438 = vld [vmem:[%s5 + $0x3e8] sm:$0xff]
        %v5439 = vld [vmem:[%s5 + $0x3f0] sm:$0xff]
        %v5440 = vld [vmem:[%s5 + $0x3f8] sm:$0xff]
        %v5441 = vld [vmem:[%s5 + $0x400] sm:$0xff]
        %v5442 = vld [vmem:[%s5 + $0x408] sm:$0xff]
        %v5443 = vld [vmem:[%s5 + $0x410] sm:$0xff]
        %v5444 = vld [vmem:[%s5 + $0x418] sm:$0xff]
        %v5445 = vld [vmem:[%s5 + $0x420] sm:$0xff]
        %v5446 = vld [vmem:[%s5 + $0x428] sm:$0xff]
        %v5447 = vld [vmem:[%s5 + $0x430] sm:$0xff]
        %v5448 = vld [vmem:[%s5 + $0x438] sm:$0xff]
        %v5449 = vld [vmem:[%s5 + $0x440] sm:$0xff]
        %v5450 = vld [vmem:[%s5 + $0x448] sm:$0xff]
        %v5451 = vld [vmem:[%s5 + $0x450] sm:$0xff]
        %v5452 = vld [vmem:[%s5 + $0x458] sm:$0xff]
        %v5453 = vld [vmem:[%s5 + $0x460] sm:$0xff]
        %v5454 = vld [vmem:[%s5 + $0x468] sm:$0xff]
        %v5455 = vld [vmem:[%s5 + $0x470] sm:$0xff]
        %v5456 = vld [vmem:[%s5 + $0x478] sm:$0xff]
        %v5457 = vld [vmem:[%s5 + $0x480] sm:$0xff]
        %v5458 = vld [vmem:[%s5 + $0x488] sm:$0xff]
        %v5459 = vld [vmem:[%s5 + $0x490] sm:$0xff]
        %v5460 = vld [vmem:[%s5 + $0x498] sm:$0xff]
        %v5461 = vld [vmem:[%s5 + $0x4a0] sm:$0xff]
        %v5462 = vld [vmem:[%s5 + $0x4a8] sm:$0xff]
        %v5463 = vld [vmem:[%s5 + $0x4b0] sm:$0xff]
        %v5464 = vld [vmem:[%s5 + $0x4b8] sm:$0xff]
        %v5465 = vld [vmem:[%s5 + $0x4c0] sm:$0xff]
        %v5466 = vld [vmem:[%s5 + $0x4c8] sm:$0xff]
        %v5467 = vld [vmem:[%s5 + $0x4d0] sm:$0xff]
        %v5468 = vld [vmem:[%s5 + $0x4d8] sm:$0xff]
        %v5469 = vld [vmem:[%s5 + $0x4e0] sm:$0xff]
        %v5470 = vld [vmem:[%s5 + $0x4e8] sm:$0xff]
        %v5471 = vld [vmem:[%s5 + $0x4f0] sm:$0xff]
        %v5472 = vld [vmem:[%s5 + $0x4f8] sm:$0xff]
        %v5473 = vld [vmem:[%s5 + $0x500] sm:$0xff]
        %v5474 = vld [vmem:[%s5 + $0x508] sm:$0xff]
        %v5475 = vld [vmem:[%s5 + $0x510] sm:$0xff]
        %v5476 = vld [vmem:[%s5 + $0x518] sm:$0xff]
        %v5477 = vld [vmem:[%s5 + $0x520] sm:$0xff]
        %v5478 = vld [vmem:[%s5 + $0x528] sm:$0xff]
        %v5479 = vld [vmem:[%s5 + $0x530] sm:$0xff]
        %v5480 = vld [vmem:[%s5 + $0x538] sm:$0xff]
        %v5481 = vld [vmem:[%s5 + $0x540] sm:$0xff]
        %v5482 = vld [vmem:[%s5 + $0x548] sm:$0xff]
        %v5483 = vld [vmem:[%s5 + $0x550] sm:$0xff]
        %v5484 = vld [vmem:[%s5 + $0x558] sm:$0xff]
        %v5485 = vld [vmem:[%s5 + $0x560] sm:$0xff]
        %v5486 = vld [vmem:[%s5 + $0x568] sm:$0xff]
        %v5487 = vld [vmem:[%s5 + $0x570] sm:$0xff]
        %v5488 = vld [vmem:[%s5 + $0x578] sm:$0xff]
        %v5489 = vld [vmem:[%s5 + $0x580] sm:$0xff]
        %v5490 = vld [vmem:[%s5 + $0x588] sm:$0xff]
        %v5491 = vld [vmem:[%s5 + $0x590] sm:$0xff]
        %v5492 = vld [vmem:[%s5 + $0x598] sm:$0xff]
        %v5493 = vld [vmem:[%s5 + $0x5a0] sm:$0xff]
        %v5494 = vld [vmem:[%s5 + $0x5a8] sm:$0xff]
        %v5495 = vld [vmem:[%s5 + $0x5b0] sm:$0xff]
        %v5496 = vld [vmem:[%s5 + $0x5b8] sm:$0xff]
        %v5497 = vld [vmem:[%s5 + $0x5c0] sm:$0xff]
        %v5498 = vld [vmem:[%s5 + $0x5c8] sm:$0xff]
        %v5499 = vld [vmem:[%s5 + $0x5d0] sm:$0xff]
        %v5500 = vld [vmem:[%s5 + $0x5d8] sm:$0xff]
        %v5501 = vld [vmem:[%s5 + $0x5e0] sm:$0xff]
        %v5502 = vld [vmem:[%s5 + $0x5e8] sm:$0xff]
        %v5503 = vld [vmem:[%s5 + $0x5f0] sm:$0xff]
        %v5504 = vld [vmem:[%s5 + $0x5f8] sm:$0xff]
        %v5505 = vld [vmem:[%s5 + $0x600] sm:$0xff]
        %v5506 = vld [vmem:[%s5 + $0x608] sm:$0xff]
        %v5507 = vld [vmem:[%s5 + $0x610] sm:$0xff]
        %v5508 = vld [vmem:[%s5 + $0x618] sm:$0xff]
        %v5509 = vld [vmem:[%s5 + $0x620] sm:$0xff]
        %v5510 = vld [vmem:[%s5 + $0x628] sm:$0xff]
        %v5511 = vld [vmem:[%s5 + $0x630] sm:$0xff]
        %v5512 = vld [vmem:[%s5 + $0x638] sm:$0xff]
        %v5513 = vld [vmem:[%s5 + $0x640] sm:$0xff]
        %v5514 = vld [vmem:[%s5 + $0x648] sm:$0xff]
        %v5515 = vld [vmem:[%s5 + $0x650] sm:$0xff]
        %v5516 = vld [vmem:[%s5 + $0x658] sm:$0xff]
        %v5517 = vld [vmem:[%s5 + $0x660] sm:$0xff]
        %v5518 = vld [vmem:[%s5 + $0x668] sm:$0xff]
        %v5519 = vld [vmem:[%s5 + $0x670] sm:$0xff]
        %v5520 = vld [vmem:[%s5 + $0x678] sm:$0xff]
        %v5521 = vld [vmem:[%s5 + $0x680] sm:$0xff]
        %v5522 = vld [vmem:[%s5 + $0x688] sm:$0xff]
        %v5523 = vld [vmem:[%s5 + $0x690] sm:$0xff]
        %v5524 = vld [vmem:[%s5 + $0x698] sm:$0xff]
        %v5525 = vld [vmem:[%s5 + $0x6a0] sm:$0xff]
        %v5526 = vld [vmem:[%s5 + $0x6a8] sm:$0xff]
        %v5527 = vld [vmem:[%s5 + $0x6b0] sm:$0xff]
        %v5528 = vld [vmem:[%s5 + $0x6b8] sm:$0xff]
        %v5529 = vld [vmem:[%s5 + $0x6c0] sm:$0xff]
        %v5530 = vld [vmem:[%s5 + $0x6c8] sm:$0xff]
        %v5531 = vld [vmem:[%s5 + $0x6d0] sm:$0xff]
        %v5532 = vld [vmem:[%s5 + $0x6d8] sm:$0xff]
        %v5533 = vld [vmem:[%s5 + $0x6e0] sm:$0xff]
        %v5534 = vld [vmem:[%s5 + $0x6e8] sm:$0xff]
        %v5535 = vld [vmem:[%s5 + $0x6f0] sm:$0xff]
        %v5536 = vld [vmem:[%s5 + $0x6f8] sm:$0xff]
        %v5537 = vld [vmem:[%s5 + $0x700] sm:$0xff]
        %v5538 = vld [vmem:[%s5 + $0x708] sm:$0xff]
        %v5539 = vld [vmem:[%s5 + $0x710] sm:$0xff]
        %v5540 = vld [vmem:[%s5 + $0x718] sm:$0xff]
        %v5541 = vld [vmem:[%s5 + $0x720] sm:$0xff]
        %v5542 = vld [vmem:[%s5 + $0x728] sm:$0xff]
        %v5543 = vld [vmem:[%s5 + $0x730] sm:$0xff]
        %v5544 = vld [vmem:[%s5 + $0x738] sm:$0xff]
        %v5545 = vld [vmem:[%s5 + $0x740] sm:$0xff]
        %v5546 = vld [vmem:[%s5 + $0x748] sm:$0xff]
        %v5547 = vld [vmem:[%s5 + $0x750] sm:$0xff]
        %v5548 = vld [vmem:[%s5 + $0x758] sm:$0xff]
        %v5549 = vld [vmem:[%s5 + $0x760] sm:$0xff]
        %v5550 = vld [vmem:[%s5 + $0x768] sm:$0xff]
        %v5551 = vld [vmem:[%s5 + $0x770] sm:$0xff]
        %v5552 = vld [vmem:[%s5 + $0x778] sm:$0xff]
        %v5553 = vld [vmem:[%s5 + $0x780] sm:$0xff]
        %v5554 = vld [vmem:[%s5 + $0x788] sm:$0xff]
        %v5555 = vld [vmem:[%s5 + $0x790] sm:$0xff]
        %v5556 = vld [vmem:[%s5 + $0x798] sm:$0xff]
        %v5557 = vld [vmem:[%s5 + $0x7a0] sm:$0xff]
        %v5558 = vld [vmem:[%s5 + $0x7a8] sm:$0xff]
        %v5559 = vld [vmem:[%s5 + $0x7b0] sm:$0xff]
        %v5560 = vld [vmem:[%s5 + $0x7b8] sm:$0xff]
        %v5561 = vld [vmem:[%s5 + $0x7c0] sm:$0xff]
        %v5562 = vld [vmem:[%s5 + $0x7c8] sm:$0xff]
        %v5563 = vld [vmem:[%s5 + $0x7d0] sm:$0xff]
        %v5564 = vld [vmem:[%s5 + $0x7d8] sm:$0xff]
        %v5565 = vld [vmem:[%s5 + $0x7e0] sm:$0xff]
        %v5566 = vld [vmem:[%s5 + $0x7e8] sm:$0xff]
        %v5567 = vld [vmem:[%s5 + $0x7f0] sm:$0xff]
        %v5568 = vld [vmem:[%s5 + $0x7f8] sm:$0xff]
        %v5569 = vld [vmem:[%s5 + $0x800] sm:$0xff]
        %v5570 = vld [vmem:[%s5 + $0x808] sm:$0xff]
        %v5571 = vld [vmem:[%s5 + $0x810] sm:$0xff]
        %v5572 = vld [vmem:[%s5 + $0x818] sm:$0xff]
        %v5573 = vld [vmem:[%s5 + $0x820] sm:$0xff]
        %v5574 = vld [vmem:[%s5 + $0x828] sm:$0xff]
        %v5575 = vld [vmem:[%s5 + $0x830] sm:$0xff]
        %v5576 = vld [vmem:[%s5 + $0x838] sm:$0xff]
        %v5577 = vld [vmem:[%s5 + $0x840] sm:$0xff]
        %v5578 = vld [vmem:[%s5 + $0x848] sm:$0xff]
        %v5579 = vld [vmem:[%s5 + $0x850] sm:$0xff]
        %v5580 = vld [vmem:[%s5 + $0x858] sm:$0xff]
        %v5581 = vld [vmem:[%s5 + $0x860] sm:$0xff]
        %v5582 = vld [vmem:[%s5 + $0x868] sm:$0xff]
        %v5583 = vld [vmem:[%s5 + $0x870] sm:$0xff]
        %v5584 = vld [vmem:[%s5 + $0x878] sm:$0xff]
        %v5585 = vld [vmem:[%s5 + $0x880] sm:$0xff]
        %v5586 = vld [vmem:[%s5 + $0x888] sm:$0xff]
        %v5587 = vld [vmem:[%s5 + $0x890] sm:$0xff]
        %v5588 = vld [vmem:[%s5 + $0x898] sm:$0xff]
        %v5589 = vld [vmem:[%s5 + $0x8a0] sm:$0xff]
        %v5590 = vld [vmem:[%s5 + $0x8a8] sm:$0xff]
        %v5591 = vld [vmem:[%s5 + $0x8b0] sm:$0xff]
        %v5592 = vld [vmem:[%s5 + $0x8b8] sm:$0xff]
        %v5593 = vld [vmem:[%s5 + $0x8c0] sm:$0xff]
        %v5594 = vld [vmem:[%s5 + $0x8c8] sm:$0xff]
        %v5595 = vld [vmem:[%s5 + $0x8d0] sm:$0xff]
        %v5596 = vld [vmem:[%s5 + $0x8d8] sm:$0xff]
        %v5597 = vld [vmem:[%s5 + $0x8e0] sm:$0xff]
        %v5598 = vld [vmem:[%s5 + $0x8e8] sm:$0xff]
        %v5599 = vld [vmem:[%s5 + $0x8f0] sm:$0xff]
        %v5600 = vld [vmem:[%s5 + $0x8f8] sm:$0xff]
        %v5601 = vld [vmem:[%s5 + $0x900] sm:$0xff]
        %v5602 = vld [vmem:[%s5 + $0x908] sm:$0xff]
        %v5603 = vld [vmem:[%s5 + $0x910] sm:$0xff]
        %v5604 = vld [vmem:[%s5 + $0x918] sm:$0xff]
        %v5605 = vld [vmem:[%s5 + $0x920] sm:$0xff]
        %v5606 = vld [vmem:[%s5 + $0x928] sm:$0xff]
        %v5607 = vld [vmem:[%s5 + $0x930] sm:$0xff]
        %v5608 = vld [vmem:[%s5 + $0x938] sm:$0xff]
        %v5609 = vld [vmem:[%s5 + $0x940] sm:$0xff]
        %v5610 = vld [vmem:[%s5 + $0x948] sm:$0xff]
        %v5611 = vld [vmem:[%s5 + $0x950] sm:$0xff]
        %v5612 = vld [vmem:[%s5 + $0x958] sm:$0xff]
        %v5613 = vld [vmem:[%s5 + $0x960] sm:$0xff]
        %v5614 = vld [vmem:[%s5 + $0x968] sm:$0xff]
        %v5615 = vld [vmem:[%s5 + $0x970] sm:$0xff]
        %v5616 = vld [vmem:[%s5 + $0x978] sm:$0xff]
        %v5617 = vld [vmem:[%s5 + $0x980] sm:$0xff]
        %v5618 = vld [vmem:[%s5 + $0x988] sm:$0xff]
        %v5619 = vld [vmem:[%s5 + $0x990] sm:$0xff]
        %v5620 = vld [vmem:[%s5 + $0x998] sm:$0xff]
        %v5621 = vld [vmem:[%s5 + $0x9a0] sm:$0xff]
        %v5622 = vld [vmem:[%s5 + $0x9a8] sm:$0xff]
        %v5623 = vld [vmem:[%s5 + $0x9b0] sm:$0xff]
        %v5624 = vld [vmem:[%s5 + $0x9b8] sm:$0xff]
        %v5625 = vld [vmem:[%s5 + $0x9c0] sm:$0xff]
        %v5626 = vld [vmem:[%s5 + $0x9c8] sm:$0xff]
        %v5627 = vld [vmem:[%s5 + $0x9d0] sm:$0xff]
        %v5628 = vld [vmem:[%s5 + $0x9d8] sm:$0xff]
        %v5629 = vld [vmem:[%s5 + $0x9e0] sm:$0xff]
        %v5630 = vld [vmem:[%s5 + $0x9e8] sm:$0xff]
        %v5631 = vld [vmem:[%s5 + $0x9f0] sm:$0xff]
        %v5632 = vld [vmem:[%s5 + $0x9f8] sm:$0xff]
        %v5633 = vld [vmem:[%s5 + $0xa00] sm:$0xff]
        %v5634 = vld [vmem:[%s5 + $0xa08] sm:$0xff]
        %v5635 = vld [vmem:[%s5 + $0xa10] sm:$0xff]
        %v5636 = vld [vmem:[%s5 + $0xa18] sm:$0xff]
        %v5637 = vld [vmem:[%s5 + $0xa20] sm:$0xff]
        %v5638 = vld [vmem:[%s5 + $0xa28] sm:$0xff]
        %v5639 = vld [vmem:[%s5 + $0xa30] sm:$0xff]
        %v5640 = vld [vmem:[%s5 + $0xa38] sm:$0xff]
        %v5641 = vld [vmem:[%s5 + $0xa40] sm:$0xff]
        %v5642 = vld [vmem:[%s5 + $0xa48] sm:$0xff]
        %v5643 = vld [vmem:[%s5 + $0xa50] sm:$0xff]
        %v5644 = vld [vmem:[%s5 + $0xa58] sm:$0xff]
        %v5645 = vld [vmem:[%s5 + $0xa60] sm:$0xff]
        %v5646 = vld [vmem:[%s5 + $0xa68] sm:$0xff]
        %v5647 = vld [vmem:[%s5 + $0xa70] sm:$0xff]
        %v5648 = vld [vmem:[%s5 + $0xa78] sm:$0xff]
        %v5649 = vld [vmem:[%s5 + $0xa80] sm:$0xff]
        %v5650 = vld [vmem:[%s5 + $0xa88] sm:$0xff]
        %v5651 = vld [vmem:[%s5 + $0xa90] sm:$0xff]
        %v5652 = vld [vmem:[%s5 + $0xa98] sm:$0xff]
        %v5653 = vld [vmem:[%s5 + $0xaa0] sm:$0xff]
        %v5654 = vld [vmem:[%s5 + $0xaa8] sm:$0xff]
        %v5655 = vld [vmem:[%s5 + $0xab0] sm:$0xff]
        %v5656 = vld [vmem:[%s5 + $0xab8] sm:$0xff]
        %v5657 = vld [vmem:[%s5 + $0xac0] sm:$0xff]
        %v5658 = vld [vmem:[%s5 + $0xac8] sm:$0xff]
        %v5659 = vld [vmem:[%s5 + $0xad0] sm:$0xff]
        %v5660 = vld [vmem:[%s5 + $0xad8] sm:$0xff]
        %v5661 = vld [vmem:[%s5 + $0xae0] sm:$0xff]
        %v5662 = vld [vmem:[%s5 + $0xae8] sm:$0xff]
        %v5663 = vld [vmem:[%s5 + $0xaf0] sm:$0xff]
        %v5664 = vld [vmem:[%s5 + $0xaf8] sm:$0xff]
        %v5665 = vld [vmem:[%s5 + $0xb00] sm:$0xff]
        %v5666 = vld [vmem:[%s5 + $0xb08] sm:$0xff]
        %v5667 = vld [vmem:[%s5 + $0xb10] sm:$0xff]
        %v5668 = vld [vmem:[%s5 + $0xb18] sm:$0xff]
        %v5669 = vld [vmem:[%s5 + $0xb20] sm:$0xff]
        %v5670 = vld [vmem:[%s5 + $0xb28] sm:$0xff]
        %v5671 = vld [vmem:[%s5 + $0xb30] sm:$0xff]
        %v5672 = vld [vmem:[%s5 + $0xb38] sm:$0xff]
        %v5673 = vld [vmem:[%s5 + $0xb40] sm:$0xff]
        %v5674 = vld [vmem:[%s5 + $0xb48] sm:$0xff]
        %v5675 = vld [vmem:[%s5 + $0xb50] sm:$0xff]
        %v5676 = vld [vmem:[%s5 + $0xb58] sm:$0xff]
        %v5677 = vld [vmem:[%s5 + $0xb60] sm:$0xff]
        %v5678 = vld [vmem:[%s5 + $0xb68] sm:$0xff]
        %v5679 = vld [vmem:[%s5 + $0xb70] sm:$0xff]
        %v5680 = vld [vmem:[%s5 + $0xb78] sm:$0xff]
        %v5681 = vld [vmem:[%s5 + $0xb80] sm:$0xff]
        %v5682 = vld [vmem:[%s5 + $0xb88] sm:$0xff]
        %v5683 = vld [vmem:[%s5 + $0xb90] sm:$0xff]
        %v5684 = vld [vmem:[%s5 + $0xb98] sm:$0xff]
        %v5685 = vld [vmem:[%s5 + $0xba0] sm:$0xff]
        %v5686 = vld [vmem:[%s5 + $0xba8] sm:$0xff]
        %v5687 = vld [vmem:[%s5 + $0xbb0] sm:$0xff]
        %v5688 = vld [vmem:[%s5 + $0xbb8] sm:$0xff]
        %v5689 = vld [vmem:[%s5 + $0xbc0] sm:$0xff]
        %v5690 = vld [vmem:[%s5 + $0xbc8] sm:$0xff]
        %v5691 = vld [vmem:[%s5 + $0xbd0] sm:$0xff]
        %v5692 = vld [vmem:[%s5 + $0xbd8] sm:$0xff]
        %v5693 = vld [vmem:[%s5 + $0xbe0] sm:$0xff]
        %v5694 = vld [vmem:[%s5 + $0xbe8] sm:$0xff]
        %v5695 = vld [vmem:[%s5 + $0xbf0] sm:$0xff]
        %v5696 = vld [vmem:[%s5 + $0xbf8] sm:$0xff]
        %v5697 = vld [vmem:[%s5 + $0xc00] sm:$0xff]
        %v5698 = vld [vmem:[%s5 + $0xc08] sm:$0xff]
        %v5699 = vld [vmem:[%s5 + $0xc10] sm:$0xff]
        %v5700 = vld [vmem:[%s5 + $0xc18] sm:$0xff]
        %v5701 = vld [vmem:[%s5 + $0xc20] sm:$0xff]
        %v5702 = vld [vmem:[%s5 + $0xc28] sm:$0xff]
        %v5703 = vld [vmem:[%s5 + $0xc30] sm:$0xff]
        %v5704 = vld [vmem:[%s5 + $0xc38] sm:$0xff]
        %v5705 = vld [vmem:[%s5 + $0xc40] sm:$0xff]
        %v5706 = vld [vmem:[%s5 + $0xc48] sm:$0xff]
        %v5707 = vld [vmem:[%s5 + $0xc50] sm:$0xff]
        %v5708 = vld [vmem:[%s5 + $0xc58] sm:$0xff]
        %v5709 = vld [vmem:[%s5 + $0xc60] sm:$0xff]
        %v5710 = vld [vmem:[%s5 + $0xc68] sm:$0xff]
        %v5711 = vld [vmem:[%s5 + $0xc70] sm:$0xff]
        %v5712 = vld [vmem:[%s5 + $0xc78] sm:$0xff]
        %v5713 = vld [vmem:[%s5 + $0xc80] sm:$0xff]
        %v5714 = vld [vmem:[%s5 + $0xc88] sm:$0xff]
        %v5715 = vld [vmem:[%s5 + $0xc90] sm:$0xff]
        %v5716 = vld [vmem:[%s5 + $0xc98] sm:$0xff]
        %v5717 = vld [vmem:[%s5 + $0xca0] sm:$0xff]
        %v5718 = vld [vmem:[%s5 + $0xca8] sm:$0xff]
        %v5719 = vld [vmem:[%s5 + $0xcb0] sm:$0xff]
        %v5720 = vld [vmem:[%s5 + $0xcb8] sm:$0xff]
        %v5721 = vld [vmem:[%s5 + $0xcc0] sm:$0xff]
        %v5722 = vld [vmem:[%s5 + $0xcc8] sm:$0xff]
        %v5723 = vld [vmem:[%s5 + $0xcd0] sm:$0xff]
        %v5724 = vld [vmem:[%s5 + $0xcd8] sm:$0xff]
        %v5725 = vld [vmem:[%s5 + $0xce0] sm:$0xff]
        %v5726 = vld [vmem:[%s5 + $0xce8] sm:$0xff]
        %v5727 = vld [vmem:[%s5 + $0xcf0] sm:$0xff]
        %v5728 = vld [vmem:[%s5 + $0xcf8] sm:$0xff]
        %v5729 = vld [vmem:[%s5 + $0xd00] sm:$0xff]
        %v5730 = vld [vmem:[%s5 + $0xd08] sm:$0xff]
        %v5731 = vld [vmem:[%s5 + $0xd10] sm:$0xff]
        %v5732 = vld [vmem:[%s5 + $0xd18] sm:$0xff]
        %v5733 = vld [vmem:[%s5 + $0xd20] sm:$0xff]
        %v5734 = vld [vmem:[%s5 + $0xd28] sm:$0xff]
        %v5735 = vld [vmem:[%s5 + $0xd30] sm:$0xff]
        %v5736 = vld [vmem:[%s5 + $0xd38] sm:$0xff]
        %v5737 = vld [vmem:[%s5 + $0xd40] sm:$0xff]
        %v5738 = vld [vmem:[%s5 + $0xd48] sm:$0xff]
        %v5739 = vld [vmem:[%s5 + $0xd50] sm:$0xff]
        %v5740 = vld [vmem:[%s5 + $0xd58] sm:$0xff]
        %v5741 = vld [vmem:[%s5 + $0xd60] sm:$0xff]
        %v5742 = vld [vmem:[%s5 + $0xd68] sm:$0xff]
        %v5743 = vld [vmem:[%s5 + $0xd70] sm:$0xff]
        %v5744 = vld [vmem:[%s5 + $0xd78] sm:$0xff]
        %v5745 = vld [vmem:[%s5 + $0xd80] sm:$0xff]
        %v5746 = vld [vmem:[%s5 + $0xd88] sm:$0xff]
        %v5747 = vld [vmem:[%s5 + $0xd90] sm:$0xff]
        %v5748 = vld [vmem:[%s5 + $0xd98] sm:$0xff]
        %v5749 = vld [vmem:[%s5 + $0xda0] sm:$0xff]
        %v5750 = vld [vmem:[%s5 + $0xda8] sm:$0xff]
        %v5751 = vld [vmem:[%s5 + $0xdb0] sm:$0xff]
        %v5752 = vld [vmem:[%s5 + $0xdb8] sm:$0xff]
        %v5753 = vld [vmem:[%s5 + $0xdc0] sm:$0xff]
        %v5754 = vld [vmem:[%s5 + $0xdc8] sm:$0xff]
        %v5755 = vld [vmem:[%s5 + $0xdd0] sm:$0xff]
        %v5756 = vld [vmem:[%s5 + $0xdd8] sm:$0xff]
        %v5757 = vld [vmem:[%s5 + $0xde0] sm:$0xff]
        %v5758 = vld [vmem:[%s5 + $0xde8] sm:$0xff]
        %v5759 = vld [vmem:[%s5 + $0xdf0] sm:$0xff]
        %v5760 = vld [vmem:[%s5 + $0xdf8] sm:$0xff]
        %v5761 = vld [vmem:[%s5 + $0xe00] sm:$0xff]
        %v5762 = vld [vmem:[%s5 + $0xe08] sm:$0xff]
        %v5763 = vld [vmem:[%s5 + $0xe10] sm:$0xff]
        %v5764 = vld [vmem:[%s5 + $0xe18] sm:$0xff]
        %v5765 = vld [vmem:[%s5 + $0xe20] sm:$0xff]
        %v5766 = vld [vmem:[%s5 + $0xe28] sm:$0xff]
        %v5767 = vld [vmem:[%s5 + $0xe30] sm:$0xff]
        %v5768 = vld [vmem:[%s5 + $0xe38] sm:$0xff]
        %v5769 = vld [vmem:[%s5 + $0xe40] sm:$0xff]
        %v5770 = vld [vmem:[%s5 + $0xe48] sm:$0xff]
        %v5771 = vld [vmem:[%s5 + $0xe50] sm:$0xff]
        %v5772 = vld [vmem:[%s5 + $0xe58] sm:$0xff]
        %v5773 = vld [vmem:[%s5 + $0xe60] sm:$0xff]
        %v5774 = vld [vmem:[%s5 + $0xe68] sm:$0xff]
        %v5775 = vld [vmem:[%s5 + $0xe70] sm:$0xff]
        %v5776 = vld [vmem:[%s5 + $0xe78] sm:$0xff]
        %v5777 = vld [vmem:[%s5 + $0xe80] sm:$0xff]
        %v5778 = vld [vmem:[%s5 + $0xe88] sm:$0xff]
        %v5779 = vld [vmem:[%s5 + $0xe90] sm:$0xff]
        %v5780 = vld [vmem:[%s5 + $0xe98] sm:$0xff]
        %v5781 = vld [vmem:[%s5 + $0xea0] sm:$0xff]
        %v5782 = vld [vmem:[%s5 + $0xea8] sm:$0xff]
        %v5783 = vld [vmem:[%s5 + $0xeb0] sm:$0xff]
        %v5784 = vld [vmem:[%s5 + $0xeb8] sm:$0xff]
        %v5785 = vld [vmem:[%s5 + $0xec0] sm:$0xff]
        %v5786 = vld [vmem:[%s5 + $0xec8] sm:$0xff]
        %v5787 = vld [vmem:[%s5 + $0xed0] sm:$0xff]
        %v5788 = vld [vmem:[%s5 + $0xed8] sm:$0xff]
        %v5789 = vld [vmem:[%s5 + $0xee0] sm:$0xff]
        %v5790 = vld [vmem:[%s5 + $0xee8] sm:$0xff]
        %v5791 = vld [vmem:[%s5 + $0xef0] sm:$0xff]
        %v5792 = vld [vmem:[%s5 + $0xef8] sm:$0xff]
        %v5793 = vld [vmem:[%s5 + $0xf00] sm:$0xff]
        %v5794 = vld [vmem:[%s5 + $0xf08] sm:$0xff]
        %v5795 = vld [vmem:[%s5 + $0xf10] sm:$0xff]
        %v5796 = vld [vmem:[%s5 + $0xf18] sm:$0xff]
        %v5797 = vld [vmem:[%s5 + $0xf20] sm:$0xff]
        %v5798 = vld [vmem:[%s5 + $0xf28] sm:$0xff]
        %v5799 = vld [vmem:[%s5 + $0xf30] sm:$0xff]
        %v5800 = vld [vmem:[%s5 + $0xf38] sm:$0xff]
        %v5801 = vld [vmem:[%s5 + $0xf40] sm:$0xff]
        %v5802 = vld [vmem:[%s5 + $0xf48] sm:$0xff]
        %v5803 = vld [vmem:[%s5 + $0xf50] sm:$0xff]
        %v5804 = vld [vmem:[%s5 + $0xf58] sm:$0xff]
        %v5805 = vld [vmem:[%s5 + $0xf60] sm:$0xff]
        %v5806 = vld [vmem:[%s5 + $0xf68] sm:$0xff]
        %v5807 = vld [vmem:[%s5 + $0xf70] sm:$0xff]
        %v5808 = vld [vmem:[%s5 + $0xf78] sm:$0xff]
        %v5809 = vld [vmem:[%s5 + $0xf80] sm:$0xff]
        %v5810 = vld [vmem:[%s5 + $0xf88] sm:$0xff]
        %v5811 = vld [vmem:[%s5 + $0xf90] sm:$0xff]
        %v5812 = vld [vmem:[%s5 + $0xf98] sm:$0xff]
        %v5813 = vld [vmem:[%s5 + $0xfa0] sm:$0xff]
        %v5814 = vld [vmem:[%s5 + $0xfa8] sm:$0xff]
        %v5815 = vld [vmem:[%s5 + $0xfb0] sm:$0xff]
        %v5816 = vld [vmem:[%s5 + $0xfb8] sm:$0xff]
        %v5817 = vld [vmem:[%s5 + $0xfc0] sm:$0xff]
        %v5818 = vld [vmem:[%s5 + $0xfc8] sm:$0xff]
        %v5819 = vld [vmem:[%s5 + $0xfd0] sm:$0xff]
        %v5820 = vld [vmem:[%s5 + $0xfd8] sm:$0xff]
        %v5821 = vld [vmem:[%s5 + $0xfe0] sm:$0xff]
        %v5822 = vld [vmem:[%s5 + $0xfe8] sm:$0xff]
        %v5823 = vld [vmem:[%s5 + $0xff0] sm:$0xff]
        %v5824 = vld [vmem:[%s5 + $0xff8] sm:$0xff]
        %v5825 = vld [vmem:[%s5 + $0x1000] sm:$0xff]
        %v5826 = vld [vmem:[%s5 + $0x1008] sm:$0xff]
        %v5827 = vld [vmem:[%s5 + $0x1010] sm:$0xff]
        %v5828 = vld [vmem:[%s5 + $0x1018] sm:$0xff]
        %v5829 = vld [vmem:[%s5 + $0x1020] sm:$0xff]
        %v5830 = vld [vmem:[%s5 + $0x1028] sm:$0xff]
        %v5831 = vld [vmem:[%s5 + $0x1030] sm:$0xff]
        %v5832 = vld [vmem:[%s5 + $0x1038] sm:$0xff]
        %v5833 = vld [vmem:[%s5 + $0x1040] sm:$0xff]
        %v5834 = vld [vmem:[%s5 + $0x1048] sm:$0xff]
        %v5835 = vld [vmem:[%s5 + $0x1050] sm:$0xff]
        %v5836 = vld [vmem:[%s5 + $0x1058] sm:$0xff]
        %v5837 = vld [vmem:[%s5 + $0x1060] sm:$0xff]
        %v5838 = vld [vmem:[%s5 + $0x1068] sm:$0xff]
        %v5839 = vld [vmem:[%s5 + $0x1070] sm:$0xff]
        %v5840 = vld [vmem:[%s5 + $0x1078] sm:$0xff]
        %v5841 = vld [vmem:[%s5 + $0x1080] sm:$0xff]
        %v5842 = vld [vmem:[%s5 + $0x1088] sm:$0xff]
        %v5843 = vld [vmem:[%s5 + $0x1090] sm:$0xff]
        %v5844 = vld [vmem:[%s5 + $0x1098] sm:$0xff]
        %v5845 = vld [vmem:[%s5 + $0x10a0] sm:$0xff]
        %v5846 = vld [vmem:[%s5 + $0x10a8] sm:$0xff]
        %v5847 = vld [vmem:[%s5 + $0x10b0] sm:$0xff]
        %v5848 = vld [vmem:[%s5 + $0x10b8] sm:$0xff]
        %v5849 = vld [vmem:[%s5 + $0x10c0] sm:$0xff]
        %v5850 = vld [vmem:[%s5 + $0x10c8] sm:$0xff]
        %v5851 = vld [vmem:[%s5 + $0x10d0] sm:$0xff]
        %v5852 = vld [vmem:[%s5 + $0x10d8] sm:$0xff]
        %v5853 = vld [vmem:[%s5 + $0x10e0] sm:$0xff]
        %v5854 = vld [vmem:[%s5 + $0x10e8] sm:$0xff]
        %v5855 = vld [vmem:[%s5 + $0x10f0] sm:$0xff]
        %v5856 = vld [vmem:[%s5 + $0x10f8] sm:$0xff]
        %v5857 = vld [vmem:[%s5 + $0x1100] sm:$0xff]
        %v5858 = vld [vmem:[%s5 + $0x1108] sm:$0xff]
        %v5859 = vld [vmem:[%s5 + $0x1110] sm:$0xff]
        %v5860 = vld [vmem:[%s5 + $0x1118] sm:$0xff]
        %v5861 = vld [vmem:[%s5 + $0x1120] sm:$0xff]
        %v5862 = vld [vmem:[%s5 + $0x1128] sm:$0xff]
        %v5863 = vld [vmem:[%s5 + $0x1130] sm:$0xff]
        %v5864 = vld [vmem:[%s5 + $0x1138] sm:$0xff]
        %v5865 = vld [vmem:[%s5 + $0x1140] sm:$0xff]
        %v5866 = vld [vmem:[%s5 + $0x1148] sm:$0xff]
        %v5867 = vld [vmem:[%s5 + $0x1150] sm:$0xff]
        %v5868 = vld [vmem:[%s5 + $0x1158] sm:$0xff]
        %v5869 = vld [vmem:[%s5 + $0x1160] sm:$0xff]
        %v5870 = vld [vmem:[%s5 + $0x1168] sm:$0xff]
        %v5871 = vld [vmem:[%s5 + $0x1170] sm:$0xff]
        %v5872 = vld [vmem:[%s5 + $0x1178] sm:$0xff]
        %v5873 = vld [vmem:[%s5 + $0x1180] sm:$0xff]
        %v5874 = vld [vmem:[%s5 + $0x1188] sm:$0xff]
        %v5875 = vld [vmem:[%s5 + $0x1190] sm:$0xff]
        %v5876 = vld [vmem:[%s5 + $0x1198] sm:$0xff]
        %v5877 = vld [vmem:[%s5 + $0x11a0] sm:$0xff]
        %v5878 = vld [vmem:[%s5 + $0x11a8] sm:$0xff]
        %v5879 = vld [vmem:[%s5 + $0x11b0] sm:$0xff]
        %v5880 = vld [vmem:[%s5 + $0x11b8] sm:$0xff]
        %v5881 = vld [vmem:[%s5 + $0x11c0] sm:$0xff]
        %v5882 = vld [vmem:[%s5 + $0x11c8] sm:$0xff]
        %v5883 = vld [vmem:[%s5 + $0x11d0] sm:$0xff]
        %v5884 = vld [vmem:[%s5 + $0x11d8] sm:$0xff]
        %v5885 = vld [vmem:[%s5 + $0x11e0] sm:$0xff]
        %v5886 = vld [vmem:[%s5 + $0x11e8] sm:$0xff]
        %v5887 = vld [vmem:[%s5 + $0x11f0] sm:$0xff]
        %v5888 = vld [vmem:[%s5 + $0x11f8] sm:$0xff]
        %v5889 = vld [vmem:[%s5 + $0x1200] sm:$0xff]
        %v5890 = vld [vmem:[%s5 + $0x1208] sm:$0xff]
        %v5891 = vld [vmem:[%s5 + $0x1210] sm:$0xff]
        %v5892 = vld [vmem:[%s5 + $0x1218] sm:$0xff]
        %v5893 = vld [vmem:[%s5 + $0x1220] sm:$0xff]
        %v5894 = vld [vmem:[%s5 + $0x1228] sm:$0xff]
        %v5895 = vld [vmem:[%s5 + $0x1230] sm:$0xff]
        %v5896 = vld [vmem:[%s5 + $0x1238] sm:$0xff]
        %v5897 = vld [vmem:[%s5 + $0x1240] sm:$0xff]
        %v5898 = vld [vmem:[%s5 + $0x1248] sm:$0xff]
        %v5899 = vld [vmem:[%s5 + $0x1250] sm:$0xff]
        %v5900 = vld [vmem:[%s5 + $0x1258] sm:$0xff]
        %v5901 = vld [vmem:[%s5 + $0x1260] sm:$0xff]
        %v5902 = vld [vmem:[%s5 + $0x1268] sm:$0xff]
        %v5903 = vld [vmem:[%s5 + $0x1270] sm:$0xff]
        %v5904 = vld [vmem:[%s5 + $0x1278] sm:$0xff]
        %v5905 = vld [vmem:[%s5 + $0x1280] sm:$0xff]
        %v5906 = vld [vmem:[%s5 + $0x1288] sm:$0xff]
        %v5907 = vld [vmem:[%s5 + $0x1290] sm:$0xff]
        %v5908 = vld [vmem:[%s5 + $0x1298] sm:$0xff]
        %v5909 = vld [vmem:[%s5 + $0x12a0] sm:$0xff]
        %v5910 = vld [vmem:[%s5 + $0x12a8] sm:$0xff]
        %v5911 = vld [vmem:[%s5 + $0x12b0] sm:$0xff]
        %v5912 = vld [vmem:[%s5 + $0x12b8] sm:$0xff]
        %v5913 = vld [vmem:[%s5 + $0x12c0] sm:$0xff]
        %v5914 = vld [vmem:[%s5 + $0x12c8] sm:$0xff]
        %v5915 = vld [vmem:[%s5 + $0x12d0] sm:$0xff]
        %v5916 = vld [vmem:[%s5 + $0x12d8] sm:$0xff]
        %v5917 = vld [vmem:[%s5 + $0x12e0] sm:$0xff]
        %v5918 = vld [vmem:[%s5 + $0x12e8] sm:$0xff]
        %v5919 = vld [vmem:[%s5 + $0x12f0] sm:$0xff]
        %v5920 = vld [vmem:[%s5 + $0x12f8] sm:$0xff]
        %v5921 = vld [vmem:[%s5 + $0x1300] sm:$0xff]
        %v5922 = vld [vmem:[%s5 + $0x1308] sm:$0xff]
        %v5923 = vld [vmem:[%s5 + $0x1310] sm:$0xff]
        %v5924 = vld [vmem:[%s5 + $0x1318] sm:$0xff]
        %v5925 = vld [vmem:[%s5 + $0x1320] sm:$0xff]
        %v5926 = vld [vmem:[%s5 + $0x1328] sm:$0xff]
        %v5927 = vld [vmem:[%s5 + $0x1330] sm:$0xff]
        %v5928 = vld [vmem:[%s5 + $0x1338] sm:$0xff]
        %v5929 = vld [vmem:[%s5 + $0x1340] sm:$0xff]
        %v5930 = vld [vmem:[%s5 + $0x1348] sm:$0xff]
        %v5931 = vld [vmem:[%s5 + $0x1350] sm:$0xff]
        %v5932 = vld [vmem:[%s5 + $0x1358] sm:$0xff]
        %v5933 = vld [vmem:[%s5 + $0x1360] sm:$0xff]
        %v5934 = vld [vmem:[%s5 + $0x1368] sm:$0xff]
        %v5935 = vld [vmem:[%s5 + $0x1370] sm:$0xff]
        %v5936 = vld [vmem:[%s5 + $0x1378] sm:$0xff]
        %v5937 = vld [vmem:[%s5 + $0x1380] sm:$0xff]
        %v5938 = vld [vmem:[%s5 + $0x1388] sm:$0xff]
        %v5939 = vld [vmem:[%s5 + $0x1390] sm:$0xff]
        %v5940 = vld [vmem:[%s5 + $0x1398] sm:$0xff]
        %v5941 = vld [vmem:[%s5 + $0x13a0] sm:$0xff]
        %v5942 = vld [vmem:[%s5 + $0x13a8] sm:$0xff]
        %v5943 = vld [vmem:[%s5 + $0x13b0] sm:$0xff]
        %v5944 = vld [vmem:[%s5 + $0x13b8] sm:$0xff]
        %v5945 = vld [vmem:[%s5 + $0x13c0] sm:$0xff]
        %v5946 = vld [vmem:[%s5 + $0x13c8] sm:$0xff]
        %v5947 = vld [vmem:[%s5 + $0x13d0] sm:$0xff]
        %v5948 = vld [vmem:[%s5 + $0x13d8] sm:$0xff]
        %v5949 = vld [vmem:[%s5 + $0x13e0] sm:$0xff]
        %v5950 = vld [vmem:[%s5 + $0x13e8] sm:$0xff]
        %v5951 = vld [vmem:[%s5 + $0x13f0] sm:$0xff]
        %v5952 = vld [vmem:[%s5 + $0x13f8] sm:$0xff]
        %v5953 = vld [vmem:[%s6] sm:$0xf]
        %v5955 = vperm.slane %v5953, 0
        %v5956 = vperm.slane %v5953, 1
        %v5957 = vperm.slane %v5953, 2
        %v5958 = vperm.slane %v5953, 3
        %v5973 = vunpack.c.l.b16 %v5303
        %v5974 = vunpack.c.h.b16 %v5303
        %v5975 = vunpack.c.l.b16 %v5304
        %v5976 = vunpack.c.h.b16 %v5304
        %v5977 = vunpack.c.l.b16 %v5305
        %v5978 = vunpack.c.h.b16 %v5305
        %v5979 = vunpack.c.l.b16 %v5306
        %v5980 = vunpack.c.h.b16 %v5306
        %v5981 = vunpack.c.l.b16 %v5307
        %v5982 = vunpack.c.h.b16 %v5307
        %v5983 = vunpack.c.l.b16 %v5308
        %v5984 = vunpack.c.h.b16 %v5308
        %v5985 = vunpack.c.l.b16 %v5309
        %v5986 = vunpack.c.h.b16 %v5309
        %v5987 = vunpack.c.l.b16 %v5310
        %v5988 = vunpack.c.h.b16 %v5310
        %v5989 = vunpack.c.l.b16 %v5311
        %v5990 = vunpack.c.h.b16 %v5311
        %v5991 = vunpack.c.l.b16 %v5312
        %v5992 = vunpack.c.h.b16 %v5312
        %v5993 = vpack.c.b16 %v5973, %v5973
        %v5994 = vpack.c.b16 %v5974, %v5974
        %v5995 = vpack.c.b16 %v5975, %v5975
        %v5996 = vpack.c.b16 %v5976, %v5976
        %v5997 = vpack.c.b16 %v5977, %v5977
        %v5998 = vpack.c.b16 %v5978, %v5978
        %v5999 = vpack.c.b16 %v5979, %v5979
        %v6000 = vpack.c.b16 %v5980, %v5980
        %v6001 = vpack.c.b16 %v5981, %v5981
        %v6002 = vpack.c.b16 %v5982, %v5982
        %v6003 = vpack.c.b16 %v5983, %v5983
        %v6004 = vpack.c.b16 %v5984, %v5984
        %v6005 = vpack.c.b16 %v5985, %v5985
        %v6006 = vpack.c.b16 %v5986, %v5986
        %v6007 = vpack.c.b16 %v5987, %v5987
        %v6008 = vpack.c.b16 %v5988, %v5988
        %v6009 = vpack.c.b16 %v5989, %v5989
        %v6010 = vpack.c.b16 %v5990, %v5990
        %v6011 = vpack.c.b16 %v5991, %v5991
        %v6012 = vpack.c.b16 %v5992, %v5992
        %v6673 = vunpack.c.l.b16 %v5313
        %v6674 = vunpack.c.h.b16 %v5313
        %v6675 = vunpack.c.l.b16 %v5314
        %v6676 = vunpack.c.h.b16 %v5314
        %v6677 = vunpack.c.l.b16 %v5315
        %v6678 = vunpack.c.h.b16 %v5315
        %v6679 = vunpack.c.l.b16 %v5316
        %v6680 = vunpack.c.h.b16 %v5316
        %v6681 = vunpack.c.l.b16 %v5317
        %v6682 = vunpack.c.h.b16 %v5317
        %v6683 = vunpack.c.l.b16 %v5318
        %v6684 = vunpack.c.h.b16 %v5318
        %v6685 = vunpack.c.l.b16 %v5319
        %v6686 = vunpack.c.h.b16 %v5319
        %v6687 = vunpack.c.l.b16 %v5320
        %v6688 = vunpack.c.h.b16 %v5320
        %v6689 = vunpack.c.l.b16 %v5321
        %v6690 = vunpack.c.h.b16 %v5321
        %v6691 = vunpack.c.l.b16 %v5322
        %v6692 = vunpack.c.h.b16 %v5322
        %v6693 = vunpack.c.l.b16 %v5323
        %v6694 = vunpack.c.h.b16 %v5323
        %v6695 = vunpack.c.l.b16 %v5324
        %v6696 = vunpack.c.h.b16 %v5324
        %v6697 = vunpack.c.l.b16 %v5325
        %v6698 = vunpack.c.h.b16 %v5325
        %v6699 = vunpack.c.l.b16 %v5326
        %v6700 = vunpack.c.h.b16 %v5326
        %v6701 = vunpack.c.l.b16 %v5327
        %v6702 = vunpack.c.h.b16 %v5327
        %v6703 = vunpack.c.l.b16 %v5328
        %v6704 = vunpack.c.h.b16 %v5328
        %v6705 = vunpack.c.l.b16 %v5329
        %v6706 = vunpack.c.h.b16 %v5329
        %v6707 = vunpack.c.l.b16 %v5330
        %v6708 = vunpack.c.h.b16 %v5330
        %v6709 = vunpack.c.l.b16 %v5331
        %v6710 = vunpack.c.h.b16 %v5331
        %v6711 = vunpack.c.l.b16 %v5332
        %v6712 = vunpack.c.h.b16 %v5332
        %v6713 = vunpack.c.l.b16 %v5333
        %v6714 = vunpack.c.h.b16 %v5333
        %v6715 = vunpack.c.l.b16 %v5334
        %v6716 = vunpack.c.h.b16 %v5334
        %v6717 = vunpack.c.l.b16 %v5335
        %v6718 = vunpack.c.h.b16 %v5335
        %v6719 = vunpack.c.l.b16 %v5336
        %v6720 = vunpack.c.h.b16 %v5336
        %v6721 = vunpack.c.l.b16 %v5337
        %v6722 = vunpack.c.h.b16 %v5337
        %v6723 = vunpack.c.l.b16 %v5338
        %v6724 = vunpack.c.h.b16 %v5338
        %v6725 = vunpack.c.l.b16 %v5339
        %v6726 = vunpack.c.h.b16 %v5339
        %v6727 = vunpack.c.l.b16 %v5340
        %v6728 = vunpack.c.h.b16 %v5340
        %v6729 = vunpack.c.l.b16 %v5341
        %v6730 = vunpack.c.h.b16 %v5341
        %v6731 = vunpack.c.l.b16 %v5342
        %v6732 = vunpack.c.h.b16 %v5342
        %v6733 = vunpack.c.l.b16 %v5343
        %v6734 = vunpack.c.h.b16 %v5343
        %v6735 = vunpack.c.l.b16 %v5344
        %v6736 = vunpack.c.h.b16 %v5344
        %v6737 = vunpack.c.l.b16 %v5345
        %v6738 = vunpack.c.h.b16 %v5345
        %v6739 = vunpack.c.l.b16 %v5346
        %v6740 = vunpack.c.h.b16 %v5346
        %v6741 = vunpack.c.l.b16 %v5347
        %v6742 = vunpack.c.h.b16 %v5347
        %v6743 = vunpack.c.l.b16 %v5348
        %v6744 = vunpack.c.h.b16 %v5348
        %v6745 = vunpack.c.l.b16 %v5349
        %v6746 = vunpack.c.h.b16 %v5349
        %v6747 = vunpack.c.l.b16 %v5350
        %v6748 = vunpack.c.h.b16 %v5350
        %v6749 = vunpack.c.l.b16 %v5351
        %v6750 = vunpack.c.h.b16 %v5351
        %v6751 = vunpack.c.l.b16 %v5352
        %v6752 = vunpack.c.h.b16 %v5352
        %v6753 = vunpack.c.l.b16 %v5353
        %v6754 = vunpack.c.h.b16 %v5353
        %v6755 = vunpack.c.l.b16 %v5354
        %v6756 = vunpack.c.h.b16 %v5354
        %v6757 = vunpack.c.l.b16 %v5355
        %v6758 = vunpack.c.h.b16 %v5355
        %v6759 = vunpack.c.l.b16 %v5356
        %v6760 = vunpack.c.h.b16 %v5356
        %v6761 = vunpack.c.l.b16 %v5357
        %v6762 = vunpack.c.h.b16 %v5357
        %v6763 = vunpack.c.l.b16 %v5358
        %v6764 = vunpack.c.h.b16 %v5358
        %v6765 = vunpack.c.l.b16 %v5359
        %v6766 = vunpack.c.h.b16 %v5359
        %v6767 = vunpack.c.l.b16 %v5360
        %v6768 = vunpack.c.h.b16 %v5360
        %v6769 = vunpack.c.l.b16 %v5361
        %v6770 = vunpack.c.h.b16 %v5361
        %v6771 = vunpack.c.l.b16 %v5362
        %v6772 = vunpack.c.h.b16 %v5362
        %v6773 = vunpack.c.l.b16 %v5363
        %v6774 = vunpack.c.h.b16 %v5363
        %v6775 = vunpack.c.l.b16 %v5364
        %v6776 = vunpack.c.h.b16 %v5364
        %v6777 = vunpack.c.l.b16 %v5365
        %v6778 = vunpack.c.h.b16 %v5365
        %v6779 = vunpack.c.l.b16 %v5366
        %v6780 = vunpack.c.h.b16 %v5366
        %v6781 = vunpack.c.l.b16 %v5367
        %v6782 = vunpack.c.h.b16 %v5367
        %v6783 = vunpack.c.l.b16 %v5368
        %v6784 = vunpack.c.h.b16 %v5368
        %v6785 = vunpack.c.l.b16 %v5369
        %v6786 = vunpack.c.h.b16 %v5369
        %v6787 = vunpack.c.l.b16 %v5370
        %v6788 = vunpack.c.h.b16 %v5370
        %v6789 = vunpack.c.l.b16 %v5371
        %v6790 = vunpack.c.h.b16 %v5371
        %v6791 = vunpack.c.l.b16 %v5372
        %v6792 = vunpack.c.h.b16 %v5372
        %v6793 = vunpack.c.l.b16 %v5373
        %v6794 = vunpack.c.h.b16 %v5373
        %v6795 = vunpack.c.l.b16 %v5374
        %v6796 = vunpack.c.h.b16 %v5374
        %v6797 = vunpack.c.l.b16 %v5375
        %v6798 = vunpack.c.h.b16 %v5375
        %v6799 = vunpack.c.l.b16 %v5376
        %v6800 = vunpack.c.h.b16 %v5376
        %v6801 = vunpack.c.l.b16 %v5377
        %v6802 = vunpack.c.h.b16 %v5377
        %v6803 = vunpack.c.l.b16 %v5378
        %v6804 = vunpack.c.h.b16 %v5378
        %v6805 = vunpack.c.l.b16 %v5379
        %v6806 = vunpack.c.h.b16 %v5379
        %v6807 = vunpack.c.l.b16 %v5380
        %v6808 = vunpack.c.h.b16 %v5380
        %v6809 = vunpack.c.l.b16 %v5381
        %v6810 = vunpack.c.h.b16 %v5381
        %v6811 = vunpack.c.l.b16 %v5382
        %v6812 = vunpack.c.h.b16 %v5382
        %v6813 = vunpack.c.l.b16 %v5383
        %v6814 = vunpack.c.h.b16 %v5383
        %v6815 = vunpack.c.l.b16 %v5384
        %v6816 = vunpack.c.h.b16 %v5384
        %v6817 = vunpack.c.l.b16 %v5385
        %v6818 = vunpack.c.h.b16 %v5385
        %v6819 = vunpack.c.l.b16 %v5386
        %v6820 = vunpack.c.h.b16 %v5386
        %v6821 = vunpack.c.l.b16 %v5387
        %v6822 = vunpack.c.h.b16 %v5387
        %v6823 = vunpack.c.l.b16 %v5388
        %v6824 = vunpack.c.h.b16 %v5388
        %v6825 = vunpack.c.l.b16 %v5389
        %v6826 = vunpack.c.h.b16 %v5389
        %v6827 = vunpack.c.l.b16 %v5390
        %v6828 = vunpack.c.h.b16 %v5390
        %v6829 = vunpack.c.l.b16 %v5391
        %v6830 = vunpack.c.h.b16 %v5391
        %v6831 = vunpack.c.l.b16 %v5392
        %v6832 = vunpack.c.h.b16 %v5392
        %v6833 = vunpack.c.l.b16 %v5393
        %v6834 = vunpack.c.h.b16 %v5393
        %v6835 = vunpack.c.l.b16 %v5394
        %v6836 = vunpack.c.h.b16 %v5394
        %v6837 = vunpack.c.l.b16 %v5395
        %v6838 = vunpack.c.h.b16 %v5395
        %v6839 = vunpack.c.l.b16 %v5396
        %v6840 = vunpack.c.h.b16 %v5396
        %v6841 = vunpack.c.l.b16 %v5397
        %v6842 = vunpack.c.h.b16 %v5397
        %v6843 = vunpack.c.l.b16 %v5398
        %v6844 = vunpack.c.h.b16 %v5398
        %v6845 = vunpack.c.l.b16 %v5399
        %v6846 = vunpack.c.h.b16 %v5399
        %v6847 = vunpack.c.l.b16 %v5400
        %v6848 = vunpack.c.h.b16 %v5400
        %v6849 = vunpack.c.l.b16 %v5401
        %v6850 = vunpack.c.h.b16 %v5401
        %v6851 = vunpack.c.l.b16 %v5402
        %v6852 = vunpack.c.h.b16 %v5402
        %v6853 = vunpack.c.l.b16 %v5403
        %v6854 = vunpack.c.h.b16 %v5403
        %v6855 = vunpack.c.l.b16 %v5404
        %v6856 = vunpack.c.h.b16 %v5404
        %v6857 = vunpack.c.l.b16 %v5405
        %v6858 = vunpack.c.h.b16 %v5405
        %v6859 = vunpack.c.l.b16 %v5406
        %v6860 = vunpack.c.h.b16 %v5406
        %v6861 = vunpack.c.l.b16 %v5407
        %v6862 = vunpack.c.h.b16 %v5407
        %v6863 = vunpack.c.l.b16 %v5408
        %v6864 = vunpack.c.h.b16 %v5408
        %v6865 = vunpack.c.l.b16 %v5409
        %v6866 = vunpack.c.h.b16 %v5409
        %v6867 = vunpack.c.l.b16 %v5410
        %v6868 = vunpack.c.h.b16 %v5410
        %v6869 = vunpack.c.l.b16 %v5411
        %v6870 = vunpack.c.h.b16 %v5411
        %v6871 = vunpack.c.l.b16 %v5412
        %v6872 = vunpack.c.h.b16 %v5412
        %v6873 = vunpack.c.l.b16 %v5413
        %v6874 = vunpack.c.h.b16 %v5413
        %v6875 = vunpack.c.l.b16 %v5414
        %v6876 = vunpack.c.h.b16 %v5414
        %v6877 = vunpack.c.l.b16 %v5415
        %v6878 = vunpack.c.h.b16 %v5415
        %v6879 = vunpack.c.l.b16 %v5416
        %v6880 = vunpack.c.h.b16 %v5416
        %v6881 = vunpack.c.l.b16 %v5417
        %v6882 = vunpack.c.h.b16 %v5417
        %v6883 = vunpack.c.l.b16 %v5418
        %v6884 = vunpack.c.h.b16 %v5418
        %v6885 = vunpack.c.l.b16 %v5419
        %v6886 = vunpack.c.h.b16 %v5419
        %v6887 = vunpack.c.l.b16 %v5420
        %v6888 = vunpack.c.h.b16 %v5420
        %v6889 = vunpack.c.l.b16 %v5421
        %v6890 = vunpack.c.h.b16 %v5421
        %v6891 = vunpack.c.l.b16 %v5422
        %v6892 = vunpack.c.h.b16 %v5422
        %v6893 = vunpack.c.l.b16 %v5423
        %v6894 = vunpack.c.h.b16 %v5423
        %v6895 = vunpack.c.l.b16 %v5424
        %v6896 = vunpack.c.h.b16 %v5424
        %v6897 = vunpack.c.l.b16 %v5425
        %v6898 = vunpack.c.h.b16 %v5425
        %v6899 = vunpack.c.l.b16 %v5426
        %v6900 = vunpack.c.h.b16 %v5426
        %v6901 = vunpack.c.l.b16 %v5427
        %v6902 = vunpack.c.h.b16 %v5427
        %v6903 = vunpack.c.l.b16 %v5428
        %v6904 = vunpack.c.h.b16 %v5428
        %v6905 = vunpack.c.l.b16 %v5429
        %v6906 = vunpack.c.h.b16 %v5429
        %v6907 = vunpack.c.l.b16 %v5430
        %v6908 = vunpack.c.h.b16 %v5430
        %v6909 = vunpack.c.l.b16 %v5431
        %v6910 = vunpack.c.h.b16 %v5431
        %v6911 = vunpack.c.l.b16 %v5432
        %v6912 = vunpack.c.h.b16 %v5432
        %v6913 = vunpack.c.l.b16 %v5433
        %v6914 = vunpack.c.h.b16 %v5433
        %v6915 = vunpack.c.l.b16 %v5434
        %v6916 = vunpack.c.h.b16 %v5434
        %v6917 = vunpack.c.l.b16 %v5435
        %v6918 = vunpack.c.h.b16 %v5435
        %v6919 = vunpack.c.l.b16 %v5436
        %v6920 = vunpack.c.h.b16 %v5436
        %v6921 = vunpack.c.l.b16 %v5437
        %v6922 = vunpack.c.h.b16 %v5437
        %v6923 = vunpack.c.l.b16 %v5438
        %v6924 = vunpack.c.h.b16 %v5438
        %v6925 = vunpack.c.l.b16 %v5439
        %v6926 = vunpack.c.h.b16 %v5439
        %v6927 = vunpack.c.l.b16 %v5440
        %v6928 = vunpack.c.h.b16 %v5440
        %v6929 = vunpack.c.l.b16 %v5441
        %v6930 = vunpack.c.h.b16 %v5441
        %v6931 = vunpack.c.l.b16 %v5442
        %v6932 = vunpack.c.h.b16 %v5442
        %v6933 = vunpack.c.l.b16 %v5443
        %v6934 = vunpack.c.h.b16 %v5443
        %v6935 = vunpack.c.l.b16 %v5444
        %v6936 = vunpack.c.h.b16 %v5444
        %v6937 = vunpack.c.l.b16 %v5445
        %v6938 = vunpack.c.h.b16 %v5445
        %v6939 = vunpack.c.l.b16 %v5446
        %v6940 = vunpack.c.h.b16 %v5446
        %v6941 = vunpack.c.l.b16 %v5447
        %v6942 = vunpack.c.h.b16 %v5447
        %v6943 = vunpack.c.l.b16 %v5448
        %v6944 = vunpack.c.h.b16 %v5448
        %v6945 = vunpack.c.l.b16 %v5449
        %v6946 = vunpack.c.h.b16 %v5449
        %v6947 = vunpack.c.l.b16 %v5450
        %v6948 = vunpack.c.h.b16 %v5450
        %v6949 = vunpack.c.l.b16 %v5451
        %v6950 = vunpack.c.h.b16 %v5451
        %v6951 = vunpack.c.l.b16 %v5452
        %v6952 = vunpack.c.h.b16 %v5452
        %v6953 = vunpack.c.l.b16 %v5453
        %v6954 = vunpack.c.h.b16 %v5453
        %v6955 = vunpack.c.l.b16 %v5454
        %v6956 = vunpack.c.h.b16 %v5454
        %v6957 = vunpack.c.l.b16 %v5455
        %v6958 = vunpack.c.h.b16 %v5455
        %v6959 = vunpack.c.l.b16 %v5456
        %v6960 = vunpack.c.h.b16 %v5456
        %v6961 = vunpack.c.l.b16 %v5457
        %v6962 = vunpack.c.h.b16 %v5457
        %v6963 = vunpack.c.l.b16 %v5458
        %v6964 = vunpack.c.h.b16 %v5458
        %v6965 = vunpack.c.l.b16 %v5459
        %v6966 = vunpack.c.h.b16 %v5459
        %v6967 = vunpack.c.l.b16 %v5460
        %v6968 = vunpack.c.h.b16 %v5460
        %v6969 = vunpack.c.l.b16 %v5461
        %v6970 = vunpack.c.h.b16 %v5461
        %v6971 = vunpack.c.l.b16 %v5462
        %v6972 = vunpack.c.h.b16 %v5462
        %v6973 = vunpack.c.l.b16 %v5463
        %v6974 = vunpack.c.h.b16 %v5463
        %v6975 = vunpack.c.l.b16 %v5464
        %v6976 = vunpack.c.h.b16 %v5464
        %v6977 = vunpack.c.l.b16 %v5465
        %v6978 = vunpack.c.h.b16 %v5465
        %v6979 = vunpack.c.l.b16 %v5466
        %v6980 = vunpack.c.h.b16 %v5466
        %v6981 = vunpack.c.l.b16 %v5467
        %v6982 = vunpack.c.h.b16 %v5467
        %v6983 = vunpack.c.l.b16 %v5468
        %v6984 = vunpack.c.h.b16 %v5468
        %v6985 = vunpack.c.l.b16 %v5469
        %v6986 = vunpack.c.h.b16 %v5469
        %v6987 = vunpack.c.l.b16 %v5470
        %v6988 = vunpack.c.h.b16 %v5470
        %v6989 = vunpack.c.l.b16 %v5471
        %v6990 = vunpack.c.h.b16 %v5471
        %v6991 = vunpack.c.l.b16 %v5472
        %v6992 = vunpack.c.h.b16 %v5472
        %v6993 = vunpack.c.l.b16 %v5473
        %v6994 = vunpack.c.h.b16 %v5473
        %v6995 = vunpack.c.l.b16 %v5474
        %v6996 = vunpack.c.h.b16 %v5474
        %v6997 = vunpack.c.l.b16 %v5475
        %v6998 = vunpack.c.h.b16 %v5475
        %v6999 = vunpack.c.l.b16 %v5476
        %v7000 = vunpack.c.h.b16 %v5476
        %v7001 = vunpack.c.l.b16 %v5477
        %v7002 = vunpack.c.h.b16 %v5477
        %v7003 = vunpack.c.l.b16 %v5478
        %v7004 = vunpack.c.h.b16 %v5478
        %v7005 = vunpack.c.l.b16 %v5479
        %v7006 = vunpack.c.h.b16 %v5479
        %v7007 = vunpack.c.l.b16 %v5480
        %v7008 = vunpack.c.h.b16 %v5480
        %v7009 = vunpack.c.l.b16 %v5481
        %v7010 = vunpack.c.h.b16 %v5481
        %v7011 = vunpack.c.l.b16 %v5482
        %v7012 = vunpack.c.h.b16 %v5482
        %v7013 = vunpack.c.l.b16 %v5483
        %v7014 = vunpack.c.h.b16 %v5483
        %v7015 = vunpack.c.l.b16 %v5484
        %v7016 = vunpack.c.h.b16 %v5484
        %v7017 = vunpack.c.l.b16 %v5485
        %v7018 = vunpack.c.h.b16 %v5485
        %v7019 = vunpack.c.l.b16 %v5486
        %v7020 = vunpack.c.h.b16 %v5486
        %v7021 = vunpack.c.l.b16 %v5487
        %v7022 = vunpack.c.h.b16 %v5487
        %v7023 = vunpack.c.l.b16 %v5488
        %v7024 = vunpack.c.h.b16 %v5488
        %v7025 = vunpack.c.l.b16 %v5489
        %v7026 = vunpack.c.h.b16 %v5489
        %v7027 = vunpack.c.l.b16 %v5490
        %v7028 = vunpack.c.h.b16 %v5490
        %v7029 = vunpack.c.l.b16 %v5491
        %v7030 = vunpack.c.h.b16 %v5491
        %v7031 = vunpack.c.l.b16 %v5492
        %v7032 = vunpack.c.h.b16 %v5492
        %v7033 = vunpack.c.l.b16 %v5493
        %v7034 = vunpack.c.h.b16 %v5493
        %v7035 = vunpack.c.l.b16 %v5494
        %v7036 = vunpack.c.h.b16 %v5494
        %v7037 = vunpack.c.l.b16 %v5495
        %v7038 = vunpack.c.h.b16 %v5495
        %v7039 = vunpack.c.l.b16 %v5496
        %v7040 = vunpack.c.h.b16 %v5496
        %v7041 = vunpack.c.l.b16 %v5497
        %v7042 = vunpack.c.h.b16 %v5497
        %v7043 = vunpack.c.l.b16 %v5498
        %v7044 = vunpack.c.h.b16 %v5498
        %v7045 = vunpack.c.l.b16 %v5499
        %v7046 = vunpack.c.h.b16 %v5499
        %v7047 = vunpack.c.l.b16 %v5500
        %v7048 = vunpack.c.h.b16 %v5500
        %v7049 = vunpack.c.l.b16 %v5501
        %v7050 = vunpack.c.h.b16 %v5501
        %v7051 = vunpack.c.l.b16 %v5502
        %v7052 = vunpack.c.h.b16 %v5502
        %v7053 = vunpack.c.l.b16 %v5503
        %v7054 = vunpack.c.h.b16 %v5503
        %v7055 = vunpack.c.l.b16 %v5504
        %v7056 = vunpack.c.h.b16 %v5504
        %v7057 = vunpack.c.l.b16 %v5505
        %v7058 = vunpack.c.h.b16 %v5505
        %v7059 = vunpack.c.l.b16 %v5506
        %v7060 = vunpack.c.h.b16 %v5506
        %v7061 = vunpack.c.l.b16 %v5507
        %v7062 = vunpack.c.h.b16 %v5507
        %v7063 = vunpack.c.l.b16 %v5508
        %v7064 = vunpack.c.h.b16 %v5508
        %v7065 = vunpack.c.l.b16 %v5509
        %v7066 = vunpack.c.h.b16 %v5509
        %v7067 = vunpack.c.l.b16 %v5510
        %v7068 = vunpack.c.h.b16 %v5510
        %v7069 = vunpack.c.l.b16 %v5511
        %v7070 = vunpack.c.h.b16 %v5511
        %v7071 = vunpack.c.l.b16 %v5512
        %v7072 = vunpack.c.h.b16 %v5512
        %v7073 = vunpack.c.l.b16 %v5513
        %v7074 = vunpack.c.h.b16 %v5513
        %v7075 = vunpack.c.l.b16 %v5514
        %v7076 = vunpack.c.h.b16 %v5514
        %v7077 = vunpack.c.l.b16 %v5515
        %v7078 = vunpack.c.h.b16 %v5515
        %v7079 = vunpack.c.l.b16 %v5516
        %v7080 = vunpack.c.h.b16 %v5516
        %v7081 = vunpack.c.l.b16 %v5517
        %v7082 = vunpack.c.h.b16 %v5517
        %v7083 = vunpack.c.l.b16 %v5518
        %v7084 = vunpack.c.h.b16 %v5518
        %v7085 = vunpack.c.l.b16 %v5519
        %v7086 = vunpack.c.h.b16 %v5519
        %v7087 = vunpack.c.l.b16 %v5520
        %v7088 = vunpack.c.h.b16 %v5520
        %v7089 = vunpack.c.l.b16 %v5521
        %v7090 = vunpack.c.h.b16 %v5521
        %v7091 = vunpack.c.l.b16 %v5522
        %v7092 = vunpack.c.h.b16 %v5522
        %v7093 = vunpack.c.l.b16 %v5523
        %v7094 = vunpack.c.h.b16 %v5523
        %v7095 = vunpack.c.l.b16 %v5524
        %v7096 = vunpack.c.h.b16 %v5524
        %v7097 = vunpack.c.l.b16 %v5525
        %v7098 = vunpack.c.h.b16 %v5525
        %v7099 = vunpack.c.l.b16 %v5526
        %v7100 = vunpack.c.h.b16 %v5526
        %v7101 = vunpack.c.l.b16 %v5527
        %v7102 = vunpack.c.h.b16 %v5527
        %v7103 = vunpack.c.l.b16 %v5528
        %v7104 = vunpack.c.h.b16 %v5528
        %v7105 = vunpack.c.l.b16 %v5529
        %v7106 = vunpack.c.h.b16 %v5529
        %v7107 = vunpack.c.l.b16 %v5530
        %v7108 = vunpack.c.h.b16 %v5530
        %v7109 = vunpack.c.l.b16 %v5531
        %v7110 = vunpack.c.h.b16 %v5531
        %v7111 = vunpack.c.l.b16 %v5532
        %v7112 = vunpack.c.h.b16 %v5532
        %v7113 = vunpack.c.l.b16 %v5533
        %v7114 = vunpack.c.h.b16 %v5533
        %v7115 = vunpack.c.l.b16 %v5534
        %v7116 = vunpack.c.h.b16 %v5534
        %v7117 = vunpack.c.l.b16 %v5535
        %v7118 = vunpack.c.h.b16 %v5535
        %v7119 = vunpack.c.l.b16 %v5536
        %v7120 = vunpack.c.h.b16 %v5536
        %v7121 = vunpack.c.l.b16 %v5537
        %v7122 = vunpack.c.h.b16 %v5537
        %v7123 = vunpack.c.l.b16 %v5538
        %v7124 = vunpack.c.h.b16 %v5538
        %v7125 = vunpack.c.l.b16 %v5539
        %v7126 = vunpack.c.h.b16 %v5539
        %v7127 = vunpack.c.l.b16 %v5540
        %v7128 = vunpack.c.h.b16 %v5540
        %v7129 = vunpack.c.l.b16 %v5541
        %v7130 = vunpack.c.h.b16 %v5541
        %v7131 = vunpack.c.l.b16 %v5542
        %v7132 = vunpack.c.h.b16 %v5542
        %v7133 = vunpack.c.l.b16 %v5543
        %v7134 = vunpack.c.h.b16 %v5543
        %v7135 = vunpack.c.l.b16 %v5544
        %v7136 = vunpack.c.h.b16 %v5544
        %v7137 = vunpack.c.l.b16 %v5545
        %v7138 = vunpack.c.h.b16 %v5545
        %v7139 = vunpack.c.l.b16 %v5546
        %v7140 = vunpack.c.h.b16 %v5546
        %v7141 = vunpack.c.l.b16 %v5547
        %v7142 = vunpack.c.h.b16 %v5547
        %v7143 = vunpack.c.l.b16 %v5548
        %v7144 = vunpack.c.h.b16 %v5548
        %v7145 = vunpack.c.l.b16 %v5549
        %v7146 = vunpack.c.h.b16 %v5549
        %v7147 = vunpack.c.l.b16 %v5550
        %v7148 = vunpack.c.h.b16 %v5550
        %v7149 = vunpack.c.l.b16 %v5551
        %v7150 = vunpack.c.h.b16 %v5551
        %v7151 = vunpack.c.l.b16 %v5552
        %v7152 = vunpack.c.h.b16 %v5552
        %v7153 = vunpack.c.l.b16 %v5553
        %v7154 = vunpack.c.h.b16 %v5553
        %v7155 = vunpack.c.l.b16 %v5554
        %v7156 = vunpack.c.h.b16 %v5554
        %v7157 = vunpack.c.l.b16 %v5555
        %v7158 = vunpack.c.h.b16 %v5555
        %v7159 = vunpack.c.l.b16 %v5556
        %v7160 = vunpack.c.h.b16 %v5556
        %v7161 = vunpack.c.l.b16 %v5557
        %v7162 = vunpack.c.h.b16 %v5557
        %v7163 = vunpack.c.l.b16 %v5558
        %v7164 = vunpack.c.h.b16 %v5558
        %v7165 = vunpack.c.l.b16 %v5559
        %v7166 = vunpack.c.h.b16 %v5559
        %v7167 = vunpack.c.l.b16 %v5560
        %v7168 = vunpack.c.h.b16 %v5560
        %v7169 = vunpack.c.l.b16 %v5561
        %v7170 = vunpack.c.h.b16 %v5561
        %v7171 = vunpack.c.l.b16 %v5562
        %v7172 = vunpack.c.h.b16 %v5562
        %v7173 = vunpack.c.l.b16 %v5563
        %v7174 = vunpack.c.h.b16 %v5563
        %v7175 = vunpack.c.l.b16 %v5564
        %v7176 = vunpack.c.h.b16 %v5564
        %v7177 = vunpack.c.l.b16 %v5565
        %v7178 = vunpack.c.h.b16 %v5565
        %v7179 = vunpack.c.l.b16 %v5566
        %v7180 = vunpack.c.h.b16 %v5566
        %v7181 = vunpack.c.l.b16 %v5567
        %v7182 = vunpack.c.h.b16 %v5567
        %v7183 = vunpack.c.l.b16 %v5568
        %v7184 = vunpack.c.h.b16 %v5568
        %v7185 = vunpack.c.l.b16 %v5569
        %v7186 = vunpack.c.h.b16 %v5569
        %v7187 = vunpack.c.l.b16 %v5570
        %v7188 = vunpack.c.h.b16 %v5570
        %v7189 = vunpack.c.l.b16 %v5571
        %v7190 = vunpack.c.h.b16 %v5571
        %v7191 = vunpack.c.l.b16 %v5572
        %v7192 = vunpack.c.h.b16 %v5572
        %v7193 = vunpack.c.l.b16 %v5573
        %v7194 = vunpack.c.h.b16 %v5573
        %v7195 = vunpack.c.l.b16 %v5574
        %v7196 = vunpack.c.h.b16 %v5574
        %v7197 = vunpack.c.l.b16 %v5575
        %v7198 = vunpack.c.h.b16 %v5575
        %v7199 = vunpack.c.l.b16 %v5576
        %v7200 = vunpack.c.h.b16 %v5576
        %v7201 = vunpack.c.l.b16 %v5577
        %v7202 = vunpack.c.h.b16 %v5577
        %v7203 = vunpack.c.l.b16 %v5578
        %v7204 = vunpack.c.h.b16 %v5578
        %v7205 = vunpack.c.l.b16 %v5579
        %v7206 = vunpack.c.h.b16 %v5579
        %v7207 = vunpack.c.l.b16 %v5580
        %v7208 = vunpack.c.h.b16 %v5580
        %v7209 = vunpack.c.l.b16 %v5581
        %v7210 = vunpack.c.h.b16 %v5581
        %v7211 = vunpack.c.l.b16 %v5582
        %v7212 = vunpack.c.h.b16 %v5582
        %v7213 = vunpack.c.l.b16 %v5583
        %v7214 = vunpack.c.h.b16 %v5583
        %v7215 = vunpack.c.l.b16 %v5584
        %v7216 = vunpack.c.h.b16 %v5584
        %v7217 = vunpack.c.l.b16 %v5585
        %v7218 = vunpack.c.h.b16 %v5585
        %v7219 = vunpack.c.l.b16 %v5586
        %v7220 = vunpack.c.h.b16 %v5586
        %v7221 = vunpack.c.l.b16 %v5587
        %v7222 = vunpack.c.h.b16 %v5587
        %v7223 = vunpack.c.l.b16 %v5588
        %v7224 = vunpack.c.h.b16 %v5588
        %v7225 = vunpack.c.l.b16 %v5589
        %v7226 = vunpack.c.h.b16 %v5589
        %v7227 = vunpack.c.l.b16 %v5590
        %v7228 = vunpack.c.h.b16 %v5590
        %v7229 = vunpack.c.l.b16 %v5591
        %v7230 = vunpack.c.h.b16 %v5591
        %v7231 = vunpack.c.l.b16 %v5592
        %v7232 = vunpack.c.h.b16 %v5592
        %v7233 = vunpack.c.l.b16 %v5593
        %v7234 = vunpack.c.h.b16 %v5593
        %v7235 = vunpack.c.l.b16 %v5594
        %v7236 = vunpack.c.h.b16 %v5594
        %v7237 = vunpack.c.l.b16 %v5595
        %v7238 = vunpack.c.h.b16 %v5595
        %v7239 = vunpack.c.l.b16 %v5596
        %v7240 = vunpack.c.h.b16 %v5596
        %v7241 = vunpack.c.l.b16 %v5597
        %v7242 = vunpack.c.h.b16 %v5597
        %v7243 = vunpack.c.l.b16 %v5598
        %v7244 = vunpack.c.h.b16 %v5598
        %v7245 = vunpack.c.l.b16 %v5599
        %v7246 = vunpack.c.h.b16 %v5599
        %v7247 = vunpack.c.l.b16 %v5600
        %v7248 = vunpack.c.h.b16 %v5600
        %v7249 = vunpack.c.l.b16 %v5601
        %v7250 = vunpack.c.h.b16 %v5601
        %v7251 = vunpack.c.l.b16 %v5602
        %v7252 = vunpack.c.h.b16 %v5602
        %v7253 = vunpack.c.l.b16 %v5603
        %v7254 = vunpack.c.h.b16 %v5603
        %v7255 = vunpack.c.l.b16 %v5604
        %v7256 = vunpack.c.h.b16 %v5604
        %v7257 = vunpack.c.l.b16 %v5605
        %v7258 = vunpack.c.h.b16 %v5605
        %v7259 = vunpack.c.l.b16 %v5606
        %v7260 = vunpack.c.h.b16 %v5606
        %v7261 = vunpack.c.l.b16 %v5607
        %v7262 = vunpack.c.h.b16 %v5607
        %v7263 = vunpack.c.l.b16 %v5608
        %v7264 = vunpack.c.h.b16 %v5608
        %v7265 = vunpack.c.l.b16 %v5609
        %v7266 = vunpack.c.h.b16 %v5609
        %v7267 = vunpack.c.l.b16 %v5610
        %v7268 = vunpack.c.h.b16 %v5610
        %v7269 = vunpack.c.l.b16 %v5611
        %v7270 = vunpack.c.h.b16 %v5611
        %v7271 = vunpack.c.l.b16 %v5612
        %v7272 = vunpack.c.h.b16 %v5612
        %v7273 = vunpack.c.l.b16 %v5613
        %v7274 = vunpack.c.h.b16 %v5613
        %v7275 = vunpack.c.l.b16 %v5614
        %v7276 = vunpack.c.h.b16 %v5614
        %v7277 = vunpack.c.l.b16 %v5615
        %v7278 = vunpack.c.h.b16 %v5615
        %v7279 = vunpack.c.l.b16 %v5616
        %v7280 = vunpack.c.h.b16 %v5616
        %v7281 = vunpack.c.l.b16 %v5617
        %v7282 = vunpack.c.h.b16 %v5617
        %v7283 = vunpack.c.l.b16 %v5618
        %v7284 = vunpack.c.h.b16 %v5618
        %v7285 = vunpack.c.l.b16 %v5619
        %v7286 = vunpack.c.h.b16 %v5619
        %v7287 = vunpack.c.l.b16 %v5620
        %v7288 = vunpack.c.h.b16 %v5620
        %v7289 = vunpack.c.l.b16 %v5621
        %v7290 = vunpack.c.h.b16 %v5621
        %v7291 = vunpack.c.l.b16 %v5622
        %v7292 = vunpack.c.h.b16 %v5622
        %v7293 = vunpack.c.l.b16 %v5623
        %v7294 = vunpack.c.h.b16 %v5623
        %v7295 = vunpack.c.l.b16 %v5624
        %v7296 = vunpack.c.h.b16 %v5624
        %v7297 = vunpack.c.l.b16 %v5625
        %v7298 = vunpack.c.h.b16 %v5625
        %v7299 = vunpack.c.l.b16 %v5626
        %v7300 = vunpack.c.h.b16 %v5626
        %v7301 = vunpack.c.l.b16 %v5627
        %v7302 = vunpack.c.h.b16 %v5627
        %v7303 = vunpack.c.l.b16 %v5628
        %v7304 = vunpack.c.h.b16 %v5628
        %v7305 = vunpack.c.l.b16 %v5629
        %v7306 = vunpack.c.h.b16 %v5629
        %v7307 = vunpack.c.l.b16 %v5630
        %v7308 = vunpack.c.h.b16 %v5630
        %v7309 = vunpack.c.l.b16 %v5631
        %v7310 = vunpack.c.h.b16 %v5631
        %v7311 = vunpack.c.l.b16 %v5632
        %v7312 = vunpack.c.h.b16 %v5632
        %v7313 = vunpack.c.l.b16 %v5633
        %v7314 = vunpack.c.h.b16 %v5633
        %v7315 = vunpack.c.l.b16 %v5634
        %v7316 = vunpack.c.h.b16 %v5634
        %v7317 = vunpack.c.l.b16 %v5635
        %v7318 = vunpack.c.h.b16 %v5635
        %v7319 = vunpack.c.l.b16 %v5636
        %v7320 = vunpack.c.h.b16 %v5636
        %v7321 = vunpack.c.l.b16 %v5637
        %v7322 = vunpack.c.h.b16 %v5637
        %v7323 = vunpack.c.l.b16 %v5638
        %v7324 = vunpack.c.h.b16 %v5638
        %v7325 = vunpack.c.l.b16 %v5639
        %v7326 = vunpack.c.h.b16 %v5639
        %v7327 = vunpack.c.l.b16 %v5640
        %v7328 = vunpack.c.h.b16 %v5640
        %v7329 = vunpack.c.l.b16 %v5641
        %v7330 = vunpack.c.h.b16 %v5641
        %v7331 = vunpack.c.l.b16 %v5642
        %v7332 = vunpack.c.h.b16 %v5642
        %v7333 = vunpack.c.l.b16 %v5643
        %v7334 = vunpack.c.h.b16 %v5643
        %v7335 = vunpack.c.l.b16 %v5644
        %v7336 = vunpack.c.h.b16 %v5644
        %v7337 = vunpack.c.l.b16 %v5645
        %v7338 = vunpack.c.h.b16 %v5645
        %v7339 = vunpack.c.l.b16 %v5646
        %v7340 = vunpack.c.h.b16 %v5646
        %v7341 = vunpack.c.l.b16 %v5647
        %v7342 = vunpack.c.h.b16 %v5647
        %v7343 = vunpack.c.l.b16 %v5648
        %v7344 = vunpack.c.h.b16 %v5648
        %v7345 = vunpack.c.l.b16 %v5649
        %v7346 = vunpack.c.h.b16 %v5649
        %v7347 = vunpack.c.l.b16 %v5650
        %v7348 = vunpack.c.h.b16 %v5650
        %v7349 = vunpack.c.l.b16 %v5651
        %v7350 = vunpack.c.h.b16 %v5651
        %v7351 = vunpack.c.l.b16 %v5652
        %v7352 = vunpack.c.h.b16 %v5652
        %v7353 = vunpack.c.l.b16 %v5653
        %v7354 = vunpack.c.h.b16 %v5653
        %v7355 = vunpack.c.l.b16 %v5654
        %v7356 = vunpack.c.h.b16 %v5654
        %v7357 = vunpack.c.l.b16 %v5655
        %v7358 = vunpack.c.h.b16 %v5655
        %v7359 = vunpack.c.l.b16 %v5656
        %v7360 = vunpack.c.h.b16 %v5656
        %v7361 = vunpack.c.l.b16 %v5657
        %v7362 = vunpack.c.h.b16 %v5657
        %v7363 = vunpack.c.l.b16 %v5658
        %v7364 = vunpack.c.h.b16 %v5658
        %v7365 = vunpack.c.l.b16 %v5659
        %v7366 = vunpack.c.h.b16 %v5659
        %v7367 = vunpack.c.l.b16 %v5660
        %v7368 = vunpack.c.h.b16 %v5660
        %v7369 = vunpack.c.l.b16 %v5661
        %v7370 = vunpack.c.h.b16 %v5661
        %v7371 = vunpack.c.l.b16 %v5662
        %v7372 = vunpack.c.h.b16 %v5662
        %v7373 = vunpack.c.l.b16 %v5663
        %v7374 = vunpack.c.h.b16 %v5663
        %v7375 = vunpack.c.l.b16 %v5664
        %v7376 = vunpack.c.h.b16 %v5664
        %v7377 = vunpack.c.l.b16 %v5665
        %v7378 = vunpack.c.h.b16 %v5665
        %v7379 = vunpack.c.l.b16 %v5666
        %v7380 = vunpack.c.h.b16 %v5666
        %v7381 = vunpack.c.l.b16 %v5667
        %v7382 = vunpack.c.h.b16 %v5667
        %v7383 = vunpack.c.l.b16 %v5668
        %v7384 = vunpack.c.h.b16 %v5668
        %v7385 = vunpack.c.l.b16 %v5669
        %v7386 = vunpack.c.h.b16 %v5669
        %v7387 = vunpack.c.l.b16 %v5670
        %v7388 = vunpack.c.h.b16 %v5670
        %v7389 = vunpack.c.l.b16 %v5671
        %v7390 = vunpack.c.h.b16 %v5671
        %v7391 = vunpack.c.l.b16 %v5672
        %v7392 = vunpack.c.h.b16 %v5672
        %v7393 = vunpack.c.l.b16 %v5673
        %v7394 = vunpack.c.h.b16 %v5673
        %v7395 = vunpack.c.l.b16 %v5674
        %v7396 = vunpack.c.h.b16 %v5674
        %v7397 = vunpack.c.l.b16 %v5675
        %v7398 = vunpack.c.h.b16 %v5675
        %v7399 = vunpack.c.l.b16 %v5676
        %v7400 = vunpack.c.h.b16 %v5676
        %v7401 = vunpack.c.l.b16 %v5677
        %v7402 = vunpack.c.h.b16 %v5677
        %v7403 = vunpack.c.l.b16 %v5678
        %v7404 = vunpack.c.h.b16 %v5678
        %v7405 = vunpack.c.l.b16 %v5679
        %v7406 = vunpack.c.h.b16 %v5679
        %v7407 = vunpack.c.l.b16 %v5680
        %v7408 = vunpack.c.h.b16 %v5680
        %v7409 = vunpack.c.l.b16 %v5681
        %v7410 = vunpack.c.h.b16 %v5681
        %v7411 = vunpack.c.l.b16 %v5682
        %v7412 = vunpack.c.h.b16 %v5682
        %v7413 = vunpack.c.l.b16 %v5683
        %v7414 = vunpack.c.h.b16 %v5683
        %v7415 = vunpack.c.l.b16 %v5684
        %v7416 = vunpack.c.h.b16 %v5684
        %v7417 = vunpack.c.l.b16 %v5685
        %v7418 = vunpack.c.h.b16 %v5685
        %v7419 = vunpack.c.l.b16 %v5686
        %v7420 = vunpack.c.h.b16 %v5686
        %v7421 = vunpack.c.l.b16 %v5687
        %v7422 = vunpack.c.h.b16 %v5687
        %v7423 = vunpack.c.l.b16 %v5688
        %v7424 = vunpack.c.h.b16 %v5688
        %v7425 = vunpack.c.l.b16 %v5689
        %v7426 = vunpack.c.h.b16 %v5689
        %v7427 = vunpack.c.l.b16 %v5690
        %v7428 = vunpack.c.h.b16 %v5690
        %v7429 = vunpack.c.l.b16 %v5691
        %v7430 = vunpack.c.h.b16 %v5691
        %v7431 = vunpack.c.l.b16 %v5692
        %v7432 = vunpack.c.h.b16 %v5692
        %v7433 = vunpack.c.l.b16 %v5693
        %v7434 = vunpack.c.h.b16 %v5693
        %v7435 = vunpack.c.l.b16 %v5694
        %v7436 = vunpack.c.h.b16 %v5694
        %v7437 = vunpack.c.l.b16 %v5695
        %v7438 = vunpack.c.h.b16 %v5695
        %v7439 = vunpack.c.l.b16 %v5696
        %v7440 = vunpack.c.h.b16 %v5696
        %v7441 = vunpack.c.l.b16 %v5697
        %v7442 = vunpack.c.h.b16 %v5697
        %v7443 = vunpack.c.l.b16 %v5698
        %v7444 = vunpack.c.h.b16 %v5698
        %v7445 = vunpack.c.l.b16 %v5699
        %v7446 = vunpack.c.h.b16 %v5699
        %v7447 = vunpack.c.l.b16 %v5700
        %v7448 = vunpack.c.h.b16 %v5700
        %v7449 = vunpack.c.l.b16 %v5701
        %v7450 = vunpack.c.h.b16 %v5701
        %v7451 = vunpack.c.l.b16 %v5702
        %v7452 = vunpack.c.h.b16 %v5702
        %v7453 = vunpack.c.l.b16 %v5703
        %v7454 = vunpack.c.h.b16 %v5703
        %v7455 = vunpack.c.l.b16 %v5704
        %v7456 = vunpack.c.h.b16 %v5704
        %v7457 = vunpack.c.l.b16 %v5705
        %v7458 = vunpack.c.h.b16 %v5705
        %v7459 = vunpack.c.l.b16 %v5706
        %v7460 = vunpack.c.h.b16 %v5706
        %v7461 = vunpack.c.l.b16 %v5707
        %v7462 = vunpack.c.h.b16 %v5707
        %v7463 = vunpack.c.l.b16 %v5708
        %v7464 = vunpack.c.h.b16 %v5708
        %v7465 = vunpack.c.l.b16 %v5709
        %v7466 = vunpack.c.h.b16 %v5709
        %v7467 = vunpack.c.l.b16 %v5710
        %v7468 = vunpack.c.h.b16 %v5710
        %v7469 = vunpack.c.l.b16 %v5711
        %v7470 = vunpack.c.h.b16 %v5711
        %v7471 = vunpack.c.l.b16 %v5712
        %v7472 = vunpack.c.h.b16 %v5712
        %v7473 = vunpack.c.l.b16 %v5713
        %v7474 = vunpack.c.h.b16 %v5713
        %v7475 = vunpack.c.l.b16 %v5714
        %v7476 = vunpack.c.h.b16 %v5714
        %v7477 = vunpack.c.l.b16 %v5715
        %v7478 = vunpack.c.h.b16 %v5715
        %v7479 = vunpack.c.l.b16 %v5716
        %v7480 = vunpack.c.h.b16 %v5716
        %v7481 = vunpack.c.l.b16 %v5717
        %v7482 = vunpack.c.h.b16 %v5717
        %v7483 = vunpack.c.l.b16 %v5718
        %v7484 = vunpack.c.h.b16 %v5718
        %v7485 = vunpack.c.l.b16 %v5719
        %v7486 = vunpack.c.h.b16 %v5719
        %v7487 = vunpack.c.l.b16 %v5720
        %v7488 = vunpack.c.h.b16 %v5720
        %v7489 = vunpack.c.l.b16 %v5721
        %v7490 = vunpack.c.h.b16 %v5721
        %v7491 = vunpack.c.l.b16 %v5722
        %v7492 = vunpack.c.h.b16 %v5722
        %v7493 = vunpack.c.l.b16 %v5723
        %v7494 = vunpack.c.h.b16 %v5723
        %v7495 = vunpack.c.l.b16 %v5724
        %v7496 = vunpack.c.h.b16 %v5724
        %v7497 = vunpack.c.l.b16 %v5725
        %v7498 = vunpack.c.h.b16 %v5725
        %v7499 = vunpack.c.l.b16 %v5726
        %v7500 = vunpack.c.h.b16 %v5726
        %v7501 = vunpack.c.l.b16 %v5727
        %v7502 = vunpack.c.h.b16 %v5727
        %v7503 = vunpack.c.l.b16 %v5728
        %v7504 = vunpack.c.h.b16 %v5728
        %v7505 = vunpack.c.l.b16 %v5729
        %v7506 = vunpack.c.h.b16 %v5729
        %v7507 = vunpack.c.l.b16 %v5730
        %v7508 = vunpack.c.h.b16 %v5730
        %v7509 = vunpack.c.l.b16 %v5731
        %v7510 = vunpack.c.h.b16 %v5731
        %v7511 = vunpack.c.l.b16 %v5732
        %v7512 = vunpack.c.h.b16 %v5732
        %v7513 = vunpack.c.l.b16 %v5733
        %v7514 = vunpack.c.h.b16 %v5733
        %v7515 = vunpack.c.l.b16 %v5734
        %v7516 = vunpack.c.h.b16 %v5734
        %v7517 = vunpack.c.l.b16 %v5735
        %v7518 = vunpack.c.h.b16 %v5735
        %v7519 = vunpack.c.l.b16 %v5736
        %v7520 = vunpack.c.h.b16 %v5736
        %v7521 = vunpack.c.l.b16 %v5737
        %v7522 = vunpack.c.h.b16 %v5737
        %v7523 = vunpack.c.l.b16 %v5738
        %v7524 = vunpack.c.h.b16 %v5738
        %v7525 = vunpack.c.l.b16 %v5739
        %v7526 = vunpack.c.h.b16 %v5739
        %v7527 = vunpack.c.l.b16 %v5740
        %v7528 = vunpack.c.h.b16 %v5740
        %v7529 = vunpack.c.l.b16 %v5741
        %v7530 = vunpack.c.h.b16 %v5741
        %v7531 = vunpack.c.l.b16 %v5742
        %v7532 = vunpack.c.h.b16 %v5742
        %v7533 = vunpack.c.l.b16 %v5743
        %v7534 = vunpack.c.h.b16 %v5743
        %v7535 = vunpack.c.l.b16 %v5744
        %v7536 = vunpack.c.h.b16 %v5744
        %v7537 = vunpack.c.l.b16 %v5745
        %v7538 = vunpack.c.h.b16 %v5745
        %v7539 = vunpack.c.l.b16 %v5746
        %v7540 = vunpack.c.h.b16 %v5746
        %v7541 = vunpack.c.l.b16 %v5747
        %v7542 = vunpack.c.h.b16 %v5747
        %v7543 = vunpack.c.l.b16 %v5748
        %v7544 = vunpack.c.h.b16 %v5748
        %v7545 = vunpack.c.l.b16 %v5749
        %v7546 = vunpack.c.h.b16 %v5749
        %v7547 = vunpack.c.l.b16 %v5750
        %v7548 = vunpack.c.h.b16 %v5750
        %v7549 = vunpack.c.l.b16 %v5751
        %v7550 = vunpack.c.h.b16 %v5751
        %v7551 = vunpack.c.l.b16 %v5752
        %v7552 = vunpack.c.h.b16 %v5752
        %v7553 = vunpack.c.l.b16 %v5753
        %v7554 = vunpack.c.h.b16 %v5753
        %v7555 = vunpack.c.l.b16 %v5754
        %v7556 = vunpack.c.h.b16 %v5754
        %v7557 = vunpack.c.l.b16 %v5755
        %v7558 = vunpack.c.h.b16 %v5755
        %v7559 = vunpack.c.l.b16 %v5756
        %v7560 = vunpack.c.h.b16 %v5756
        %v7561 = vunpack.c.l.b16 %v5757
        %v7562 = vunpack.c.h.b16 %v5757
        %v7563 = vunpack.c.l.b16 %v5758
        %v7564 = vunpack.c.h.b16 %v5758
        %v7565 = vunpack.c.l.b16 %v5759
        %v7566 = vunpack.c.h.b16 %v5759
        %v7567 = vunpack.c.l.b16 %v5760
        %v7568 = vunpack.c.h.b16 %v5760
        %v7569 = vunpack.c.l.b16 %v5761
        %v7570 = vunpack.c.h.b16 %v5761
        %v7571 = vunpack.c.l.b16 %v5762
        %v7572 = vunpack.c.h.b16 %v5762
        %v7573 = vunpack.c.l.b16 %v5763
        %v7574 = vunpack.c.h.b16 %v5763
        %v7575 = vunpack.c.l.b16 %v5764
        %v7576 = vunpack.c.h.b16 %v5764
        %v7577 = vunpack.c.l.b16 %v5765
        %v7578 = vunpack.c.h.b16 %v5765
        %v7579 = vunpack.c.l.b16 %v5766
        %v7580 = vunpack.c.h.b16 %v5766
        %v7581 = vunpack.c.l.b16 %v5767
        %v7582 = vunpack.c.h.b16 %v5767
        %v7583 = vunpack.c.l.b16 %v5768
        %v7584 = vunpack.c.h.b16 %v5768
        %v7585 = vunpack.c.l.b16 %v5769
        %v7586 = vunpack.c.h.b16 %v5769
        %v7587 = vunpack.c.l.b16 %v5770
        %v7588 = vunpack.c.h.b16 %v5770
        %v7589 = vunpack.c.l.b16 %v5771
        %v7590 = vunpack.c.h.b16 %v5771
        %v7591 = vunpack.c.l.b16 %v5772
        %v7592 = vunpack.c.h.b16 %v5772
        %v7593 = vunpack.c.l.b16 %v5773
        %v7594 = vunpack.c.h.b16 %v5773
        %v7595 = vunpack.c.l.b16 %v5774
        %v7596 = vunpack.c.h.b16 %v5774
        %v7597 = vunpack.c.l.b16 %v5775
        %v7598 = vunpack.c.h.b16 %v5775
        %v7599 = vunpack.c.l.b16 %v5776
        %v7600 = vunpack.c.h.b16 %v5776
        %v7601 = vunpack.c.l.b16 %v5777
        %v7602 = vunpack.c.h.b16 %v5777
        %v7603 = vunpack.c.l.b16 %v5778
        %v7604 = vunpack.c.h.b16 %v5778
        %v7605 = vunpack.c.l.b16 %v5779
        %v7606 = vunpack.c.h.b16 %v5779
        %v7607 = vunpack.c.l.b16 %v5780
        %v7608 = vunpack.c.h.b16 %v5780
        %v7609 = vunpack.c.l.b16 %v5781
        %v7610 = vunpack.c.h.b16 %v5781
        %v7611 = vunpack.c.l.b16 %v5782
        %v7612 = vunpack.c.h.b16 %v5782
        %v7613 = vunpack.c.l.b16 %v5783
        %v7614 = vunpack.c.h.b16 %v5783
        %v7615 = vunpack.c.l.b16 %v5784
        %v7616 = vunpack.c.h.b16 %v5784
        %v7617 = vunpack.c.l.b16 %v5785
        %v7618 = vunpack.c.h.b16 %v5785
        %v7619 = vunpack.c.l.b16 %v5786
        %v7620 = vunpack.c.h.b16 %v5786
        %v7621 = vunpack.c.l.b16 %v5787
        %v7622 = vunpack.c.h.b16 %v5787
        %v7623 = vunpack.c.l.b16 %v5788
        %v7624 = vunpack.c.h.b16 %v5788
        %v7625 = vunpack.c.l.b16 %v5789
        %v7626 = vunpack.c.h.b16 %v5789
        %v7627 = vunpack.c.l.b16 %v5790
        %v7628 = vunpack.c.h.b16 %v5790
        %v7629 = vunpack.c.l.b16 %v5791
        %v7630 = vunpack.c.h.b16 %v5791
        %v7631 = vunpack.c.l.b16 %v5792
        %v7632 = vunpack.c.h.b16 %v5792
        %v7633 = vunpack.c.l.b16 %v5793
        %v7634 = vunpack.c.h.b16 %v5793
        %v7635 = vunpack.c.l.b16 %v5794
        %v7636 = vunpack.c.h.b16 %v5794
        %v7637 = vunpack.c.l.b16 %v5795
        %v7638 = vunpack.c.h.b16 %v5795
        %v7639 = vunpack.c.l.b16 %v5796
        %v7640 = vunpack.c.h.b16 %v5796
        %v7641 = vunpack.c.l.b16 %v5797
        %v7642 = vunpack.c.h.b16 %v5797
        %v7643 = vunpack.c.l.b16 %v5798
        %v7644 = vunpack.c.h.b16 %v5798
        %v7645 = vunpack.c.l.b16 %v5799
        %v7646 = vunpack.c.h.b16 %v5799
        %v7647 = vunpack.c.l.b16 %v5800
        %v7648 = vunpack.c.h.b16 %v5800
        %v7649 = vunpack.c.l.b16 %v5801
        %v7650 = vunpack.c.h.b16 %v5801
        %v7651 = vunpack.c.l.b16 %v5802
        %v7652 = vunpack.c.h.b16 %v5802
        %v7653 = vunpack.c.l.b16 %v5803
        %v7654 = vunpack.c.h.b16 %v5803
        %v7655 = vunpack.c.l.b16 %v5804
        %v7656 = vunpack.c.h.b16 %v5804
        %v7657 = vunpack.c.l.b16 %v5805
        %v7658 = vunpack.c.h.b16 %v5805
        %v7659 = vunpack.c.l.b16 %v5806
        %v7660 = vunpack.c.h.b16 %v5806
        %v7661 = vunpack.c.l.b16 %v5807
        %v7662 = vunpack.c.h.b16 %v5807
        %v7663 = vunpack.c.l.b16 %v5808
        %v7664 = vunpack.c.h.b16 %v5808
        %v7665 = vunpack.c.l.b16 %v5809
        %v7666 = vunpack.c.h.b16 %v5809
        %v7667 = vunpack.c.l.b16 %v5810
        %v7668 = vunpack.c.h.b16 %v5810
        %v7669 = vunpack.c.l.b16 %v5811
        %v7670 = vunpack.c.h.b16 %v5811
        %v7671 = vunpack.c.l.b16 %v5812
        %v7672 = vunpack.c.h.b16 %v5812
        %v7673 = vunpack.c.l.b16 %v5813
        %v7674 = vunpack.c.h.b16 %v5813
        %v7675 = vunpack.c.l.b16 %v5814
        %v7676 = vunpack.c.h.b16 %v5814
        %v7677 = vunpack.c.l.b16 %v5815
        %v7678 = vunpack.c.h.b16 %v5815
        %v7679 = vunpack.c.l.b16 %v5816
        %v7680 = vunpack.c.h.b16 %v5816
        %v7681 = vunpack.c.l.b16 %v5817
        %v7682 = vunpack.c.h.b16 %v5817
        %v7683 = vunpack.c.l.b16 %v5818
        %v7684 = vunpack.c.h.b16 %v5818
        %v7685 = vunpack.c.l.b16 %v5819
        %v7686 = vunpack.c.h.b16 %v5819
        %v7687 = vunpack.c.l.b16 %v5820
        %v7688 = vunpack.c.h.b16 %v5820
        %v7689 = vunpack.c.l.b16 %v5821
        %v7690 = vunpack.c.h.b16 %v5821
        %v7691 = vunpack.c.l.b16 %v5822
        %v7692 = vunpack.c.h.b16 %v5822
        %v7693 = vunpack.c.l.b16 %v5823
        %v7694 = vunpack.c.h.b16 %v5823
        %v7695 = vunpack.c.l.b16 %v5824
        %v7696 = vunpack.c.h.b16 %v5824
        %v7697 = vunpack.c.l.b16 %v5825
        %v7698 = vunpack.c.h.b16 %v5825
        %v7699 = vunpack.c.l.b16 %v5826
        %v7700 = vunpack.c.h.b16 %v5826
        %v7701 = vunpack.c.l.b16 %v5827
        %v7702 = vunpack.c.h.b16 %v5827
        %v7703 = vunpack.c.l.b16 %v5828
        %v7704 = vunpack.c.h.b16 %v5828
        %v7705 = vunpack.c.l.b16 %v5829
        %v7706 = vunpack.c.h.b16 %v5829
        %v7707 = vunpack.c.l.b16 %v5830
        %v7708 = vunpack.c.h.b16 %v5830
        %v7709 = vunpack.c.l.b16 %v5831
        %v7710 = vunpack.c.h.b16 %v5831
        %v7711 = vunpack.c.l.b16 %v5832
        %v7712 = vunpack.c.h.b16 %v5832
        %v7713 = vunpack.c.l.b16 %v5833
        %v7714 = vunpack.c.h.b16 %v5833
        %v7715 = vunpack.c.l.b16 %v5834
        %v7716 = vunpack.c.h.b16 %v5834
        %v7717 = vunpack.c.l.b16 %v5835
        %v7718 = vunpack.c.h.b16 %v5835
        %v7719 = vunpack.c.l.b16 %v5836
        %v7720 = vunpack.c.h.b16 %v5836
        %v7721 = vunpack.c.l.b16 %v5837
        %v7722 = vunpack.c.h.b16 %v5837
        %v7723 = vunpack.c.l.b16 %v5838
        %v7724 = vunpack.c.h.b16 %v5838
        %v7725 = vunpack.c.l.b16 %v5839
        %v7726 = vunpack.c.h.b16 %v5839
        %v7727 = vunpack.c.l.b16 %v5840
        %v7728 = vunpack.c.h.b16 %v5840
        %v7729 = vunpack.c.l.b16 %v5841
        %v7730 = vunpack.c.h.b16 %v5841
        %v7731 = vunpack.c.l.b16 %v5842
        %v7732 = vunpack.c.h.b16 %v5842
        %v7733 = vunpack.c.l.b16 %v5843
        %v7734 = vunpack.c.h.b16 %v5843
        %v7735 = vunpack.c.l.b16 %v5844
        %v7736 = vunpack.c.h.b16 %v5844
        %v7737 = vunpack.c.l.b16 %v5845
        %v7738 = vunpack.c.h.b16 %v5845
        %v7739 = vunpack.c.l.b16 %v5846
        %v7740 = vunpack.c.h.b16 %v5846
        %v7741 = vunpack.c.l.b16 %v5847
        %v7742 = vunpack.c.h.b16 %v5847
        %v7743 = vunpack.c.l.b16 %v5848
        %v7744 = vunpack.c.h.b16 %v5848
        %v7745 = vunpack.c.l.b16 %v5849
        %v7746 = vunpack.c.h.b16 %v5849
        %v7747 = vunpack.c.l.b16 %v5850
        %v7748 = vunpack.c.h.b16 %v5850
        %v7749 = vunpack.c.l.b16 %v5851
        %v7750 = vunpack.c.h.b16 %v5851
        %v7751 = vunpack.c.l.b16 %v5852
        %v7752 = vunpack.c.h.b16 %v5852
        %v7753 = vunpack.c.l.b16 %v5853
        %v7754 = vunpack.c.h.b16 %v5853
        %v7755 = vunpack.c.l.b16 %v5854
        %v7756 = vunpack.c.h.b16 %v5854
        %v7757 = vunpack.c.l.b16 %v5855
        %v7758 = vunpack.c.h.b16 %v5855
        %v7759 = vunpack.c.l.b16 %v5856
        %v7760 = vunpack.c.h.b16 %v5856
        %v7761 = vunpack.c.l.b16 %v5857
        %v7762 = vunpack.c.h.b16 %v5857
        %v7763 = vunpack.c.l.b16 %v5858
        %v7764 = vunpack.c.h.b16 %v5858
        %v7765 = vunpack.c.l.b16 %v5859
        %v7766 = vunpack.c.h.b16 %v5859
        %v7767 = vunpack.c.l.b16 %v5860
        %v7768 = vunpack.c.h.b16 %v5860
        %v7769 = vunpack.c.l.b16 %v5861
        %v7770 = vunpack.c.h.b16 %v5861
        %v7771 = vunpack.c.l.b16 %v5862
        %v7772 = vunpack.c.h.b16 %v5862
        %v7773 = vunpack.c.l.b16 %v5863
        %v7774 = vunpack.c.h.b16 %v5863
        %v7775 = vunpack.c.l.b16 %v5864
        %v7776 = vunpack.c.h.b16 %v5864
        %v7777 = vunpack.c.l.b16 %v5865
        %v7778 = vunpack.c.h.b16 %v5865
        %v7779 = vunpack.c.l.b16 %v5866
        %v7780 = vunpack.c.h.b16 %v5866
        %v7781 = vunpack.c.l.b16 %v5867
        %v7782 = vunpack.c.h.b16 %v5867
        %v7783 = vunpack.c.l.b16 %v5868
        %v7784 = vunpack.c.h.b16 %v5868
        %v7785 = vunpack.c.l.b16 %v5869
        %v7786 = vunpack.c.h.b16 %v5869
        %v7787 = vunpack.c.l.b16 %v5870
        %v7788 = vunpack.c.h.b16 %v5870
        %v7789 = vunpack.c.l.b16 %v5871
        %v7790 = vunpack.c.h.b16 %v5871
        %v7791 = vunpack.c.l.b16 %v5872
        %v7792 = vunpack.c.h.b16 %v5872
        %v7793 = vunpack.c.l.b16 %v5873
        %v7794 = vunpack.c.h.b16 %v5873
        %v7795 = vunpack.c.l.b16 %v5874
        %v7796 = vunpack.c.h.b16 %v5874
        %v7797 = vunpack.c.l.b16 %v5875
        %v7798 = vunpack.c.h.b16 %v5875
        %v7799 = vunpack.c.l.b16 %v5876
        %v7800 = vunpack.c.h.b16 %v5876
        %v7801 = vunpack.c.l.b16 %v5877
        %v7802 = vunpack.c.h.b16 %v5877
        %v7803 = vunpack.c.l.b16 %v5878
        %v7804 = vunpack.c.h.b16 %v5878
        %v7805 = vunpack.c.l.b16 %v5879
        %v7806 = vunpack.c.h.b16 %v5879
        %v7807 = vunpack.c.l.b16 %v5880
        %v7808 = vunpack.c.h.b16 %v5880
        %v7809 = vunpack.c.l.b16 %v5881
        %v7810 = vunpack.c.h.b16 %v5881
        %v7811 = vunpack.c.l.b16 %v5882
        %v7812 = vunpack.c.h.b16 %v5882
        %v7813 = vunpack.c.l.b16 %v5883
        %v7814 = vunpack.c.h.b16 %v5883
        %v7815 = vunpack.c.l.b16 %v5884
        %v7816 = vunpack.c.h.b16 %v5884
        %v7817 = vunpack.c.l.b16 %v5885
        %v7818 = vunpack.c.h.b16 %v5885
        %v7819 = vunpack.c.l.b16 %v5886
        %v7820 = vunpack.c.h.b16 %v5886
        %v7821 = vunpack.c.l.b16 %v5887
        %v7822 = vunpack.c.h.b16 %v5887
        %v7823 = vunpack.c.l.b16 %v5888
        %v7824 = vunpack.c.h.b16 %v5888
        %v7825 = vunpack.c.l.b16 %v5889
        %v7826 = vunpack.c.h.b16 %v5889
        %v7827 = vunpack.c.l.b16 %v5890
        %v7828 = vunpack.c.h.b16 %v5890
        %v7829 = vunpack.c.l.b16 %v5891
        %v7830 = vunpack.c.h.b16 %v5891
        %v7831 = vunpack.c.l.b16 %v5892
        %v7832 = vunpack.c.h.b16 %v5892
        %v7833 = vunpack.c.l.b16 %v5893
        %v7834 = vunpack.c.h.b16 %v5893
        %v7835 = vunpack.c.l.b16 %v5894
        %v7836 = vunpack.c.h.b16 %v5894
        %v7837 = vunpack.c.l.b16 %v5895
        %v7838 = vunpack.c.h.b16 %v5895
        %v7839 = vunpack.c.l.b16 %v5896
        %v7840 = vunpack.c.h.b16 %v5896
        %v7841 = vunpack.c.l.b16 %v5897
        %v7842 = vunpack.c.h.b16 %v5897
        %v7843 = vunpack.c.l.b16 %v5898
        %v7844 = vunpack.c.h.b16 %v5898
        %v7845 = vunpack.c.l.b16 %v5899
        %v7846 = vunpack.c.h.b16 %v5899
        %v7847 = vunpack.c.l.b16 %v5900
        %v7848 = vunpack.c.h.b16 %v5900
        %v7849 = vunpack.c.l.b16 %v5901
        %v7850 = vunpack.c.h.b16 %v5901
        %v7851 = vunpack.c.l.b16 %v5902
        %v7852 = vunpack.c.h.b16 %v5902
        %v7853 = vunpack.c.l.b16 %v5903
        %v7854 = vunpack.c.h.b16 %v5903
        %v7855 = vunpack.c.l.b16 %v5904
        %v7856 = vunpack.c.h.b16 %v5904
        %v7857 = vunpack.c.l.b16 %v5905
        %v7858 = vunpack.c.h.b16 %v5905
        %v7859 = vunpack.c.l.b16 %v5906
        %v7860 = vunpack.c.h.b16 %v5906
        %v7861 = vunpack.c.l.b16 %v5907
        %v7862 = vunpack.c.h.b16 %v5907
        %v7863 = vunpack.c.l.b16 %v5908
        %v7864 = vunpack.c.h.b16 %v5908
        %v7865 = vunpack.c.l.b16 %v5909
        %v7866 = vunpack.c.h.b16 %v5909
        %v7867 = vunpack.c.l.b16 %v5910
        %v7868 = vunpack.c.h.b16 %v5910
        %v7869 = vunpack.c.l.b16 %v5911
        %v7870 = vunpack.c.h.b16 %v5911
        %v7871 = vunpack.c.l.b16 %v5912
        %v7872 = vunpack.c.h.b16 %v5912
        %v7873 = vunpack.c.l.b16 %v5913
        %v7874 = vunpack.c.h.b16 %v5913
        %v7875 = vunpack.c.l.b16 %v5914
        %v7876 = vunpack.c.h.b16 %v5914
        %v7877 = vunpack.c.l.b16 %v5915
        %v7878 = vunpack.c.h.b16 %v5915
        %v7879 = vunpack.c.l.b16 %v5916
        %v7880 = vunpack.c.h.b16 %v5916
        %v7881 = vunpack.c.l.b16 %v5917
        %v7882 = vunpack.c.h.b16 %v5917
        %v7883 = vunpack.c.l.b16 %v5918
        %v7884 = vunpack.c.h.b16 %v5918
        %v7885 = vunpack.c.l.b16 %v5919
        %v7886 = vunpack.c.h.b16 %v5919
        %v7887 = vunpack.c.l.b16 %v5920
        %v7888 = vunpack.c.h.b16 %v5920
        %v7889 = vunpack.c.l.b16 %v5921
        %v7890 = vunpack.c.h.b16 %v5921
        %v7891 = vunpack.c.l.b16 %v5922
        %v7892 = vunpack.c.h.b16 %v5922
        %v7893 = vunpack.c.l.b16 %v5923
        %v7894 = vunpack.c.h.b16 %v5923
        %v7895 = vunpack.c.l.b16 %v5924
        %v7896 = vunpack.c.h.b16 %v5924
        %v7897 = vunpack.c.l.b16 %v5925
        %v7898 = vunpack.c.h.b16 %v5925
        %v7899 = vunpack.c.l.b16 %v5926
        %v7900 = vunpack.c.h.b16 %v5926
        %v7901 = vunpack.c.l.b16 %v5927
        %v7902 = vunpack.c.h.b16 %v5927
        %v7903 = vunpack.c.l.b16 %v5928
        %v7904 = vunpack.c.h.b16 %v5928
        %v7905 = vunpack.c.l.b16 %v5929
        %v7906 = vunpack.c.h.b16 %v5929
        %v7907 = vunpack.c.l.b16 %v5930
        %v7908 = vunpack.c.h.b16 %v5930
        %v7909 = vunpack.c.l.b16 %v5931
        %v7910 = vunpack.c.h.b16 %v5931
        %v7911 = vunpack.c.l.b16 %v5932
        %v7912 = vunpack.c.h.b16 %v5932
        %v7913 = vunpack.c.l.b16 %v5933
        %v7914 = vunpack.c.h.b16 %v5933
        %v7915 = vunpack.c.l.b16 %v5934
        %v7916 = vunpack.c.h.b16 %v5934
        %v7917 = vunpack.c.l.b16 %v5935
        %v7918 = vunpack.c.h.b16 %v5935
        %v7919 = vunpack.c.l.b16 %v5936
        %v7920 = vunpack.c.h.b16 %v5936
        %v7921 = vunpack.c.l.b16 %v5937
        %v7922 = vunpack.c.h.b16 %v5937
        %v7923 = vunpack.c.l.b16 %v5938
        %v7924 = vunpack.c.h.b16 %v5938
        %v7925 = vunpack.c.l.b16 %v5939
        %v7926 = vunpack.c.h.b16 %v5939
        %v7927 = vunpack.c.l.b16 %v5940
        %v7928 = vunpack.c.h.b16 %v5940
        %v7929 = vunpack.c.l.b16 %v5941
        %v7930 = vunpack.c.h.b16 %v5941
        %v7931 = vunpack.c.l.b16 %v5942
        %v7932 = vunpack.c.h.b16 %v5942
        %v7933 = vunpack.c.l.b16 %v5943
        %v7934 = vunpack.c.h.b16 %v5943
        %v7935 = vunpack.c.l.b16 %v5944
        %v7936 = vunpack.c.h.b16 %v5944
        %v7937 = vunpack.c.l.b16 %v5945
        %v7938 = vunpack.c.h.b16 %v5945
        %v7939 = vunpack.c.l.b16 %v5946
        %v7940 = vunpack.c.h.b16 %v5946
        %v7941 = vunpack.c.l.b16 %v5947
        %v7942 = vunpack.c.h.b16 %v5947
        %v7943 = vunpack.c.l.b16 %v5948
        %v7944 = vunpack.c.h.b16 %v5948
        %v7945 = vunpack.c.l.b16 %v5949
        %v7946 = vunpack.c.h.b16 %v5949
        %v7947 = vunpack.c.l.b16 %v5950
        %v7948 = vunpack.c.h.b16 %v5950
        %v7949 = vunpack.c.l.b16 %v5951
        %v7950 = vunpack.c.h.b16 %v5951
        %v7951 = vunpack.c.l.b16 %v5952
        %v7952 = vunpack.c.h.b16 %v5952
        %v7953 = vpack.c.b16 %v6677, %v6673
        %v7954 = vpack.c.b16 %v6678, %v6674
        %v7955 = vpack.c.b16 %v6679, %v6675
        %v7956 = vpack.c.b16 %v6680, %v6676
        %v7957 = vpack.c.b16 %v6685, %v6681
        %v7958 = vpack.c.b16 %v6686, %v6682
        %v7959 = vpack.c.b16 %v6687, %v6683
        %v7960 = vpack.c.b16 %v6688, %v6684
        %v7961 = vpack.c.b16 %v6693, %v6689
        %v7962 = vpack.c.b16 %v6694, %v6690
        %v7963 = vpack.c.b16 %v6695, %v6691
        %v7964 = vpack.c.b16 %v6696, %v6692
        %v7965 = vpack.c.b16 %v6701, %v6697
        %v7966 = vpack.c.b16 %v6702, %v6698
        %v7967 = vpack.c.b16 %v6703, %v6699
        %v7968 = vpack.c.b16 %v6704, %v6700
        %v7969 = vpack.c.b16 %v6709, %v6705
        %v7970 = vpack.c.b16 %v6710, %v6706
        %v7971 = vpack.c.b16 %v6711, %v6707
        %v7972 = vpack.c.b16 %v6712, %v6708
        %v7973 = vpack.c.b16 %v6717, %v6713
        %v7974 = vpack.c.b16 %v6718, %v6714
        %v7975 = vpack.c.b16 %v6719, %v6715
        %v7976 = vpack.c.b16 %v6720, %v6716
        %v7977 = vpack.c.b16 %v6725, %v6721
        %v7978 = vpack.c.b16 %v6726, %v6722
        %v7979 = vpack.c.b16 %v6727, %v6723
        %v7980 = vpack.c.b16 %v6728, %v6724
        %v7981 = vpack.c.b16 %v6733, %v6729
        %v7982 = vpack.c.b16 %v6734, %v6730
        %v7983 = vpack.c.b16 %v6735, %v6731
        %v7984 = vpack.c.b16 %v6736, %v6732
        %v7985 = vpack.c.b16 %v6741, %v6737
        %v7986 = vpack.c.b16 %v6742, %v6738
        %v7987 = vpack.c.b16 %v6743, %v6739
        %v7988 = vpack.c.b16 %v6744, %v6740
        %v7989 = vpack.c.b16 %v6749, %v6745
        %v7990 = vpack.c.b16 %v6750, %v6746
        %v7991 = vpack.c.b16 %v6751, %v6747
        %v7992 = vpack.c.b16 %v6752, %v6748
        %v7993 = vpack.c.b16 %v6757, %v6753
        %v7994 = vpack.c.b16 %v6758, %v6754
        %v7995 = vpack.c.b16 %v6759, %v6755
        %v7996 = vpack.c.b16 %v6760, %v6756
        %v7997 = vpack.c.b16 %v6765, %v6761
        %v7998 = vpack.c.b16 %v6766, %v6762
        %v7999 = vpack.c.b16 %v6767, %v6763
        %v8000 = vpack.c.b16 %v6768, %v6764
        %v8001 = vpack.c.b16 %v6773, %v6769
        %v8002 = vpack.c.b16 %v6774, %v6770
        %v8003 = vpack.c.b16 %v6775, %v6771
        %v8004 = vpack.c.b16 %v6776, %v6772
        %v8005 = vpack.c.b16 %v6781, %v6777
        %v8006 = vpack.c.b16 %v6782, %v6778
        %v8007 = vpack.c.b16 %v6783, %v6779
        %v8008 = vpack.c.b16 %v6784, %v6780
        %v8009 = vpack.c.b16 %v6789, %v6785
        %v8010 = vpack.c.b16 %v6790, %v6786
        %v8011 = vpack.c.b16 %v6791, %v6787
        %v8012 = vpack.c.b16 %v6792, %v6788
        %v8013 = vpack.c.b16 %v6797, %v6793
        %v8014 = vpack.c.b16 %v6798, %v6794
        %v8015 = vpack.c.b16 %v6799, %v6795
        %v8016 = vpack.c.b16 %v6800, %v6796
        %v8017 = vpack.c.b16 %v6805, %v6801
        %v8018 = vpack.c.b16 %v6806, %v6802
        %v8019 = vpack.c.b16 %v6807, %v6803
        %v8020 = vpack.c.b16 %v6808, %v6804
        %v8021 = vpack.c.b16 %v6813, %v6809
        %v8022 = vpack.c.b16 %v6814, %v6810
        %v8023 = vpack.c.b16 %v6815, %v6811
        %v8024 = vpack.c.b16 %v6816, %v6812
        %v8025 = vpack.c.b16 %v6821, %v6817
        %v8026 = vpack.c.b16 %v6822, %v6818
        %v8027 = vpack.c.b16 %v6823, %v6819
        %v8028 = vpack.c.b16 %v6824, %v6820
        %v8029 = vpack.c.b16 %v6829, %v6825
        %v8030 = vpack.c.b16 %v6830, %v6826
        %v8031 = vpack.c.b16 %v6831, %v6827
        %v8032 = vpack.c.b16 %v6832, %v6828
        %v8033 = vpack.c.b16 %v6837, %v6833
        %v8034 = vpack.c.b16 %v6838, %v6834
        %v8035 = vpack.c.b16 %v6839, %v6835
        %v8036 = vpack.c.b16 %v6840, %v6836
        %v8037 = vpack.c.b16 %v6845, %v6841
        %v8038 = vpack.c.b16 %v6846, %v6842
        %v8039 = vpack.c.b16 %v6847, %v6843
        %v8040 = vpack.c.b16 %v6848, %v6844
        %v8041 = vpack.c.b16 %v6853, %v6849
        %v8042 = vpack.c.b16 %v6854, %v6850
        %v8043 = vpack.c.b16 %v6855, %v6851
        %v8044 = vpack.c.b16 %v6856, %v6852
        %v8045 = vpack.c.b16 %v6861, %v6857
        %v8046 = vpack.c.b16 %v6862, %v6858
        %v8047 = vpack.c.b16 %v6863, %v6859
        %v8048 = vpack.c.b16 %v6864, %v6860
        %v8049 = vpack.c.b16 %v6869, %v6865
        %v8050 = vpack.c.b16 %v6870, %v6866
        %v8051 = vpack.c.b16 %v6871, %v6867
        %v8052 = vpack.c.b16 %v6872, %v6868
        %v8053 = vpack.c.b16 %v6877, %v6873
        %v8054 = vpack.c.b16 %v6878, %v6874
        %v8055 = vpack.c.b16 %v6879, %v6875
        %v8056 = vpack.c.b16 %v6880, %v6876
        %v8057 = vpack.c.b16 %v6885, %v6881
        %v8058 = vpack.c.b16 %v6886, %v6882
        %v8059 = vpack.c.b16 %v6887, %v6883
        %v8060 = vpack.c.b16 %v6888, %v6884
        %v8061 = vpack.c.b16 %v6893, %v6889
        %v8062 = vpack.c.b16 %v6894, %v6890
        %v8063 = vpack.c.b16 %v6895, %v6891
        %v8064 = vpack.c.b16 %v6896, %v6892
        %v8065 = vpack.c.b16 %v6901, %v6897
        %v8066 = vpack.c.b16 %v6902, %v6898
        %v8067 = vpack.c.b16 %v6903, %v6899
        %v8068 = vpack.c.b16 %v6904, %v6900
        %v8069 = vpack.c.b16 %v6909, %v6905
        %v8070 = vpack.c.b16 %v6910, %v6906
        %v8071 = vpack.c.b16 %v6911, %v6907
        %v8072 = vpack.c.b16 %v6912, %v6908
        %v8073 = vpack.c.b16 %v6917, %v6913
        %v8074 = vpack.c.b16 %v6918, %v6914
        %v8075 = vpack.c.b16 %v6919, %v6915
        %v8076 = vpack.c.b16 %v6920, %v6916
        %v8077 = vpack.c.b16 %v6925, %v6921
        %v8078 = vpack.c.b16 %v6926, %v6922
        %v8079 = vpack.c.b16 %v6927, %v6923
        %v8080 = vpack.c.b16 %v6928, %v6924
        %v8081 = vpack.c.b16 %v6933, %v6929
        %v8082 = vpack.c.b16 %v6934, %v6930
        %v8083 = vpack.c.b16 %v6935, %v6931
        %v8084 = vpack.c.b16 %v6936, %v6932
        %v8085 = vpack.c.b16 %v6941, %v6937
        %v8086 = vpack.c.b16 %v6942, %v6938
        %v8087 = vpack.c.b16 %v6943, %v6939
        %v8088 = vpack.c.b16 %v6944, %v6940
        %v8089 = vpack.c.b16 %v6949, %v6945
        %v8090 = vpack.c.b16 %v6950, %v6946
        %v8091 = vpack.c.b16 %v6951, %v6947
        %v8092 = vpack.c.b16 %v6952, %v6948
        %v8093 = vpack.c.b16 %v6957, %v6953
        %v8094 = vpack.c.b16 %v6958, %v6954
        %v8095 = vpack.c.b16 %v6959, %v6955
        %v8096 = vpack.c.b16 %v6960, %v6956
        %v8097 = vpack.c.b16 %v6965, %v6961
        %v8098 = vpack.c.b16 %v6966, %v6962
        %v8099 = vpack.c.b16 %v6967, %v6963
        %v8100 = vpack.c.b16 %v6968, %v6964
        %v8101 = vpack.c.b16 %v6973, %v6969
        %v8102 = vpack.c.b16 %v6974, %v6970
        %v8103 = vpack.c.b16 %v6975, %v6971
        %v8104 = vpack.c.b16 %v6976, %v6972
        %v8105 = vpack.c.b16 %v6981, %v6977
        %v8106 = vpack.c.b16 %v6982, %v6978
        %v8107 = vpack.c.b16 %v6983, %v6979
        %v8108 = vpack.c.b16 %v6984, %v6980
        %v8109 = vpack.c.b16 %v6989, %v6985
        %v8110 = vpack.c.b16 %v6990, %v6986
        %v8111 = vpack.c.b16 %v6991, %v6987
        %v8112 = vpack.c.b16 %v6992, %v6988
        %v8113 = vpack.c.b16 %v6997, %v6993
        %v8114 = vpack.c.b16 %v6998, %v6994
        %v8115 = vpack.c.b16 %v6999, %v6995
        %v8116 = vpack.c.b16 %v7000, %v6996
        %v8117 = vpack.c.b16 %v7005, %v7001
        %v8118 = vpack.c.b16 %v7006, %v7002
        %v8119 = vpack.c.b16 %v7007, %v7003
        %v8120 = vpack.c.b16 %v7008, %v7004
        %v8121 = vpack.c.b16 %v7013, %v7009
        %v8122 = vpack.c.b16 %v7014, %v7010
        %v8123 = vpack.c.b16 %v7015, %v7011
        %v8124 = vpack.c.b16 %v7016, %v7012
        %v8125 = vpack.c.b16 %v7021, %v7017
        %v8126 = vpack.c.b16 %v7022, %v7018
        %v8127 = vpack.c.b16 %v7023, %v7019
        %v8128 = vpack.c.b16 %v7024, %v7020
        %v8129 = vpack.c.b16 %v7029, %v7025
        %v8130 = vpack.c.b16 %v7030, %v7026
        %v8131 = vpack.c.b16 %v7031, %v7027
        %v8132 = vpack.c.b16 %v7032, %v7028
        %v8133 = vpack.c.b16 %v7037, %v7033
        %v8134 = vpack.c.b16 %v7038, %v7034
        %v8135 = vpack.c.b16 %v7039, %v7035
        %v8136 = vpack.c.b16 %v7040, %v7036
        %v8137 = vpack.c.b16 %v7045, %v7041
        %v8138 = vpack.c.b16 %v7046, %v7042
        %v8139 = vpack.c.b16 %v7047, %v7043
        %v8140 = vpack.c.b16 %v7048, %v7044
        %v8141 = vpack.c.b16 %v7053, %v7049
        %v8142 = vpack.c.b16 %v7054, %v7050
        %v8143 = vpack.c.b16 %v7055, %v7051
        %v8144 = vpack.c.b16 %v7056, %v7052
        %v8145 = vpack.c.b16 %v7061, %v7057
        %v8146 = vpack.c.b16 %v7062, %v7058
        %v8147 = vpack.c.b16 %v7063, %v7059
        %v8148 = vpack.c.b16 %v7064, %v7060
        %v8149 = vpack.c.b16 %v7069, %v7065
        %v8150 = vpack.c.b16 %v7070, %v7066
        %v8151 = vpack.c.b16 %v7071, %v7067
        %v8152 = vpack.c.b16 %v7072, %v7068
        %v8153 = vpack.c.b16 %v7077, %v7073
        %v8154 = vpack.c.b16 %v7078, %v7074
        %v8155 = vpack.c.b16 %v7079, %v7075
        %v8156 = vpack.c.b16 %v7080, %v7076
        %v8157 = vpack.c.b16 %v7085, %v7081
        %v8158 = vpack.c.b16 %v7086, %v7082
        %v8159 = vpack.c.b16 %v7087, %v7083
        %v8160 = vpack.c.b16 %v7088, %v7084
        %v8161 = vpack.c.b16 %v7093, %v7089
        %v8162 = vpack.c.b16 %v7094, %v7090
        %v8163 = vpack.c.b16 %v7095, %v7091
        %v8164 = vpack.c.b16 %v7096, %v7092
        %v8165 = vpack.c.b16 %v7101, %v7097
        %v8166 = vpack.c.b16 %v7102, %v7098
        %v8167 = vpack.c.b16 %v7103, %v7099
        %v8168 = vpack.c.b16 %v7104, %v7100
        %v8169 = vpack.c.b16 %v7109, %v7105
        %v8170 = vpack.c.b16 %v7110, %v7106
        %v8171 = vpack.c.b16 %v7111, %v7107
        %v8172 = vpack.c.b16 %v7112, %v7108
        %v8173 = vpack.c.b16 %v7117, %v7113
        %v8174 = vpack.c.b16 %v7118, %v7114
        %v8175 = vpack.c.b16 %v7119, %v7115
        %v8176 = vpack.c.b16 %v7120, %v7116
        %v8177 = vpack.c.b16 %v7125, %v7121
        %v8178 = vpack.c.b16 %v7126, %v7122
        %v8179 = vpack.c.b16 %v7127, %v7123
        %v8180 = vpack.c.b16 %v7128, %v7124
        %v8181 = vpack.c.b16 %v7133, %v7129
        %v8182 = vpack.c.b16 %v7134, %v7130
        %v8183 = vpack.c.b16 %v7135, %v7131
        %v8184 = vpack.c.b16 %v7136, %v7132
        %v8185 = vpack.c.b16 %v7141, %v7137
        %v8186 = vpack.c.b16 %v7142, %v7138
        %v8187 = vpack.c.b16 %v7143, %v7139
        %v8188 = vpack.c.b16 %v7144, %v7140
        %v8189 = vpack.c.b16 %v7149, %v7145
        %v8190 = vpack.c.b16 %v7150, %v7146
        %v8191 = vpack.c.b16 %v7151, %v7147
        %v8192 = vpack.c.b16 %v7152, %v7148
        %v8193 = vpack.c.b16 %v7157, %v7153
        %v8194 = vpack.c.b16 %v7158, %v7154
        %v8195 = vpack.c.b16 %v7159, %v7155
        %v8196 = vpack.c.b16 %v7160, %v7156
        %v8197 = vpack.c.b16 %v7165, %v7161
        %v8198 = vpack.c.b16 %v7166, %v7162
        %v8199 = vpack.c.b16 %v7167, %v7163
        %v8200 = vpack.c.b16 %v7168, %v7164
        %v8201 = vpack.c.b16 %v7173, %v7169
        %v8202 = vpack.c.b16 %v7174, %v7170
        %v8203 = vpack.c.b16 %v7175, %v7171
        %v8204 = vpack.c.b16 %v7176, %v7172
        %v8205 = vpack.c.b16 %v7181, %v7177
        %v8206 = vpack.c.b16 %v7182, %v7178
        %v8207 = vpack.c.b16 %v7183, %v7179
        %v8208 = vpack.c.b16 %v7184, %v7180
        %v8209 = vpack.c.b16 %v7189, %v7185
        %v8210 = vpack.c.b16 %v7190, %v7186
        %v8211 = vpack.c.b16 %v7191, %v7187
        %v8212 = vpack.c.b16 %v7192, %v7188
        %v8213 = vpack.c.b16 %v7197, %v7193
        %v8214 = vpack.c.b16 %v7198, %v7194
        %v8215 = vpack.c.b16 %v7199, %v7195
        %v8216 = vpack.c.b16 %v7200, %v7196
        %v8217 = vpack.c.b16 %v7205, %v7201
        %v8218 = vpack.c.b16 %v7206, %v7202
        %v8219 = vpack.c.b16 %v7207, %v7203
        %v8220 = vpack.c.b16 %v7208, %v7204
        %v8221 = vpack.c.b16 %v7213, %v7209
        %v8222 = vpack.c.b16 %v7214, %v7210
        %v8223 = vpack.c.b16 %v7215, %v7211
        %v8224 = vpack.c.b16 %v7216, %v7212
        %v8225 = vpack.c.b16 %v7221, %v7217
        %v8226 = vpack.c.b16 %v7222, %v7218
        %v8227 = vpack.c.b16 %v7223, %v7219
        %v8228 = vpack.c.b16 %v7224, %v7220
        %v8229 = vpack.c.b16 %v7229, %v7225
        %v8230 = vpack.c.b16 %v7230, %v7226
        %v8231 = vpack.c.b16 %v7231, %v7227
        %v8232 = vpack.c.b16 %v7232, %v7228
        %v8233 = vpack.c.b16 %v7237, %v7233
        %v8234 = vpack.c.b16 %v7238, %v7234
        %v8235 = vpack.c.b16 %v7239, %v7235
        %v8236 = vpack.c.b16 %v7240, %v7236
        %v8237 = vpack.c.b16 %v7245, %v7241
        %v8238 = vpack.c.b16 %v7246, %v7242
        %v8239 = vpack.c.b16 %v7247, %v7243
        %v8240 = vpack.c.b16 %v7248, %v7244
        %v8241 = vpack.c.b16 %v7253, %v7249
        %v8242 = vpack.c.b16 %v7254, %v7250
        %v8243 = vpack.c.b16 %v7255, %v7251
        %v8244 = vpack.c.b16 %v7256, %v7252
        %v8245 = vpack.c.b16 %v7261, %v7257
        %v8246 = vpack.c.b16 %v7262, %v7258
        %v8247 = vpack.c.b16 %v7263, %v7259
        %v8248 = vpack.c.b16 %v7264, %v7260
        %v8249 = vpack.c.b16 %v7269, %v7265
        %v8250 = vpack.c.b16 %v7270, %v7266
        %v8251 = vpack.c.b16 %v7271, %v7267
        %v8252 = vpack.c.b16 %v7272, %v7268
        %v8253 = vpack.c.b16 %v7277, %v7273
        %v8254 = vpack.c.b16 %v7278, %v7274
        %v8255 = vpack.c.b16 %v7279, %v7275
        %v8256 = vpack.c.b16 %v7280, %v7276
        %v8257 = vpack.c.b16 %v7285, %v7281
        %v8258 = vpack.c.b16 %v7286, %v7282
        %v8259 = vpack.c.b16 %v7287, %v7283
        %v8260 = vpack.c.b16 %v7288, %v7284
        %v8261 = vpack.c.b16 %v7293, %v7289
        %v8262 = vpack.c.b16 %v7294, %v7290
        %v8263 = vpack.c.b16 %v7295, %v7291
        %v8264 = vpack.c.b16 %v7296, %v7292
        %v8265 = vpack.c.b16 %v7301, %v7297
        %v8266 = vpack.c.b16 %v7302, %v7298
        %v8267 = vpack.c.b16 %v7303, %v7299
        %v8268 = vpack.c.b16 %v7304, %v7300
        %v8269 = vpack.c.b16 %v7309, %v7305
        %v8270 = vpack.c.b16 %v7310, %v7306
        %v8271 = vpack.c.b16 %v7311, %v7307
        %v8272 = vpack.c.b16 %v7312, %v7308
        %v8273 = vpack.c.b16 %v7317, %v7313
        %v8274 = vpack.c.b16 %v7318, %v7314
        %v8275 = vpack.c.b16 %v7319, %v7315
        %v8276 = vpack.c.b16 %v7320, %v7316
        %v8277 = vpack.c.b16 %v7325, %v7321
        %v8278 = vpack.c.b16 %v7326, %v7322
        %v8279 = vpack.c.b16 %v7327, %v7323
        %v8280 = vpack.c.b16 %v7328, %v7324
        %v8281 = vpack.c.b16 %v7333, %v7329
        %v8282 = vpack.c.b16 %v7334, %v7330
        %v8283 = vpack.c.b16 %v7335, %v7331
        %v8284 = vpack.c.b16 %v7336, %v7332
        %v8285 = vpack.c.b16 %v7341, %v7337
        %v8286 = vpack.c.b16 %v7342, %v7338
        %v8287 = vpack.c.b16 %v7343, %v7339
        %v8288 = vpack.c.b16 %v7344, %v7340
        %v8289 = vpack.c.b16 %v7349, %v7345
        %v8290 = vpack.c.b16 %v7350, %v7346
        %v8291 = vpack.c.b16 %v7351, %v7347
        %v8292 = vpack.c.b16 %v7352, %v7348
        %v8293 = vpack.c.b16 %v7357, %v7353
        %v8294 = vpack.c.b16 %v7358, %v7354
        %v8295 = vpack.c.b16 %v7359, %v7355
        %v8296 = vpack.c.b16 %v7360, %v7356
        %v8297 = vpack.c.b16 %v7365, %v7361
        %v8298 = vpack.c.b16 %v7366, %v7362
        %v8299 = vpack.c.b16 %v7367, %v7363
        %v8300 = vpack.c.b16 %v7368, %v7364
        %v8301 = vpack.c.b16 %v7373, %v7369
        %v8302 = vpack.c.b16 %v7374, %v7370
        %v8303 = vpack.c.b16 %v7375, %v7371
        %v8304 = vpack.c.b16 %v7376, %v7372
        %v8305 = vpack.c.b16 %v7381, %v7377
        %v8306 = vpack.c.b16 %v7382, %v7378
        %v8307 = vpack.c.b16 %v7383, %v7379
        %v8308 = vpack.c.b16 %v7384, %v7380
        %v8309 = vpack.c.b16 %v7389, %v7385
        %v8310 = vpack.c.b16 %v7390, %v7386
        %v8311 = vpack.c.b16 %v7391, %v7387
        %v8312 = vpack.c.b16 %v7392, %v7388
        %v8313 = vpack.c.b16 %v7397, %v7393
        %v8314 = vpack.c.b16 %v7398, %v7394
        %v8315 = vpack.c.b16 %v7399, %v7395
        %v8316 = vpack.c.b16 %v7400, %v7396
        %v8317 = vpack.c.b16 %v7405, %v7401
        %v8318 = vpack.c.b16 %v7406, %v7402
        %v8319 = vpack.c.b16 %v7407, %v7403
        %v8320 = vpack.c.b16 %v7408, %v7404
        %v8321 = vpack.c.b16 %v7413, %v7409
        %v8322 = vpack.c.b16 %v7414, %v7410
        %v8323 = vpack.c.b16 %v7415, %v7411
        %v8324 = vpack.c.b16 %v7416, %v7412
        %v8325 = vpack.c.b16 %v7421, %v7417
        %v8326 = vpack.c.b16 %v7422, %v7418
        %v8327 = vpack.c.b16 %v7423, %v7419
        %v8328 = vpack.c.b16 %v7424, %v7420
        %v8329 = vpack.c.b16 %v7429, %v7425
        %v8330 = vpack.c.b16 %v7430, %v7426
        %v8331 = vpack.c.b16 %v7431, %v7427
        %v8332 = vpack.c.b16 %v7432, %v7428
        %v8333 = vpack.c.b16 %v7437, %v7433
        %v8334 = vpack.c.b16 %v7438, %v7434
        %v8335 = vpack.c.b16 %v7439, %v7435
        %v8336 = vpack.c.b16 %v7440, %v7436
        %v8337 = vpack.c.b16 %v7445, %v7441
        %v8338 = vpack.c.b16 %v7446, %v7442
        %v8339 = vpack.c.b16 %v7447, %v7443
        %v8340 = vpack.c.b16 %v7448, %v7444
        %v8341 = vpack.c.b16 %v7453, %v7449
        %v8342 = vpack.c.b16 %v7454, %v7450
        %v8343 = vpack.c.b16 %v7455, %v7451
        %v8344 = vpack.c.b16 %v7456, %v7452
        %v8345 = vpack.c.b16 %v7461, %v7457
        %v8346 = vpack.c.b16 %v7462, %v7458
        %v8347 = vpack.c.b16 %v7463, %v7459
        %v8348 = vpack.c.b16 %v7464, %v7460
        %v8349 = vpack.c.b16 %v7469, %v7465
        %v8350 = vpack.c.b16 %v7470, %v7466
        %v8351 = vpack.c.b16 %v7471, %v7467
        %v8352 = vpack.c.b16 %v7472, %v7468
        %v8353 = vpack.c.b16 %v7477, %v7473
        %v8354 = vpack.c.b16 %v7478, %v7474
        %v8355 = vpack.c.b16 %v7479, %v7475
        %v8356 = vpack.c.b16 %v7480, %v7476
        %v8357 = vpack.c.b16 %v7485, %v7481
        %v8358 = vpack.c.b16 %v7486, %v7482
        %v8359 = vpack.c.b16 %v7487, %v7483
        %v8360 = vpack.c.b16 %v7488, %v7484
        %v8361 = vpack.c.b16 %v7493, %v7489
        %v8362 = vpack.c.b16 %v7494, %v7490
        %v8363 = vpack.c.b16 %v7495, %v7491
        %v8364 = vpack.c.b16 %v7496, %v7492
        %v8365 = vpack.c.b16 %v7501, %v7497
        %v8366 = vpack.c.b16 %v7502, %v7498
        %v8367 = vpack.c.b16 %v7503, %v7499
        %v8368 = vpack.c.b16 %v7504, %v7500
        %v8369 = vpack.c.b16 %v7509, %v7505
        %v8370 = vpack.c.b16 %v7510, %v7506
        %v8371 = vpack.c.b16 %v7511, %v7507
        %v8372 = vpack.c.b16 %v7512, %v7508
        %v8373 = vpack.c.b16 %v7517, %v7513
        %v8374 = vpack.c.b16 %v7518, %v7514
        %v8375 = vpack.c.b16 %v7519, %v7515
        %v8376 = vpack.c.b16 %v7520, %v7516
        %v8377 = vpack.c.b16 %v7525, %v7521
        %v8378 = vpack.c.b16 %v7526, %v7522
        %v8379 = vpack.c.b16 %v7527, %v7523
        %v8380 = vpack.c.b16 %v7528, %v7524
        %v8381 = vpack.c.b16 %v7533, %v7529
        %v8382 = vpack.c.b16 %v7534, %v7530
        %v8383 = vpack.c.b16 %v7535, %v7531
        %v8384 = vpack.c.b16 %v7536, %v7532
        %v8385 = vpack.c.b16 %v7541, %v7537
        %v8386 = vpack.c.b16 %v7542, %v7538
        %v8387 = vpack.c.b16 %v7543, %v7539
        %v8388 = vpack.c.b16 %v7544, %v7540
        %v8389 = vpack.c.b16 %v7549, %v7545
        %v8390 = vpack.c.b16 %v7550, %v7546
        %v8391 = vpack.c.b16 %v7551, %v7547
        %v8392 = vpack.c.b16 %v7552, %v7548
        %v8393 = vpack.c.b16 %v7557, %v7553
        %v8394 = vpack.c.b16 %v7558, %v7554
        %v8395 = vpack.c.b16 %v7559, %v7555
        %v8396 = vpack.c.b16 %v7560, %v7556
        %v8397 = vpack.c.b16 %v7565, %v7561
        %v8398 = vpack.c.b16 %v7566, %v7562
        %v8399 = vpack.c.b16 %v7567, %v7563
        %v8400 = vpack.c.b16 %v7568, %v7564
        %v8401 = vpack.c.b16 %v7573, %v7569
        %v8402 = vpack.c.b16 %v7574, %v7570
        %v8403 = vpack.c.b16 %v7575, %v7571
        %v8404 = vpack.c.b16 %v7576, %v7572
        %v8405 = vpack.c.b16 %v7581, %v7577
        %v8406 = vpack.c.b16 %v7582, %v7578
        %v8407 = vpack.c.b16 %v7583, %v7579
        %v8408 = vpack.c.b16 %v7584, %v7580
        %v8409 = vpack.c.b16 %v7589, %v7585
        %v8410 = vpack.c.b16 %v7590, %v7586
        %v8411 = vpack.c.b16 %v7591, %v7587
        %v8412 = vpack.c.b16 %v7592, %v7588
        %v8413 = vpack.c.b16 %v7597, %v7593
        %v8414 = vpack.c.b16 %v7598, %v7594
        %v8415 = vpack.c.b16 %v7599, %v7595
        %v8416 = vpack.c.b16 %v7600, %v7596
        %v8417 = vpack.c.b16 %v7605, %v7601
        %v8418 = vpack.c.b16 %v7606, %v7602
        %v8419 = vpack.c.b16 %v7607, %v7603
        %v8420 = vpack.c.b16 %v7608, %v7604
        %v8421 = vpack.c.b16 %v7613, %v7609
        %v8422 = vpack.c.b16 %v7614, %v7610
        %v8423 = vpack.c.b16 %v7615, %v7611
        %v8424 = vpack.c.b16 %v7616, %v7612
        %v8425 = vpack.c.b16 %v7621, %v7617
        %v8426 = vpack.c.b16 %v7622, %v7618
        %v8427 = vpack.c.b16 %v7623, %v7619
        %v8428 = vpack.c.b16 %v7624, %v7620
        %v8429 = vpack.c.b16 %v7629, %v7625
        %v8430 = vpack.c.b16 %v7630, %v7626
        %v8431 = vpack.c.b16 %v7631, %v7627
        %v8432 = vpack.c.b16 %v7632, %v7628
        %v8433 = vpack.c.b16 %v7637, %v7633
        %v8434 = vpack.c.b16 %v7638, %v7634
        %v8435 = vpack.c.b16 %v7639, %v7635
        %v8436 = vpack.c.b16 %v7640, %v7636
        %v8437 = vpack.c.b16 %v7645, %v7641
        %v8438 = vpack.c.b16 %v7646, %v7642
        %v8439 = vpack.c.b16 %v7647, %v7643
        %v8440 = vpack.c.b16 %v7648, %v7644
        %v8441 = vpack.c.b16 %v7653, %v7649
        %v8442 = vpack.c.b16 %v7654, %v7650
        %v8443 = vpack.c.b16 %v7655, %v7651
        %v8444 = vpack.c.b16 %v7656, %v7652
        %v8445 = vpack.c.b16 %v7661, %v7657
        %v8446 = vpack.c.b16 %v7662, %v7658
        %v8447 = vpack.c.b16 %v7663, %v7659
        %v8448 = vpack.c.b16 %v7664, %v7660
        %v8449 = vpack.c.b16 %v7669, %v7665
        %v8450 = vpack.c.b16 %v7670, %v7666
        %v8451 = vpack.c.b16 %v7671, %v7667
        %v8452 = vpack.c.b16 %v7672, %v7668
        %v8453 = vpack.c.b16 %v7677, %v7673
        %v8454 = vpack.c.b16 %v7678, %v7674
        %v8455 = vpack.c.b16 %v7679, %v7675
        %v8456 = vpack.c.b16 %v7680, %v7676
        %v8457 = vpack.c.b16 %v7685, %v7681
        %v8458 = vpack.c.b16 %v7686, %v7682
        %v8459 = vpack.c.b16 %v7687, %v7683
        %v8460 = vpack.c.b16 %v7688, %v7684
        %v8461 = vpack.c.b16 %v7693, %v7689
        %v8462 = vpack.c.b16 %v7694, %v7690
        %v8463 = vpack.c.b16 %v7695, %v7691
        %v8464 = vpack.c.b16 %v7696, %v7692
        %v8465 = vpack.c.b16 %v7701, %v7697
        %v8466 = vpack.c.b16 %v7702, %v7698
        %v8467 = vpack.c.b16 %v7703, %v7699
        %v8468 = vpack.c.b16 %v7704, %v7700
        %v8469 = vpack.c.b16 %v7709, %v7705
        %v8470 = vpack.c.b16 %v7710, %v7706
        %v8471 = vpack.c.b16 %v7711, %v7707
        %v8472 = vpack.c.b16 %v7712, %v7708
        %v8473 = vpack.c.b16 %v7717, %v7713
        %v8474 = vpack.c.b16 %v7718, %v7714
        %v8475 = vpack.c.b16 %v7719, %v7715
        %v8476 = vpack.c.b16 %v7720, %v7716
        %v8477 = vpack.c.b16 %v7725, %v7721
        %v8478 = vpack.c.b16 %v7726, %v7722
        %v8479 = vpack.c.b16 %v7727, %v7723
        %v8480 = vpack.c.b16 %v7728, %v7724
        %v8481 = vpack.c.b16 %v7733, %v7729
        %v8482 = vpack.c.b16 %v7734, %v7730
        %v8483 = vpack.c.b16 %v7735, %v7731
        %v8484 = vpack.c.b16 %v7736, %v7732
        %v8485 = vpack.c.b16 %v7741, %v7737
        %v8486 = vpack.c.b16 %v7742, %v7738
        %v8487 = vpack.c.b16 %v7743, %v7739
        %v8488 = vpack.c.b16 %v7744, %v7740
        %v8489 = vpack.c.b16 %v7749, %v7745
        %v8490 = vpack.c.b16 %v7750, %v7746
        %v8491 = vpack.c.b16 %v7751, %v7747
        %v8492 = vpack.c.b16 %v7752, %v7748
        %v8493 = vpack.c.b16 %v7757, %v7753
        %v8494 = vpack.c.b16 %v7758, %v7754
        %v8495 = vpack.c.b16 %v7759, %v7755
        %v8496 = vpack.c.b16 %v7760, %v7756
        %v8497 = vpack.c.b16 %v7765, %v7761
        %v8498 = vpack.c.b16 %v7766, %v7762
        %v8499 = vpack.c.b16 %v7767, %v7763
        %v8500 = vpack.c.b16 %v7768, %v7764
        %v8501 = vpack.c.b16 %v7773, %v7769
        %v8502 = vpack.c.b16 %v7774, %v7770
        %v8503 = vpack.c.b16 %v7775, %v7771
        %v8504 = vpack.c.b16 %v7776, %v7772
        %v8505 = vpack.c.b16 %v7781, %v7777
        %v8506 = vpack.c.b16 %v7782, %v7778
        %v8507 = vpack.c.b16 %v7783, %v7779
        %v8508 = vpack.c.b16 %v7784, %v7780
        %v8509 = vpack.c.b16 %v7789, %v7785
        %v8510 = vpack.c.b16 %v7790, %v7786
        %v8511 = vpack.c.b16 %v7791, %v7787
        %v8512 = vpack.c.b16 %v7792, %v7788
        %v8513 = vpack.c.b16 %v7797, %v7793
        %v8514 = vpack.c.b16 %v7798, %v7794
        %v8515 = vpack.c.b16 %v7799, %v7795
        %v8516 = vpack.c.b16 %v7800, %v7796
        %v8517 = vpack.c.b16 %v7805, %v7801
        %v8518 = vpack.c.b16 %v7806, %v7802
        %v8519 = vpack.c.b16 %v7807, %v7803
        %v8520 = vpack.c.b16 %v7808, %v7804
        %v8521 = vpack.c.b16 %v7813, %v7809
        %v8522 = vpack.c.b16 %v7814, %v7810
        %v8523 = vpack.c.b16 %v7815, %v7811
        %v8524 = vpack.c.b16 %v7816, %v7812
        %v8525 = vpack.c.b16 %v7821, %v7817
        %v8526 = vpack.c.b16 %v7822, %v7818
        %v8527 = vpack.c.b16 %v7823, %v7819
        %v8528 = vpack.c.b16 %v7824, %v7820
        %v8529 = vpack.c.b16 %v7829, %v7825
        %v8530 = vpack.c.b16 %v7830, %v7826
        %v8531 = vpack.c.b16 %v7831, %v7827
        %v8532 = vpack.c.b16 %v7832, %v7828
        %v8533 = vpack.c.b16 %v7837, %v7833
        %v8534 = vpack.c.b16 %v7838, %v7834
        %v8535 = vpack.c.b16 %v7839, %v7835
        %v8536 = vpack.c.b16 %v7840, %v7836
        %v8537 = vpack.c.b16 %v7845, %v7841
        %v8538 = vpack.c.b16 %v7846, %v7842
        %v8539 = vpack.c.b16 %v7847, %v7843
        %v8540 = vpack.c.b16 %v7848, %v7844
        %v8541 = vpack.c.b16 %v7853, %v7849
        %v8542 = vpack.c.b16 %v7854, %v7850
        %v8543 = vpack.c.b16 %v7855, %v7851
        %v8544 = vpack.c.b16 %v7856, %v7852
        %v8545 = vpack.c.b16 %v7861, %v7857
        %v8546 = vpack.c.b16 %v7862, %v7858
        %v8547 = vpack.c.b16 %v7863, %v7859
        %v8548 = vpack.c.b16 %v7864, %v7860
        %v8549 = vpack.c.b16 %v7869, %v7865
        %v8550 = vpack.c.b16 %v7870, %v7866
        %v8551 = vpack.c.b16 %v7871, %v7867
        %v8552 = vpack.c.b16 %v7872, %v7868
        %v8553 = vpack.c.b16 %v7877, %v7873
        %v8554 = vpack.c.b16 %v7878, %v7874
        %v8555 = vpack.c.b16 %v7879, %v7875
        %v8556 = vpack.c.b16 %v7880, %v7876
        %v8557 = vpack.c.b16 %v7885, %v7881
        %v8558 = vpack.c.b16 %v7886, %v7882
        %v8559 = vpack.c.b16 %v7887, %v7883
        %v8560 = vpack.c.b16 %v7888, %v7884
        %v8561 = vpack.c.b16 %v7893, %v7889
        %v8562 = vpack.c.b16 %v7894, %v7890
        %v8563 = vpack.c.b16 %v7895, %v7891
        %v8564 = vpack.c.b16 %v7896, %v7892
        %v8565 = vpack.c.b16 %v7901, %v7897
        %v8566 = vpack.c.b16 %v7902, %v7898
        %v8567 = vpack.c.b16 %v7903, %v7899
        %v8568 = vpack.c.b16 %v7904, %v7900
        %v8569 = vpack.c.b16 %v7909, %v7905
        %v8570 = vpack.c.b16 %v7910, %v7906
        %v8571 = vpack.c.b16 %v7911, %v7907
        %v8572 = vpack.c.b16 %v7912, %v7908
        %v8573 = vpack.c.b16 %v7917, %v7913
        %v8574 = vpack.c.b16 %v7918, %v7914
        %v8575 = vpack.c.b16 %v7919, %v7915
        %v8576 = vpack.c.b16 %v7920, %v7916
        %v8577 = vpack.c.b16 %v7925, %v7921
        %v8578 = vpack.c.b16 %v7926, %v7922
        %v8579 = vpack.c.b16 %v7927, %v7923
        %v8580 = vpack.c.b16 %v7928, %v7924
        %v8581 = vpack.c.b16 %v7933, %v7929
        %v8582 = vpack.c.b16 %v7934, %v7930
        %v8583 = vpack.c.b16 %v7935, %v7931
        %v8584 = vpack.c.b16 %v7936, %v7932
        %v8585 = vpack.c.b16 %v7941, %v7937
        %v8586 = vpack.c.b16 %v7942, %v7938
        %v8587 = vpack.c.b16 %v7943, %v7939
        %v8588 = vpack.c.b16 %v7944, %v7940
        %v8589 = vpack.c.b16 %v7949, %v7945
        %v8590 = vpack.c.b16 %v7950, %v7946
        %v8591 = vpack.c.b16 %v7951, %v7947
        %v8592 = vpack.c.b16 %v7952, %v7948
        %9233 = vmatpush.bf16.msra.mxu0 %v7981
        %9234 = vmatpush.bf16.msra.mxu0 %v7977
        %9235 = vmatpush.bf16.msra.mxu0 %v7973
        %9236 = vmatpush.bf16.msra.mxu0 %v7969
        %9237 = vmatpush.bf16.msra.mxu0 %v7965
        %9238 = vmatpush.bf16.msra.mxu0 %v7961
        %9239 = vmatpush.bf16.msra.mxu0 %v7957
        %9240 = vmatpush.bf16.msra.mxu0 %v7953
        %9241 = vmatmul.bf16.gmra.mxu0 %v5993
        %v9242 = vpop.f32.mrf.mxu0
        %v9243 = vadd.f32 %v5955, %v9242
        %v9244 = vpop.f32.mrf.mxu0
        %9245 = vdwg.mxu0
        %9246 = vmatpush.bf16.msra.mxu0 %v8013
        %9247 = vmatpush.bf16.msra.mxu0 %v8009
        %9248 = vmatpush.bf16.msra.mxu0 %v8005
        %9249 = vmatpush.bf16.msra.mxu0 %v8001
        %9250 = vmatpush.bf16.msra.mxu0 %v7997
        %9251 = vmatpush.bf16.msra.mxu0 %v7993
        %9252 = vmatpush.bf16.msra.mxu0 %v7989
        %9253 = vmatpush.bf16.msra.mxu0 %v7985
        %9254 = vmatmul.bf16.gmra.mxu0 %v5994
        %v9255 = vpop.f32.mrf.mxu0
        %v9256 = vadd.f32 %v9243, %v9255
        %v9257 = vpop.f32.mrf.mxu0
        %9258 = vdwg.mxu0
        %9259 = vmatpush.bf16.msra.mxu0 %v8045
        %9260 = vmatpush.bf16.msra.mxu0 %v8041
        %9261 = vmatpush.bf16.msra.mxu0 %v8037
        %9262 = vmatpush.bf16.msra.mxu0 %v8033
        %9263 = vmatpush.bf16.msra.mxu0 %v8029
        %9264 = vmatpush.bf16.msra.mxu0 %v8025
        %9265 = vmatpush.bf16.msra.mxu0 %v8021
        %9266 = vmatpush.bf16.msra.mxu0 %v8017
        %9267 = vmatmul.bf16.gmra.mxu0 %v5995
        %v9268 = vpop.f32.mrf.mxu0
        %v9269 = vadd.f32 %v9256, %v9268
        %v9270 = vpop.f32.mrf.mxu0
        %9271 = vdwg.mxu0
        %9272 = vmatpush.bf16.msra.mxu0 %v8077
        %9273 = vmatpush.bf16.msra.mxu0 %v8073
        %9274 = vmatpush.bf16.msra.mxu0 %v8069
        %9275 = vmatpush.bf16.msra.mxu0 %v8065
        %9276 = vmatpush.bf16.msra.mxu0 %v8061
        %9277 = vmatpush.bf16.msra.mxu0 %v8057
        %9278 = vmatpush.bf16.msra.mxu0 %v8053
        %9279 = vmatpush.bf16.msra.mxu0 %v8049
        %9280 = vmatmul.bf16.gmra.mxu0 %v5996
        %v9281 = vpop.f32.mrf.mxu0
        %v9282 = vadd.f32 %v9269, %v9281
        %v9283 = vpop.f32.mrf.mxu0
        %9284 = vdwg.mxu0
        %9285 = vmatpush.bf16.msra.mxu0 %v8109
        %9286 = vmatpush.bf16.msra.mxu0 %v8105
        %9287 = vmatpush.bf16.msra.mxu0 %v8101
        %9288 = vmatpush.bf16.msra.mxu0 %v8097
        %9289 = vmatpush.bf16.msra.mxu0 %v8093
        %9290 = vmatpush.bf16.msra.mxu0 %v8089
        %9291 = vmatpush.bf16.msra.mxu0 %v8085
        %9292 = vmatpush.bf16.msra.mxu0 %v8081
        %9293 = vmatmul.bf16.gmra.mxu0 %v5997
        %v9294 = vpop.f32.mrf.mxu0
        %v9295 = vadd.f32 %v9282, %v9294
        %v9296 = vpop.f32.mrf.mxu0
        %9297 = vdwg.mxu0
        %9298 = vmatpush.bf16.msra.mxu0 %v8141
        %9299 = vmatpush.bf16.msra.mxu0 %v8137
        %9300 = vmatpush.bf16.msra.mxu0 %v8133
        %9301 = vmatpush.bf16.msra.mxu0 %v8129
        %9302 = vmatpush.bf16.msra.mxu0 %v8125
        %9303 = vmatpush.bf16.msra.mxu0 %v8121
        %9304 = vmatpush.bf16.msra.mxu0 %v8117
        %9305 = vmatpush.bf16.msra.mxu0 %v8113
        %9306 = vmatmul.bf16.gmra.mxu0 %v5998
        %v9307 = vpop.f32.mrf.mxu0
        %v9308 = vadd.f32 %v9295, %v9307
        %v9309 = vpop.f32.mrf.mxu0
        %9310 = vdwg.mxu0
        %9311 = vmatpush.bf16.msra.mxu0 %v8173
        %9312 = vmatpush.bf16.msra.mxu0 %v8169
        %9313 = vmatpush.bf16.msra.mxu0 %v8165
        %9314 = vmatpush.bf16.msra.mxu0 %v8161
        %9315 = vmatpush.bf16.msra.mxu0 %v8157
        %9316 = vmatpush.bf16.msra.mxu0 %v8153
        %9317 = vmatpush.bf16.msra.mxu0 %v8149
        %9318 = vmatpush.bf16.msra.mxu0 %v8145
        %9319 = vmatmul.bf16.gmra.mxu0 %v5999
        %v9320 = vpop.f32.mrf.mxu0
        %v9321 = vadd.f32 %v9308, %v9320
        %v9322 = vpop.f32.mrf.mxu0
        %9323 = vdwg.mxu0
        %9324 = vmatpush.bf16.msra.mxu0 %v8205
        %9325 = vmatpush.bf16.msra.mxu0 %v8201
        %9326 = vmatpush.bf16.msra.mxu0 %v8197
        %9327 = vmatpush.bf16.msra.mxu0 %v8193
        %9328 = vmatpush.bf16.msra.mxu0 %v8189
        %9329 = vmatpush.bf16.msra.mxu0 %v8185
        %9330 = vmatpush.bf16.msra.mxu0 %v8181
        %9331 = vmatpush.bf16.msra.mxu0 %v8177
        %9332 = vmatmul.bf16.gmra.mxu0 %v6000
        %v9333 = vpop.f32.mrf.mxu0
        %v9334 = vadd.f32 %v9321, %v9333
        %v9335 = vpop.f32.mrf.mxu0
        %9336 = vdwg.mxu0
        %9337 = vmatpush.bf16.msra.mxu0 %v8237
        %9338 = vmatpush.bf16.msra.mxu0 %v8233
        %9339 = vmatpush.bf16.msra.mxu0 %v8229
        %9340 = vmatpush.bf16.msra.mxu0 %v8225
        %9341 = vmatpush.bf16.msra.mxu0 %v8221
        %9342 = vmatpush.bf16.msra.mxu0 %v8217
        %9343 = vmatpush.bf16.msra.mxu0 %v8213
        %9344 = vmatpush.bf16.msra.mxu0 %v8209
        %9345 = vmatmul.bf16.gmra.mxu0 %v6001
        %v9346 = vpop.f32.mrf.mxu0
        %v9347 = vadd.f32 %v9334, %v9346
        %v9348 = vpop.f32.mrf.mxu0
        %9349 = vdwg.mxu0
        %9350 = vmatpush.bf16.msra.mxu0 %v8269
        %9351 = vmatpush.bf16.msra.mxu0 %v8265
        %9352 = vmatpush.bf16.msra.mxu0 %v8261
        %9353 = vmatpush.bf16.msra.mxu0 %v8257
        %9354 = vmatpush.bf16.msra.mxu0 %v8253
        %9355 = vmatpush.bf16.msra.mxu0 %v8249
        %9356 = vmatpush.bf16.msra.mxu0 %v8245
        %9357 = vmatpush.bf16.msra.mxu0 %v8241
        %9358 = vmatmul.bf16.gmra.mxu0 %v6002
        %v9359 = vpop.f32.mrf.mxu0
        %v9360 = vadd.f32 %v9347, %v9359
        %v9361 = vpop.f32.mrf.mxu0
        %9362 = vdwg.mxu0
        %9363 = vmatpush.bf16.msra.mxu0 %v8301
        %9364 = vmatpush.bf16.msra.mxu0 %v8297
        %9365 = vmatpush.bf16.msra.mxu0 %v8293
        %9366 = vmatpush.bf16.msra.mxu0 %v8289
        %9367 = vmatpush.bf16.msra.mxu0 %v8285
        %9368 = vmatpush.bf16.msra.mxu0 %v8281
        %9369 = vmatpush.bf16.msra.mxu0 %v8277
        %9370 = vmatpush.bf16.msra.mxu0 %v8273
        %9371 = vmatmul.bf16.gmra.mxu0 %v6003
        %v9372 = vpop.f32.mrf.mxu0
        %v9373 = vadd.f32 %v9360, %v9372
        %v9374 = vpop.f32.mrf.mxu0
        %9375 = vdwg.mxu0
        %9376 = vmatpush.bf16.msra.mxu0 %v8333
        %9377 = vmatpush.bf16.msra.mxu0 %v8329
        %9378 = vmatpush.bf16.msra.mxu0 %v8325
        %9379 = vmatpush.bf16.msra.mxu0 %v8321
        %9380 = vmatpush.bf16.msra.mxu0 %v8317
        %9381 = vmatpush.bf16.msra.mxu0 %v8313
        %9382 = vmatpush.bf16.msra.mxu0 %v8309
        %9383 = vmatpush.bf16.msra.mxu0 %v8305
        %9384 = vmatmul.bf16.gmra.mxu0 %v6004
        %v9385 = vpop.f32.mrf.mxu0
        %v9386 = vadd.f32 %v9373, %v9385
        %v9387 = vpop.f32.mrf.mxu0
        %9388 = vdwg.mxu0
        %9389 = vmatpush.bf16.msra.mxu0 %v8365
        %9390 = vmatpush.bf16.msra.mxu0 %v8361
        %9391 = vmatpush.bf16.msra.mxu0 %v8357
        %9392 = vmatpush.bf16.msra.mxu0 %v8353
        %9393 = vmatpush.bf16.msra.mxu0 %v8349
        %9394 = vmatpush.bf16.msra.mxu0 %v8345
        %9395 = vmatpush.bf16.msra.mxu0 %v8341
        %9396 = vmatpush.bf16.msra.mxu0 %v8337
        %9397 = vmatmul.bf16.gmra.mxu0 %v6005
        %v9398 = vpop.f32.mrf.mxu0
        %v9399 = vadd.f32 %v9386, %v9398
        %v9400 = vpop.f32.mrf.mxu0
        %9401 = vdwg.mxu0
        %9402 = vmatpush.bf16.msra.mxu0 %v8397
        %9403 = vmatpush.bf16.msra.mxu0 %v8393
        %9404 = vmatpush.bf16.msra.mxu0 %v8389
        %9405 = vmatpush.bf16.msra.mxu0 %v8385
        %9406 = vmatpush.bf16.msra.mxu0 %v8381
        %9407 = vmatpush.bf16.msra.mxu0 %v8377
        %9408 = vmatpush.bf16.msra.mxu0 %v8373
        %9409 = vmatpush.bf16.msra.mxu0 %v8369
        %9410 = vmatmul.bf16.gmra.mxu0 %v6006
        %v9411 = vpop.f32.mrf.mxu0
        %v9412 = vadd.f32 %v9399, %v9411
        %v9413 = vpop.f32.mrf.mxu0
        %9414 = vdwg.mxu0
        %9415 = vmatpush.bf16.msra.mxu0 %v8429
        %9416 = vmatpush.bf16.msra.mxu0 %v8425
        %9417 = vmatpush.bf16.msra.mxu0 %v8421
        %9418 = vmatpush.bf16.msra.mxu0 %v8417
        %9419 = vmatpush.bf16.msra.mxu0 %v8413
        %9420 = vmatpush.bf16.msra.mxu0 %v8409
        %9421 = vmatpush.bf16.msra.mxu0 %v8405
        %9422 = vmatpush.bf16.msra.mxu0 %v8401
        %9423 = vmatmul.bf16.gmra.mxu0 %v6007
        %v9424 = vpop.f32.mrf.mxu0
        %v9425 = vadd.f32 %v9412, %v9424
        %v9426 = vpop.f32.mrf.mxu0
        %9427 = vdwg.mxu0
        %9428 = vmatpush.bf16.msra.mxu0 %v8461
        %9429 = vmatpush.bf16.msra.mxu0 %v8457
        %9430 = vmatpush.bf16.msra.mxu0 %v8453
        %9431 = vmatpush.bf16.msra.mxu0 %v8449
        %9432 = vmatpush.bf16.msra.mxu0 %v8445
        %9433 = vmatpush.bf16.msra.mxu0 %v8441
        %9434 = vmatpush.bf16.msra.mxu0 %v8437
        %9435 = vmatpush.bf16.msra.mxu0 %v8433
        %9436 = vmatmul.bf16.gmra.mxu0 %v6008
        %v9437 = vpop.f32.mrf.mxu0
        %v9438 = vadd.f32 %v9425, %v9437
        %v9439 = vpop.f32.mrf.mxu0
        %9440 = vdwg.mxu0
        %9441 = vmatpush.bf16.msra.mxu0 %v8493
        %9442 = vmatpush.bf16.msra.mxu0 %v8489
        %9443 = vmatpush.bf16.msra.mxu0 %v8485
        %9444 = vmatpush.bf16.msra.mxu0 %v8481
        %9445 = vmatpush.bf16.msra.mxu0 %v8477
        %9446 = vmatpush.bf16.msra.mxu0 %v8473
        %9447 = vmatpush.bf16.msra.mxu0 %v8469
        %9448 = vmatpush.bf16.msra.mxu0 %v8465
        %9449 = vmatmul.bf16.gmra.mxu0 %v6009
        %v9450 = vpop.f32.mrf.mxu0
        %v9451 = vadd.f32 %v9438, %v9450
        %v9452 = vpop.f32.mrf.mxu0
        %9453 = vdwg.mxu0
        %9454 = vmatpush.bf16.msra.mxu0 %v8525
        %9455 = vmatpush.bf16.msra.mxu0 %v8521
        %9456 = vmatpush.bf16.msra.mxu0 %v8517
        %9457 = vmatpush.bf16.msra.mxu0 %v8513
        %9458 = vmatpush.bf16.msra.mxu0 %v8509
        %9459 = vmatpush.bf16.msra.mxu0 %v8505
        %9460 = vmatpush.bf16.msra.mxu0 %v8501
        %9461 = vmatpush.bf16.msra.mxu0 %v8497
        %9462 = vmatmul.bf16.gmra.mxu0 %v6010
        %v9463 = vpop.f32.mrf.mxu0
        %v9464 = vadd.f32 %v9451, %v9463
        %v9465 = vpop.f32.mrf.mxu0
        %9466 = vdwg.mxu0
        %9467 = vmatpush.bf16.msra.mxu0 %v8557
        %9468 = vmatpush.bf16.msra.mxu0 %v8553
        %9469 = vmatpush.bf16.msra.mxu0 %v8549
        %9470 = vmatpush.bf16.msra.mxu0 %v8545
        %9471 = vmatpush.bf16.msra.mxu0 %v8541
        %9472 = vmatpush.bf16.msra.mxu0 %v8537
        %9473 = vmatpush.bf16.msra.mxu0 %v8533
        %9474 = vmatpush.bf16.msra.mxu0 %v8529
        %9475 = vmatmul.bf16.gmra.mxu0 %v6011
        %v9476 = vpop.f32.mrf.mxu0
        %v9477 = vadd.f32 %v9464, %v9476
        %v9478 = vpop.f32.mrf.mxu0
        %9479 = vdwg.mxu0
        %9480 = vmatpush.bf16.msra.mxu0 %v8589
        %9481 = vmatpush.bf16.msra.mxu0 %v8585
        %9482 = vmatpush.bf16.msra.mxu0 %v8581
        %9483 = vmatpush.bf16.msra.mxu0 %v8577
        %9484 = vmatpush.bf16.msra.mxu0 %v8573
        %9485 = vmatpush.bf16.msra.mxu0 %v8569
        %9486 = vmatpush.bf16.msra.mxu0 %v8565
        %9487 = vmatpush.bf16.msra.mxu0 %v8561
        %9488 = vmatmul.bf16.gmra.mxu0 %v6012
        %v9489 = vpop.f32.mrf.mxu0
        %v9490 = vadd.f32 %v9477, %v9489
        %v9491 = vpop.f32.mrf.mxu0
        %9492 = vdwg.mxu0
        %9493 = vmatpush.bf16.msra.mxu0 %v7982
        %9494 = vmatpush.bf16.msra.mxu0 %v7978
        %9495 = vmatpush.bf16.msra.mxu0 %v7974
        %9496 = vmatpush.bf16.msra.mxu0 %v7970
        %9497 = vmatpush.bf16.msra.mxu0 %v7966
        %9498 = vmatpush.bf16.msra.mxu0 %v7962
        %9499 = vmatpush.bf16.msra.mxu0 %v7958
        %9500 = vmatpush.bf16.msra.mxu0 %v7954
        %9501 = vmatmul.bf16.gmra.mxu0 %v5993
        %v9502 = vpop.f32.mrf.mxu0
        %v9503 = vadd.f32 %v5956, %v9502
        %v9504 = vpop.f32.mrf.mxu0
        %9505 = vdwg.mxu0
        %9506 = vmatpush.bf16.msra.mxu0 %v8014
        %9507 = vmatpush.bf16.msra.mxu0 %v8010
        %9508 = vmatpush.bf16.msra.mxu0 %v8006
        %9509 = vmatpush.bf16.msra.mxu0 %v8002
        %9510 = vmatpush.bf16.msra.mxu0 %v7998
        %9511 = vmatpush.bf16.msra.mxu0 %v7994
        %9512 = vmatpush.bf16.msra.mxu0 %v7990
        %9513 = vmatpush.bf16.msra.mxu0 %v7986
        %9514 = vmatmul.bf16.gmra.mxu0 %v5994
        %v9515 = vpop.f32.mrf.mxu0
        %v9516 = vadd.f32 %v9503, %v9515
        %v9517 = vpop.f32.mrf.mxu0
        %9518 = vdwg.mxu0
        %9519 = vmatpush.bf16.msra.mxu0 %v8046
        %9520 = vmatpush.bf16.msra.mxu0 %v8042
        %9521 = vmatpush.bf16.msra.mxu0 %v8038
        %9522 = vmatpush.bf16.msra.mxu0 %v8034
        %9523 = vmatpush.bf16.msra.mxu0 %v8030
        %9524 = vmatpush.bf16.msra.mxu0 %v8026
        %9525 = vmatpush.bf16.msra.mxu0 %v8022
        %9526 = vmatpush.bf16.msra.mxu0 %v8018
        %9527 = vmatmul.bf16.gmra.mxu0 %v5995
        %v9528 = vpop.f32.mrf.mxu0
        %v9529 = vadd.f32 %v9516, %v9528
        %v9530 = vpop.f32.mrf.mxu0
        %9531 = vdwg.mxu0
        %9532 = vmatpush.bf16.msra.mxu0 %v8078
        %9533 = vmatpush.bf16.msra.mxu0 %v8074
        %9534 = vmatpush.bf16.msra.mxu0 %v8070
        %9535 = vmatpush.bf16.msra.mxu0 %v8066
        %9536 = vmatpush.bf16.msra.mxu0 %v8062
        %9537 = vmatpush.bf16.msra.mxu0 %v8058
        %9538 = vmatpush.bf16.msra.mxu0 %v8054
        %9539 = vmatpush.bf16.msra.mxu0 %v8050
        %9540 = vmatmul.bf16.gmra.mxu0 %v5996
        %v9541 = vpop.f32.mrf.mxu0
        %v9542 = vadd.f32 %v9529, %v9541
        %v9543 = vpop.f32.mrf.mxu0
        %9544 = vdwg.mxu0
        %9545 = vmatpush.bf16.msra.mxu0 %v8110
        %9546 = vmatpush.bf16.msra.mxu0 %v8106
        %9547 = vmatpush.bf16.msra.mxu0 %v8102
        %9548 = vmatpush.bf16.msra.mxu0 %v8098
        %9549 = vmatpush.bf16.msra.mxu0 %v8094
        %9550 = vmatpush.bf16.msra.mxu0 %v8090
        %9551 = vmatpush.bf16.msra.mxu0 %v8086
        %9552 = vmatpush.bf16.msra.mxu0 %v8082
        %9553 = vmatmul.bf16.gmra.mxu0 %v5997
        %v9554 = vpop.f32.mrf.mxu0
        %v9555 = vadd.f32 %v9542, %v9554
        %v9556 = vpop.f32.mrf.mxu0
        %9557 = vdwg.mxu0
        %9558 = vmatpush.bf16.msra.mxu0 %v8142
        %9559 = vmatpush.bf16.msra.mxu0 %v8138
        %9560 = vmatpush.bf16.msra.mxu0 %v8134
        %9561 = vmatpush.bf16.msra.mxu0 %v8130
        %9562 = vmatpush.bf16.msra.mxu0 %v8126
        %9563 = vmatpush.bf16.msra.mxu0 %v8122
        %9564 = vmatpush.bf16.msra.mxu0 %v8118
        %9565 = vmatpush.bf16.msra.mxu0 %v8114
        %9566 = vmatmul.bf16.gmra.mxu0 %v5998
        %v9567 = vpop.f32.mrf.mxu0
        %v9568 = vadd.f32 %v9555, %v9567
        %v9569 = vpop.f32.mrf.mxu0
        %9570 = vdwg.mxu0
        %9571 = vmatpush.bf16.msra.mxu0 %v8174
        %9572 = vmatpush.bf16.msra.mxu0 %v8170
        %9573 = vmatpush.bf16.msra.mxu0 %v8166
        %9574 = vmatpush.bf16.msra.mxu0 %v8162
        %9575 = vmatpush.bf16.msra.mxu0 %v8158
        %9576 = vmatpush.bf16.msra.mxu0 %v8154
        %9577 = vmatpush.bf16.msra.mxu0 %v8150
        %9578 = vmatpush.bf16.msra.mxu0 %v8146
        %9579 = vmatmul.bf16.gmra.mxu0 %v5999
        %v9580 = vpop.f32.mrf.mxu0
        %v9581 = vadd.f32 %v9568, %v9580
        %v9582 = vpop.f32.mrf.mxu0
        %9583 = vdwg.mxu0
        %9584 = vmatpush.bf16.msra.mxu0 %v8206
        %9585 = vmatpush.bf16.msra.mxu0 %v8202
        %9586 = vmatpush.bf16.msra.mxu0 %v8198
        %9587 = vmatpush.bf16.msra.mxu0 %v8194
        %9588 = vmatpush.bf16.msra.mxu0 %v8190
        %9589 = vmatpush.bf16.msra.mxu0 %v8186
        %9590 = vmatpush.bf16.msra.mxu0 %v8182
        %9591 = vmatpush.bf16.msra.mxu0 %v8178
        %9592 = vmatmul.bf16.gmra.mxu0 %v6000
        %v9593 = vpop.f32.mrf.mxu0
        %v9594 = vadd.f32 %v9581, %v9593
        %v9595 = vpop.f32.mrf.mxu0
        %9596 = vdwg.mxu0
        %9597 = vmatpush.bf16.msra.mxu0 %v8238
        %9598 = vmatpush.bf16.msra.mxu0 %v8234
        %9599 = vmatpush.bf16.msra.mxu0 %v8230
        %9600 = vmatpush.bf16.msra.mxu0 %v8226
        %9601 = vmatpush.bf16.msra.mxu0 %v8222
        %9602 = vmatpush.bf16.msra.mxu0 %v8218
        %9603 = vmatpush.bf16.msra.mxu0 %v8214
        %9604 = vmatpush.bf16.msra.mxu0 %v8210
        %9605 = vmatmul.bf16.gmra.mxu0 %v6001
        %v9606 = vpop.f32.mrf.mxu0
        %v9607 = vadd.f32 %v9594, %v9606
        %v9608 = vpop.f32.mrf.mxu0
        %9609 = vdwg.mxu0
        %9610 = vmatpush.bf16.msra.mxu0 %v8270
        %9611 = vmatpush.bf16.msra.mxu0 %v8266
        %9612 = vmatpush.bf16.msra.mxu0 %v8262
        %9613 = vmatpush.bf16.msra.mxu0 %v8258
        %9614 = vmatpush.bf16.msra.mxu0 %v8254
        %9615 = vmatpush.bf16.msra.mxu0 %v8250
        %9616 = vmatpush.bf16.msra.mxu0 %v8246
        %9617 = vmatpush.bf16.msra.mxu0 %v8242
        %9618 = vmatmul.bf16.gmra.mxu0 %v6002
        %v9619 = vpop.f32.mrf.mxu0
        %v9620 = vadd.f32 %v9607, %v9619
        %v9621 = vpop.f32.mrf.mxu0
        %9622 = vdwg.mxu0
        %9623 = vmatpush.bf16.msra.mxu0 %v8302
        %9624 = vmatpush.bf16.msra.mxu0 %v8298
        %9625 = vmatpush.bf16.msra.mxu0 %v8294
        %9626 = vmatpush.bf16.msra.mxu0 %v8290
        %9627 = vmatpush.bf16.msra.mxu0 %v8286
        %9628 = vmatpush.bf16.msra.mxu0 %v8282
        %9629 = vmatpush.bf16.msra.mxu0 %v8278
        %9630 = vmatpush.bf16.msra.mxu0 %v8274
        %9631 = vmatmul.bf16.gmra.mxu0 %v6003
        %v9632 = vpop.f32.mrf.mxu0
        %v9633 = vadd.f32 %v9620, %v9632
        %v9634 = vpop.f32.mrf.mxu0
        %9635 = vdwg.mxu0
        %9636 = vmatpush.bf16.msra.mxu0 %v8334
        %9637 = vmatpush.bf16.msra.mxu0 %v8330
        %9638 = vmatpush.bf16.msra.mxu0 %v8326
        %9639 = vmatpush.bf16.msra.mxu0 %v8322
        %9640 = vmatpush.bf16.msra.mxu0 %v8318
        %9641 = vmatpush.bf16.msra.mxu0 %v8314
        %9642 = vmatpush.bf16.msra.mxu0 %v8310
        %9643 = vmatpush.bf16.msra.mxu0 %v8306
        %9644 = vmatmul.bf16.gmra.mxu0 %v6004
        %v9645 = vpop.f32.mrf.mxu0
        %v9646 = vadd.f32 %v9633, %v9645
        %v9647 = vpop.f32.mrf.mxu0
        %9648 = vdwg.mxu0
        %9649 = vmatpush.bf16.msra.mxu0 %v8366
        %9650 = vmatpush.bf16.msra.mxu0 %v8362
        %9651 = vmatpush.bf16.msra.mxu0 %v8358
        %9652 = vmatpush.bf16.msra.mxu0 %v8354
        %9653 = vmatpush.bf16.msra.mxu0 %v8350
        %9654 = vmatpush.bf16.msra.mxu0 %v8346
        %9655 = vmatpush.bf16.msra.mxu0 %v8342
        %9656 = vmatpush.bf16.msra.mxu0 %v8338
        %9657 = vmatmul.bf16.gmra.mxu0 %v6005
        %v9658 = vpop.f32.mrf.mxu0
        %v9659 = vadd.f32 %v9646, %v9658
        %v9660 = vpop.f32.mrf.mxu0
        %9661 = vdwg.mxu0
        %9662 = vmatpush.bf16.msra.mxu0 %v8398
        %9663 = vmatpush.bf16.msra.mxu0 %v8394
        %9664 = vmatpush.bf16.msra.mxu0 %v8390
        %9665 = vmatpush.bf16.msra.mxu0 %v8386
        %9666 = vmatpush.bf16.msra.mxu0 %v8382
        %9667 = vmatpush.bf16.msra.mxu0 %v8378
        %9668 = vmatpush.bf16.msra.mxu0 %v8374
        %9669 = vmatpush.bf16.msra.mxu0 %v8370
        %9670 = vmatmul.bf16.gmra.mxu0 %v6006
        %v9671 = vpop.f32.mrf.mxu0
        %v9672 = vadd.f32 %v9659, %v9671
        %v9673 = vpop.f32.mrf.mxu0
        %9674 = vdwg.mxu0
        %9675 = vmatpush.bf16.msra.mxu0 %v8430
        %9676 = vmatpush.bf16.msra.mxu0 %v8426
        %9677 = vmatpush.bf16.msra.mxu0 %v8422
        %9678 = vmatpush.bf16.msra.mxu0 %v8418
        %9679 = vmatpush.bf16.msra.mxu0 %v8414
        %9680 = vmatpush.bf16.msra.mxu0 %v8410
        %9681 = vmatpush.bf16.msra.mxu0 %v8406
        %9682 = vmatpush.bf16.msra.mxu0 %v8402
        %9683 = vmatmul.bf16.gmra.mxu0 %v6007
        %v9684 = vpop.f32.mrf.mxu0
        %v9685 = vadd.f32 %v9672, %v9684
        %v9686 = vpop.f32.mrf.mxu0
        %9687 = vdwg.mxu0
        %9688 = vmatpush.bf16.msra.mxu0 %v8462
        %9689 = vmatpush.bf16.msra.mxu0 %v8458
        %9690 = vmatpush.bf16.msra.mxu0 %v8454
        %9691 = vmatpush.bf16.msra.mxu0 %v8450
        %9692 = vmatpush.bf16.msra.mxu0 %v8446
        %9693 = vmatpush.bf16.msra.mxu0 %v8442
        %9694 = vmatpush.bf16.msra.mxu0 %v8438
        %9695 = vmatpush.bf16.msra.mxu0 %v8434
        %9696 = vmatmul.bf16.gmra.mxu0 %v6008
        %v9697 = vpop.f32.mrf.mxu0
        %v9698 = vadd.f32 %v9685, %v9697
        %v9699 = vpop.f32.mrf.mxu0
        %9700 = vdwg.mxu0
        %9701 = vmatpush.bf16.msra.mxu0 %v8494
        %9702 = vmatpush.bf16.msra.mxu0 %v8490
        %9703 = vmatpush.bf16.msra.mxu0 %v8486
        %9704 = vmatpush.bf16.msra.mxu0 %v8482
        %9705 = vmatpush.bf16.msra.mxu0 %v8478
        %9706 = vmatpush.bf16.msra.mxu0 %v8474
        %9707 = vmatpush.bf16.msra.mxu0 %v8470
        %9708 = vmatpush.bf16.msra.mxu0 %v8466
        %9709 = vmatmul.bf16.gmra.mxu0 %v6009
        %v9710 = vpop.f32.mrf.mxu0
        %v9711 = vadd.f32 %v9698, %v9710
        %v9712 = vpop.f32.mrf.mxu0
        %9713 = vdwg.mxu0
        %9714 = vmatpush.bf16.msra.mxu0 %v8526
        %9715 = vmatpush.bf16.msra.mxu0 %v8522
        %9716 = vmatpush.bf16.msra.mxu0 %v8518
        %9717 = vmatpush.bf16.msra.mxu0 %v8514
        %9718 = vmatpush.bf16.msra.mxu0 %v8510
        %9719 = vmatpush.bf16.msra.mxu0 %v8506
        %9720 = vmatpush.bf16.msra.mxu0 %v8502
        %9721 = vmatpush.bf16.msra.mxu0 %v8498
        %9722 = vmatmul.bf16.gmra.mxu0 %v6010
        %v9723 = vpop.f32.mrf.mxu0
        %v9724 = vadd.f32 %v9711, %v9723
        %v9725 = vpop.f32.mrf.mxu0
        %9726 = vdwg.mxu0
        %9727 = vmatpush.bf16.msra.mxu0 %v8558
        %9728 = vmatpush.bf16.msra.mxu0 %v8554
        %9729 = vmatpush.bf16.msra.mxu0 %v8550
        %9730 = vmatpush.bf16.msra.mxu0 %v8546
        %9731 = vmatpush.bf16.msra.mxu0 %v8542
        %9732 = vmatpush.bf16.msra.mxu0 %v8538
        %9733 = vmatpush.bf16.msra.mxu0 %v8534
        %9734 = vmatpush.bf16.msra.mxu0 %v8530
        %9735 = vmatmul.bf16.gmra.mxu0 %v6011
        %v9736 = vpop.f32.mrf.mxu0
        %v9737 = vadd.f32 %v9724, %v9736
        %v9738 = vpop.f32.mrf.mxu0
        %9739 = vdwg.mxu0
        %9740 = vmatpush.bf16.msra.mxu0 %v8590
        %9741 = vmatpush.bf16.msra.mxu0 %v8586
        %9742 = vmatpush.bf16.msra.mxu0 %v8582
        %9743 = vmatpush.bf16.msra.mxu0 %v8578
        %9744 = vmatpush.bf16.msra.mxu0 %v8574
        %9745 = vmatpush.bf16.msra.mxu0 %v8570
        %9746 = vmatpush.bf16.msra.mxu0 %v8566
        %9747 = vmatpush.bf16.msra.mxu0 %v8562
        %9748 = vmatmul.bf16.gmra.mxu0 %v6012
        %v9749 = vpop.f32.mrf.mxu0
        %v9750 = vadd.f32 %v9737, %v9749
        %v9751 = vpop.f32.mrf.mxu0
        %9752 = vdwg.mxu0
        %9753 = vmatpush.bf16.msra.mxu0 %v7983
        %9754 = vmatpush.bf16.msra.mxu0 %v7979
        %9755 = vmatpush.bf16.msra.mxu0 %v7975
        %9756 = vmatpush.bf16.msra.mxu0 %v7971
        %9757 = vmatpush.bf16.msra.mxu0 %v7967
        %9758 = vmatpush.bf16.msra.mxu0 %v7963
        %9759 = vmatpush.bf16.msra.mxu0 %v7959
        %9760 = vmatpush.bf16.msra.mxu0 %v7955
        %9761 = vmatmul.bf16.gmra.mxu0 %v5993
        %v9762 = vpop.f32.mrf.mxu0
        %v9763 = vadd.f32 %v5957, %v9762
        %v9764 = vpop.f32.mrf.mxu0
        %9765 = vdwg.mxu0
        %9766 = vmatpush.bf16.msra.mxu0 %v8015
        %9767 = vmatpush.bf16.msra.mxu0 %v8011
        %9768 = vmatpush.bf16.msra.mxu0 %v8007
        %9769 = vmatpush.bf16.msra.mxu0 %v8003
        %9770 = vmatpush.bf16.msra.mxu0 %v7999
        %9771 = vmatpush.bf16.msra.mxu0 %v7995
        %9772 = vmatpush.bf16.msra.mxu0 %v7991
        %9773 = vmatpush.bf16.msra.mxu0 %v7987
        %9774 = vmatmul.bf16.gmra.mxu0 %v5994
        %v9775 = vpop.f32.mrf.mxu0
        %v9776 = vadd.f32 %v9763, %v9775
        %v9777 = vpop.f32.mrf.mxu0
        %9778 = vdwg.mxu0
        %9779 = vmatpush.bf16.msra.mxu0 %v8047
        %9780 = vmatpush.bf16.msra.mxu0 %v8043
        %9781 = vmatpush.bf16.msra.mxu0 %v8039
        %9782 = vmatpush.bf16.msra.mxu0 %v8035
        %9783 = vmatpush.bf16.msra.mxu0 %v8031
        %9784 = vmatpush.bf16.msra.mxu0 %v8027
        %9785 = vmatpush.bf16.msra.mxu0 %v8023
        %9786 = vmatpush.bf16.msra.mxu0 %v8019
        %9787 = vmatmul.bf16.gmra.mxu0 %v5995
        %v9788 = vpop.f32.mrf.mxu0
        %v9789 = vadd.f32 %v9776, %v9788
        %v9790 = vpop.f32.mrf.mxu0
        %9791 = vdwg.mxu0
        %9792 = vmatpush.bf16.msra.mxu0 %v8079
        %9793 = vmatpush.bf16.msra.mxu0 %v8075
        %9794 = vmatpush.bf16.msra.mxu0 %v8071
        %9795 = vmatpush.bf16.msra.mxu0 %v8067
        %9796 = vmatpush.bf16.msra.mxu0 %v8063
        %9797 = vmatpush.bf16.msra.mxu0 %v8059
        %9798 = vmatpush.bf16.msra.mxu0 %v8055
        %9799 = vmatpush.bf16.msra.mxu0 %v8051
        %9800 = vmatmul.bf16.gmra.mxu0 %v5996
        %v9801 = vpop.f32.mrf.mxu0
        %v9802 = vadd.f32 %v9789, %v9801
        %v9803 = vpop.f32.mrf.mxu0
        %9804 = vdwg.mxu0
        %9805 = vmatpush.bf16.msra.mxu0 %v8111
        %9806 = vmatpush.bf16.msra.mxu0 %v8107
        %9807 = vmatpush.bf16.msra.mxu0 %v8103
        %9808 = vmatpush.bf16.msra.mxu0 %v8099
        %9809 = vmatpush.bf16.msra.mxu0 %v8095
        %9810 = vmatpush.bf16.msra.mxu0 %v8091
        %9811 = vmatpush.bf16.msra.mxu0 %v8087
        %9812 = vmatpush.bf16.msra.mxu0 %v8083
        %9813 = vmatmul.bf16.gmra.mxu0 %v5997
        %v9814 = vpop.f32.mrf.mxu0
        %v9815 = vadd.f32 %v9802, %v9814
        %v9816 = vpop.f32.mrf.mxu0
        %9817 = vdwg.mxu0
        %9818 = vmatpush.bf16.msra.mxu0 %v8143
        %9819 = vmatpush.bf16.msra.mxu0 %v8139
        %9820 = vmatpush.bf16.msra.mxu0 %v8135
        %9821 = vmatpush.bf16.msra.mxu0 %v8131
        %9822 = vmatpush.bf16.msra.mxu0 %v8127
        %9823 = vmatpush.bf16.msra.mxu0 %v8123
        %9824 = vmatpush.bf16.msra.mxu0 %v8119
        %9825 = vmatpush.bf16.msra.mxu0 %v8115
        %9826 = vmatmul.bf16.gmra.mxu0 %v5998
        %v9827 = vpop.f32.mrf.mxu0
        %v9828 = vadd.f32 %v9815, %v9827
        %v9829 = vpop.f32.mrf.mxu0
        %9830 = vdwg.mxu0
        %9831 = vmatpush.bf16.msra.mxu0 %v8175
        %9832 = vmatpush.bf16.msra.mxu0 %v8171
        %9833 = vmatpush.bf16.msra.mxu0 %v8167
        %9834 = vmatpush.bf16.msra.mxu0 %v8163
        %9835 = vmatpush.bf16.msra.mxu0 %v8159
        %9836 = vmatpush.bf16.msra.mxu0 %v8155
        %9837 = vmatpush.bf16.msra.mxu0 %v8151
        %9838 = vmatpush.bf16.msra.mxu0 %v8147
        %9839 = vmatmul.bf16.gmra.mxu0 %v5999
        %v9840 = vpop.f32.mrf.mxu0
        %v9841 = vadd.f32 %v9828, %v9840
        %v9842 = vpop.f32.mrf.mxu0
        %9843 = vdwg.mxu0
        %9844 = vmatpush.bf16.msra.mxu0 %v8207
        %9845 = vmatpush.bf16.msra.mxu0 %v8203
        %9846 = vmatpush.bf16.msra.mxu0 %v8199
        %9847 = vmatpush.bf16.msra.mxu0 %v8195
        %9848 = vmatpush.bf16.msra.mxu0 %v8191
        %9849 = vmatpush.bf16.msra.mxu0 %v8187
        %9850 = vmatpush.bf16.msra.mxu0 %v8183
        %9851 = vmatpush.bf16.msra.mxu0 %v8179
        %9852 = vmatmul.bf16.gmra.mxu0 %v6000
        %v9853 = vpop.f32.mrf.mxu0
        %v9854 = vadd.f32 %v9841, %v9853
        %v9855 = vpop.f32.mrf.mxu0
        %9856 = vdwg.mxu0
        %9857 = vmatpush.bf16.msra.mxu0 %v8239
        %9858 = vmatpush.bf16.msra.mxu0 %v8235
        %9859 = vmatpush.bf16.msra.mxu0 %v8231
        %9860 = vmatpush.bf16.msra.mxu0 %v8227
        %9861 = vmatpush.bf16.msra.mxu0 %v8223
        %9862 = vmatpush.bf16.msra.mxu0 %v8219
        %9863 = vmatpush.bf16.msra.mxu0 %v8215
        %9864 = vmatpush.bf16.msra.mxu0 %v8211
        %9865 = vmatmul.bf16.gmra.mxu0 %v6001
        %v9866 = vpop.f32.mrf.mxu0
        %v9867 = vadd.f32 %v9854, %v9866
        %v9868 = vpop.f32.mrf.mxu0
        %9869 = vdwg.mxu0
        %9870 = vmatpush.bf16.msra.mxu0 %v8271
        %9871 = vmatpush.bf16.msra.mxu0 %v8267
        %9872 = vmatpush.bf16.msra.mxu0 %v8263
        %9873 = vmatpush.bf16.msra.mxu0 %v8259
        %9874 = vmatpush.bf16.msra.mxu0 %v8255
        %9875 = vmatpush.bf16.msra.mxu0 %v8251
        %9876 = vmatpush.bf16.msra.mxu0 %v8247
        %9877 = vmatpush.bf16.msra.mxu0 %v8243
        %9878 = vmatmul.bf16.gmra.mxu0 %v6002
        %v9879 = vpop.f32.mrf.mxu0
        %v9880 = vadd.f32 %v9867, %v9879
        %v9881 = vpop.f32.mrf.mxu0
        %9882 = vdwg.mxu0
        %9883 = vmatpush.bf16.msra.mxu0 %v8303
        %9884 = vmatpush.bf16.msra.mxu0 %v8299
        %9885 = vmatpush.bf16.msra.mxu0 %v8295
        %9886 = vmatpush.bf16.msra.mxu0 %v8291
        %9887 = vmatpush.bf16.msra.mxu0 %v8287
        %9888 = vmatpush.bf16.msra.mxu0 %v8283
        %9889 = vmatpush.bf16.msra.mxu0 %v8279
        %9890 = vmatpush.bf16.msra.mxu0 %v8275
        %9891 = vmatmul.bf16.gmra.mxu0 %v6003
        %v9892 = vpop.f32.mrf.mxu0
        %v9893 = vadd.f32 %v9880, %v9892
        %v9894 = vpop.f32.mrf.mxu0
        %9895 = vdwg.mxu0
        %9896 = vmatpush.bf16.msra.mxu0 %v8335
        %9897 = vmatpush.bf16.msra.mxu0 %v8331
        %9898 = vmatpush.bf16.msra.mxu0 %v8327
        %9899 = vmatpush.bf16.msra.mxu0 %v8323
        %9900 = vmatpush.bf16.msra.mxu0 %v8319
        %9901 = vmatpush.bf16.msra.mxu0 %v8315
        %9902 = vmatpush.bf16.msra.mxu0 %v8311
        %9903 = vmatpush.bf16.msra.mxu0 %v8307
        %9904 = vmatmul.bf16.gmra.mxu0 %v6004
        %v9905 = vpop.f32.mrf.mxu0
        %v9906 = vadd.f32 %v9893, %v9905
        %v9907 = vpop.f32.mrf.mxu0
        %9908 = vdwg.mxu0
        %9909 = vmatpush.bf16.msra.mxu0 %v8367
        %9910 = vmatpush.bf16.msra.mxu0 %v8363
        %9911 = vmatpush.bf16.msra.mxu0 %v8359
        %9912 = vmatpush.bf16.msra.mxu0 %v8355
        %9913 = vmatpush.bf16.msra.mxu0 %v8351
        %9914 = vmatpush.bf16.msra.mxu0 %v8347
        %9915 = vmatpush.bf16.msra.mxu0 %v8343
        %9916 = vmatpush.bf16.msra.mxu0 %v8339
        %9917 = vmatmul.bf16.gmra.mxu0 %v6005
        %v9918 = vpop.f32.mrf.mxu0
        %v9919 = vadd.f32 %v9906, %v9918
        %v9920 = vpop.f32.mrf.mxu0
        %9921 = vdwg.mxu0
        %9922 = vmatpush.bf16.msra.mxu0 %v8399
        %9923 = vmatpush.bf16.msra.mxu0 %v8395
        %9924 = vmatpush.bf16.msra.mxu0 %v8391
        %9925 = vmatpush.bf16.msra.mxu0 %v8387
        %9926 = vmatpush.bf16.msra.mxu0 %v8383
        %9927 = vmatpush.bf16.msra.mxu0 %v8379
        %9928 = vmatpush.bf16.msra.mxu0 %v8375
        %9929 = vmatpush.bf16.msra.mxu0 %v8371
        %9930 = vmatmul.bf16.gmra.mxu0 %v6006
        %v9931 = vpop.f32.mrf.mxu0
        %v9932 = vadd.f32 %v9919, %v9931
        %v9933 = vpop.f32.mrf.mxu0
        %9934 = vdwg.mxu0
        %9935 = vmatpush.bf16.msra.mxu0 %v8431
        %9936 = vmatpush.bf16.msra.mxu0 %v8427
        %9937 = vmatpush.bf16.msra.mxu0 %v8423
        %9938 = vmatpush.bf16.msra.mxu0 %v8419
        %9939 = vmatpush.bf16.msra.mxu0 %v8415
        %9940 = vmatpush.bf16.msra.mxu0 %v8411
        %9941 = vmatpush.bf16.msra.mxu0 %v8407
        %9942 = vmatpush.bf16.msra.mxu0 %v8403
        %9943 = vmatmul.bf16.gmra.mxu0 %v6007
        %v9944 = vpop.f32.mrf.mxu0
        %v9945 = vadd.f32 %v9932, %v9944
        %v9946 = vpop.f32.mrf.mxu0
        %9947 = vdwg.mxu0
        %9948 = vmatpush.bf16.msra.mxu0 %v8463
        %9949 = vmatpush.bf16.msra.mxu0 %v8459
        %9950 = vmatpush.bf16.msra.mxu0 %v8455
        %9951 = vmatpush.bf16.msra.mxu0 %v8451
        %9952 = vmatpush.bf16.msra.mxu0 %v8447
        %9953 = vmatpush.bf16.msra.mxu0 %v8443
        %9954 = vmatpush.bf16.msra.mxu0 %v8439
        %9955 = vmatpush.bf16.msra.mxu0 %v8435
        %9956 = vmatmul.bf16.gmra.mxu0 %v6008
        %v9957 = vpop.f32.mrf.mxu0
        %v9958 = vadd.f32 %v9945, %v9957
        %v9959 = vpop.f32.mrf.mxu0
        %9960 = vdwg.mxu0
        %9961 = vmatpush.bf16.msra.mxu0 %v8495
        %9962 = vmatpush.bf16.msra.mxu0 %v8491
        %9963 = vmatpush.bf16.msra.mxu0 %v8487
        %9964 = vmatpush.bf16.msra.mxu0 %v8483
        %9965 = vmatpush.bf16.msra.mxu0 %v8479
        %9966 = vmatpush.bf16.msra.mxu0 %v8475
        %9967 = vmatpush.bf16.msra.mxu0 %v8471
        %9968 = vmatpush.bf16.msra.mxu0 %v8467
        %9969 = vmatmul.bf16.gmra.mxu0 %v6009
        %v9970 = vpop.f32.mrf.mxu0
        %v9971 = vadd.f32 %v9958, %v9970
        %v9972 = vpop.f32.mrf.mxu0
        %9973 = vdwg.mxu0
        %9974 = vmatpush.bf16.msra.mxu0 %v8527
        %9975 = vmatpush.bf16.msra.mxu0 %v8523
        %9976 = vmatpush.bf16.msra.mxu0 %v8519
        %9977 = vmatpush.bf16.msra.mxu0 %v8515
        %9978 = vmatpush.bf16.msra.mxu0 %v8511
        %9979 = vmatpush.bf16.msra.mxu0 %v8507
        %9980 = vmatpush.bf16.msra.mxu0 %v8503
        %9981 = vmatpush.bf16.msra.mxu0 %v8499
        %9982 = vmatmul.bf16.gmra.mxu0 %v6010
        %v9983 = vpop.f32.mrf.mxu0
        %v9984 = vadd.f32 %v9971, %v9983
        %v9985 = vpop.f32.mrf.mxu0
        %9986 = vdwg.mxu0
        %9987 = vmatpush.bf16.msra.mxu0 %v8559
        %9988 = vmatpush.bf16.msra.mxu0 %v8555
        %9989 = vmatpush.bf16.msra.mxu0 %v8551
        %9990 = vmatpush.bf16.msra.mxu0 %v8547
        %9991 = vmatpush.bf16.msra.mxu0 %v8543
        %9992 = vmatpush.bf16.msra.mxu0 %v8539
        %9993 = vmatpush.bf16.msra.mxu0 %v8535
        %9994 = vmatpush.bf16.msra.mxu0 %v8531
        %9995 = vmatmul.bf16.gmra.mxu0 %v6011
        %v9996 = vpop.f32.mrf.mxu0
        %v9997 = vadd.f32 %v9984, %v9996
        %v9998 = vpop.f32.mrf.mxu0
        %9999 = vdwg.mxu0
        %10000 = vmatpush.bf16.msra.mxu0 %v8591
        %10001 = vmatpush.bf16.msra.mxu0 %v8587
        %10002 = vmatpush.bf16.msra.mxu0 %v8583
        %10003 = vmatpush.bf16.msra.mxu0 %v8579
        %10004 = vmatpush.bf16.msra.mxu0 %v8575
        %10005 = vmatpush.bf16.msra.mxu0 %v8571
        %10006 = vmatpush.bf16.msra.mxu0 %v8567
        %10007 = vmatpush.bf16.msra.mxu0 %v8563
        %10008 = vmatmul.bf16.gmra.mxu0 %v6012
        %v10009 = vpop.f32.mrf.mxu0
        %v10010 = vadd.f32 %v9997, %v10009
        %v10011 = vpop.f32.mrf.mxu0
        %10012 = vdwg.mxu0
        %10013 = vmatpush.bf16.msra.mxu0 %v7984
        %10014 = vmatpush.bf16.msra.mxu0 %v7980
        %10015 = vmatpush.bf16.msra.mxu0 %v7976
        %10016 = vmatpush.bf16.msra.mxu0 %v7972
        %10017 = vmatpush.bf16.msra.mxu0 %v7968
        %10018 = vmatpush.bf16.msra.mxu0 %v7964
        %10019 = vmatpush.bf16.msra.mxu0 %v7960
        %10020 = vmatpush.bf16.msra.mxu0 %v7956
        %10021 = vmatmul.bf16.gmra.mxu0 %v5993
        %v10022 = vpop.f32.mrf.mxu0
        %v10023 = vadd.f32 %v5958, %v10022
        %v10024 = vpop.f32.mrf.mxu0
        %10025 = vdwg.mxu0
        %10026 = vmatpush.bf16.msra.mxu0 %v8016
        %10027 = vmatpush.bf16.msra.mxu0 %v8012
        %10028 = vmatpush.bf16.msra.mxu0 %v8008
        %10029 = vmatpush.bf16.msra.mxu0 %v8004
        %10030 = vmatpush.bf16.msra.mxu0 %v8000
        %10031 = vmatpush.bf16.msra.mxu0 %v7996
        %10032 = vmatpush.bf16.msra.mxu0 %v7992
        %10033 = vmatpush.bf16.msra.mxu0 %v7988
        %10034 = vmatmul.bf16.gmra.mxu0 %v5994
        %v10035 = vpop.f32.mrf.mxu0
        %v10036 = vadd.f32 %v10023, %v10035
        %v10037 = vpop.f32.mrf.mxu0
        %10038 = vdwg.mxu0
        %10039 = vmatpush.bf16.msra.mxu0 %v8048
        %10040 = vmatpush.bf16.msra.mxu0 %v8044
        %10041 = vmatpush.bf16.msra.mxu0 %v8040
        %10042 = vmatpush.bf16.msra.mxu0 %v8036
        %10043 = vmatpush.bf16.msra.mxu0 %v8032
        %10044 = vmatpush.bf16.msra.mxu0 %v8028
        %10045 = vmatpush.bf16.msra.mxu0 %v8024
        %10046 = vmatpush.bf16.msra.mxu0 %v8020
        %10047 = vmatmul.bf16.gmra.mxu0 %v5995
        %v10048 = vpop.f32.mrf.mxu0
        %v10049 = vadd.f32 %v10036, %v10048
        %v10050 = vpop.f32.mrf.mxu0
        %10051 = vdwg.mxu0
        %10052 = vmatpush.bf16.msra.mxu0 %v8080
        %10053 = vmatpush.bf16.msra.mxu0 %v8076
        %10054 = vmatpush.bf16.msra.mxu0 %v8072
        %10055 = vmatpush.bf16.msra.mxu0 %v8068
        %10056 = vmatpush.bf16.msra.mxu0 %v8064
        %10057 = vmatpush.bf16.msra.mxu0 %v8060
        %10058 = vmatpush.bf16.msra.mxu0 %v8056
        %10059 = vmatpush.bf16.msra.mxu0 %v8052
        %10060 = vmatmul.bf16.gmra.mxu0 %v5996
        %v10061 = vpop.f32.mrf.mxu0
        %v10062 = vadd.f32 %v10049, %v10061
        %v10063 = vpop.f32.mrf.mxu0
        %10064 = vdwg.mxu0
        %10065 = vmatpush.bf16.msra.mxu0 %v8112
        %10066 = vmatpush.bf16.msra.mxu0 %v8108
        %10067 = vmatpush.bf16.msra.mxu0 %v8104
        %10068 = vmatpush.bf16.msra.mxu0 %v8100
        %10069 = vmatpush.bf16.msra.mxu0 %v8096
        %10070 = vmatpush.bf16.msra.mxu0 %v8092
        %10071 = vmatpush.bf16.msra.mxu0 %v8088
        %10072 = vmatpush.bf16.msra.mxu0 %v8084
        %10073 = vmatmul.bf16.gmra.mxu0 %v5997
        %v10074 = vpop.f32.mrf.mxu0
        %v10075 = vadd.f32 %v10062, %v10074
        %v10076 = vpop.f32.mrf.mxu0
        %10077 = vdwg.mxu0
        %10078 = vmatpush.bf16.msra.mxu0 %v8144
        %10079 = vmatpush.bf16.msra.mxu0 %v8140
        %10080 = vmatpush.bf16.msra.mxu0 %v8136
        %10081 = vmatpush.bf16.msra.mxu0 %v8132
        %10082 = vmatpush.bf16.msra.mxu0 %v8128
        %10083 = vmatpush.bf16.msra.mxu0 %v8124
        %10084 = vmatpush.bf16.msra.mxu0 %v8120
        %10085 = vmatpush.bf16.msra.mxu0 %v8116
        %10086 = vmatmul.bf16.gmra.mxu0 %v5998
        %v10087 = vpop.f32.mrf.mxu0
        %v10088 = vadd.f32 %v10075, %v10087
        %v10089 = vpop.f32.mrf.mxu0
        %10090 = vdwg.mxu0
        %10091 = vmatpush.bf16.msra.mxu0 %v8176
        %10092 = vmatpush.bf16.msra.mxu0 %v8172
        %10093 = vmatpush.bf16.msra.mxu0 %v8168
        %10094 = vmatpush.bf16.msra.mxu0 %v8164
        %10095 = vmatpush.bf16.msra.mxu0 %v8160
        %10096 = vmatpush.bf16.msra.mxu0 %v8156
        %10097 = vmatpush.bf16.msra.mxu0 %v8152
        %10098 = vmatpush.bf16.msra.mxu0 %v8148
        %10099 = vmatmul.bf16.gmra.mxu0 %v5999
        %v10100 = vpop.f32.mrf.mxu0
        %v10101 = vadd.f32 %v10088, %v10100
        %v10102 = vpop.f32.mrf.mxu0
        %10103 = vdwg.mxu0
        %10104 = vmatpush.bf16.msra.mxu0 %v8208
        %10105 = vmatpush.bf16.msra.mxu0 %v8204
        %10106 = vmatpush.bf16.msra.mxu0 %v8200
        %10107 = vmatpush.bf16.msra.mxu0 %v8196
        %10108 = vmatpush.bf16.msra.mxu0 %v8192
        %10109 = vmatpush.bf16.msra.mxu0 %v8188
        %10110 = vmatpush.bf16.msra.mxu0 %v8184
        %10111 = vmatpush.bf16.msra.mxu0 %v8180
        %10112 = vmatmul.bf16.gmra.mxu0 %v6000
        %v10113 = vpop.f32.mrf.mxu0
        %v10114 = vadd.f32 %v10101, %v10113
        %v10115 = vpop.f32.mrf.mxu0
        %10116 = vdwg.mxu0
        %10117 = vmatpush.bf16.msra.mxu0 %v8240
        %10118 = vmatpush.bf16.msra.mxu0 %v8236
        %10119 = vmatpush.bf16.msra.mxu0 %v8232
        %10120 = vmatpush.bf16.msra.mxu0 %v8228
        %10121 = vmatpush.bf16.msra.mxu0 %v8224
        %10122 = vmatpush.bf16.msra.mxu0 %v8220
        %10123 = vmatpush.bf16.msra.mxu0 %v8216
        %10124 = vmatpush.bf16.msra.mxu0 %v8212
        %10125 = vmatmul.bf16.gmra.mxu0 %v6001
        %v10126 = vpop.f32.mrf.mxu0
        %v10127 = vadd.f32 %v10114, %v10126
        %v10128 = vpop.f32.mrf.mxu0
        %10129 = vdwg.mxu0
        %10130 = vmatpush.bf16.msra.mxu0 %v8272
        %10131 = vmatpush.bf16.msra.mxu0 %v8268
        %10132 = vmatpush.bf16.msra.mxu0 %v8264
        %10133 = vmatpush.bf16.msra.mxu0 %v8260
        %10134 = vmatpush.bf16.msra.mxu0 %v8256
        %10135 = vmatpush.bf16.msra.mxu0 %v8252
        %10136 = vmatpush.bf16.msra.mxu0 %v8248
        %10137 = vmatpush.bf16.msra.mxu0 %v8244
        %10138 = vmatmul.bf16.gmra.mxu0 %v6002
        %v10139 = vpop.f32.mrf.mxu0
        %v10140 = vadd.f32 %v10127, %v10139
        %v10141 = vpop.f32.mrf.mxu0
        %10142 = vdwg.mxu0
        %10143 = vmatpush.bf16.msra.mxu0 %v8304
        %10144 = vmatpush.bf16.msra.mxu0 %v8300
        %10145 = vmatpush.bf16.msra.mxu0 %v8296
        %10146 = vmatpush.bf16.msra.mxu0 %v8292
        %10147 = vmatpush.bf16.msra.mxu0 %v8288
        %10148 = vmatpush.bf16.msra.mxu0 %v8284
        %10149 = vmatpush.bf16.msra.mxu0 %v8280
        %10150 = vmatpush.bf16.msra.mxu0 %v8276
        %10151 = vmatmul.bf16.gmra.mxu0 %v6003
        %v10152 = vpop.f32.mrf.mxu0
        %v10153 = vadd.f32 %v10140, %v10152
        %v10154 = vpop.f32.mrf.mxu0
        %10155 = vdwg.mxu0
        %10156 = vmatpush.bf16.msra.mxu0 %v8336
        %10157 = vmatpush.bf16.msra.mxu0 %v8332
        %10158 = vmatpush.bf16.msra.mxu0 %v8328
        %10159 = vmatpush.bf16.msra.mxu0 %v8324
        %10160 = vmatpush.bf16.msra.mxu0 %v8320
        %10161 = vmatpush.bf16.msra.mxu0 %v8316
        %10162 = vmatpush.bf16.msra.mxu0 %v8312
        %10163 = vmatpush.bf16.msra.mxu0 %v8308
        %10164 = vmatmul.bf16.gmra.mxu0 %v6004
        %v10165 = vpop.f32.mrf.mxu0
        %v10166 = vadd.f32 %v10153, %v10165
        %v10167 = vpop.f32.mrf.mxu0
        %10168 = vdwg.mxu0
        %10169 = vmatpush.bf16.msra.mxu0 %v8368
        %10170 = vmatpush.bf16.msra.mxu0 %v8364
        %10171 = vmatpush.bf16.msra.mxu0 %v8360
        %10172 = vmatpush.bf16.msra.mxu0 %v8356
        %10173 = vmatpush.bf16.msra.mxu0 %v8352
        %10174 = vmatpush.bf16.msra.mxu0 %v8348
        %10175 = vmatpush.bf16.msra.mxu0 %v8344
        %10176 = vmatpush.bf16.msra.mxu0 %v8340
        %10177 = vmatmul.bf16.gmra.mxu0 %v6005
        %v10178 = vpop.f32.mrf.mxu0
        %v10179 = vadd.f32 %v10166, %v10178
        %v10180 = vpop.f32.mrf.mxu0
        %10181 = vdwg.mxu0
        %10182 = vmatpush.bf16.msra.mxu0 %v8400
        %10183 = vmatpush.bf16.msra.mxu0 %v8396
        %10184 = vmatpush.bf16.msra.mxu0 %v8392
        %10185 = vmatpush.bf16.msra.mxu0 %v8388
        %10186 = vmatpush.bf16.msra.mxu0 %v8384
        %10187 = vmatpush.bf16.msra.mxu0 %v8380
        %10188 = vmatpush.bf16.msra.mxu0 %v8376
        %10189 = vmatpush.bf16.msra.mxu0 %v8372
        %10190 = vmatmul.bf16.gmra.mxu0 %v6006
        %v10191 = vpop.f32.mrf.mxu0
        %v10192 = vadd.f32 %v10179, %v10191
        %v10193 = vpop.f32.mrf.mxu0
        %10194 = vdwg.mxu0
        %10195 = vmatpush.bf16.msra.mxu0 %v8432
        %10196 = vmatpush.bf16.msra.mxu0 %v8428
        %10197 = vmatpush.bf16.msra.mxu0 %v8424
        %10198 = vmatpush.bf16.msra.mxu0 %v8420
        %10199 = vmatpush.bf16.msra.mxu0 %v8416
        %10200 = vmatpush.bf16.msra.mxu0 %v8412
        %10201 = vmatpush.bf16.msra.mxu0 %v8408
        %10202 = vmatpush.bf16.msra.mxu0 %v8404
        %10203 = vmatmul.bf16.gmra.mxu0 %v6007
        %v10204 = vpop.f32.mrf.mxu0
        %v10205 = vadd.f32 %v10192, %v10204
        %v10206 = vpop.f32.mrf.mxu0
        %10207 = vdwg.mxu0
        %10208 = vmatpush.bf16.msra.mxu0 %v8464
        %10209 = vmatpush.bf16.msra.mxu0 %v8460
        %10210 = vmatpush.bf16.msra.mxu0 %v8456
        %10211 = vmatpush.bf16.msra.mxu0 %v8452
        %10212 = vmatpush.bf16.msra.mxu0 %v8448
        %10213 = vmatpush.bf16.msra.mxu0 %v8444
        %10214 = vmatpush.bf16.msra.mxu0 %v8440
        %10215 = vmatpush.bf16.msra.mxu0 %v8436
        %10216 = vmatmul.bf16.gmra.mxu0 %v6008
        %v10217 = vpop.f32.mrf.mxu0
        %v10218 = vadd.f32 %v10205, %v10217
        %v10219 = vpop.f32.mrf.mxu0
        %10220 = vdwg.mxu0
        %10221 = vmatpush.bf16.msra.mxu0 %v8496
        %10222 = vmatpush.bf16.msra.mxu0 %v8492
        %10223 = vmatpush.bf16.msra.mxu0 %v8488
        %10224 = vmatpush.bf16.msra.mxu0 %v8484
        %10225 = vmatpush.bf16.msra.mxu0 %v8480
        %10226 = vmatpush.bf16.msra.mxu0 %v8476
        %10227 = vmatpush.bf16.msra.mxu0 %v8472
        %10228 = vmatpush.bf16.msra.mxu0 %v8468
        %10229 = vmatmul.bf16.gmra.mxu0 %v6009
        %v10230 = vpop.f32.mrf.mxu0
        %v10231 = vadd.f32 %v10218, %v10230
        %v10232 = vpop.f32.mrf.mxu0
        %10233 = vdwg.mxu0
        %10234 = vmatpush.bf16.msra.mxu0 %v8528
        %10235 = vmatpush.bf16.msra.mxu0 %v8524
        %10236 = vmatpush.bf16.msra.mxu0 %v8520
        %10237 = vmatpush.bf16.msra.mxu0 %v8516
        %10238 = vmatpush.bf16.msra.mxu0 %v8512
        %10239 = vmatpush.bf16.msra.mxu0 %v8508
        %10240 = vmatpush.bf16.msra.mxu0 %v8504
        %10241 = vmatpush.bf16.msra.mxu0 %v8500
        %10242 = vmatmul.bf16.gmra.mxu0 %v6010
        %v10243 = vpop.f32.mrf.mxu0
        %v10244 = vadd.f32 %v10231, %v10243
        %v10245 = vpop.f32.mrf.mxu0
        %10246 = vdwg.mxu0
        %10247 = vmatpush.bf16.msra.mxu0 %v8560
        %10248 = vmatpush.bf16.msra.mxu0 %v8556
        %10249 = vmatpush.bf16.msra.mxu0 %v8552
        %10250 = vmatpush.bf16.msra.mxu0 %v8548
        %10251 = vmatpush.bf16.msra.mxu0 %v8544
        %10252 = vmatpush.bf16.msra.mxu0 %v8540
        %10253 = vmatpush.bf16.msra.mxu0 %v8536
        %10254 = vmatpush.bf16.msra.mxu0 %v8532
        %10255 = vmatmul.bf16.gmra.mxu0 %v6011
        %v10256 = vpop.f32.mrf.mxu0
        %v10257 = vadd.f32 %v10244, %v10256
        %v10258 = vpop.f32.mrf.mxu0
        %10259 = vdwg.mxu0
        %10260 = vmatpush.bf16.msra.mxu0 %v8592
        %10261 = vmatpush.bf16.msra.mxu0 %v8588
        %10262 = vmatpush.bf16.msra.mxu0 %v8584
        %10263 = vmatpush.bf16.msra.mxu0 %v8580
        %10264 = vmatpush.bf16.msra.mxu0 %v8576
        %10265 = vmatpush.bf16.msra.mxu0 %v8572
        %10266 = vmatpush.bf16.msra.mxu0 %v8568
        %10267 = vmatpush.bf16.msra.mxu0 %v8564
        %10268 = vmatmul.bf16.gmra.mxu0 %v6012
        %v10269 = vpop.f32.mrf.mxu0
        %v10270 = vadd.f32 %v10257, %v10269
        %v10271 = vpop.f32.mrf.mxu0
        %10272 = vdwg.mxu0
        %v10273 = vmax.f32 %v9490, 0.0
        %v10274 = vmax.f32 %v9750, 0.0
        %v10275 = vmax.f32 %v10010, 0.0
        %v10276 = vmax.f32 %v10270, 0.0
        %v10277 = vpack.c.bf16 %v10273, %v10273
        %v10278 = vpack.c.bf16 %v10274, %v10274
        %v10279 = vpack.c.bf16 %v10275, %v10275
        %v10280 = vpack.c.bf16 %v10276, %v10276
        %v10281 = vld [vmem:[%s7] sm:$0xf]
        %v10282 = vld [vmem:[%s7 + $0x4] sm:$0xf]
        %v10283 = vld [vmem:[%s7 + $0x8] sm:$0xf]
        %v10284 = vld [vmem:[%s7 + $0xc] sm:$0xf]
        %v10285 = vld [vmem:[%s7 + $0x10] sm:$0xf]
        %v10286 = vld [vmem:[%s7 + $0x14] sm:$0xf]
        %v10287 = vld [vmem:[%s7 + $0x18] sm:$0xf]
        %v10288 = vld [vmem:[%s7 + $0x1c] sm:$0xf]
        %v10289 = vld [vmem:[%s7 + $0x20] sm:$0xf]
        %v10290 = vld [vmem:[%s7 + $0x24] sm:$0xf]
        %v10291 = vld [vmem:[%s7 + $0x28] sm:$0xf]
        %v10292 = vld [vmem:[%s7 + $0x2c] sm:$0xf]
        %v10293 = vld [vmem:[%s7 + $0x30] sm:$0xf]
        %v10294 = vld [vmem:[%s7 + $0x34] sm:$0xf]
        %v10295 = vld [vmem:[%s7 + $0x38] sm:$0xf]
        %v10296 = vld [vmem:[%s7 + $0x3c] sm:$0xf]
        %v10297 = vld [vmem:[%s7 + $0x40] sm:$0xf]
        %v10298 = vld [vmem:[%s7 + $0x44] sm:$0xf]
        %v10299 = vld [vmem:[%s7 + $0x48] sm:$0xf]
        %v10300 = vld [vmem:[%s7 + $0x4c] sm:$0xf]
        %v10301 = vld [vmem:[%s7 + $0x50] sm:$0xf]
        %v10302 = vld [vmem:[%s7 + $0x54] sm:$0xf]
        %v10303 = vld [vmem:[%s7 + $0x58] sm:$0xf]
        %v10304 = vld [vmem:[%s7 + $0x5c] sm:$0xf]
        %v10305 = vld [vmem:[%s7 + $0x60] sm:$0xf]
        %v10306 = vld [vmem:[%s7 + $0x64] sm:$0xf]
        %v10307 = vld [vmem:[%s7 + $0x68] sm:$0xf]
        %v10308 = vld [vmem:[%s7 + $0x6c] sm:$0xf]
        %v10309 = vld [vmem:[%s7 + $0x70] sm:$0xf]
        %v10310 = vld [vmem:[%s7 + $0x74] sm:$0xf]
        %v10311 = vld [vmem:[%s7 + $0x78] sm:$0xf]
        %v10312 = vld [vmem:[%s7 + $0x7c] sm:$0xf]
        %v10313 = vld [vmem:[%s7 + $0x80] sm:$0xf]
        %v10314 = vld [vmem:[%s7 + $0x84] sm:$0xf]
        %v10315 = vld [vmem:[%s7 + $0x88] sm:$0xf]
        %v10316 = vld [vmem:[%s7 + $0x8c] sm:$0xf]
        %v10317 = vld [vmem:[%s7 + $0x90] sm:$0xf]
        %v10318 = vld [vmem:[%s7 + $0x94] sm:$0xf]
        %v10319 = vld [vmem:[%s7 + $0x98] sm:$0xf]
        %v10320 = vld [vmem:[%s7 + $0x9c] sm:$0xf]
        %v10321 = vld [vmem:[%s7 + $0xa0] sm:$0xf]
        %v10322 = vld [vmem:[%s7 + $0xa4] sm:$0xf]
        %v10323 = vld [vmem:[%s7 + $0xa8] sm:$0xf]
        %v10324 = vld [vmem:[%s7 + $0xac] sm:$0xf]
        %v10325 = vld [vmem:[%s7 + $0xb0] sm:$0xf]
        %v10326 = vld [vmem:[%s7 + $0xb4] sm:$0xf]
        %v10327 = vld [vmem:[%s7 + $0xb8] sm:$0xf]
        %v10328 = vld [vmem:[%s7 + $0xbc] sm:$0xf]
        %v10329 = vld [vmem:[%s7 + $0xc0] sm:$0xf]
        %v10330 = vld [vmem:[%s7 + $0xc4] sm:$0xf]
        %v10331 = vld [vmem:[%s7 + $0xc8] sm:$0xf]
        %v10332 = vld [vmem:[%s7 + $0xcc] sm:$0xf]
        %v10333 = vld [vmem:[%s7 + $0xd0] sm:$0xf]
        %v10334 = vld [vmem:[%s7 + $0xd4] sm:$0xf]
        %v10335 = vld [vmem:[%s7 + $0xd8] sm:$0xf]
        %v10336 = vld [vmem:[%s7 + $0xdc] sm:$0xf]
        %v10337 = vld [vmem:[%s7 + $0xe0] sm:$0xf]
        %v10338 = vld [vmem:[%s7 + $0xe4] sm:$0xf]
        %v10339 = vld [vmem:[%s7 + $0xe8] sm:$0xf]
        %v10340 = vld [vmem:[%s7 + $0xec] sm:$0xf]
        %v10341 = vld [vmem:[%s7 + $0xf0] sm:$0xf]
        %v10342 = vld [vmem:[%s7 + $0xf4] sm:$0xf]
        %v10343 = vld [vmem:[%s7 + $0xf8] sm:$0xf]
        %v10344 = vld [vmem:[%s7 + $0xfc] sm:$0xf]
        %v10345 = vld [vmem:[%s8] sm:$0x1]
        %v10347 = vperm.slane %v10345, 0
        %v10413 = vunpack.c.l.b16 %v10281
        %v10414 = vunpack.c.l.b16 %v10282
        %v10415 = vunpack.c.l.b16 %v10283
        %v10416 = vunpack.c.l.b16 %v10284
        %v10417 = vunpack.c.l.b16 %v10285
        %v10418 = vunpack.c.l.b16 %v10286
        %v10419 = vunpack.c.l.b16 %v10287
        %v10420 = vunpack.c.l.b16 %v10288
        %v10421 = vunpack.c.l.b16 %v10289
        %v10422 = vunpack.c.l.b16 %v10290
        %v10423 = vunpack.c.l.b16 %v10291
        %v10424 = vunpack.c.l.b16 %v10292
        %v10425 = vunpack.c.l.b16 %v10293
        %v10426 = vunpack.c.l.b16 %v10294
        %v10427 = vunpack.c.l.b16 %v10295
        %v10428 = vunpack.c.l.b16 %v10296
        %v10429 = vunpack.c.l.b16 %v10297
        %v10430 = vunpack.c.l.b16 %v10298
        %v10431 = vunpack.c.l.b16 %v10299
        %v10432 = vunpack.c.l.b16 %v10300
        %v10433 = vunpack.c.l.b16 %v10301
        %v10434 = vunpack.c.l.b16 %v10302
        %v10435 = vunpack.c.l.b16 %v10303
        %v10436 = vunpack.c.l.b16 %v10304
        %v10437 = vunpack.c.l.b16 %v10305
        %v10438 = vunpack.c.l.b16 %v10306
        %v10439 = vunpack.c.l.b16 %v10307
        %v10440 = vunpack.c.l.b16 %v10308
        %v10441 = vunpack.c.l.b16 %v10309
        %v10442 = vunpack.c.l.b16 %v10310
        %v10443 = vunpack.c.l.b16 %v10311
        %v10444 = vunpack.c.l.b16 %v10312
        %v10445 = vunpack.c.l.b16 %v10313
        %v10446 = vunpack.c.l.b16 %v10314
        %v10447 = vunpack.c.l.b16 %v10315
        %v10448 = vunpack.c.l.b16 %v10316
        %v10449 = vunpack.c.l.b16 %v10317
        %v10450 = vunpack.c.l.b16 %v10318
        %v10451 = vunpack.c.l.b16 %v10319
        %v10452 = vunpack.c.l.b16 %v10320
        %v10453 = vunpack.c.l.b16 %v10321
        %v10454 = vunpack.c.l.b16 %v10322
        %v10455 = vunpack.c.l.b16 %v10323
        %v10456 = vunpack.c.l.b16 %v10324
        %v10457 = vunpack.c.l.b16 %v10325
        %v10458 = vunpack.c.l.b16 %v10326
        %v10459 = vunpack.c.l.b16 %v10327
        %v10460 = vunpack.c.l.b16 %v10328
        %v10461 = vunpack.c.l.b16 %v10329
        %v10462 = vunpack.c.l.b16 %v10330
        %v10463 = vunpack.c.l.b16 %v10331
        %v10464 = vunpack.c.l.b16 %v10332
        %v10465 = vunpack.c.l.b16 %v10333
        %v10466 = vunpack.c.l.b16 %v10334
        %v10467 = vunpack.c.l.b16 %v10335
        %v10468 = vunpack.c.l.b16 %v10336
        %v10469 = vunpack.c.l.b16 %v10337
        %v10470 = vunpack.c.l.b16 %v10338
        %v10471 = vunpack.c.l.b16 %v10339
        %v10472 = vunpack.c.l.b16 %v10340
        %v10473 = vunpack.c.l.b16 %v10341
        %v10474 = vunpack.c.l.b16 %v10342
        %v10475 = vunpack.c.l.b16 %v10343
        %v10476 = vunpack.c.l.b16 %v10344
        %v10477 = vpack.c.b16 %v10414, %v10413
        %v10478 = vpack.c.b16 %v10416, %v10415
        %v10479 = vpack.c.b16 %v10418, %v10417
        %v10480 = vpack.c.b16 %v10420, %v10419
        %v10481 = vpack.c.b16 %v10422, %v10421
        %v10482 = vpack.c.b16 %v10424, %v10423
        %v10483 = vpack.c.b16 %v10426, %v10425
        %v10484 = vpack.c.b16 %v10428, %v10427
        %v10485 = vpack.c.b16 %v10430, %v10429
        %v10486 = vpack.c.b16 %v10432, %v10431
        %v10487 = vpack.c.b16 %v10434, %v10433
        %v10488 = vpack.c.b16 %v10436, %v10435
        %v10489 = vpack.c.b16 %v10438, %v10437
        %v10490 = vpack.c.b16 %v10440, %v10439
        %v10491 = vpack.c.b16 %v10442, %v10441
        %v10492 = vpack.c.b16 %v10444, %v10443
        %v10493 = vpack.c.b16 %v10446, %v10445
        %v10494 = vpack.c.b16 %v10448, %v10447
        %v10495 = vpack.c.b16 %v10450, %v10449
        %v10496 = vpack.c.b16 %v10452, %v10451
        %v10497 = vpack.c.b16 %v10454, %v10453
        %v10498 = vpack.c.b16 %v10456, %v10455
        %v10499 = vpack.c.b16 %v10458, %v10457
        %v10500 = vpack.c.b16 %v10460, %v10459
        %v10501 = vpack.c.b16 %v10462, %v10461
        %v10502 = vpack.c.b16 %v10464, %v10463
        %v10503 = vpack.c.b16 %v10466, %v10465
        %v10504 = vpack.c.b16 %v10468, %v10467
        %v10505 = vpack.c.b16 %v10470, %v10469
        %v10506 = vpack.c.b16 %v10472, %v10471
        %v10507 = vpack.c.b16 %v10474, %v10473
        %v10508 = vpack.c.b16 %v10476, %v10475
        %10541 = vmatpush.bf16.msra.mxu0 %v10484
        %10542 = vmatpush.bf16.msra.mxu0 %v10483
        %10543 = vmatpush.bf16.msra.mxu0 %v10482
        %10544 = vmatpush.bf16.msra.mxu0 %v10481
        %10545 = vmatpush.bf16.msra.mxu0 %v10480
        %10546 = vmatpush.bf16.msra.mxu0 %v10479
        %10547 = vmatpush.bf16.msra.mxu0 %v10478
        %10548 = vmatpush.bf16.msra.mxu0 %v10477
        %10549 = vmatmul.bf16.gmra.mxu0 %v10277
        %v10550 = vpop.f32.mrf.mxu0
        %v10551 = vadd.f32 %v10347, %v10550
        %v10552 = vpop.f32.mrf.mxu0
        %10553 = vdwg.mxu0
        %10554 = vmatpush.bf16.msra.mxu0 %v10492
        %10555 = vmatpush.bf16.msra.mxu0 %v10491
        %10556 = vmatpush.bf16.msra.mxu0 %v10490
        %10557 = vmatpush.bf16.msra.mxu0 %v10489
        %10558 = vmatpush.bf16.msra.mxu0 %v10488
        %10559 = vmatpush.bf16.msra.mxu0 %v10487
        %10560 = vmatpush.bf16.msra.mxu0 %v10486
        %10561 = vmatpush.bf16.msra.mxu0 %v10485
        %10562 = vmatmul.bf16.gmra.mxu0 %v10278
        %v10563 = vpop.f32.mrf.mxu0
        %v10564 = vadd.f32 %v10551, %v10563
        %v10565 = vpop.f32.mrf.mxu0
        %10566 = vdwg.mxu0
        %10567 = vmatpush.bf16.msra.mxu0 %v10500
        %10568 = vmatpush.bf16.msra.mxu0 %v10499
        %10569 = vmatpush.bf16.msra.mxu0 %v10498
        %10570 = vmatpush.bf16.msra.mxu0 %v10497
        %10571 = vmatpush.bf16.msra.mxu0 %v10496
        %10572 = vmatpush.bf16.msra.mxu0 %v10495
        %10573 = vmatpush.bf16.msra.mxu0 %v10494
        %10574 = vmatpush.bf16.msra.mxu0 %v10493
        %10575 = vmatmul.bf16.gmra.mxu0 %v10279
        %v10576 = vpop.f32.mrf.mxu0
        %v10577 = vadd.f32 %v10564, %v10576
        %v10578 = vpop.f32.mrf.mxu0
        %10579 = vdwg.mxu0
        %10580 = vmatpush.bf16.msra.mxu0 %v10508
        %10581 = vmatpush.bf16.msra.mxu0 %v10507
        %10582 = vmatpush.bf16.msra.mxu0 %v10506
        %10583 = vmatpush.bf16.msra.mxu0 %v10505
        %10584 = vmatpush.bf16.msra.mxu0 %v10504
        %10585 = vmatpush.bf16.msra.mxu0 %v10503
        %10586 = vmatpush.bf16.msra.mxu0 %v10502
        %10587 = vmatpush.bf16.msra.mxu0 %v10501
        %10588 = vmatmul.bf16.gmra.mxu0 %v10280
        %v10589 = vpop.f32.mrf.mxu0
        %v10590 = vadd.f32 %v10577, %v10589
        %v10591 = vpop.f32.mrf.mxu0
        %10592 = vdwg.mxu0
        %v10593 = vlaneseq
        %v10594 = vand.u32 %v10593, 127
        %vm10595 = vcmp.lt.s32.totalorder %v10594, 10
        %v10596 = vsel %vm10595, 1, 0
        %vm10597 = vcmp.eq.s32.totalorder %v10596, 1
        %v10598 = vsel %vm10597, %v10590, -1e+30
        %10599 = vmax.xlane.f32.xlu0 %v10598
        %v10600 = vpop.xlane.xlu0 %10599
        %v10601 = vsub.f32 %v10598, %v10600
        %v10602 = vmul.f32 %v10601, 1.442695
        %v10603 = vpow.pop %v10602
        %v10604 = vsel %vm10597, %v10603, 0.0
        %10605 = vadd.xlane.f32.xlu0 %v10604
        %v10606 = vpop.xlane.xlu0 %10605
        %v10607 = vlog2.pop %v10606
        %v10608 = vmul.f32 %v10607, 0.6931472
        %v10609 = vsub.f32 %v10601, %v10608
        %10610 = vst [vmem:[%s458] sm:$0xff] %v10609
        %p10611 = scmp.lt.s32.totalorder %s20, 1
        %s10612 = scalar_select %p10611, %s20, 1
        %s10613 = smul.addr %s10612, 8
        %s10614 = scalar_lea.vmem %s9, %s10613
        // Predicated region
        $region95: #{digit_forward.1} parent=89 // pred_check
          %p10615 = pneg %p232
        $region96: #{digit_forward.1} parent=89 // pred_check_branch
          %10617 = sbr.rel (%p10615) target = $region98
        $region97: #{digit_forward.1} parent=89 // pred_region
          _
        $region98: #{digit_forward.1} parent=89 // pred_fallthru
          _
      $region90: #{digit_forward.1} parent=5 // pred_fallthru
        _
      %p10618 = scmp.le.s32.totalorder 2, %s15
      // Predicated region
      $region99: #{digit_forward.1} parent=5 // pred_check
        %p10619 = pneg %p10618
      $region100: #{digit_forward.1} parent=5 // pred_check_branch
        %10621 = sbr.rel (%p10619) target = $region102
      $region101: #{digit_forward.1} parent=5 // pred_region
        %s10622 = ssub.s32 %s15, 2
        // Predicated region
        $region103: #{digit_forward.1} parent=101 // pred_check
          %p10623 = pneg %p238
        $region104: #{digit_forward.1} parent=101 // pred_check_branch
          %10625 = sbr.rel (%p10623) target = $region106
        $region105: #{digit_forward.1} parent=101 // pred_region
          %p10626 = scmp.lt.s32.totalorder %s21, 1
          %s10627 = scalar_select %p10626, %s21, 1
          %s10628 = smul.addr %s10627, 8
          %s10629 = scalar_lea.vmem %s9, %s10628
        $region106: #{digit_forward.1} parent=101 // pred_fallthru
          _
      $region102: #{digit_forward.1} parent=5 // pred_fallthru
        _
    $region6: #{digit_forward.1} parent=1 // loop_footer
      %s19 = sadd.s32 1, %s15
    $region7: #{digit_forward.1} parent=1 // loop_footer_branch
      %14 = sbr.rel target = $region3
    $region8: #{digit_forward.1} parent=1 // loop_exit
      _

</llo_original>
